<compile_context>
chip_gen: v7x
topology: tpu7x:2x2x1
jax: 0.10.0
libtpu: 0.0.40
codegen_flags: <defaults>
</compile_context>

<pallas_src>
import functools

import numpy as np
import jax
import jax.numpy as jnp
from jax import lax
from jax.experimental import pallas as pl
from jax.experimental.pallas import tpu as pltpu

BN_EPS = 1e-5
LEAKY_SLOPE = 0.01          # nn.LeakyReLU() default negative_slope
N_STAGES = 5                # five (BatchNorm, LeakyReLU, PixelShuffle(2)) blocks


# ------------------------------ Pallas kernel -------------------------------

def psgen_kernel(a_ref, b_ref, gam_ref, bet_ref, o_ref, *, n_rows, c0):
    """Entire PSGenerator forward on one lane-dense (n_rows, C0) tile.

    a_ref : (n_rows, 16*nz) bf16  block-diagonal lhs, row = (n, h0*4 + w0)
    b_ref : (16*nz, C0)     bf16  conv-transpose weights, row = (h0,w0,ci)
    gam/bet : (5, C0)       f32   column-expanded BN affine params per stage
    o_ref : (n_rows, C0)    bf16  un-shuffled channels-last activations (tanh'd)
    """
    f32 = jnp.float32

    # ConvTranspose2d(nz, C0, 4, 1, 0) on a 1x1 input == one GEMM (MXU, bf16
    # operands, f32 accumulation).
    x = jnp.dot(a_ref[...], b_ref[...], preferred_element_type=f32)

    gam = gam_ref[...]
    bet = bet_ref[...]
    # Lane index, hoisted once (broadcast_in_dim is not CSE'd inside the loop).
    lane = lax.broadcasted_iota(jnp.int32, (1, c0), 1)

    for k in range(N_STAGES):
        # Rows-first statistics: the row reduce commutes with the group sums,
        # so all grouped work happens on tiny (1, C0) vectors.  The square is
        # consumed directly by the reduce — no full-size x*x is kept live.
        s = jnp.sum(x, axis=0, keepdims=True)           # (1, C0)
        sq = jnp.sum(x * x, axis=0, keepdims=True)      # (1, C0)

        if k > 0:
            # After k pixel-shuffles the BN channel of column c0 is c0 // 4**k:
            # segmented all-reduce over aligned lane-groups of g = 4**k via a
            # log2(g)-step roll+add butterfly (XLU slots, no HBM mask traffic).
            g = 4 ** k
            step = 1
            while step < g:
                take_up = (lane & step) == 0            # partner = lane ^ step
                s = s + jnp.where(take_up,
                                  pltpu.roll(s, shift=c0 - step, axis=1),
                                  pltpu.roll(s, shift=step, axis=1))
                sq = sq + jnp.where(take_up,
                                    pltpu.roll(sq, shift=c0 - step, axis=1),
                                    pltpu.roll(sq, shift=step, axis=1))
                step *= 2

        inv_cnt = 1.0 / float(n_rows * (4 ** k))        # = N * H_k * W_k
        mean = s * inv_cnt
        var = jnp.maximum(sq * inv_cnt - mean * mean, 0.0)   # clamp >= 0
        scale = gam[k:k + 1, :] * lax.rsqrt(var + BN_EPS)
        offs = bet[k:k + 1, :] - mean * scale
        y = x * scale + offs                            # BatchNorm2d (train)
        x = jnp.where(y >= 0.0, y, LEAKY_SLOPE * y)     # LeakyReLU(0.01)
        # PixelShuffle(2): pure permutation -> deferred to the final reshape.

    o_ref[...] = jnp.tanh(x).astype(o_ref.dtype)        # fused Tanh, bf16 store


# ------------------------------ Pallas wrapper -------------------------------

def _full_spec(shape):
    nd = len(shape)
    return pl.BlockSpec(shape, lambda i, _nd=nd: (0,) * _nd)


def psgen_pallas(a, b, gam, bet):
    n_rows = a.shape[0]
    c0 = b.shape[1]
    assert c0 % 128 == 0 and n_rows % 8 == 0, (n_rows, c0)
    return pl.pallas_call(
        functools.partial(psgen_kernel, n_rows=n_rows, c0=c0),
        out_shape=jax.ShapeDtypeStruct((n_rows, c0), jnp.bfloat16),
        grid=(1,),
        in_specs=[_full_spec(a.shape), _full_spec(b.shape),
                  _full_spec(gam.shape), _full_spec(bet.shape)],
        out_specs=_full_spec((n_rows, c0)),
        compiler_params=pltpu.CompilerParams(
            dimension_semantics=("arbitrary",)),
    )(a, b, gam, bet)


# ------------------------------ host-side glue -------------------------------

def pack_params(params):
    """One-time (outside jit) packing of weights into kernel-friendly layout."""
    w = jnp.asarray(params["w"])                        # (nz, C0, 4, 4)
    nz, c0 = w.shape[0], w.shape[1]
    b = w.transpose(2, 3, 0, 1).reshape(16 * nz, c0).astype(jnp.bfloat16)
    # Stage-k BN channel of column c0 is c0 // 4**k  ->  column-expand affine.
    gam = jnp.stack([jnp.repeat(jnp.asarray(params["gammas"][k]), 4 ** k)
                     for k in range(N_STAGES)]).astype(jnp.float32)
    bet = jnp.stack([jnp.repeat(jnp.asarray(params["betas"][k]), 4 ** k)
                     for k in range(N_STAGES)]).astype(jnp.float32)
    return {"b": b, "gam": gam, "bet": bet}


def psgenerator_forward(x, packed):
    """x: (N, nz, 1, 1) f32 -> (N, C0 // 1024, 128, 128) f32 (NCHW)."""
    b, gam, bet = packed["b"], packed["gam"], packed["bet"]
    n = x.shape[0]
    nz = b.shape[0] // 16
    c0 = b.shape[1]

    # Block-diagonal lhs: row (n, h0*4+w0) carries x[n] in the (h0*4+w0)-th
    # nz-wide column block, so a @ b lands directly in the (N*16, C0)
    # channels-last, un-shuffled layout (no reshape of the GEMM output).
    xv = x.reshape(n, nz)
    eye = jnp.eye(16, dtype=x.dtype)
    a = (xv[:, None, None, :] * eye[None, :, :, None]).reshape(n * 16, 16 * nz)

    xflat = psgen_pallas(a.astype(jnp.bfloat16), b, gam, bet)   # (N*16, C0) bf16

    # The five deferred PixelShuffle(2)s + NCHW relayout == ONE permutation of
    # the kernel output.  Rows split as (n, h0, w0); columns split base-4 as
    # (c_out, d5, d4, d3, d2, d1) with d_k = 2*a_k + b_k; then
    #   h = h0*32 + a1*16 + a2*8 + a3*4 + a4*2 + a5, w likewise with b-bits.
    c_out = c0 // (4 ** N_STAGES)
    hw = 4 * 2 ** N_STAGES                                      # 128
    h = xflat.reshape(n, 4, 4, c_out, 2, 2, 2, 2, 2, 2, 2, 2, 2, 2)
    #                 n h0 w0 cout a5 b5 a4 b4 a3 b3 a2 b2 a1 b1
    h = h.transpose(0, 3, 1, 12, 10, 8, 6, 4, 2, 13, 11, 9, 7, 5)
    h = h.reshape(n, c_out, hw, hw)
    return h.astype(jnp.float32)


# --------------------------- params & reference ------------------------------

def init_params(key, nz, ngf):
    c0 = ngf * 16
    keys = jax.random.split(key, 2 * N_STAGES + 1)
    params = {"w": 0.02 * jax.random.normal(keys[0], (nz, c0, 4, 4), jnp.float32),
              "gammas": [], "betas": []}
    for k in range(N_STAGES):
        ck = c0 // (4 ** k)
        params["gammas"].append(
            1.0 + 0.02 * jax.random.normal(keys[1 + 2 * k], (ck,), jnp.float32))
        params["betas"].append(
            0.02 * jax.random.normal(keys[2 + 2 * k], (ck,), jnp.float32))
    return params


def _pixel_shuffle_nchw(x, r):
    n, c, h, w = x.shape
    x = x.reshape(n, c // (r * r), r, r, h, w)
    x = x.transpose(0, 1, 4, 2, 5, 3)
    return x.reshape(n, c // (r * r), h * r, w * r)


def reference_forward(x, params):
    """Plain-JAX replica of the PyTorch module (validation only).

    BatchNorm uses batch statistics (training-mode semantics), like the kernel.
    """
    n, nz = x.shape[0], x.shape[1]
    # Same bf16 rounding of the GEMM inputs as the Pallas kernel.
    xv = x.reshape(n, nz).astype(jnp.bfloat16).astype(jnp.float32)
    wf = params["w"].astype(jnp.bfloat16).astype(jnp.float32)
    h = jnp.einsum("ni,icuv->ncuv", xv, wf)   # ConvTranspose2d(4,1,0), 1x1 input
    for k in range(N_STAGES):
        g = params["gammas"][k].reshape(1, -1, 1, 1)
        bt = params["betas"][k].reshape(1, -1, 1, 1)
        mean = h.mean(axis=(0, 2, 3), keepdims=True)
        var = ((h - mean) ** 2).mean(axis=(0, 2, 3), keepdims=True)
        h = (h - mean) / jnp.sqrt(var + BN_EPS) * g + bt
        h = jnp.where(h >= 0.0, h, LEAKY_SLOPE * h)
        h = _pixel_shuffle_nchw(h, 2)
    return jnp.tanh(h)


if __name__ == "__main__":
    # Smallest valid PSGenerator: ngf must be a multiple of 64 (final channel
    # count is ngf / 64).  L and nc do not enter the forward computation.
    L, nz, ngf, nc = 128, 8, 64, 1
    key = jax.random.PRNGKey(0)
    k_in, k_par = jax.random.split(key)
    x = jax.random.normal(k_in, (2, nz, 1, 1), jnp.float32)
    params = init_params(k_par, nz, ngf)
    packed = pack_params(params)          # one-time packing, outside the jit

    fwd = jax.jit(psgenerator_forward)
    y = jax.block_until_ready(fwd(x, packed))

    assert y.shape == (2, ngf // 64, 128, 128), y.shape
    assert bool(jnp.all(jnp.isfinite(y)))
    assert bool(jnp.all(jnp.abs(y) <= 1.0 + 1e-5))        # tanh output range

    y_ref = jax.block_until_ready(jax.jit(reference_forward)(x, params))
    # atol covers the bf16 output storage (half-ulp <= 2**-9 near |y| ~ 1).
    np.testing.assert_allclose(np.asarray(y), np.asarray(y_ref),
                               rtol=2e-3, atol=3e-3)
    print("KERNEL_OK")
</pallas_src>

<mosaic_0001>
module attributes {stable_mosaic.version = 11 : i64} {
  func.func @psgen_kernel(%arg0: i32, %arg1: memref<32x128xbf16, #tpu.memory_space<vmem>>, %arg2: memref<128x1024xbf16, #tpu.memory_space<vmem>>, %arg3: memref<5x1024xf32, #tpu.memory_space<vmem>>, %arg4: memref<5x1024xf32, #tpu.memory_space<vmem>>, %arg5: memref<32x1024xbf16, #tpu.memory_space<vmem>>) attributes {dimension_semantics = [#tpu.dimension_semantics<arbitrary>], iteration_bounds = array<i64: 1>, scalar_prefetch = 0 : i64, scratch_operands = 0 : i64, tpu.core_type = #tpu.core_type<tc>, window_params = [{pipeline_mode = #tpu.pipeline_mode<synchronous>, transform_indices = @transform_0, window_bounds = array<i64: 32, 128>}, {pipeline_mode = #tpu.pipeline_mode<synchronous>, transform_indices = @transform_1, window_bounds = array<i64: 128, 1024>}, {pipeline_mode = #tpu.pipeline_mode<synchronous>, transform_indices = @transform_2, window_bounds = array<i64: 5, 1024>}, {pipeline_mode = #tpu.pipeline_mode<synchronous>, transform_indices = @transform_3, window_bounds = array<i64: 5, 1024>}, {pipeline_mode = #tpu.pipeline_mode<synchronous>, transform_indices = @transform_4, window_bounds = array<i64: 32, 1024>}]} {
    %c0 = arith.constant 0 : index
    %c0_0 = arith.constant 0 : index
    %0 = vector.load %arg1[%c0, %c0_0] : memref<32x128xbf16, #tpu.memory_space<vmem>>, vector<32x128xbf16>
    %c0_1 = arith.constant 0 : index
    %c0_2 = arith.constant 0 : index
    %1 = vector.load %arg2[%c0_1, %c0_2] : memref<128x1024xbf16, #tpu.memory_space<vmem>>, vector<128x1024xbf16>
    %cst = arith.constant dense<0.000000e+00> : vector<32x1024xf32>
    %2 = tpu.matmul %0, %1, %cst {dimension_numbers = #tpu.dot_dimension_numbers<[1], [0], [0], [1], [0, 0, 1, 1], [], []>} : vector<32x128xbf16>, vector<128x1024xbf16>, vector<32x1024xf32> -> vector<32x1024xf32>
    %c0_3 = arith.constant 0 : index
    %c0_4 = arith.constant 0 : index
    %3 = vector.load %arg3[%c0_3, %c0_4] : memref<5x1024xf32, #tpu.memory_space<vmem>>, vector<5x1024xf32>
    %c0_5 = arith.constant 0 : index
    %c0_6 = arith.constant 0 : index
    %4 = vector.load %arg4[%c0_5, %c0_6] : memref<5x1024xf32, #tpu.memory_space<vmem>>, vector<5x1024xf32>
    %5 = tpu.iota {dimensions = array<i32: 1>} : vector<1x1024xi32>
    %cst_7 = arith.constant dense<0.000000e+00> : vector<1024xf32>
    %6 = vector.multi_reduction <add>, %2, %cst_7 [0] : vector<32x1024xf32> to vector<1024xf32>
    %7 = vector.shape_cast %6 : vector<1024xf32> to vector<1x1024xf32>
    %8 = arith.mulf %2, %2 : vector<32x1024xf32>
    %cst_8 = arith.constant dense<0.000000e+00> : vector<1024xf32>
    %9 = vector.multi_reduction <add>, %8, %cst_8 [0] : vector<32x1024xf32> to vector<1024xf32>
    %10 = vector.shape_cast %9 : vector<1024xf32> to vector<1x1024xf32>
    %cst_9 = arith.constant 3.125000e-02 : f32
    %11 = vector.broadcast %cst_9 : f32 to vector<1x1024xf32>
    %12 = arith.mulf %7, %11 : vector<1x1024xf32>
    %cst_10 = arith.constant 3.125000e-02 : f32
    %13 = vector.broadcast %cst_10 : f32 to vector<1x1024xf32>
    %14 = arith.mulf %10, %13 : vector<1x1024xf32>
    %15 = arith.mulf %12, %12 : vector<1x1024xf32>
    %16 = arith.subf %14, %15 : vector<1x1024xf32>
    %cst_11 = arith.constant 0.000000e+00 : f32
    %17 = vector.broadcast %cst_11 : f32 to vector<1x1024xf32>
    %18 = arith.maximumf %16, %17 : vector<1x1024xf32>
    %19 = vector.extract_strided_slice %3 {offsets = [0, 0], sizes = [1, 1024], strides = [1, 1]} : vector<5x1024xf32> to vector<1x1024xf32>
    %cst_12 = arith.constant 9.99999974E-6 : f32
    %20 = vector.broadcast %cst_12 : f32 to vector<1x1024xf32>
    %21 = arith.addf %18, %20 : vector<1x1024xf32>
    %22 = math.rsqrt %21 : vector<1x1024xf32>
    %23 = arith.mulf %19, %22 : vector<1x1024xf32>
    %24 = vector.extract_strided_slice %4 {offsets = [0, 0], sizes = [1, 1024], strides = [1, 1]} : vector<5x1024xf32> to vector<1x1024xf32>
    %25 = arith.mulf %12, %23 : vector<1x1024xf32>
    %26 = arith.subf %24, %25 : vector<1x1024xf32>
    %27 = vector.broadcast %23 : vector<1x1024xf32> to vector<32x1024xf32>
    %28 = arith.mulf %2, %27 : vector<32x1024xf32>
    %29 = vector.broadcast %26 : vector<1x1024xf32> to vector<32x1024xf32>
    %30 = arith.addf %28, %29 : vector<32x1024xf32>
    %cst_13 = arith.constant 0.000000e+00 : f32
    %31 = vector.broadcast %cst_13 : f32 to vector<32x1024xf32>
    %32 = arith.cmpf oge, %30, %31 : vector<32x1024xf32>
    %cst_14 = arith.constant 0.00999999977 : f32
    %33 = vector.broadcast %cst_14 : f32 to vector<32x1024xf32>
    %34 = arith.mulf %33, %30 : vector<32x1024xf32>
    %35 = arith.select %32, %30, %34 : vector<32x1024xi1>, vector<32x1024xf32>
    %cst_15 = arith.constant dense<0.000000e+00> : vector<1024xf32>
    %36 = vector.multi_reduction <add>, %35, %cst_15 [0] : vector<32x1024xf32> to vector<1024xf32>
    %37 = vector.shape_cast %36 : vector<1024xf32> to vector<1x1024xf32>
    %38 = arith.mulf %35, %35 : vector<32x1024xf32>
    %cst_16 = arith.constant dense<0.000000e+00> : vector<1024xf32>
    %39 = vector.multi_reduction <add>, %38, %cst_16 [0] : vector<32x1024xf32> to vector<1024xf32>
    %40 = vector.shape_cast %39 : vector<1024xf32> to vector<1x1024xf32>
    %c1_i32 = arith.constant 1 : i32
    %41 = vector.broadcast %c1_i32 : i32 to vector<1x1024xi32>
    %42 = arith.andi %5, %41 : vector<1x1024xi32>
    %c0_i32 = arith.constant 0 : i32
    %43 = vector.broadcast %c0_i32 : i32 to vector<1x1024xi32>
    %44 = arith.cmpi eq, %42, %43 : vector<1x1024xi32>
    %c1023_i32 = arith.constant 1023 : i32
    %45 = tpu.dynamic_rotate %37 by %c1023_i32 dim 1 : vector<1x1024xf32>, i32 -> vector<1x1024xf32>
    %c1_i32_17 = arith.constant 1 : i32
    %46 = tpu.dynamic_rotate %37 by %c1_i32_17 dim 1 : vector<1x1024xf32>, i32 -> vector<1x1024xf32>
    %47 = arith.select %44, %45, %46 : vector<1x1024xi1>, vector<1x1024xf32>
    %48 = arith.addf %37, %47 : vector<1x1024xf32>
    %c1023_i32_18 = arith.constant 1023 : i32
    %49 = tpu.dynamic_rotate %40 by %c1023_i32_18 dim 1 : vector<1x1024xf32>, i32 -> vector<1x1024xf32>
    %c1_i32_19 = arith.constant 1 : i32
    %50 = tpu.dynamic_rotate %40 by %c1_i32_19 dim 1 : vector<1x1024xf32>, i32 -> vector<1x1024xf32>
    %51 = arith.select %44, %49, %50 : vector<1x1024xi1>, vector<1x1024xf32>
    %52 = arith.addf %40, %51 : vector<1x1024xf32>
    %c2_i32 = arith.constant 2 : i32
    %53 = vector.broadcast %c2_i32 : i32 to vector<1x1024xi32>
    %54 = arith.andi %5, %53 : vector<1x1024xi32>
    %c0_i32_20 = arith.constant 0 : i32
    %55 = vector.broadcast %c0_i32_20 : i32 to vector<1x1024xi32>
    %56 = arith.cmpi eq, %54, %55 : vector<1x1024xi32>
    %c1022_i32 = arith.constant 1022 : i32
    %57 = tpu.dynamic_rotate %48 by %c1022_i32 dim 1 : vector<1x1024xf32>, i32 -> vector<1x1024xf32>
    %c2_i32_21 = arith.constant 2 : i32
    %58 = tpu.dynamic_rotate %48 by %c2_i32_21 dim 1 : vector<1x1024xf32>, i32 -> vector<1x1024xf32>
    %59 = arith.select %56, %57, %58 : vector<1x1024xi1>, vector<1x1024xf32>
    %60 = arith.addf %48, %59 : vector<1x1024xf32>
    %c1022_i32_22 = arith.constant 1022 : i32
    %61 = tpu.dynamic_rotate %52 by %c1022_i32_22 dim 1 : vector<1x1024xf32>, i32 -> vector<1x1024xf32>
    %c2_i32_23 = arith.constant 2 : i32
    %62 = tpu.dynamic_rotate %52 by %c2_i32_23 dim 1 : vector<1x1024xf32>, i32 -> vector<1x1024xf32>
    %63 = arith.select %56, %61, %62 : vector<1x1024xi1>, vector<1x1024xf32>
    %64 = arith.addf %52, %63 : vector<1x1024xf32>
    %cst_24 = arith.constant 7.812500e-03 : f32
    %65 = vector.broadcast %cst_24 : f32 to vector<1x1024xf32>
    %66 = arith.mulf %60, %65 : vector<1x1024xf32>
    %cst_25 = arith.constant 7.812500e-03 : f32
    %67 = vector.broadcast %cst_25 : f32 to vector<1x1024xf32>
    %68 = arith.mulf %64, %67 : vector<1x1024xf32>
    %69 = arith.mulf %66, %66 : vector<1x1024xf32>
    %70 = arith.subf %68, %69 : vector<1x1024xf32>
    %cst_26 = arith.constant 0.000000e+00 : f32
    %71 = vector.broadcast %cst_26 : f32 to vector<1x1024xf32>
    %72 = arith.maximumf %70, %71 : vector<1x1024xf32>
    %73 = vector.extract_strided_slice %3 {offsets = [1, 0], sizes = [1, 1024], strides = [1, 1]} : vector<5x1024xf32> to vector<1x1024xf32>
    %cst_27 = arith.constant 9.99999974E-6 : f32
    %74 = vector.broadcast %cst_27 : f32 to vector<1x1024xf32>
    %75 = arith.addf %72, %74 : vector<1x1024xf32>
    %76 = math.rsqrt %75 : vector<1x1024xf32>
    %77 = arith.mulf %73, %76 : vector<1x1024xf32>
    %78 = vector.extract_strided_slice %4 {offsets = [1, 0], sizes = [1, 1024], strides = [1, 1]} : vector<5x1024xf32> to vector<1x1024xf32>
    %79 = arith.mulf %66, %77 : vector<1x1024xf32>
    %80 = arith.subf %78, %79 : vector<1x1024xf32>
    %81 = vector.broadcast %77 : vector<1x1024xf32> to vector<32x1024xf32>
    %82 = arith.mulf %35, %81 : vector<32x1024xf32>
    %83 = vector.broadcast %80 : vector<1x1024xf32> to vector<32x1024xf32>
    %84 = arith.addf %82, %83 : vector<32x1024xf32>
    %cst_28 = arith.constant 0.000000e+00 : f32
    %85 = vector.broadcast %cst_28 : f32 to vector<32x1024xf32>
    %86 = arith.cmpf oge, %84, %85 : vector<32x1024xf32>
    %cst_29 = arith.constant 0.00999999977 : f32
    %87 = vector.broadcast %cst_29 : f32 to vector<32x1024xf32>
    %88 = arith.mulf %87, %84 : vector<32x1024xf32>
    %89 = arith.select %86, %84, %88 : vector<32x1024xi1>, vector<32x1024xf32>
    %cst_30 = arith.constant dense<0.000000e+00> : vector<1024xf32>
    %90 = vector.multi_reduction <add>, %89, %cst_30 [0] : vector<32x1024xf32> to vector<1024xf32>
    %91 = vector.shape_cast %90 : vector<1024xf32> to vector<1x1024xf32>
    %92 = arith.mulf %89, %89 : vector<32x1024xf32>
    %cst_31 = arith.constant dense<0.000000e+00> : vector<1024xf32>
    %93 = vector.multi_reduction <add>, %92, %cst_31 [0] : vector<32x1024xf32> to vector<1024xf32>
    %94 = vector.shape_cast %93 : vector<1024xf32> to vector<1x1024xf32>
    %c1_i32_32 = arith.constant 1 : i32
    %95 = vector.broadcast %c1_i32_32 : i32 to vector<1x1024xi32>
    %96 = arith.andi %5, %95 : vector<1x1024xi32>
    %c0_i32_33 = arith.constant 0 : i32
    %97 = vector.broadcast %c0_i32_33 : i32 to vector<1x1024xi32>
    %98 = arith.cmpi eq, %96, %97 : vector<1x1024xi32>
    %c1023_i32_34 = arith.constant 1023 : i32
    %99 = tpu.dynamic_rotate %91 by %c1023_i32_34 dim 1 : vector<1x1024xf32>, i32 -> vector<1x1024xf32>
    %c1_i32_35 = arith.constant 1 : i32
    %100 = tpu.dynamic_rotate %91 by %c1_i32_35 dim 1 : vector<1x1024xf32>, i32 -> vector<1x1024xf32>
    %101 = arith.select %98, %99, %100 : vector<1x1024xi1>, vector<1x1024xf32>
    %102 = arith.addf %91, %101 : vector<1x1024xf32>
    %c1023_i32_36 = arith.constant 1023 : i32
    %103 = tpu.dynamic_rotate %94 by %c1023_i32_36 dim 1 : vector<1x1024xf32>, i32 -> vector<1x1024xf32>
    %c1_i32_37 = arith.constant 1 : i32
    %104 = tpu.dynamic_rotate %94 by %c1_i32_37 dim 1 : vector<1x1024xf32>, i32 -> vector<1x1024xf32>
    %105 = arith.select %98, %103, %104 : vector<1x1024xi1>, vector<1x1024xf32>
    %106 = arith.addf %94, %105 : vector<1x1024xf32>
    %c2_i32_38 = arith.constant 2 : i32
    %107 = vector.broadcast %c2_i32_38 : i32 to vector<1x1024xi32>
    %108 = arith.andi %5, %107 : vector<1x1024xi32>
    %c0_i32_39 = arith.constant 0 : i32
    %109 = vector.broadcast %c0_i32_39 : i32 to vector<1x1024xi32>
    %110 = arith.cmpi eq, %108, %109 : vector<1x1024xi32>
    %c1022_i32_40 = arith.constant 1022 : i32
    %111 = tpu.dynamic_rotate %102 by %c1022_i32_40 dim 1 : vector<1x1024xf32>, i32 -> vector<1x1024xf32>
    %c2_i32_41 = arith.constant 2 : i32
    %112 = tpu.dynamic_rotate %102 by %c2_i32_41 dim 1 : vector<1x1024xf32>, i32 -> vector<1x1024xf32>
    %113 = arith.select %110, %111, %112 : vector<1x1024xi1>, vector<1x1024xf32>
    %114 = arith.addf %102, %113 : vector<1x1024xf32>
    %c1022_i32_42 = arith.constant 1022 : i32
    %115 = tpu.dynamic_rotate %106 by %c1022_i32_42 dim 1 : vector<1x1024xf32>, i32 -> vector<1x1024xf32>
    %c2_i32_43 = arith.constant 2 : i32
    %116 = tpu.dynamic_rotate %106 by %c2_i32_43 dim 1 : vector<1x1024xf32>, i32 -> vector<1x1024xf32>
    %117 = arith.select %110, %115, %116 : vector<1x1024xi1>, vector<1x1024xf32>
    %118 = arith.addf %106, %117 : vector<1x1024xf32>
    %c4_i32 = arith.constant 4 : i32
    %119 = vector.broadcast %c4_i32 : i32 to vector<1x1024xi32>
    %120 = arith.andi %5, %119 : vector<1x1024xi32>
    %c0_i32_44 = arith.constant 0 : i32
    %121 = vector.broadcast %c0_i32_44 : i32 to vector<1x1024xi32>
    %122 = arith.cmpi eq, %120, %121 : vector<1x1024xi32>
    %c1020_i32 = arith.constant 1020 : i32
    %123 = tpu.dynamic_rotate %114 by %c1020_i32 dim 1 : vector<1x1024xf32>, i32 -> vector<1x1024xf32>
    %c4_i32_45 = arith.constant 4 : i32
    %124 = tpu.dynamic_rotate %114 by %c4_i32_45 dim 1 : vector<1x1024xf32>, i32 -> vector<1x1024xf32>
    %125 = arith.select %122, %123, %124 : vector<1x1024xi1>, vector<1x1024xf32>
    %126 = arith.addf %114, %125 : vector<1x1024xf32>
    %c1020_i32_46 = arith.constant 1020 : i32
    %127 = tpu.dynamic_rotate %118 by %c1020_i32_46 dim 1 : vector<1x1024xf32>, i32 -> vector<1x1024xf32>
    %c4_i32_47 = arith.constant 4 : i32
    %128 = tpu.dynamic_rotate %118 by %c4_i32_47 dim 1 : vector<1x1024xf32>, i32 -> vector<1x1024xf32>
    %129 = arith.select %122, %127, %128 : vector<1x1024xi1>, vector<1x1024xf32>
    %130 = arith.addf %118, %129 : vector<1x1024xf32>
    %c8_i32 = arith.constant 8 : i32
    %131 = vector.broadcast %c8_i32 : i32 to vector<1x1024xi32>
    %132 = arith.andi %5, %131 : vector<1x1024xi32>
    %c0_i32_48 = arith.constant 0 : i32
    %133 = vector.broadcast %c0_i32_48 : i32 to vector<1x1024xi32>
    %134 = arith.cmpi eq, %132, %133 : vector<1x1024xi32>
    %c1016_i32 = arith.constant 1016 : i32
    %135 = tpu.dynamic_rotate %126 by %c1016_i32 dim 1 : vector<1x1024xf32>, i32 -> vector<1x1024xf32>
    %c8_i32_49 = arith.constant 8 : i32
    %136 = tpu.dynamic_rotate %126 by %c8_i32_49 dim 1 : vector<1x1024xf32>, i32 -> vector<1x1024xf32>
    %137 = arith.select %134, %135, %136 : vector<1x1024xi1>, vector<1x1024xf32>
    %138 = arith.addf %126, %137 : vector<1x1024xf32>
    %c1016_i32_50 = arith.constant 1016 : i32
    %139 = tpu.dynamic_rotate %130 by %c1016_i32_50 dim 1 : vector<1x1024xf32>, i32 -> vector<1x1024xf32>
    %c8_i32_51 = arith.constant 8 : i32
    %140 = tpu.dynamic_rotate %130 by %c8_i32_51 dim 1 : vector<1x1024xf32>, i32 -> vector<1x1024xf32>
    %141 = arith.select %134, %139, %140 : vector<1x1024xi1>, vector<1x1024xf32>
    %142 = arith.addf %130, %141 : vector<1x1024xf32>
    %cst_52 = arith.constant 0.001953125 : f32
    %143 = vector.broadcast %cst_52 : f32 to vector<1x1024xf32>
    %144 = arith.mulf %138, %143 : vector<1x1024xf32>
    %cst_53 = arith.constant 0.001953125 : f32
    %145 = vector.broadcast %cst_53 : f32 to vector<1x1024xf32>
    %146 = arith.mulf %142, %145 : vector<1x1024xf32>
    %147 = arith.mulf %144, %144 : vector<1x1024xf32>
    %148 = arith.subf %146, %147 : vector<1x1024xf32>
    %cst_54 = arith.constant 0.000000e+00 : f32
    %149 = vector.broadcast %cst_54 : f32 to vector<1x1024xf32>
    %150 = arith.maximumf %148, %149 : vector<1x1024xf32>
    %151 = vector.extract_strided_slice %3 {offsets = [2, 0], sizes = [1, 1024], strides = [1, 1]} : vector<5x1024xf32> to vector<1x1024xf32>
    %cst_55 = arith.constant 9.99999974E-6 : f32
    %152 = vector.broadcast %cst_55 : f32 to vector<1x1024xf32>
    %153 = arith.addf %150, %152 : vector<1x1024xf32>
    %154 = math.rsqrt %153 : vector<1x1024xf32>
    %155 = arith.mulf %151, %154 : vector<1x1024xf32>
    %156 = vector.extract_strided_slice %4 {offsets = [2, 0], sizes = [1, 1024], strides = [1, 1]} : vector<5x1024xf32> to vector<1x1024xf32>
    %157 = arith.mulf %144, %155 : vector<1x1024xf32>
    %158 = arith.subf %156, %157 : vector<1x1024xf32>
    %159 = vector.broadcast %155 : vector<1x1024xf32> to vector<32x1024xf32>
    %160 = arith.mulf %89, %159 : vector<32x1024xf32>
    %161 = vector.broadcast %158 : vector<1x1024xf32> to vector<32x1024xf32>
    %162 = arith.addf %160, %161 : vector<32x1024xf32>
    %cst_56 = arith.constant 0.000000e+00 : f32
    %163 = vector.broadcast %cst_56 : f32 to vector<32x1024xf32>
    %164 = arith.cmpf oge, %162, %163 : vector<32x1024xf32>
    %cst_57 = arith.constant 0.00999999977 : f32
    %165 = vector.broadcast %cst_57 : f32 to vector<32x1024xf32>
    %166 = arith.mulf %165, %162 : vector<32x1024xf32>
    %167 = arith.select %164, %162, %166 : vector<32x1024xi1>, vector<32x1024xf32>
    %cst_58 = arith.constant dense<0.000000e+00> : vector<1024xf32>
    %168 = vector.multi_reduction <add>, %167, %cst_58 [0] : vector<32x1024xf32> to vector<1024xf32>
    %169 = vector.shape_cast %168 : vector<1024xf32> to vector<1x1024xf32>
    %170 = arith.mulf %167, %167 : vector<32x1024xf32>
    %cst_59 = arith.constant dense<0.000000e+00> : vector<1024xf32>
    %171 = vector.multi_reduction <add>, %170, %cst_59 [0] : vector<32x1024xf32> to vector<1024xf32>
    %172 = vector.shape_cast %171 : vector<1024xf32> to vector<1x1024xf32>
    %c1_i32_60 = arith.constant 1 : i32
    %173 = vector.broadcast %c1_i32_60 : i32 to vector<1x1024xi32>
    %174 = arith.andi %5, %173 : vector<1x1024xi32>
    %c0_i32_61 = arith.constant 0 : i32
    %175 = vector.broadcast %c0_i32_61 : i32 to vector<1x1024xi32>
    %176 = arith.cmpi eq, %174, %175 : vector<1x1024xi32>
    %c1023_i32_62 = arith.constant 1023 : i32
    %177 = tpu.dynamic_rotate %169 by %c1023_i32_62 dim 1 : vector<1x1024xf32>, i32 -> vector<1x1024xf32>
    %c1_i32_63 = arith.constant 1 : i32
    %178 = tpu.dynamic_rotate %169 by %c1_i32_63 dim 1 : vector<1x1024xf32>, i32 -> vector<1x1024xf32>
    %179 = arith.select %176, %177, %178 : vector<1x1024xi1>, vector<1x1024xf32>
    %180 = arith.addf %169, %179 : vector<1x1024xf32>
    %c1023_i32_64 = arith.constant 1023 : i32
    %181 = tpu.dynamic_rotate %172 by %c1023_i32_64 dim 1 : vector<1x1024xf32>, i32 -> vector<1x1024xf32>
    %c1_i32_65 = arith.constant 1 : i32
    %182 = tpu.dynamic_rotate %172 by %c1_i32_65 dim 1 : vector<1x1024xf32>, i32 -> vector<1x1024xf32>
    %183 = arith.select %176, %181, %182 : vector<1x1024xi1>, vector<1x1024xf32>
    %184 = arith.addf %172, %183 : vector<1x1024xf32>
    %c2_i32_66 = arith.constant 2 : i32
    %185 = vector.broadcast %c2_i32_66 : i32 to vector<1x1024xi32>
    %186 = arith.andi %5, %185 : vector<1x1024xi32>
    %c0_i32_67 = arith.constant 0 : i32
    %187 = vector.broadcast %c0_i32_67 : i32 to vector<1x1024xi32>
    %188 = arith.cmpi eq, %186, %187 : vector<1x1024xi32>
    %c1022_i32_68 = arith.constant 1022 : i32
    %189 = tpu.dynamic_rotate %180 by %c1022_i32_68 dim 1 : vector<1x1024xf32>, i32 -> vector<1x1024xf32>
    %c2_i32_69 = arith.constant 2 : i32
    %190 = tpu.dynamic_rotate %180 by %c2_i32_69 dim 1 : vector<1x1024xf32>, i32 -> vector<1x1024xf32>
    %191 = arith.select %188, %189, %190 : vector<1x1024xi1>, vector<1x1024xf32>
    %192 = arith.addf %180, %191 : vector<1x1024xf32>
    %c1022_i32_70 = arith.constant 1022 : i32
    %193 = tpu.dynamic_rotate %184 by %c1022_i32_70 dim 1 : vector<1x1024xf32>, i32 -> vector<1x1024xf32>
    %c2_i32_71 = arith.constant 2 : i32
    %194 = tpu.dynamic_rotate %184 by %c2_i32_71 dim 1 : vector<1x1024xf32>, i32 -> vector<1x1024xf32>
    %195 = arith.select %188, %193, %194 : vector<1x1024xi1>, vector<1x1024xf32>
    %196 = arith.addf %184, %195 : vector<1x1024xf32>
    %c4_i32_72 = arith.constant 4 : i32
    %197 = vector.broadcast %c4_i32_72 : i32 to vector<1x1024xi32>
    %198 = arith.andi %5, %197 : vector<1x1024xi32>
    %c0_i32_73 = arith.constant 0 : i32
    %199 = vector.broadcast %c0_i32_73 : i32 to vector<1x1024xi32>
    %200 = arith.cmpi eq, %198, %199 : vector<1x1024xi32>
    %c1020_i32_74 = arith.constant 1020 : i32
    %201 = tpu.dynamic_rotate %192 by %c1020_i32_74 dim 1 : vector<1x1024xf32>, i32 -> vector<1x1024xf32>
    %c4_i32_75 = arith.constant 4 : i32
    %202 = tpu.dynamic_rotate %192 by %c4_i32_75 dim 1 : vector<1x1024xf32>, i32 -> vector<1x1024xf32>
    %203 = arith.select %200, %201, %202 : vector<1x1024xi1>, vector<1x1024xf32>
    %204 = arith.addf %192, %203 : vector<1x1024xf32>
    %c1020_i32_76 = arith.constant 1020 : i32
    %205 = tpu.dynamic_rotate %196 by %c1020_i32_76 dim 1 : vector<1x1024xf32>, i32 -> vector<1x1024xf32>
    %c4_i32_77 = arith.constant 4 : i32
    %206 = tpu.dynamic_rotate %196 by %c4_i32_77 dim 1 : vector<1x1024xf32>, i32 -> vector<1x1024xf32>
    %207 = arith.select %200, %205, %206 : vector<1x1024xi1>, vector<1x1024xf32>
    %208 = arith.addf %196, %207 : vector<1x1024xf32>
    %c8_i32_78 = arith.constant 8 : i32
    %209 = vector.broadcast %c8_i32_78 : i32 to vector<1x1024xi32>
    %210 = arith.andi %5, %209 : vector<1x1024xi32>
    %c0_i32_79 = arith.constant 0 : i32
    %211 = vector.broadcast %c0_i32_79 : i32 to vector<1x1024xi32>
    %212 = arith.cmpi eq, %210, %211 : vector<1x1024xi32>
    %c1016_i32_80 = arith.constant 1016 : i32
    %213 = tpu.dynamic_rotate %204 by %c1016_i32_80 dim 1 : vector<1x1024xf32>, i32 -> vector<1x1024xf32>
    %c8_i32_81 = arith.constant 8 : i32
    %214 = tpu.dynamic_rotate %204 by %c8_i32_81 dim 1 : vector<1x1024xf32>, i32 -> vector<1x1024xf32>
    %215 = arith.select %212, %213, %214 : vector<1x1024xi1>, vector<1x1024xf32>
    %216 = arith.addf %204, %215 : vector<1x1024xf32>
    %c1016_i32_82 = arith.constant 1016 : i32
    %217 = tpu.dynamic_rotate %208 by %c1016_i32_82 dim 1 : vector<1x1024xf32>, i32 -> vector<1x1024xf32>
    %c8_i32_83 = arith.constant 8 : i32
    %218 = tpu.dynamic_rotate %208 by %c8_i32_83 dim 1 : vector<1x1024xf32>, i32 -> vector<1x1024xf32>
    %219 = arith.select %212, %217, %218 : vector<1x1024xi1>, vector<1x1024xf32>
    %220 = arith.addf %208, %219 : vector<1x1024xf32>
    %c16_i32 = arith.constant 16 : i32
    %221 = vector.broadcast %c16_i32 : i32 to vector<1x1024xi32>
    %222 = arith.andi %5, %221 : vector<1x1024xi32>
    %c0_i32_84 = arith.constant 0 : i32
    %223 = vector.broadcast %c0_i32_84 : i32 to vector<1x1024xi32>
    %224 = arith.cmpi eq, %222, %223 : vector<1x1024xi32>
    %c1008_i32 = arith.constant 1008 : i32
    %225 = tpu.dynamic_rotate %216 by %c1008_i32 dim 1 : vector<1x1024xf32>, i32 -> vector<1x1024xf32>
    %c16_i32_85 = arith.constant 16 : i32
    %226 = tpu.dynamic_rotate %216 by %c16_i32_85 dim 1 : vector<1x1024xf32>, i32 -> vector<1x1024xf32>
    %227 = arith.select %224, %225, %226 : vector<1x1024xi1>, vector<1x1024xf32>
    %228 = arith.addf %216, %227 : vector<1x1024xf32>
    %c1008_i32_86 = arith.constant 1008 : i32
    %229 = tpu.dynamic_rotate %220 by %c1008_i32_86 dim 1 : vector<1x1024xf32>, i32 -> vector<1x1024xf32>
    %c16_i32_87 = arith.constant 16 : i32
    %230 = tpu.dynamic_rotate %220 by %c16_i32_87 dim 1 : vector<1x1024xf32>, i32 -> vector<1x1024xf32>
    %231 = arith.select %224, %229, %230 : vector<1x1024xi1>, vector<1x1024xf32>
    %232 = arith.addf %220, %231 : vector<1x1024xf32>
    %c32_i32 = arith.constant 32 : i32
    %233 = vector.broadcast %c32_i32 : i32 to vector<1x1024xi32>
    %234 = arith.andi %5, %233 : vector<1x1024xi32>
    %c0_i32_88 = arith.constant 0 : i32
    %235 = vector.broadcast %c0_i32_88 : i32 to vector<1x1024xi32>
    %236 = arith.cmpi eq, %234, %235 : vector<1x1024xi32>
    %c992_i32 = arith.constant 992 : i32
    %237 = tpu.dynamic_rotate %228 by %c992_i32 dim 1 : vector<1x1024xf32>, i32 -> vector<1x1024xf32>
    %c32_i32_89 = arith.constant 32 : i32
    %238 = tpu.dynamic_rotate %228 by %c32_i32_89 dim 1 : vector<1x1024xf32>, i32 -> vector<1x1024xf32>
    %239 = arith.select %236, %237, %238 : vector<1x1024xi1>, vector<1x1024xf32>
    %240 = arith.addf %228, %239 : vector<1x1024xf32>
    %c992_i32_90 = arith.constant 992 : i32
    %241 = tpu.dynamic_rotate %232 by %c992_i32_90 dim 1 : vector<1x1024xf32>, i32 -> vector<1x1024xf32>
    %c32_i32_91 = arith.constant 32 : i32
    %242 = tpu.dynamic_rotate %232 by %c32_i32_91 dim 1 : vector<1x1024xf32>, i32 -> vector<1x1024xf32>
    %243 = arith.select %236, %241, %242 : vector<1x1024xi1>, vector<1x1024xf32>
    %244 = arith.addf %232, %243 : vector<1x1024xf32>
    %cst_92 = arith.constant 4.8828125E-4 : f32
    %245 = vector.broadcast %cst_92 : f32 to vector<1x1024xf32>
    %246 = arith.mulf %240, %245 : vector<1x1024xf32>
    %cst_93 = arith.constant 4.8828125E-4 : f32
    %247 = vector.broadcast %cst_93 : f32 to vector<1x1024xf32>
    %248 = arith.mulf %244, %247 : vector<1x1024xf32>
    %249 = arith.mulf %246, %246 : vector<1x1024xf32>
    %250 = arith.subf %248, %249 : vector<1x1024xf32>
    %cst_94 = arith.constant 0.000000e+00 : f32
    %251 = vector.broadcast %cst_94 : f32 to vector<1x1024xf32>
    %252 = arith.maximumf %250, %251 : vector<1x1024xf32>
    %253 = vector.extract_strided_slice %3 {offsets = [3, 0], sizes = [1, 1024], strides = [1, 1]} : vector<5x1024xf32> to vector<1x1024xf32>
    %cst_95 = arith.constant 9.99999974E-6 : f32
    %254 = vector.broadcast %cst_95 : f32 to vector<1x1024xf32>
    %255 = arith.addf %252, %254 : vector<1x1024xf32>
    %256 = math.rsqrt %255 : vector<1x1024xf32>
    %257 = arith.mulf %253, %256 : vector<1x1024xf32>
    %258 = vector.extract_strided_slice %4 {offsets = [3, 0], sizes = [1, 1024], strides = [1, 1]} : vector<5x1024xf32> to vector<1x1024xf32>
    %259 = arith.mulf %246, %257 : vector<1x1024xf32>
    %260 = arith.subf %258, %259 : vector<1x1024xf32>
    %261 = vector.broadcast %257 : vector<1x1024xf32> to vector<32x1024xf32>
    %262 = arith.mulf %167, %261 : vector<32x1024xf32>
    %263 = vector.broadcast %260 : vector<1x1024xf32> to vector<32x1024xf32>
    %264 = arith.addf %262, %263 : vector<32x1024xf32>
    %cst_96 = arith.constant 0.000000e+00 : f32
    %265 = vector.broadcast %cst_96 : f32 to vector<32x1024xf32>
    %266 = arith.cmpf oge, %264, %265 : vector<32x1024xf32>
    %cst_97 = arith.constant 0.00999999977 : f32
    %267 = vector.broadcast %cst_97 : f32 to vector<32x1024xf32>
    %268 = arith.mulf %267, %264 : vector<32x1024xf32>
    %269 = arith.select %266, %264, %268 : vector<32x1024xi1>, vector<32x1024xf32>
    %cst_98 = arith.constant dense<0.000000e+00> : vector<1024xf32>
    %270 = vector.multi_reduction <add>, %269, %cst_98 [0] : vector<32x1024xf32> to vector<1024xf32>
    %271 = vector.shape_cast %270 : vector<1024xf32> to vector<1x1024xf32>
    %272 = arith.mulf %269, %269 : vector<32x1024xf32>
    %cst_99 = arith.constant dense<0.000000e+00> : vector<1024xf32>
    %273 = vector.multi_reduction <add>, %272, %cst_99 [0] : vector<32x1024xf32> to vector<1024xf32>
    %274 = vector.shape_cast %273 : vector<1024xf32> to vector<1x1024xf32>
    %c1_i32_100 = arith.constant 1 : i32
    %275 = vector.broadcast %c1_i32_100 : i32 to vector<1x1024xi32>
    %276 = arith.andi %5, %275 : vector<1x1024xi32>
    %c0_i32_101 = arith.constant 0 : i32
    %277 = vector.broadcast %c0_i32_101 : i32 to vector<1x1024xi32>
    %278 = arith.cmpi eq, %276, %277 : vector<1x1024xi32>
    %c1023_i32_102 = arith.constant 1023 : i32
    %279 = tpu.dynamic_rotate %271 by %c1023_i32_102 dim 1 : vector<1x1024xf32>, i32 -> vector<1x1024xf32>
    %c1_i32_103 = arith.constant 1 : i32
    %280 = tpu.dynamic_rotate %271 by %c1_i32_103 dim 1 : vector<1x1024xf32>, i32 -> vector<1x1024xf32>
    %281 = arith.select %278, %279, %280 : vector<1x1024xi1>, vector<1x1024xf32>
    %282 = arith.addf %271, %281 : vector<1x1024xf32>
    %c1023_i32_104 = arith.constant 1023 : i32
    %283 = tpu.dynamic_rotate %274 by %c1023_i32_104 dim 1 : vector<1x1024xf32>, i32 -> vector<1x1024xf32>
    %c1_i32_105 = arith.constant 1 : i32
    %284 = tpu.dynamic_rotate %274 by %c1_i32_105 dim 1 : vector<1x1024xf32>, i32 -> vector<1x1024xf32>
    %285 = arith.select %278, %283, %284 : vector<1x1024xi1>, vector<1x1024xf32>
    %286 = arith.addf %274, %285 : vector<1x1024xf32>
    %c2_i32_106 = arith.constant 2 : i32
    %287 = vector.broadcast %c2_i32_106 : i32 to vector<1x1024xi32>
    %288 = arith.andi %5, %287 : vector<1x1024xi32>
    %c0_i32_107 = arith.constant 0 : i32
    %289 = vector.broadcast %c0_i32_107 : i32 to vector<1x1024xi32>
    %290 = arith.cmpi eq, %288, %289 : vector<1x1024xi32>
    %c1022_i32_108 = arith.constant 1022 : i32
    %291 = tpu.dynamic_rotate %282 by %c1022_i32_108 dim 1 : vector<1x1024xf32>, i32 -> vector<1x1024xf32>
    %c2_i32_109 = arith.constant 2 : i32
    %292 = tpu.dynamic_rotate %282 by %c2_i32_109 dim 1 : vector<1x1024xf32>, i32 -> vector<1x1024xf32>
    %293 = arith.select %290, %291, %292 : vector<1x1024xi1>, vector<1x1024xf32>
    %294 = arith.addf %282, %293 : vector<1x1024xf32>
    %c1022_i32_110 = arith.constant 1022 : i32
    %295 = tpu.dynamic_rotate %286 by %c1022_i32_110 dim 1 : vector<1x1024xf32>, i32 -> vector<1x1024xf32>
    %c2_i32_111 = arith.constant 2 : i32
    %296 = tpu.dynamic_rotate %286 by %c2_i32_111 dim 1 : vector<1x1024xf32>, i32 -> vector<1x1024xf32>
    %297 = arith.select %290, %295, %296 : vector<1x1024xi1>, vector<1x1024xf32>
    %298 = arith.addf %286, %297 : vector<1x1024xf32>
    %c4_i32_112 = arith.constant 4 : i32
    %299 = vector.broadcast %c4_i32_112 : i32 to vector<1x1024xi32>
    %300 = arith.andi %5, %299 : vector<1x1024xi32>
    %c0_i32_113 = arith.constant 0 : i32
    %301 = vector.broadcast %c0_i32_113 : i32 to vector<1x1024xi32>
    %302 = arith.cmpi eq, %300, %301 : vector<1x1024xi32>
    %c1020_i32_114 = arith.constant 1020 : i32
    %303 = tpu.dynamic_rotate %294 by %c1020_i32_114 dim 1 : vector<1x1024xf32>, i32 -> vector<1x1024xf32>
    %c4_i32_115 = arith.constant 4 : i32
    %304 = tpu.dynamic_rotate %294 by %c4_i32_115 dim 1 : vector<1x1024xf32>, i32 -> vector<1x1024xf32>
    %305 = arith.select %302, %303, %304 : vector<1x1024xi1>, vector<1x1024xf32>
    %306 = arith.addf %294, %305 : vector<1x1024xf32>
    %c1020_i32_116 = arith.constant 1020 : i32
    %307 = tpu.dynamic_rotate %298 by %c1020_i32_116 dim 1 : vector<1x1024xf32>, i32 -> vector<1x1024xf32>
    %c4_i32_117 = arith.constant 4 : i32
    %308 = tpu.dynamic_rotate %298 by %c4_i32_117 dim 1 : vector<1x1024xf32>, i32 -> vector<1x1024xf32>
    %309 = arith.select %302, %307, %308 : vector<1x1024xi1>, vector<1x1024xf32>
    %310 = arith.addf %298, %309 : vector<1x1024xf32>
    %c8_i32_118 = arith.constant 8 : i32
    %311 = vector.broadcast %c8_i32_118 : i32 to vector<1x1024xi32>
    %312 = arith.andi %5, %311 : vector<1x1024xi32>
    %c0_i32_119 = arith.constant 0 : i32
    %313 = vector.broadcast %c0_i32_119 : i32 to vector<1x1024xi32>
    %314 = arith.cmpi eq, %312, %313 : vector<1x1024xi32>
    %c1016_i32_120 = arith.constant 1016 : i32
    %315 = tpu.dynamic_rotate %306 by %c1016_i32_120 dim 1 : vector<1x1024xf32>, i32 -> vector<1x1024xf32>
    %c8_i32_121 = arith.constant 8 : i32
    %316 = tpu.dynamic_rotate %306 by %c8_i32_121 dim 1 : vector<1x1024xf32>, i32 -> vector<1x1024xf32>
    %317 = arith.select %314, %315, %316 : vector<1x1024xi1>, vector<1x1024xf32>
    %318 = arith.addf %306, %317 : vector<1x1024xf32>
    %c1016_i32_122 = arith.constant 1016 : i32
    %319 = tpu.dynamic_rotate %310 by %c1016_i32_122 dim 1 : vector<1x1024xf32>, i32 -> vector<1x1024xf32>
    %c8_i32_123 = arith.constant 8 : i32
    %320 = tpu.dynamic_rotate %310 by %c8_i32_123 dim 1 : vector<1x1024xf32>, i32 -> vector<1x1024xf32>
    %321 = arith.select %314, %319, %320 : vector<1x1024xi1>, vector<1x1024xf32>
    %322 = arith.addf %310, %321 : vector<1x1024xf32>
    %c16_i32_124 = arith.constant 16 : i32
    %323 = vector.broadcast %c16_i32_124 : i32 to vector<1x1024xi32>
    %324 = arith.andi %5, %323 : vector<1x1024xi32>
    %c0_i32_125 = arith.constant 0 : i32
    %325 = vector.broadcast %c0_i32_125 : i32 to vector<1x1024xi32>
    %326 = arith.cmpi eq, %324, %325 : vector<1x1024xi32>
    %c1008_i32_126 = arith.constant 1008 : i32
    %327 = tpu.dynamic_rotate %318 by %c1008_i32_126 dim 1 : vector<1x1024xf32>, i32 -> vector<1x1024xf32>
    %c16_i32_127 = arith.constant 16 : i32
    %328 = tpu.dynamic_rotate %318 by %c16_i32_127 dim 1 : vector<1x1024xf32>, i32 -> vector<1x1024xf32>
    %329 = arith.select %326, %327, %328 : vector<1x1024xi1>, vector<1x1024xf32>
    %330 = arith.addf %318, %329 : vector<1x1024xf32>
    %c1008_i32_128 = arith.constant 1008 : i32
    %331 = tpu.dynamic_rotate %322 by %c1008_i32_128 dim 1 : vector<1x1024xf32>, i32 -> vector<1x1024xf32>
    %c16_i32_129 = arith.constant 16 : i32
    %332 = tpu.dynamic_rotate %322 by %c16_i32_129 dim 1 : vector<1x1024xf32>, i32 -> vector<1x1024xf32>
    %333 = arith.select %326, %331, %332 : vector<1x1024xi1>, vector<1x1024xf32>
    %334 = arith.addf %322, %333 : vector<1x1024xf32>
    %c32_i32_130 = arith.constant 32 : i32
    %335 = vector.broadcast %c32_i32_130 : i32 to vector<1x1024xi32>
    %336 = arith.andi %5, %335 : vector<1x1024xi32>
    %c0_i32_131 = arith.constant 0 : i32
    %337 = vector.broadcast %c0_i32_131 : i32 to vector<1x1024xi32>
    %338 = arith.cmpi eq, %336, %337 : vector<1x1024xi32>
    %c992_i32_132 = arith.constant 992 : i32
    %339 = tpu.dynamic_rotate %330 by %c992_i32_132 dim 1 : vector<1x1024xf32>, i32 -> vector<1x1024xf32>
    %c32_i32_133 = arith.constant 32 : i32
    %340 = tpu.dynamic_rotate %330 by %c32_i32_133 dim 1 : vector<1x1024xf32>, i32 -> vector<1x1024xf32>
    %341 = arith.select %338, %339, %340 : vector<1x1024xi1>, vector<1x1024xf32>
    %342 = arith.addf %330, %341 : vector<1x1024xf32>
    %c992_i32_134 = arith.constant 992 : i32
    %343 = tpu.dynamic_rotate %334 by %c992_i32_134 dim 1 : vector<1x1024xf32>, i32 -> vector<1x1024xf32>
    %c32_i32_135 = arith.constant 32 : i32
    %344 = tpu.dynamic_rotate %334 by %c32_i32_135 dim 1 : vector<1x1024xf32>, i32 -> vector<1x1024xf32>
    %345 = arith.select %338, %343, %344 : vector<1x1024xi1>, vector<1x1024xf32>
    %346 = arith.addf %334, %345 : vector<1x1024xf32>
    %c64_i32 = arith.constant 64 : i32
    %347 = vector.broadcast %c64_i32 : i32 to vector<1x1024xi32>
    %348 = arith.andi %5, %347 : vector<1x1024xi32>
    %c0_i32_136 = arith.constant 0 : i32
    %349 = vector.broadcast %c0_i32_136 : i32 to vector<1x1024xi32>
    %350 = arith.cmpi eq, %348, %349 : vector<1x1024xi32>
    %c960_i32 = arith.constant 960 : i32
    %351 = tpu.dynamic_rotate %342 by %c960_i32 dim 1 : vector<1x1024xf32>, i32 -> vector<1x1024xf32>
    %c64_i32_137 = arith.constant 64 : i32
    %352 = tpu.dynamic_rotate %342 by %c64_i32_137 dim 1 : vector<1x1024xf32>, i32 -> vector<1x1024xf32>
    %353 = arith.select %350, %351, %352 : vector<1x1024xi1>, vector<1x1024xf32>
    %354 = arith.addf %342, %353 : vector<1x1024xf32>
    %c960_i32_138 = arith.constant 960 : i32
    %355 = tpu.dynamic_rotate %346 by %c960_i32_138 dim 1 : vector<1x1024xf32>, i32 -> vector<1x1024xf32>
    %c64_i32_139 = arith.constant 64 : i32
    %356 = tpu.dynamic_rotate %346 by %c64_i32_139 dim 1 : vector<1x1024xf32>, i32 -> vector<1x1024xf32>
    %357 = arith.select %350, %355, %356 : vector<1x1024xi1>, vector<1x1024xf32>
    %358 = arith.addf %346, %357 : vector<1x1024xf32>
    %c128_i32 = arith.constant 128 : i32
    %359 = vector.broadcast %c128_i32 : i32 to vector<1x1024xi32>
    %360 = arith.andi %5, %359 : vector<1x1024xi32>
    %c0_i32_140 = arith.constant 0 : i32
    %361 = vector.broadcast %c0_i32_140 : i32 to vector<1x1024xi32>
    %362 = arith.cmpi eq, %360, %361 : vector<1x1024xi32>
    %c896_i32 = arith.constant 896 : i32
    %363 = tpu.dynamic_rotate %354 by %c896_i32 dim 1 : vector<1x1024xf32>, i32 -> vector<1x1024xf32>
    %c128_i32_141 = arith.constant 128 : i32
    %364 = tpu.dynamic_rotate %354 by %c128_i32_141 dim 1 : vector<1x1024xf32>, i32 -> vector<1x1024xf32>
    %365 = arith.select %362, %363, %364 : vector<1x1024xi1>, vector<1x1024xf32>
    %366 = arith.addf %354, %365 : vector<1x1024xf32>
    %c896_i32_142 = arith.constant 896 : i32
    %367 = tpu.dynamic_rotate %358 by %c896_i32_142 dim 1 : vector<1x1024xf32>, i32 -> vector<1x1024xf32>
    %c128_i32_143 = arith.constant 128 : i32
    %368 = tpu.dynamic_rotate %358 by %c128_i32_143 dim 1 : vector<1x1024xf32>, i32 -> vector<1x1024xf32>
    %369 = arith.select %362, %367, %368 : vector<1x1024xi1>, vector<1x1024xf32>
    %370 = arith.addf %358, %369 : vector<1x1024xf32>
    %cst_144 = arith.constant 1.22070313E-4 : f32
    %371 = vector.broadcast %cst_144 : f32 to vector<1x1024xf32>
    %372 = arith.mulf %366, %371 : vector<1x1024xf32>
    %cst_145 = arith.constant 1.22070313E-4 : f32
    %373 = vector.broadcast %cst_145 : f32 to vector<1x1024xf32>
    %374 = arith.mulf %370, %373 : vector<1x1024xf32>
    %375 = arith.mulf %372, %372 : vector<1x1024xf32>
    %376 = arith.subf %374, %375 : vector<1x1024xf32>
    %cst_146 = arith.constant 0.000000e+00 : f32
    %377 = vector.broadcast %cst_146 : f32 to vector<1x1024xf32>
    %378 = arith.maximumf %376, %377 : vector<1x1024xf32>
    %379 = vector.extract_strided_slice %3 {offsets = [4, 0], sizes = [1, 1024], strides = [1, 1]} : vector<5x1024xf32> to vector<1x1024xf32>
    %cst_147 = arith.constant 9.99999974E-6 : f32
    %380 = vector.broadcast %cst_147 : f32 to vector<1x1024xf32>
    %381 = arith.addf %378, %380 : vector<1x1024xf32>
    %382 = math.rsqrt %381 : vector<1x1024xf32>
    %383 = arith.mulf %379, %382 : vector<1x1024xf32>
    %384 = vector.extract_strided_slice %4 {offsets = [4, 0], sizes = [1, 1024], strides = [1, 1]} : vector<5x1024xf32> to vector<1x1024xf32>
    %385 = arith.mulf %372, %383 : vector<1x1024xf32>
    %386 = arith.subf %384, %385 : vector<1x1024xf32>
    %387 = vector.broadcast %383 : vector<1x1024xf32> to vector<32x1024xf32>
    %388 = arith.mulf %269, %387 : vector<32x1024xf32>
    %389 = vector.broadcast %386 : vector<1x1024xf32> to vector<32x1024xf32>
    %390 = arith.addf %388, %389 : vector<32x1024xf32>
    %cst_148 = arith.constant 0.000000e+00 : f32
    %391 = vector.broadcast %cst_148 : f32 to vector<32x1024xf32>
    %392 = arith.cmpf oge, %390, %391 : vector<32x1024xf32>
    %cst_149 = arith.constant 0.00999999977 : f32
    %393 = vector.broadcast %cst_149 : f32 to vector<32x1024xf32>
    %394 = arith.mulf %393, %390 : vector<32x1024xf32>
    %395 = arith.select %392, %390, %394 : vector<32x1024xi1>, vector<32x1024xf32>
    %396 = math.tanh %395 : vector<32x1024xf32>
    %397 = arith.truncf %396 : vector<32x1024xf32> to vector<32x1024xbf16>
    %c0_150 = arith.constant 0 : index
    %c0_151 = arith.constant 0 : index
    %398 = vector.load %arg5[%c0_150, %c0_151] : memref<32x1024xbf16, #tpu.memory_space<vmem>>, vector<32x1024xbf16>
    tpu.vector_store %arg5[%c0_150, %c0_151], %397 {strides = array<i32>} : memref<32x1024xbf16, #tpu.memory_space<vmem>>, vector<32x1024xbf16>,
    return
  }
  func.func @transform_0(%arg0: i32) -> (i32, i32) {
    %c0_i32 = arith.constant 0 : i32
    %c0_i32_0 = arith.constant 0 : i32
    %c0_i32_1 = arith.constant 0 : i32
    return %c0_i32, %c0_i32_0 : i32, i32
  }
  func.func @transform_1(%arg0: i32) -> (i32, i32) {
    %c0_i32 = arith.constant 0 : i32
    %c0_i32_0 = arith.constant 0 : i32
    %c0_i32_1 = arith.constant 0 : i32
    return %c0_i32, %c0_i32_0 : i32, i32
  }
  func.func @transform_2(%arg0: i32) -> (i32, i32) {
    %c0_i32 = arith.constant 0 : i32
    %c0_i32_0 = arith.constant 0 : i32
    %c0_i32_1 = arith.constant 0 : i32
    return %c0_i32, %c0_i32_0 : i32, i32
  }
  func.func @transform_3(%arg0: i32) -> (i32, i32) {
    %c0_i32 = arith.constant 0 : i32
    %c0_i32_0 = arith.constant 0 : i32
    %c0_i32_1 = arith.constant 0 : i32
    return %c0_i32, %c0_i32_0 : i32, i32
  }
  func.func @transform_4(%arg0: i32) -> (i32, i32) {
    %c0_i32 = arith.constant 0 : i32
    %c0_i32_0 = arith.constant 0 : i32
    %c0_i32_1 = arith.constant 0 : i32
    return %c0_i32, %c0_i32_0 : i32, i32
  }
}

</mosaic_0001>

<llo_original>
// kernel: psgenerator_forward.1
$region0: #{psgenerator_forward.1}
  #allocation0 [shape = 'u32[]', space=smem, size = 0x4, offset = 0x4, fixed_abs, tag = 'smem constant byte address 0x4 - core index']
  #allocation1 [shape = 'u32[144,128]{1,0:T(1,128)}', space=vmem, size = 0x12000, scoped, tag = 'internal scratch']
  %s0 = inlined_call_operand.vmem [shape: bf16[32,128], index: 0, kind: input, shape index: {}]
  %s1 = inlined_call_operand.hbm [shape: bf16[128,1024], index: 1, kind: input, shape index: {}]
  %s2 = inlined_call_operand.hbm [shape: f32[5,1024], index: 2, kind: input, shape index: {}]
  %s3 = inlined_call_operand.hbm [shape: f32[5,1024], index: 3, kind: input, shape index: {}]
  %s4 = inlined_call_operand.vmem [shape: bf16[32,1024], index: 4, kind: output, shape index: {}]
  %s5 = sld [smem:[#allocation0]]
  $region38: #{psgenerator_forward.1} parent=0
    _
  %s7 = ssub.s32 1, %s5
  %s8 = scalar_select 0, %s7, %s5
  $region1: #{psgenerator_forward.1} parent=0
    #allocation2 [shape = 'u8[262144]{0}', space=vmem, size = 0x40000, scoped, tag = 'input window, operand 1, single buffered']
    #allocation3 [shape = 's32[1]{0}', space=sflag, size = 0x4, scoped, tag = 'scoped memory for psgenerator_forward.1']
    #allocation4 [shape = 'u8[32768]{0}', space=vmem, size = 0x8000, scoped, tag = 'input window, operand 2, single buffered']
    #allocation5 [shape = 's32[1]{0}', space=sflag, size = 0x4, scoped, tag = 'scoped memory for psgenerator_forward.1']
    #allocation6 [shape = 'u8[32768]{0}', space=vmem, size = 0x8000, scoped, tag = 'input window, operand 3, single buffered']
    %9 = vsyncpa [#allocation3], 0
    %10 = vsyncpa [#allocation5], 0
    // Predicated region
    $region2: #{psgenerator_forward.1} parent=1 // pred_check
      _
    $region3: #{psgenerator_forward.1} parent=1 // pred_check_branch
      %12 = sbr.rel (0) target = $region5
    $region4: #{psgenerator_forward.1} parent=1 // pred_region
      _
    $region5: #{psgenerator_forward.1} parent=1 // pred_fallthru
      _
    // Predicated region
    $region6: #{psgenerator_forward.1} parent=1 // pred_check
      _
    $region7: #{psgenerator_forward.1} parent=1 // pred_check_branch
      %14 = sbr.rel (0) target = $region9
    $region8: #{psgenerator_forward.1} parent=1 // pred_region
      %s16 = ssub.s32 8192, 8192
      %17 = vsyncadd [#allocation3], %s16
      %s18 = sshll.u32 [#allocation2], 4
      %s19 = int_to_ptr.vmem [resolvable:$true] %s18
      %24 = dma.hbm_to_vmem [thread:$0]  %s1, 8192, %s19, [#allocation3], 512, 512, 32
    $region9: #{psgenerator_forward.1} parent=1 // pred_fallthru
      _
    // Predicated region
    $region10: #{psgenerator_forward.1} parent=1 // pred_check
      _
    $region11: #{psgenerator_forward.1} parent=1 // pred_check_branch
      %26 = sbr.rel (0) target = $region13
    $region12: #{psgenerator_forward.1} parent=1 // pred_region
      %s28 = ssub.s32 1024, 1024
      %29 = vsyncadd [#allocation5], %s28
      %s31 = sshll.u32 [#allocation4], 4
      %s32 = int_to_ptr.vmem [resolvable:$true] %s31
      %34 = dma.hbm_to_vmem [thread:$0]  %s2, 1024, %s32, [#allocation5]
    $region13: #{psgenerator_forward.1} parent=1 // pred_fallthru
      _
    // Predicated region
    $region14: #{psgenerator_forward.1} parent=1 // pred_check
      _
    $region15: #{psgenerator_forward.1} parent=1 // pred_check_branch
      %36 = sbr.rel (0) target = $region17
    $region16: #{psgenerator_forward.1} parent=1 // pred_region
      %s38 = ssub.s32 1024, 1024
      %39 = vsyncadd [#allocation5], %s38
      %s41 = sshll.u32 [#allocation6], 4
      %s42 = int_to_ptr.vmem [resolvable:$true] %s41
      %44 = dma.hbm_to_vmem [thread:$0]  %s3, 1024, %s42, [#allocation5]
    $region17: #{psgenerator_forward.1} parent=1 // pred_fallthru
      _
    // Predicated region
    $region18: #{psgenerator_forward.1} parent=1 // pred_check
      _
    $region19: #{psgenerator_forward.1} parent=1 // pred_check_branch
      %46 = sbr.rel (0) target = $region21
    $region20: #{psgenerator_forward.1} parent=1 // pred_region
      %47 = dma.done [#allocation3], 8192
    $region21: #{psgenerator_forward.1} parent=1 // pred_fallthru
      _
    // Predicated region
    $region22: #{psgenerator_forward.1} parent=1 // pred_check
      _
    $region23: #{psgenerator_forward.1} parent=1 // pred_check_branch
      %49 = sbr.rel (0) target = $region25
    $region24: #{psgenerator_forward.1} parent=1 // pred_region
      %50 = dma.done [#allocation5], 1024
    $region25: #{psgenerator_forward.1} parent=1 // pred_fallthru
      _
    // Predicated region
    $region26: #{psgenerator_forward.1} parent=1 // pred_check
      _
    $region27: #{psgenerator_forward.1} parent=1 // pred_check_branch
      %52 = sbr.rel (0) target = $region29
    $region28: #{psgenerator_forward.1} parent=1 // pred_region
      %53 = dma.done [#allocation5], 1024
    $region29: #{psgenerator_forward.1} parent=1 // pred_fallthru
      _
    %v55 = vld [vmem:[%s0] sm:$0xf]
    %v56 = vld [vmem:[%s0 + $0x4] sm:$0xf]
    %v57 = vld [vmem:[%s0 + $0x8] sm:$0xf]
    %v58 = vld [vmem:[%s0 + $0xc] sm:$0xf]
    %v59 = vld [vmem:[#allocation2] sm:$0xff]
    %v60 = vld [vmem:[#allocation2 + $0x8] sm:$0xff]
    %v61 = vld [vmem:[#allocation2 + $0x10] sm:$0xff]
    %v62 = vld [vmem:[#allocation2 + $0x18] sm:$0xff]
    %v63 = vld [vmem:[#allocation2 + $0x20] sm:$0xff]
    %v64 = vld [vmem:[#allocation2 + $0x28] sm:$0xff]
    %v65 = vld [vmem:[#allocation2 + $0x30] sm:$0xff]
    %v66 = vld [vmem:[#allocation2 + $0x38] sm:$0xff]
    %v67 = vld [vmem:[#allocation2 + $0x40] sm:$0xff]
    %v68 = vld [vmem:[#allocation2 + $0x48] sm:$0xff]
    %v69 = vld [vmem:[#allocation2 + $0x50] sm:$0xff]
    %v70 = vld [vmem:[#allocation2 + $0x58] sm:$0xff]
    %v71 = vld [vmem:[#allocation2 + $0x60] sm:$0xff]
    %v72 = vld [vmem:[#allocation2 + $0x68] sm:$0xff]
    %v73 = vld [vmem:[#allocation2 + $0x70] sm:$0xff]
    %v74 = vld [vmem:[#allocation2 + $0x78] sm:$0xff]
    %v75 = vld [vmem:[#allocation2 + $0x80] sm:$0xff]
    %v76 = vld [vmem:[#allocation2 + $0x88] sm:$0xff]
    %v77 = vld [vmem:[#allocation2 + $0x90] sm:$0xff]
    %v78 = vld [vmem:[#allocation2 + $0x98] sm:$0xff]
    %v79 = vld [vmem:[#allocation2 + $0xa0] sm:$0xff]
    %v80 = vld [vmem:[#allocation2 + $0xa8] sm:$0xff]
    %v81 = vld [vmem:[#allocation2 + $0xb0] sm:$0xff]
    %v82 = vld [vmem:[#allocation2 + $0xb8] sm:$0xff]
    %v83 = vld [vmem:[#allocation2 + $0xc0] sm:$0xff]
    %v84 = vld [vmem:[#allocation2 + $0xc8] sm:$0xff]
    %v85 = vld [vmem:[#allocation2 + $0xd0] sm:$0xff]
    %v86 = vld [vmem:[#allocation2 + $0xd8] sm:$0xff]
    %v87 = vld [vmem:[#allocation2 + $0xe0] sm:$0xff]
    %v88 = vld [vmem:[#allocation2 + $0xe8] sm:$0xff]
    %v89 = vld [vmem:[#allocation2 + $0xf0] sm:$0xff]
    %v90 = vld [vmem:[#allocation2 + $0xf8] sm:$0xff]
    %v91 = vld [vmem:[#allocation2 + $0x100] sm:$0xff]
    %v92 = vld [vmem:[#allocation2 + $0x108] sm:$0xff]
    %v93 = vld [vmem:[#allocation2 + $0x110] sm:$0xff]
    %v94 = vld [vmem:[#allocation2 + $0x118] sm:$0xff]
    %v95 = vld [vmem:[#allocation2 + $0x120] sm:$0xff]
    %v96 = vld [vmem:[#allocation2 + $0x128] sm:$0xff]
    %v97 = vld [vmem:[#allocation2 + $0x130] sm:$0xff]
    %v98 = vld [vmem:[#allocation2 + $0x138] sm:$0xff]
    %v99 = vld [vmem:[#allocation2 + $0x140] sm:$0xff]
    %v100 = vld [vmem:[#allocation2 + $0x148] sm:$0xff]
    %v101 = vld [vmem:[#allocation2 + $0x150] sm:$0xff]
    %v102 = vld [vmem:[#allocation2 + $0x158] sm:$0xff]
    %v103 = vld [vmem:[#allocation2 + $0x160] sm:$0xff]
    %v104 = vld [vmem:[#allocation2 + $0x168] sm:$0xff]
    %v105 = vld [vmem:[#allocation2 + $0x170] sm:$0xff]
    %v106 = vld [vmem:[#allocation2 + $0x178] sm:$0xff]
    %v107 = vld [vmem:[#allocation2 + $0x180] sm:$0xff]
    %v108 = vld [vmem:[#allocation2 + $0x188] sm:$0xff]
    %v109 = vld [vmem:[#allocation2 + $0x190] sm:$0xff]
    %v110 = vld [vmem:[#allocation2 + $0x198] sm:$0xff]
    %v111 = vld [vmem:[#allocation2 + $0x1a0] sm:$0xff]
    %v112 = vld [vmem:[#allocation2 + $0x1a8] sm:$0xff]
    %v113 = vld [vmem:[#allocation2 + $0x1b0] sm:$0xff]
    %v114 = vld [vmem:[#allocation2 + $0x1b8] sm:$0xff]
    %v115 = vld [vmem:[#allocation2 + $0x1c0] sm:$0xff]
    %v116 = vld [vmem:[#allocation2 + $0x1c8] sm:$0xff]
    %v117 = vld [vmem:[#allocation2 + $0x1d0] sm:$0xff]
    %v118 = vld [vmem:[#allocation2 + $0x1d8] sm:$0xff]
    %v119 = vld [vmem:[#allocation2 + $0x1e0] sm:$0xff]
    %v120 = vld [vmem:[#allocation2 + $0x1e8] sm:$0xff]
    %v121 = vld [vmem:[#allocation2 + $0x1f0] sm:$0xff]
    %v122 = vld [vmem:[#allocation2 + $0x1f8] sm:$0xff]
    %v127 = vunpack.c.l.b16 %v55
    %v128 = vunpack.c.l.b16 %v56
    %v129 = vunpack.c.l.b16 %v57
    %v130 = vunpack.c.l.b16 %v58
    %v131 = vpack.c.b16 %v128, %v127
    %v132 = vpack.c.b16 %v130, %v129
    %v199 = vunpack.c.l.b16 %v59
    %v200 = vunpack.c.h.b16 %v59
    %v201 = vunpack.c.l.b16 %v60
    %v202 = vunpack.c.h.b16 %v60
    %v203 = vunpack.c.l.b16 %v61
    %v204 = vunpack.c.h.b16 %v61
    %v205 = vunpack.c.l.b16 %v62
    %v206 = vunpack.c.h.b16 %v62
    %v207 = vunpack.c.l.b16 %v63
    %v208 = vunpack.c.h.b16 %v63
    %v209 = vunpack.c.l.b16 %v64
    %v210 = vunpack.c.h.b16 %v64
    %v211 = vunpack.c.l.b16 %v65
    %v212 = vunpack.c.h.b16 %v65
    %v213 = vunpack.c.l.b16 %v66
    %v214 = vunpack.c.h.b16 %v66
    %v215 = vunpack.c.l.b16 %v67
    %v216 = vunpack.c.h.b16 %v67
    %v217 = vunpack.c.l.b16 %v68
    %v218 = vunpack.c.h.b16 %v68
    %v219 = vunpack.c.l.b16 %v69
    %v220 = vunpack.c.h.b16 %v69
    %v221 = vunpack.c.l.b16 %v70
    %v222 = vunpack.c.h.b16 %v70
    %v223 = vunpack.c.l.b16 %v71
    %v224 = vunpack.c.h.b16 %v71
    %v225 = vunpack.c.l.b16 %v72
    %v226 = vunpack.c.h.b16 %v72
    %v227 = vunpack.c.l.b16 %v73
    %v228 = vunpack.c.h.b16 %v73
    %v229 = vunpack.c.l.b16 %v74
    %v230 = vunpack.c.h.b16 %v74
    %v231 = vunpack.c.l.b16 %v75
    %v232 = vunpack.c.h.b16 %v75
    %v233 = vunpack.c.l.b16 %v76
    %v234 = vunpack.c.h.b16 %v76
    %v235 = vunpack.c.l.b16 %v77
    %v236 = vunpack.c.h.b16 %v77
    %v237 = vunpack.c.l.b16 %v78
    %v238 = vunpack.c.h.b16 %v78
    %v239 = vunpack.c.l.b16 %v79
    %v240 = vunpack.c.h.b16 %v79
    %v241 = vunpack.c.l.b16 %v80
    %v242 = vunpack.c.h.b16 %v80
    %v243 = vunpack.c.l.b16 %v81
    %v244 = vunpack.c.h.b16 %v81
    %v245 = vunpack.c.l.b16 %v82
    %v246 = vunpack.c.h.b16 %v82
    %v247 = vunpack.c.l.b16 %v83
    %v248 = vunpack.c.h.b16 %v83
    %v249 = vunpack.c.l.b16 %v84
    %v250 = vunpack.c.h.b16 %v84
    %v251 = vunpack.c.l.b16 %v85
    %v252 = vunpack.c.h.b16 %v85
    %v253 = vunpack.c.l.b16 %v86
    %v254 = vunpack.c.h.b16 %v86
    %v255 = vunpack.c.l.b16 %v87
    %v256 = vunpack.c.h.b16 %v87
    %v257 = vunpack.c.l.b16 %v88
    %v258 = vunpack.c.h.b16 %v88
    %v259 = vunpack.c.l.b16 %v89
    %v260 = vunpack.c.h.b16 %v89
    %v261 = vunpack.c.l.b16 %v90
    %v262 = vunpack.c.h.b16 %v90
    %v263 = vunpack.c.l.b16 %v91
    %v264 = vunpack.c.h.b16 %v91
    %v265 = vunpack.c.l.b16 %v92
    %v266 = vunpack.c.h.b16 %v92
    %v267 = vunpack.c.l.b16 %v93
    %v268 = vunpack.c.h.b16 %v93
    %v269 = vunpack.c.l.b16 %v94
    %v270 = vunpack.c.h.b16 %v94
    %v271 = vunpack.c.l.b16 %v95
    %v272 = vunpack.c.h.b16 %v95
    %v273 = vunpack.c.l.b16 %v96
    %v274 = vunpack.c.h.b16 %v96
    %v275 = vunpack.c.l.b16 %v97
    %v276 = vunpack.c.h.b16 %v97
    %v277 = vunpack.c.l.b16 %v98
    %v278 = vunpack.c.h.b16 %v98
    %v279 = vunpack.c.l.b16 %v99
    %v280 = vunpack.c.h.b16 %v99
    %v281 = vunpack.c.l.b16 %v100
    %v282 = vunpack.c.h.b16 %v100
    %v283 = vunpack.c.l.b16 %v101
    %v284 = vunpack.c.h.b16 %v101
    %v285 = vunpack.c.l.b16 %v102
    %v286 = vunpack.c.h.b16 %v102
    %v287 = vunpack.c.l.b16 %v103
    %v288 = vunpack.c.h.b16 %v103
    %v289 = vunpack.c.l.b16 %v104
    %v290 = vunpack.c.h.b16 %v104
    %v291 = vunpack.c.l.b16 %v105
    %v292 = vunpack.c.h.b16 %v105
    %v293 = vunpack.c.l.b16 %v106
    %v294 = vunpack.c.h.b16 %v106
    %v295 = vunpack.c.l.b16 %v107
    %v296 = vunpack.c.h.b16 %v107
    %v297 = vunpack.c.l.b16 %v108
    %v298 = vunpack.c.h.b16 %v108
    %v299 = vunpack.c.l.b16 %v109
    %v300 = vunpack.c.h.b16 %v109
    %v301 = vunpack.c.l.b16 %v110
    %v302 = vunpack.c.h.b16 %v110
    %v303 = vunpack.c.l.b16 %v111
    %v304 = vunpack.c.h.b16 %v111
    %v305 = vunpack.c.l.b16 %v112
    %v306 = vunpack.c.h.b16 %v112
    %v307 = vunpack.c.l.b16 %v113
    %v308 = vunpack.c.h.b16 %v113
    %v309 = vunpack.c.l.b16 %v114
    %v310 = vunpack.c.h.b16 %v114
    %v311 = vunpack.c.l.b16 %v115
    %v312 = vunpack.c.h.b16 %v115
    %v313 = vunpack.c.l.b16 %v116
    %v314 = vunpack.c.h.b16 %v116
    %v315 = vunpack.c.l.b16 %v117
    %v316 = vunpack.c.h.b16 %v117
    %v317 = vunpack.c.l.b16 %v118
    %v318 = vunpack.c.h.b16 %v118
    %v319 = vunpack.c.l.b16 %v119
    %v320 = vunpack.c.h.b16 %v119
    %v321 = vunpack.c.l.b16 %v120
    %v322 = vunpack.c.h.b16 %v120
    %v323 = vunpack.c.l.b16 %v121
    %v324 = vunpack.c.h.b16 %v121
    %v325 = vunpack.c.l.b16 %v122
    %v326 = vunpack.c.h.b16 %v122
    %v327 = vpack.c.b16 %v207, %v199
    %v328 = vpack.c.b16 %v208, %v200
    %v329 = vpack.c.b16 %v209, %v201
    %v330 = vpack.c.b16 %v210, %v202
    %v331 = vpack.c.b16 %v211, %v203
    %v332 = vpack.c.b16 %v212, %v204
    %v333 = vpack.c.b16 %v213, %v205
    %v334 = vpack.c.b16 %v214, %v206
    %v335 = vpack.c.b16 %v223, %v215
    %v336 = vpack.c.b16 %v224, %v216
    %v337 = vpack.c.b16 %v225, %v217
    %v338 = vpack.c.b16 %v226, %v218
    %v339 = vpack.c.b16 %v227, %v219
    %v340 = vpack.c.b16 %v228, %v220
    %v341 = vpack.c.b16 %v229, %v221
    %v342 = vpack.c.b16 %v230, %v222
    %v343 = vpack.c.b16 %v239, %v231
    %v344 = vpack.c.b16 %v240, %v232
    %v345 = vpack.c.b16 %v241, %v233
    %v346 = vpack.c.b16 %v242, %v234
    %v347 = vpack.c.b16 %v243, %v235
    %v348 = vpack.c.b16 %v244, %v236
    %v349 = vpack.c.b16 %v245, %v237
    %v350 = vpack.c.b16 %v246, %v238
    %v351 = vpack.c.b16 %v255, %v247
    %v352 = vpack.c.b16 %v256, %v248
    %v353 = vpack.c.b16 %v257, %v249
    %v354 = vpack.c.b16 %v258, %v250
    %v355 = vpack.c.b16 %v259, %v251
    %v356 = vpack.c.b16 %v260, %v252
    %v357 = vpack.c.b16 %v261, %v253
    %v358 = vpack.c.b16 %v262, %v254
    %v359 = vpack.c.b16 %v271, %v263
    %v360 = vpack.c.b16 %v272, %v264
    %v361 = vpack.c.b16 %v273, %v265
    %v362 = vpack.c.b16 %v274, %v266
    %v363 = vpack.c.b16 %v275, %v267
    %v364 = vpack.c.b16 %v276, %v268
    %v365 = vpack.c.b16 %v277, %v269
    %v366 = vpack.c.b16 %v278, %v270
    %v367 = vpack.c.b16 %v287, %v279
    %v368 = vpack.c.b16 %v288, %v280
    %v369 = vpack.c.b16 %v289, %v281
    %v370 = vpack.c.b16 %v290, %v282
    %v371 = vpack.c.b16 %v291, %v283
    %v372 = vpack.c.b16 %v292, %v284
    %v373 = vpack.c.b16 %v293, %v285
    %v374 = vpack.c.b16 %v294, %v286
    %v375 = vpack.c.b16 %v303, %v295
    %v376 = vpack.c.b16 %v304, %v296
    %v377 = vpack.c.b16 %v305, %v297
    %v378 = vpack.c.b16 %v306, %v298
    %v379 = vpack.c.b16 %v307, %v299
    %v380 = vpack.c.b16 %v308, %v300
    %v381 = vpack.c.b16 %v309, %v301
    %v382 = vpack.c.b16 %v310, %v302
    %v383 = vpack.c.b16 %v319, %v311
    %v384 = vpack.c.b16 %v320, %v312
    %v385 = vpack.c.b16 %v321, %v313
    %v386 = vpack.c.b16 %v322, %v314
    %v387 = vpack.c.b16 %v323, %v315
    %v388 = vpack.c.b16 %v324, %v316
    %v389 = vpack.c.b16 %v325, %v317
    %v390 = vpack.c.b16 %v326, %v318
    %455 = vmatprep.subr.bf16.mxu0 %v328
    %456 = vmatpush1.bf16.msra.mxu0 %v327
    %457 = vmatprep.subr.bf16.mxu0 %v336
    %458 = vmatpush1.bf16.msra.mxu0 %v335
    %459 = vmatprep.subr.bf16.mxu0 %v344
    %460 = vmatpush1.bf16.msra.mxu0 %v343
    %461 = vmatprep.subr.bf16.mxu0 %v352
    %462 = vmatpush1.bf16.msra.mxu0 %v351
    %463 = vmatprep.subr.bf16.mxu0 %v360
    %464 = vmatpush1.bf16.msra.mxu0 %v359
    %465 = vmatprep.subr.bf16.mxu0 %v368
    %466 = vmatpush1.bf16.msra.mxu0 %v367
    %467 = vmatprep.subr.bf16.mxu0 %v376
    %468 = vmatpush1.bf16.msra.mxu0 %v375
    %469 = vmatprep.subr.bf16.mxu0 %v384
    %470 = vmatpush1.bf16.msra.mxu0 %v383
    %471 = vmatprep.subr.bf16.mxu0 0
    %472 = vmatpush1.bf16.msra.mxu0 0
    %473 = vmatprep.subr.bf16.mxu0 0
    %474 = vmatpush1.bf16.msra.mxu0 0
    %475 = vmatprep.subr.bf16.mxu0 0
    %476 = vmatpush1.bf16.msra.mxu0 0
    %477 = vmatprep.subr.bf16.mxu0 0
    %478 = vmatpush1.bf16.msra.mxu0 0
    %479 = vmatprep.subr.bf16.mxu0 0
    %480 = vmatpush1.bf16.msra.mxu0 0
    %481 = vmatprep.subr.bf16.mxu0 0
    %482 = vmatpush1.bf16.msra.mxu0 0
    %483 = vmatprep.subr.bf16.mxu0 0
    %484 = vmatpush1.bf16.msra.mxu0 0
    %485 = vmatprep.subr.bf16.mxu0 0
    %486 = vmatpush1.bf16.msra.mxu0 0
    %487 = vmatprep.mubr.bf16.mxu0 0
    %488 = vmatmul.mubr.bf16.gmra.mrb[0].mxu0 %v131
    %v489 = vpop.f32.mrb[0].mxu0
    %v490 = vadd.f32 0.0, %v489
    %v491 = vpop.f32.mrb[0].mxu0
    %v492 = vadd.f32 0.0, %v491
    %v493 = vpop.f32.mrb[0].mxu0
    %v494 = vadd.f32 0.0, %v493
    %v495 = vpop.f32.mrb[0].mxu0
    %v496 = vadd.f32 0.0, %v495
    %497 = vmatprep.mubr.bf16.mxu0 0
    %498 = vmatmul.mubr.bf16.gmra.mrb[0].mxu0 %v132
    %v499 = vpop.f32.mrb[0].mxu0
    %v500 = vadd.f32 0.0, %v499
    %v501 = vpop.f32.mrb[0].mxu0
    %v502 = vadd.f32 0.0, %v501
    %v503 = vpop.f32.mrb[0].mxu0
    %v504 = vadd.f32 0.0, %v503
    %v505 = vpop.f32.mrb[0].mxu0
    %v506 = vadd.f32 0.0, %v505
    %507 = vdwg.mxu0
    %508 = vmatprep.subr.bf16.mxu0 %v330
    %509 = vmatpush1.bf16.msra.mxu0 %v329
    %510 = vmatprep.subr.bf16.mxu0 %v338
    %511 = vmatpush1.bf16.msra.mxu0 %v337
    %512 = vmatprep.subr.bf16.mxu0 %v346
    %513 = vmatpush1.bf16.msra.mxu0 %v345
    %514 = vmatprep.subr.bf16.mxu0 %v354
    %515 = vmatpush1.bf16.msra.mxu0 %v353
    %516 = vmatprep.subr.bf16.mxu0 %v362
    %517 = vmatpush1.bf16.msra.mxu0 %v361
    %518 = vmatprep.subr.bf16.mxu0 %v370
    %519 = vmatpush1.bf16.msra.mxu0 %v369
    %520 = vmatprep.subr.bf16.mxu0 %v378
    %521 = vmatpush1.bf16.msra.mxu0 %v377
    %522 = vmatprep.subr.bf16.mxu0 %v386
    %523 = vmatpush1.bf16.msra.mxu0 %v385
    %524 = vmatprep.subr.bf16.mxu0 0
    %525 = vmatpush1.bf16.msra.mxu0 0
    %526 = vmatprep.subr.bf16.mxu0 0
    %527 = vmatpush1.bf16.msra.mxu0 0
    %528 = vmatprep.subr.bf16.mxu0 0
    %529 = vmatpush1.bf16.msra.mxu0 0
    %530 = vmatprep.subr.bf16.mxu0 0
    %531 = vmatpush1.bf16.msra.mxu0 0
    %532 = vmatprep.subr.bf16.mxu0 0
    %533 = vmatpush1.bf16.msra.mxu0 0
    %534 = vmatprep.subr.bf16.mxu0 0
    %535 = vmatpush1.bf16.msra.mxu0 0
    %536 = vmatprep.subr.bf16.mxu0 0
    %537 = vmatpush1.bf16.msra.mxu0 0
    %538 = vmatprep.subr.bf16.mxu0 0
    %539 = vmatpush1.bf16.msra.mxu0 0
    %540 = vmatprep.mubr.bf16.mxu0 0
    %541 = vmatmul.mubr.bf16.gmra.mrb[0].mxu0 %v131
    %v542 = vpop.f32.mrb[0].mxu0
    %v543 = vadd.f32 0.0, %v542
    %v544 = vpop.f32.mrb[0].mxu0
    %v545 = vadd.f32 0.0, %v544
    %v546 = vpop.f32.mrb[0].mxu0
    %v547 = vadd.f32 0.0, %v546
    %v548 = vpop.f32.mrb[0].mxu0
    %v549 = vadd.f32 0.0, %v548
    %550 = vmatprep.mubr.bf16.mxu0 0
    %551 = vmatmul.mubr.bf16.gmra.mrb[0].mxu0 %v132
    %v552 = vpop.f32.mrb[0].mxu0
    %v553 = vadd.f32 0.0, %v552
    %v554 = vpop.f32.mrb[0].mxu0
    %v555 = vadd.f32 0.0, %v554
    %v556 = vpop.f32.mrb[0].mxu0
    %v557 = vadd.f32 0.0, %v556
    %v558 = vpop.f32.mrb[0].mxu0
    %v559 = vadd.f32 0.0, %v558
    %560 = vdwg.mxu0
    %561 = vmatprep.subr.bf16.mxu0 %v332
    %562 = vmatpush1.bf16.msra.mxu0 %v331
    %563 = vmatprep.subr.bf16.mxu0 %v340
    %564 = vmatpush1.bf16.msra.mxu0 %v339
    %565 = vmatprep.subr.bf16.mxu0 %v348
    %566 = vmatpush1.bf16.msra.mxu0 %v347
    %567 = vmatprep.subr.bf16.mxu0 %v356
    %568 = vmatpush1.bf16.msra.mxu0 %v355
    %569 = vmatprep.subr.bf16.mxu0 %v364
    %570 = vmatpush1.bf16.msra.mxu0 %v363
    %571 = vmatprep.subr.bf16.mxu0 %v372
    %572 = vmatpush1.bf16.msra.mxu0 %v371
    %573 = vmatprep.subr.bf16.mxu0 %v380
    %574 = vmatpush1.bf16.msra.mxu0 %v379
    %575 = vmatprep.subr.bf16.mxu0 %v388
    %576 = vmatpush1.bf16.msra.mxu0 %v387
    %577 = vmatprep.subr.bf16.mxu0 0
    %578 = vmatpush1.bf16.msra.mxu0 0
    %579 = vmatprep.subr.bf16.mxu0 0
    %580 = vmatpush1.bf16.msra.mxu0 0
    %581 = vmatprep.subr.bf16.mxu0 0
    %582 = vmatpush1.bf16.msra.mxu0 0
    %583 = vmatprep.subr.bf16.mxu0 0
    %584 = vmatpush1.bf16.msra.mxu0 0
    %585 = vmatprep.subr.bf16.mxu0 0
    %586 = vmatpush1.bf16.msra.mxu0 0
    %587 = vmatprep.subr.bf16.mxu0 0
    %588 = vmatpush1.bf16.msra.mxu0 0
    %589 = vmatprep.subr.bf16.mxu0 0
    %590 = vmatpush1.bf16.msra.mxu0 0
    %591 = vmatprep.subr.bf16.mxu0 0
    %592 = vmatpush1.bf16.msra.mxu0 0
    %593 = vmatprep.mubr.bf16.mxu0 0
    %594 = vmatmul.mubr.bf16.gmra.mrb[0].mxu0 %v131
    %v595 = vpop.f32.mrb[0].mxu0
    %v596 = vadd.f32 0.0, %v595
    %v597 = vpop.f32.mrb[0].mxu0
    %v598 = vadd.f32 0.0, %v597
    %v599 = vpop.f32.mrb[0].mxu0
    %v600 = vadd.f32 0.0, %v599
    %v601 = vpop.f32.mrb[0].mxu0
    %v602 = vadd.f32 0.0, %v601
    %603 = vmatprep.mubr.bf16.mxu0 0
    %604 = vmatmul.mubr.bf16.gmra.mrb[0].mxu0 %v132
    %v605 = vpop.f32.mrb[0].mxu0
    %v606 = vadd.f32 0.0, %v605
    %v607 = vpop.f32.mrb[0].mxu0
    %v608 = vadd.f32 0.0, %v607
    %v609 = vpop.f32.mrb[0].mxu0
    %v610 = vadd.f32 0.0, %v609
    %v611 = vpop.f32.mrb[0].mxu0
    %v612 = vadd.f32 0.0, %v611
    %613 = vdwg.mxu0
    %614 = vmatprep.subr.bf16.mxu0 %v334
    %615 = vmatpush1.bf16.msra.mxu0 %v333
    %616 = vmatprep.subr.bf16.mxu0 %v342
    %617 = vmatpush1.bf16.msra.mxu0 %v341
    %618 = vmatprep.subr.bf16.mxu0 %v350
    %619 = vmatpush1.bf16.msra.mxu0 %v349
    %620 = vmatprep.subr.bf16.mxu0 %v358
    %621 = vmatpush1.bf16.msra.mxu0 %v357
    %622 = vmatprep.subr.bf16.mxu0 %v366
    %623 = vmatpush1.bf16.msra.mxu0 %v365
    %624 = vmatprep.subr.bf16.mxu0 %v374
    %625 = vmatpush1.bf16.msra.mxu0 %v373
    %626 = vmatprep.subr.bf16.mxu0 %v382
    %627 = vmatpush1.bf16.msra.mxu0 %v381
    %628 = vmatprep.subr.bf16.mxu0 %v390
    %629 = vmatpush1.bf16.msra.mxu0 %v389
    %630 = vmatprep.subr.bf16.mxu0 0
    %631 = vmatpush1.bf16.msra.mxu0 0
    %632 = vmatprep.subr.bf16.mxu0 0
    %633 = vmatpush1.bf16.msra.mxu0 0
    %634 = vmatprep.subr.bf16.mxu0 0
    %635 = vmatpush1.bf16.msra.mxu0 0
    %636 = vmatprep.subr.bf16.mxu0 0
    %637 = vmatpush1.bf16.msra.mxu0 0
    %638 = vmatprep.subr.bf16.mxu0 0
    %639 = vmatpush1.bf16.msra.mxu0 0
    %640 = vmatprep.subr.bf16.mxu0 0
    %641 = vmatpush1.bf16.msra.mxu0 0
    %642 = vmatprep.subr.bf16.mxu0 0
    %643 = vmatpush1.bf16.msra.mxu0 0
    %644 = vmatprep.subr.bf16.mxu0 0
    %645 = vmatpush1.bf16.msra.mxu0 0
    %646 = vmatprep.mubr.bf16.mxu0 0
    %647 = vmatmul.mubr.bf16.gmra.mrb[0].mxu0 %v131
    %v648 = vpop.f32.mrb[0].mxu0
    %v649 = vadd.f32 0.0, %v648
    %v650 = vpop.f32.mrb[0].mxu0
    %v651 = vadd.f32 0.0, %v650
    %v652 = vpop.f32.mrb[0].mxu0
    %v653 = vadd.f32 0.0, %v652
    %v654 = vpop.f32.mrb[0].mxu0
    %v655 = vadd.f32 0.0, %v654
    %656 = vmatprep.mubr.bf16.mxu0 0
    %657 = vmatmul.mubr.bf16.gmra.mrb[0].mxu0 %v132
    %v658 = vpop.f32.mrb[0].mxu0
    %v659 = vadd.f32 0.0, %v658
    %v660 = vpop.f32.mrb[0].mxu0
    %v661 = vadd.f32 0.0, %v660
    %v662 = vpop.f32.mrb[0].mxu0
    %v663 = vadd.f32 0.0, %v662
    %v664 = vpop.f32.mrb[0].mxu0
    %v665 = vadd.f32 0.0, %v664
    %666 = vdwg.mxu0
    %v667 = vld [vmem:[#allocation4] sm:$0x1f]
    %v668 = vld [vmem:[#allocation4 + $0x8] sm:$0x1f]
    %v669 = vld [vmem:[#allocation4 + $0x10] sm:$0x1f]
    %v670 = vld [vmem:[#allocation4 + $0x18] sm:$0x1f]
    %v671 = vld [vmem:[#allocation4 + $0x20] sm:$0x1f]
    %v672 = vld [vmem:[#allocation4 + $0x28] sm:$0x1f]
    %v673 = vld [vmem:[#allocation4 + $0x30] sm:$0x1f]
    %v674 = vld [vmem:[#allocation4 + $0x38] sm:$0x1f]
    %v675 = vld [vmem:[#allocation6] sm:$0x1f]
    %v676 = vld [vmem:[#allocation6 + $0x8] sm:$0x1f]
    %v677 = vld [vmem:[#allocation6 + $0x10] sm:$0x1f]
    %v678 = vld [vmem:[#allocation6 + $0x18] sm:$0x1f]
    %v679 = vld [vmem:[#allocation6 + $0x20] sm:$0x1f]
    %v680 = vld [vmem:[#allocation6 + $0x28] sm:$0x1f]
    %v681 = vld [vmem:[#allocation6 + $0x30] sm:$0x1f]
    %v682 = vld [vmem:[#allocation6 + $0x38] sm:$0x1f]
    %v683 = vlaneseq
    %v684 = vand.u32 %v683, 127
    %v685 = vadd.s32 %v684, 128
    %v686 = vadd.s32 %v684, 256
    %v687 = vadd.s32 %v684, 384
    %v688 = vadd.s32 %v684, 512
    %v689 = vadd.s32 %v684, 640
    %v690 = vadd.s32 %v684, 768
    %v691 = vadd.s32 %v684, 896
    %v692 = vadd.f32 %v490, %v494
    %v693 = vadd.f32 %v692, %v500
    %v694 = vadd.f32 %v693, %v504
    %v695 = vrot.slane %v694, 4
    %v696 = vadd.f32 %v694, %v695
    %v697 = vrot.slane %v696, 2
    %v698 = vadd.f32 %v696, %v697
    %v699 = vrot.slane %v698, 1
    %v700 = vadd.f32 %v698, %v699
    %v701 = vadd.f32 %v492, %v496
    %v702 = vadd.f32 %v701, %v502
    %v703 = vadd.f32 %v702, %v506
    %v704 = vrot.slane %v703, 4
    %v705 = vadd.f32 %v703, %v704
    %v706 = vrot.slane %v705, 2
    %v707 = vadd.f32 %v705, %v706
    %v708 = vrot.slane %v707, 1
    %v709 = vadd.f32 %v707, %v708
    %v710 = vadd.f32 %v543, %v547
    %v711 = vadd.f32 %v710, %v553
    %v712 = vadd.f32 %v711, %v557
    %v713 = vrot.slane %v712, 4
    %v714 = vadd.f32 %v712, %v713
    %v715 = vrot.slane %v714, 2
    %v716 = vadd.f32 %v714, %v715
    %v717 = vrot.slane %v716, 1
    %v718 = vadd.f32 %v716, %v717
    %v719 = vadd.f32 %v545, %v549
    %v720 = vadd.f32 %v719, %v555
    %v721 = vadd.f32 %v720, %v559
    %v722 = vrot.slane %v721, 4
    %v723 = vadd.f32 %v721, %v722
    %v724 = vrot.slane %v723, 2
    %v725 = vadd.f32 %v723, %v724
    %v726 = vrot.slane %v725, 1
    %v727 = vadd.f32 %v725, %v726
    %v728 = vadd.f32 %v596, %v600
    %v729 = vadd.f32 %v728, %v606
    %v730 = vadd.f32 %v729, %v610
    %v731 = vrot.slane %v730, 4
    %v732 = vadd.f32 %v730, %v731
    %v733 = vrot.slane %v732, 2
    %v734 = vadd.f32 %v732, %v733
    %v735 = vrot.slane %v734, 1
    %v736 = vadd.f32 %v734, %v735
    %v737 = vadd.f32 %v598, %v602
    %v738 = vadd.f32 %v737, %v608
    %v739 = vadd.f32 %v738, %v612
    %v740 = vrot.slane %v739, 4
    %v741 = vadd.f32 %v739, %v740
    %v742 = vrot.slane %v741, 2
    %v743 = vadd.f32 %v741, %v742
    %v744 = vrot.slane %v743, 1
    %v745 = vadd.f32 %v743, %v744
    %v746 = vadd.f32 %v649, %v653
    %v747 = vadd.f32 %v746, %v659
    %v748 = vadd.f32 %v747, %v663
    %v749 = vrot.slane %v748, 4
    %v750 = vadd.f32 %v748, %v749
    %v751 = vrot.slane %v750, 2
    %v752 = vadd.f32 %v750, %v751
    %v753 = vrot.slane %v752, 1
    %v754 = vadd.f32 %v752, %v753
    %v755 = vadd.f32 %v651, %v655
    %v756 = vadd.f32 %v755, %v661
    %v757 = vadd.f32 %v756, %v665
    %v758 = vrot.slane %v757, 4
    %v759 = vadd.f32 %v757, %v758
    %v760 = vrot.slane %v759, 2
    %v761 = vadd.f32 %v759, %v760
    %v762 = vrot.slane %v761, 1
    %v763 = vadd.f32 %v761, %v762
    %v764 = vmul.f32 %v490, %v490
    %v765 = vmul.f32 %v492, %v492
    %v766 = vmul.f32 %v543, %v543
    %v767 = vmul.f32 %v545, %v545
    %v768 = vmul.f32 %v596, %v596
    %v769 = vmul.f32 %v598, %v598
    %v770 = vmul.f32 %v649, %v649
    %v771 = vmul.f32 %v651, %v651
    %v772 = vmul.f32 %v494, %v494
    %v773 = vmul.f32 %v496, %v496
    %v774 = vmul.f32 %v547, %v547
    %v775 = vmul.f32 %v549, %v549
    %v776 = vmul.f32 %v600, %v600
    %v777 = vmul.f32 %v602, %v602
    %v778 = vmul.f32 %v653, %v653
    %v779 = vmul.f32 %v655, %v655
    %v780 = vmul.f32 %v500, %v500
    %v781 = vmul.f32 %v502, %v502
    %v782 = vmul.f32 %v553, %v553
    %v783 = vmul.f32 %v555, %v555
    %v784 = vmul.f32 %v606, %v606
    %v785 = vmul.f32 %v608, %v608
    %v786 = vmul.f32 %v659, %v659
    %v787 = vmul.f32 %v661, %v661
    %v788 = vmul.f32 %v504, %v504
    %v789 = vmul.f32 %v506, %v506
    %v790 = vmul.f32 %v557, %v557
    %v791 = vmul.f32 %v559, %v559
    %v792 = vmul.f32 %v610, %v610
    %v793 = vmul.f32 %v612, %v612
    %v794 = vmul.f32 %v663, %v663
    %v795 = vmul.f32 %v665, %v665
    %v796 = vadd.f32 %v764, %v772
    %v797 = vadd.f32 %v796, %v780
    %v798 = vadd.f32 %v797, %v788
    %v799 = vrot.slane %v798, 4
    %v800 = vadd.f32 %v798, %v799
    %v801 = vrot.slane %v800, 2
    %v802 = vadd.f32 %v800, %v801
    %v803 = vrot.slane %v802, 1
    %v804 = vadd.f32 %v802, %v803
    %v805 = vadd.f32 %v765, %v773
    %v806 = vadd.f32 %v805, %v781
    %v807 = vadd.f32 %v806, %v789
    %v808 = vrot.slane %v807, 4
    %v809 = vadd.f32 %v807, %v808
    %v810 = vrot.slane %v809, 2
    %v811 = vadd.f32 %v809, %v810
    %v812 = vrot.slane %v811, 1
    %v813 = vadd.f32 %v811, %v812
    %v814 = vadd.f32 %v766, %v774
    %v815 = vadd.f32 %v814, %v782
    %v816 = vadd.f32 %v815, %v790
    %v817 = vrot.slane %v816, 4
    %v818 = vadd.f32 %v816, %v817
    %v819 = vrot.slane %v818, 2
    %v820 = vadd.f32 %v818, %v819
    %v821 = vrot.slane %v820, 1
    %v822 = vadd.f32 %v820, %v821
    %v823 = vadd.f32 %v767, %v775
    %v824 = vadd.f32 %v823, %v783
    %v825 = vadd.f32 %v824, %v791
    %v826 = vrot.slane %v825, 4
    %v827 = vadd.f32 %v825, %v826
    %v828 = vrot.slane %v827, 2
    %v829 = vadd.f32 %v827, %v828
    %v830 = vrot.slane %v829, 1
    %v831 = vadd.f32 %v829, %v830
    %v832 = vadd.f32 %v768, %v776
    %v833 = vadd.f32 %v832, %v784
    %v834 = vadd.f32 %v833, %v792
    %v835 = vrot.slane %v834, 4
    %v836 = vadd.f32 %v834, %v835
    %v837 = vrot.slane %v836, 2
    %v838 = vadd.f32 %v836, %v837
    %v839 = vrot.slane %v838, 1
    %v840 = vadd.f32 %v838, %v839
    %v841 = vadd.f32 %v769, %v777
    %v842 = vadd.f32 %v841, %v785
    %v843 = vadd.f32 %v842, %v793
    %v844 = vrot.slane %v843, 4
    %v845 = vadd.f32 %v843, %v844
    %v846 = vrot.slane %v845, 2
    %v847 = vadd.f32 %v845, %v846
    %v848 = vrot.slane %v847, 1
    %v849 = vadd.f32 %v847, %v848
    %v850 = vadd.f32 %v770, %v778
    %v851 = vadd.f32 %v850, %v786
    %v852 = vadd.f32 %v851, %v794
    %v853 = vrot.slane %v852, 4
    %v854 = vadd.f32 %v852, %v853
    %v855 = vrot.slane %v854, 2
    %v856 = vadd.f32 %v854, %v855
    %v857 = vrot.slane %v856, 1
    %v858 = vadd.f32 %v856, %v857
    %v859 = vadd.f32 %v771, %v779
    %v860 = vadd.f32 %v859, %v787
    %v861 = vadd.f32 %v860, %v795
    %v862 = vrot.slane %v861, 4
    %v863 = vadd.f32 %v861, %v862
    %v864 = vrot.slane %v863, 2
    %v865 = vadd.f32 %v863, %v864
    %v866 = vrot.slane %v865, 1
    %v867 = vadd.f32 %v865, %v866
    %v868 = vmul.f32 %v700, 0.03125
    %v869 = vmul.f32 %v709, 0.03125
    %v870 = vmul.f32 %v718, 0.03125
    %v871 = vmul.f32 %v727, 0.03125
    %v872 = vmul.f32 %v736, 0.03125
    %v873 = vmul.f32 %v745, 0.03125
    %v874 = vmul.f32 %v754, 0.03125
    %v875 = vmul.f32 %v763, 0.03125
    %v876 = vmul.f32 %v804, 0.03125
    %v877 = vmul.f32 %v813, 0.03125
    %v878 = vmul.f32 %v822, 0.03125
    %v879 = vmul.f32 %v831, 0.03125
    %v880 = vmul.f32 %v840, 0.03125
    %v881 = vmul.f32 %v849, 0.03125
    %v882 = vmul.f32 %v858, 0.03125
    %v883 = vmul.f32 %v867, 0.03125
    %v884 = vmul.f32 %v868, %v868
    %v885 = vmul.f32 %v869, %v869
    %v886 = vmul.f32 %v870, %v870
    %v887 = vmul.f32 %v871, %v871
    %v888 = vmul.f32 %v872, %v872
    %v889 = vmul.f32 %v873, %v873
    %v890 = vmul.f32 %v874, %v874
    %v891 = vmul.f32 %v875, %v875
    %v892 = vsub.f32 %v876, %v884
    %v893 = vsub.f32 %v877, %v885
    %v894 = vsub.f32 %v878, %v886
    %v895 = vsub.f32 %v879, %v887
    %v896 = vsub.f32 %v880, %v888
    %v897 = vsub.f32 %v881, %v889
    %v898 = vsub.f32 %v882, %v890
    %v899 = vsub.f32 %v883, %v891
    %v900 = vmax.f32 %v892, 0.0
    %v901 = vmax.f32 %v893, 0.0
    %v902 = vmax.f32 %v894, 0.0
    %v903 = vmax.f32 %v895, 0.0
    %v904 = vmax.f32 %v896, 0.0
    %v905 = vmax.f32 %v897, 0.0
    %v906 = vmax.f32 %v898, 0.0
    %v907 = vmax.f32 %v899, 0.0
    %v908 = vadd.f32 %v900, 1e-05
    %v909 = vadd.f32 %v901, 1e-05
    %v910 = vadd.f32 %v902, 1e-05
    %v911 = vadd.f32 %v903, 1e-05
    %v912 = vadd.f32 %v904, 1e-05
    %v913 = vadd.f32 %v905, 1e-05
    %v914 = vadd.f32 %v906, 1e-05
    %v915 = vadd.f32 %v907, 1e-05
    %v916 = vrsqrt.pop %v908
    %v917 = vrsqrt.pop %v909
    %v918 = vrsqrt.pop %v910
    %v919 = vrsqrt.pop %v911
    %v920 = vrsqrt.pop %v912
    %v921 = vrsqrt.pop %v913
    %v922 = vrsqrt.pop %v914
    %v923 = vrsqrt.pop %v915
    %v924 = vmul.f32 %v667, %v916
    %v925 = vmul.f32 %v668, %v917
    %v926 = vmul.f32 %v669, %v918
    %v927 = vmul.f32 %v670, %v919
    %v928 = vmul.f32 %v671, %v920
    %v929 = vmul.f32 %v672, %v921
    %v930 = vmul.f32 %v673, %v922
    %v931 = vmul.f32 %v674, %v923
    %v932 = vmul.f32 %v868, %v924
    %v933 = vmul.f32 %v869, %v925
    %v934 = vmul.f32 %v870, %v926
    %v935 = vmul.f32 %v871, %v927
    %v936 = vmul.f32 %v872, %v928
    %v937 = vmul.f32 %v873, %v929
    %v938 = vmul.f32 %v874, %v930
    %v939 = vmul.f32 %v875, %v931
    %v940 = vsub.f32 %v675, %v932
    %v941 = vsub.f32 %v676, %v933
    %v942 = vsub.f32 %v677, %v934
    %v943 = vsub.f32 %v678, %v935
    %v944 = vsub.f32 %v679, %v936
    %v945 = vsub.f32 %v680, %v937
    %v946 = vsub.f32 %v681, %v938
    %v947 = vsub.f32 %v682, %v939
    %v948 = vlaneseq
    %v949 = vshrl.u32 %v948, 7
    %v950 = vsub.s32 0, %v949
    %v951 = vrot.slane %v924, %v950
    %v952 = vlaneseq
    %v953 = vshrl.u32 %v952, 7
    %v954 = vsub.s32 0, %v953
    %v955 = vrot.slane %v925, %v954
    %v956 = vlaneseq
    %v957 = vshrl.u32 %v956, 7
    %v958 = vsub.s32 0, %v957
    %v959 = vrot.slane %v926, %v958
    %v960 = vlaneseq
    %v961 = vshrl.u32 %v960, 7
    %v962 = vsub.s32 0, %v961
    %v963 = vrot.slane %v927, %v962
    %v964 = vlaneseq
    %v965 = vshrl.u32 %v964, 7
    %v966 = vsub.s32 0, %v965
    %v967 = vrot.slane %v928, %v966
    %v968 = vlaneseq
    %v969 = vshrl.u32 %v968, 7
    %v970 = vsub.s32 0, %v969
    %v971 = vrot.slane %v929, %v970
    %v972 = vlaneseq
    %v973 = vshrl.u32 %v972, 7
    %v974 = vsub.s32 0, %v973
    %v975 = vrot.slane %v930, %v974
    %v976 = vlaneseq
    %v977 = vshrl.u32 %v976, 7
    %v978 = vsub.s32 0, %v977
    %v979 = vrot.slane %v931, %v978
    %v980 = vmul.f32 %v490, %v951
    %v981 = vmul.f32 %v492, %v955
    %v982 = vmul.f32 %v543, %v959
    %v983 = vmul.f32 %v545, %v963
    %v984 = vmul.f32 %v596, %v967
    %v985 = vmul.f32 %v598, %v971
    %v986 = vmul.f32 %v649, %v975
    %v987 = vmul.f32 %v651, %v979
    %v988 = vmul.f32 %v494, %v951
    %v989 = vmul.f32 %v496, %v955
    %v990 = vmul.f32 %v547, %v959
    %v991 = vmul.f32 %v549, %v963
    %v992 = vmul.f32 %v600, %v967
    %v993 = vmul.f32 %v602, %v971
    %v994 = vmul.f32 %v653, %v975
    %v995 = vmul.f32 %v655, %v979
    %v996 = vmul.f32 %v500, %v951
    %v997 = vmul.f32 %v502, %v955
    %v998 = vmul.f32 %v553, %v959
    %v999 = vmul.f32 %v555, %v963
    %v1000 = vmul.f32 %v606, %v967
    %v1001 = vmul.f32 %v608, %v971
    %v1002 = vmul.f32 %v659, %v975
    %v1003 = vmul.f32 %v661, %v979
    %v1004 = vmul.f32 %v504, %v951
    %v1005 = vmul.f32 %v506, %v955
    %v1006 = vmul.f32 %v557, %v959
    %v1007 = vmul.f32 %v559, %v963
    %v1008 = vmul.f32 %v610, %v967
    %v1009 = vmul.f32 %v612, %v971
    %v1010 = vmul.f32 %v663, %v975
    %v1011 = vmul.f32 %v665, %v979
    %v1012 = vlaneseq
    %v1013 = vshrl.u32 %v1012, 7
    %v1014 = vsub.s32 0, %v1013
    %v1015 = vrot.slane %v940, %v1014
    %v1016 = vlaneseq
    %v1017 = vshrl.u32 %v1016, 7
    %v1018 = vsub.s32 0, %v1017
    %v1019 = vrot.slane %v941, %v1018
    %v1020 = vlaneseq
    %v1021 = vshrl.u32 %v1020, 7
    %v1022 = vsub.s32 0, %v1021
    %v1023 = vrot.slane %v942, %v1022
    %v1024 = vlaneseq
    %v1025 = vshrl.u32 %v1024, 7
    %v1026 = vsub.s32 0, %v1025
    %v1027 = vrot.slane %v943, %v1026
    %v1028 = vlaneseq
    %v1029 = vshrl.u32 %v1028, 7
    %v1030 = vsub.s32 0, %v1029
    %v1031 = vrot.slane %v944, %v1030
    %v1032 = vlaneseq
    %v1033 = vshrl.u32 %v1032, 7
    %v1034 = vsub.s32 0, %v1033
    %v1035 = vrot.slane %v945, %v1034
    %v1036 = vlaneseq
    %v1037 = vshrl.u32 %v1036, 7
    %v1038 = vsub.s32 0, %v1037
    %v1039 = vrot.slane %v946, %v1038
    %v1040 = vlaneseq
    %v1041 = vshrl.u32 %v1040, 7
    %v1042 = vsub.s32 0, %v1041
    %v1043 = vrot.slane %v947, %v1042
    %v1044 = vadd.f32 %v980, %v1015
    %v1045 = vadd.f32 %v981, %v1019
    %v1046 = vadd.f32 %v982, %v1023
    %v1047 = vadd.f32 %v983, %v1027
    %v1048 = vadd.f32 %v984, %v1031
    %v1049 = vadd.f32 %v985, %v1035
    %v1050 = vadd.f32 %v986, %v1039
    %v1051 = vadd.f32 %v987, %v1043
    %v1052 = vadd.f32 %v988, %v1015
    %v1053 = vadd.f32 %v989, %v1019
    %v1054 = vadd.f32 %v990, %v1023
    %v1055 = vadd.f32 %v991, %v1027
    %v1056 = vadd.f32 %v992, %v1031
    %v1057 = vadd.f32 %v993, %v1035
    %v1058 = vadd.f32 %v994, %v1039
    %v1059 = vadd.f32 %v995, %v1043
    %v1060 = vadd.f32 %v996, %v1015
    %v1061 = vadd.f32 %v997, %v1019
    %v1062 = vadd.f32 %v998, %v1023
    %v1063 = vadd.f32 %v999, %v1027
    %v1064 = vadd.f32 %v1000, %v1031
    %v1065 = vadd.f32 %v1001, %v1035
    %v1066 = vadd.f32 %v1002, %v1039
    %v1067 = vadd.f32 %v1003, %v1043
    %v1068 = vadd.f32 %v1004, %v1015
    %v1069 = vadd.f32 %v1005, %v1019
    %v1070 = vadd.f32 %v1006, %v1023
    %v1071 = vadd.f32 %v1007, %v1027
    %v1072 = vadd.f32 %v1008, %v1031
    %v1073 = vadd.f32 %v1009, %v1035
    %v1074 = vadd.f32 %v1010, %v1039
    %v1075 = vadd.f32 %v1011, %v1043
    %vm1076 = vcmp.ge.f32.partialorder %v1044, 0.0
    %vm1077 = vcmp.ge.f32.partialorder %v1045, 0.0
    %vm1078 = vcmp.ge.f32.partialorder %v1046, 0.0
    %vm1079 = vcmp.ge.f32.partialorder %v1047, 0.0
    %vm1080 = vcmp.ge.f32.partialorder %v1048, 0.0
    %vm1081 = vcmp.ge.f32.partialorder %v1049, 0.0
    %vm1082 = vcmp.ge.f32.partialorder %v1050, 0.0
    %vm1083 = vcmp.ge.f32.partialorder %v1051, 0.0
    %vm1084 = vcmp.ge.f32.partialorder %v1052, 0.0
    %vm1085 = vcmp.ge.f32.partialorder %v1053, 0.0
    %vm1086 = vcmp.ge.f32.partialorder %v1054, 0.0
    %vm1087 = vcmp.ge.f32.partialorder %v1055, 0.0
    %vm1088 = vcmp.ge.f32.partialorder %v1056, 0.0
    %vm1089 = vcmp.ge.f32.partialorder %v1057, 0.0
    %vm1090 = vcmp.ge.f32.partialorder %v1058, 0.0
    %vm1091 = vcmp.ge.f32.partialorder %v1059, 0.0
    %vm1092 = vcmp.ge.f32.partialorder %v1060, 0.0
    %vm1093 = vcmp.ge.f32.partialorder %v1061, 0.0
    %vm1094 = vcmp.ge.f32.partialorder %v1062, 0.0
    %vm1095 = vcmp.ge.f32.partialorder %v1063, 0.0
    %vm1096 = vcmp.ge.f32.partialorder %v1064, 0.0
    %vm1097 = vcmp.ge.f32.partialorder %v1065, 0.0
    %vm1098 = vcmp.ge.f32.partialorder %v1066, 0.0
    %vm1099 = vcmp.ge.f32.partialorder %v1067, 0.0
    %vm1100 = vcmp.ge.f32.partialorder %v1068, 0.0
    %vm1101 = vcmp.ge.f32.partialorder %v1069, 0.0
    %vm1102 = vcmp.ge.f32.partialorder %v1070, 0.0
    %vm1103 = vcmp.ge.f32.partialorder %v1071, 0.0
    %vm1104 = vcmp.ge.f32.partialorder %v1072, 0.0
    %vm1105 = vcmp.ge.f32.partialorder %v1073, 0.0
    %vm1106 = vcmp.ge.f32.partialorder %v1074, 0.0
    %vm1107 = vcmp.ge.f32.partialorder %v1075, 0.0
    %v1108 = vmul.f32 %v1044, 0.01
    %v1109 = vmul.f32 %v1045, 0.01
    %v1110 = vmul.f32 %v1046, 0.01
    %v1111 = vmul.f32 %v1047, 0.01
    %v1112 = vmul.f32 %v1048, 0.01
    %v1113 = vmul.f32 %v1049, 0.01
    %v1114 = vmul.f32 %v1050, 0.01
    %v1115 = vmul.f32 %v1051, 0.01
    %v1116 = vmul.f32 %v1052, 0.01
    %v1117 = vmul.f32 %v1053, 0.01
    %v1118 = vmul.f32 %v1054, 0.01
    %v1119 = vmul.f32 %v1055, 0.01
    %v1120 = vmul.f32 %v1056, 0.01
    %v1121 = vmul.f32 %v1057, 0.01
    %v1122 = vmul.f32 %v1058, 0.01
    %v1123 = vmul.f32 %v1059, 0.01
    %v1124 = vmul.f32 %v1060, 0.01
    %v1125 = vmul.f32 %v1061, 0.01
    %v1126 = vmul.f32 %v1062, 0.01
    %v1127 = vmul.f32 %v1063, 0.01
    %v1128 = vmul.f32 %v1064, 0.01
    %v1129 = vmul.f32 %v1065, 0.01
    %v1130 = vmul.f32 %v1066, 0.01
    %v1131 = vmul.f32 %v1067, 0.01
    %v1132 = vmul.f32 %v1068, 0.01
    %v1133 = vmul.f32 %v1069, 0.01
    %v1134 = vmul.f32 %v1070, 0.01
    %v1135 = vmul.f32 %v1071, 0.01
    %v1136 = vmul.f32 %v1072, 0.01
    %v1137 = vmul.f32 %v1073, 0.01
    %v1138 = vmul.f32 %v1074, 0.01
    %v1139 = vmul.f32 %v1075, 0.01
    %v1140 = vsel %vm1076, %v1044, %v1108
    %v1141 = vsel %vm1077, %v1045, %v1109
    %v1142 = vsel %vm1078, %v1046, %v1110
    %v1143 = vsel %vm1079, %v1047, %v1111
    %v1144 = vsel %vm1080, %v1048, %v1112
    %v1145 = vsel %vm1081, %v1049, %v1113
    %v1146 = vsel %vm1082, %v1050, %v1114
    %v1147 = vsel %vm1083, %v1051, %v1115
    %v1148 = vsel %vm1084, %v1052, %v1116
    %v1149 = vsel %vm1085, %v1053, %v1117
    %v1150 = vsel %vm1086, %v1054, %v1118
    %v1151 = vsel %vm1087, %v1055, %v1119
    %v1152 = vsel %vm1088, %v1056, %v1120
    %v1153 = vsel %vm1089, %v1057, %v1121
    %v1154 = vsel %vm1090, %v1058, %v1122
    %v1155 = vsel %vm1091, %v1059, %v1123
    %v1156 = vsel %vm1092, %v1060, %v1124
    %v1157 = vsel %vm1093, %v1061, %v1125
    %v1158 = vsel %vm1094, %v1062, %v1126
    %v1159 = vsel %vm1095, %v1063, %v1127
    %v1160 = vsel %vm1096, %v1064, %v1128
    %v1161 = vsel %vm1097, %v1065, %v1129
    %v1162 = vsel %vm1098, %v1066, %v1130
    %v1163 = vsel %vm1099, %v1067, %v1131
    %v1164 = vsel %vm1100, %v1068, %v1132
    %v1165 = vsel %vm1101, %v1069, %v1133
    %v1166 = vsel %vm1102, %v1070, %v1134
    %v1167 = vsel %vm1103, %v1071, %v1135
    %v1168 = vsel %vm1104, %v1072, %v1136
    %v1169 = vsel %vm1105, %v1073, %v1137
    %v1170 = vsel %vm1106, %v1074, %v1138
    %v1171 = vsel %vm1107, %v1075, %v1139
    %v1172 = vadd.f32 %v1140, %v1148
    %v1173 = vadd.f32 %v1172, %v1156
    %v1174 = vadd.f32 %v1173, %v1164
    %v1175 = vrot.slane %v1174, 4
    %v1176 = vadd.f32 %v1174, %v1175
    %v1177 = vrot.slane %v1176, 2
    %v1178 = vadd.f32 %v1176, %v1177
    %v1179 = vrot.slane %v1178, 1
    %v1180 = vadd.f32 %v1178, %v1179
    %v1181 = vadd.f32 %v1141, %v1149
    %v1182 = vadd.f32 %v1181, %v1157
    %v1183 = vadd.f32 %v1182, %v1165
    %v1184 = vrot.slane %v1183, 4
    %v1185 = vadd.f32 %v1183, %v1184
    %v1186 = vrot.slane %v1185, 2
    %v1187 = vadd.f32 %v1185, %v1186
    %v1188 = vrot.slane %v1187, 1
    %v1189 = vadd.f32 %v1187, %v1188
    %v1190 = vadd.f32 %v1142, %v1150
    %v1191 = vadd.f32 %v1190, %v1158
    %v1192 = vadd.f32 %v1191, %v1166
    %v1193 = vrot.slane %v1192, 4
    %v1194 = vadd.f32 %v1192, %v1193
    %v1195 = vrot.slane %v1194, 2
    %v1196 = vadd.f32 %v1194, %v1195
    %v1197 = vrot.slane %v1196, 1
    %v1198 = vadd.f32 %v1196, %v1197
    %v1199 = vadd.f32 %v1143, %v1151
    %v1200 = vadd.f32 %v1199, %v1159
    %v1201 = vadd.f32 %v1200, %v1167
    %v1202 = vrot.slane %v1201, 4
    %v1203 = vadd.f32 %v1201, %v1202
    %v1204 = vrot.slane %v1203, 2
    %v1205 = vadd.f32 %v1203, %v1204
    %v1206 = vrot.slane %v1205, 1
    %v1207 = vadd.f32 %v1205, %v1206
    %v1208 = vadd.f32 %v1144, %v1152
    %v1209 = vadd.f32 %v1208, %v1160
    %v1210 = vadd.f32 %v1209, %v1168
    %v1211 = vrot.slane %v1210, 4
    %v1212 = vadd.f32 %v1210, %v1211
    %v1213 = vrot.slane %v1212, 2
    %v1214 = vadd.f32 %v1212, %v1213
    %v1215 = vrot.slane %v1214, 1
    %v1216 = vadd.f32 %v1214, %v1215
    %v1217 = vadd.f32 %v1145, %v1153
    %v1218 = vadd.f32 %v1217, %v1161
    %v1219 = vadd.f32 %v1218, %v1169
    %v1220 = vrot.slane %v1219, 4
    %v1221 = vadd.f32 %v1219, %v1220
    %v1222 = vrot.slane %v1221, 2
    %v1223 = vadd.f32 %v1221, %v1222
    %v1224 = vrot.slane %v1223, 1
    %v1225 = vadd.f32 %v1223, %v1224
    %v1226 = vadd.f32 %v1146, %v1154
    %v1227 = vadd.f32 %v1226, %v1162
    %v1228 = vadd.f32 %v1227, %v1170
    %v1229 = vrot.slane %v1228, 4
    %v1230 = vadd.f32 %v1228, %v1229
    %v1231 = vrot.slane %v1230, 2
    %v1232 = vadd.f32 %v1230, %v1231
    %v1233 = vrot.slane %v1232, 1
    %v1234 = vadd.f32 %v1232, %v1233
    %v1235 = vadd.f32 %v1147, %v1155
    %v1236 = vadd.f32 %v1235, %v1163
    %v1237 = vadd.f32 %v1236, %v1171
    %v1238 = vrot.slane %v1237, 4
    %v1239 = vadd.f32 %v1237, %v1238
    %v1240 = vrot.slane %v1239, 2
    %v1241 = vadd.f32 %v1239, %v1240
    %v1242 = vrot.slane %v1241, 1
    %v1243 = vadd.f32 %v1241, %v1242
    %v1244 = vmul.f32 %v1140, %v1140
    %v1245 = vmul.f32 %v1141, %v1141
    %v1246 = vmul.f32 %v1142, %v1142
    %v1247 = vmul.f32 %v1143, %v1143
    %v1248 = vmul.f32 %v1144, %v1144
    %v1249 = vmul.f32 %v1145, %v1145
    %v1250 = vmul.f32 %v1146, %v1146
    %v1251 = vmul.f32 %v1147, %v1147
    %v1252 = vmul.f32 %v1148, %v1148
    %v1253 = vmul.f32 %v1149, %v1149
    %v1254 = vmul.f32 %v1150, %v1150
    %v1255 = vmul.f32 %v1151, %v1151
    %v1256 = vmul.f32 %v1152, %v1152
    %v1257 = vmul.f32 %v1153, %v1153
    %v1258 = vmul.f32 %v1154, %v1154
    %v1259 = vmul.f32 %v1155, %v1155
    %v1260 = vmul.f32 %v1156, %v1156
    %v1261 = vmul.f32 %v1157, %v1157
    %v1262 = vmul.f32 %v1158, %v1158
    %v1263 = vmul.f32 %v1159, %v1159
    %v1264 = vmul.f32 %v1160, %v1160
    %v1265 = vmul.f32 %v1161, %v1161
    %v1266 = vmul.f32 %v1162, %v1162
    %v1267 = vmul.f32 %v1163, %v1163
    %v1268 = vmul.f32 %v1164, %v1164
    %v1269 = vmul.f32 %v1165, %v1165
    %v1270 = vmul.f32 %v1166, %v1166
    %v1271 = vmul.f32 %v1167, %v1167
    %v1272 = vmul.f32 %v1168, %v1168
    %v1273 = vmul.f32 %v1169, %v1169
    %v1274 = vmul.f32 %v1170, %v1170
    %v1275 = vmul.f32 %v1171, %v1171
    %v1276 = vadd.f32 %v1244, %v1252
    %v1277 = vadd.f32 %v1276, %v1260
    %v1278 = vadd.f32 %v1277, %v1268
    %v1279 = vrot.slane %v1278, 4
    %v1280 = vadd.f32 %v1278, %v1279
    %v1281 = vrot.slane %v1280, 2
    %v1282 = vadd.f32 %v1280, %v1281
    %v1283 = vrot.slane %v1282, 1
    %v1284 = vadd.f32 %v1282, %v1283
    %v1285 = vadd.f32 %v1245, %v1253
    %v1286 = vadd.f32 %v1285, %v1261
    %v1287 = vadd.f32 %v1286, %v1269
    %v1288 = vrot.slane %v1287, 4
    %v1289 = vadd.f32 %v1287, %v1288
    %v1290 = vrot.slane %v1289, 2
    %v1291 = vadd.f32 %v1289, %v1290
    %v1292 = vrot.slane %v1291, 1
    %v1293 = vadd.f32 %v1291, %v1292
    %v1294 = vadd.f32 %v1246, %v1254
    %v1295 = vadd.f32 %v1294, %v1262
    %v1296 = vadd.f32 %v1295, %v1270
    %v1297 = vrot.slane %v1296, 4
    %v1298 = vadd.f32 %v1296, %v1297
    %v1299 = vrot.slane %v1298, 2
    %v1300 = vadd.f32 %v1298, %v1299
    %v1301 = vrot.slane %v1300, 1
    %v1302 = vadd.f32 %v1300, %v1301
    %v1303 = vadd.f32 %v1247, %v1255
    %v1304 = vadd.f32 %v1303, %v1263
    %v1305 = vadd.f32 %v1304, %v1271
    %v1306 = vrot.slane %v1305, 4
    %v1307 = vadd.f32 %v1305, %v1306
    %v1308 = vrot.slane %v1307, 2
    %v1309 = vadd.f32 %v1307, %v1308
    %v1310 = vrot.slane %v1309, 1
    %v1311 = vadd.f32 %v1309, %v1310
    %v1312 = vadd.f32 %v1248, %v1256
    %v1313 = vadd.f32 %v1312, %v1264
    %v1314 = vadd.f32 %v1313, %v1272
    %v1315 = vrot.slane %v1314, 4
    %v1316 = vadd.f32 %v1314, %v1315
    %v1317 = vrot.slane %v1316, 2
    %v1318 = vadd.f32 %v1316, %v1317
    %v1319 = vrot.slane %v1318, 1
    %v1320 = vadd.f32 %v1318, %v1319
    %v1321 = vadd.f32 %v1249, %v1257
    %v1322 = vadd.f32 %v1321, %v1265
    %v1323 = vadd.f32 %v1322, %v1273
    %v1324 = vrot.slane %v1323, 4
    %v1325 = vadd.f32 %v1323, %v1324
    %v1326 = vrot.slane %v1325, 2
    %v1327 = vadd.f32 %v1325, %v1326
    %v1328 = vrot.slane %v1327, 1
    %v1329 = vadd.f32 %v1327, %v1328
    %v1330 = vadd.f32 %v1250, %v1258
    %v1331 = vadd.f32 %v1330, %v1266
    %v1332 = vadd.f32 %v1331, %v1274
    %v1333 = vrot.slane %v1332, 4
    %v1334 = vadd.f32 %v1332, %v1333
    %v1335 = vrot.slane %v1334, 2
    %v1336 = vadd.f32 %v1334, %v1335
    %v1337 = vrot.slane %v1336, 1
    %v1338 = vadd.f32 %v1336, %v1337
    %v1339 = vadd.f32 %v1251, %v1259
    %v1340 = vadd.f32 %v1339, %v1267
    %v1341 = vadd.f32 %v1340, %v1275
    %v1342 = vrot.slane %v1341, 4
    %v1343 = vadd.f32 %v1341, %v1342
    %v1344 = vrot.slane %v1343, 2
    %v1345 = vadd.f32 %v1343, %v1344
    %v1346 = vrot.slane %v1345, 1
    %v1347 = vadd.f32 %v1345, %v1346
    %v1348 = vand.u32 %v684, 1
    %v1349 = vand.u32 %v685, 1
    %v1350 = vand.u32 %v686, 1
    %v1351 = vand.u32 %v687, 1
    %v1352 = vand.u32 %v688, 1
    %v1353 = vand.u32 %v689, 1
    %v1354 = vand.u32 %v690, 1
    %v1355 = vand.u32 %v691, 1
    %vm1356 = vcmp.eq.s32.totalorder %v1348, 0
    %vm1357 = vcmp.eq.s32.totalorder %v1349, 0
    %vm1358 = vcmp.eq.s32.totalorder %v1350, 0
    %vm1359 = vcmp.eq.s32.totalorder %v1351, 0
    %vm1360 = vcmp.eq.s32.totalorder %v1352, 0
    %vm1361 = vcmp.eq.s32.totalorder %v1353, 0
    %vm1362 = vcmp.eq.s32.totalorder %v1354, 0
    %vm1363 = vcmp.eq.s32.totalorder %v1355, 0
    %1364 = vrot.lane.b32.xlu0 %v1180, 127
    %v1365 = vpop.permute.xlu0 %1364
    %1366 = vrot.lane.b32.xlu0 %v1189, 127
    %v1367 = vpop.permute.xlu0 %1366
    %1368 = vrot.lane.b32.xlu0 %v1198, 127
    %v1369 = vpop.permute.xlu0 %1368
    %1370 = vrot.lane.b32.xlu0 %v1207, 127
    %v1371 = vpop.permute.xlu0 %1370
    %1372 = vrot.lane.b32.xlu0 %v1216, 127
    %v1373 = vpop.permute.xlu0 %1372
    %1374 = vrot.lane.b32.xlu0 %v1225, 127
    %v1375 = vpop.permute.xlu0 %1374
    %1376 = vrot.lane.b32.xlu0 %v1234, 127
    %v1377 = vpop.permute.xlu0 %1376
    %1378 = vrot.lane.b32.xlu0 %v1243, 127
    %v1379 = vpop.permute.xlu0 %1378
    %vm1380 = vcmp.lt.s32.totalorder %v684, 127
    %v1381 = vsel %vm1380, %v1377, %v1379
    %v1382 = vsel %vm1380, %v1375, %v1377
    %v1383 = vsel %vm1380, %v1373, %v1375
    %v1384 = vsel %vm1380, %v1371, %v1373
    %v1385 = vsel %vm1380, %v1369, %v1371
    %v1386 = vsel %vm1380, %v1367, %v1369
    %v1387 = vsel %vm1380, %v1365, %v1367
    %v1388 = vsel %vm1380, %v1379, %v1365
    %1389 = vrot.lane.b32.xlu0 %v1180, 1
    %v1390 = vpop.permute.xlu0 %1389
    %1391 = vrot.lane.b32.xlu0 %v1189, 1
    %v1392 = vpop.permute.xlu0 %1391
    %1393 = vrot.lane.b32.xlu0 %v1198, 1
    %v1394 = vpop.permute.xlu0 %1393
    %1395 = vrot.lane.b32.xlu0 %v1207, 1
    %v1396 = vpop.permute.xlu0 %1395
    %1397 = vrot.lane.b32.xlu0 %v1216, 1
    %v1398 = vpop.permute.xlu0 %1397
    %1399 = vrot.lane.b32.xlu0 %v1225, 1
    %v1400 = vpop.permute.xlu0 %1399
    %1401 = vrot.lane.b32.xlu0 %v1234, 1
    %v1402 = vpop.permute.xlu0 %1401
    %1403 = vrot.lane.b32.xlu0 %v1243, 1
    %v1404 = vpop.permute.xlu0 %1403
    %vm1405 = vcmp.lt.s32.totalorder %v684, 1
    %v1406 = vsel %vm1405, %v1402, %v1404
    %v1407 = vsel %vm1405, %v1400, %v1402
    %v1408 = vsel %vm1405, %v1398, %v1400
    %v1409 = vsel %vm1405, %v1396, %v1398
    %v1410 = vsel %vm1405, %v1394, %v1396
    %v1411 = vsel %vm1405, %v1392, %v1394
    %v1412 = vsel %vm1405, %v1390, %v1392
    %v1413 = vsel %vm1405, %v1404, %v1390
    %v1414 = vsel %vm1356, %v1387, %v1413
    %v1415 = vsel %vm1357, %v1386, %v1412
    %v1416 = vsel %vm1358, %v1385, %v1411
    %v1417 = vsel %vm1359, %v1384, %v1410
    %v1418 = vsel %vm1360, %v1383, %v1409
    %v1419 = vsel %vm1361, %v1382, %v1408
    %v1420 = vsel %vm1362, %v1381, %v1407
    %v1421 = vsel %vm1363, %v1388, %v1406
    %v1422 = vadd.f32 %v1180, %v1414
    %v1423 = vadd.f32 %v1189, %v1415
    %v1424 = vadd.f32 %v1198, %v1416
    %v1425 = vadd.f32 %v1207, %v1417
    %v1426 = vadd.f32 %v1216, %v1418
    %v1427 = vadd.f32 %v1225, %v1419
    %v1428 = vadd.f32 %v1234, %v1420
    %v1429 = vadd.f32 %v1243, %v1421
    %1430 = vrot.lane.b32.xlu0 %v1284, 127
    %v1431 = vpop.permute.xlu0 %1430
    %1432 = vrot.lane.b32.xlu0 %v1293, 127
    %v1433 = vpop.permute.xlu0 %1432
    %1434 = vrot.lane.b32.xlu0 %v1302, 127
    %v1435 = vpop.permute.xlu0 %1434
    %1436 = vrot.lane.b32.xlu0 %v1311, 127
    %v1437 = vpop.permute.xlu0 %1436
    %1438 = vrot.lane.b32.xlu0 %v1320, 127
    %v1439 = vpop.permute.xlu0 %1438
    %1440 = vrot.lane.b32.xlu0 %v1329, 127
    %v1441 = vpop.permute.xlu0 %1440
    %1442 = vrot.lane.b32.xlu0 %v1338, 127
    %v1443 = vpop.permute.xlu0 %1442
    %1444 = vrot.lane.b32.xlu0 %v1347, 127
    %v1445 = vpop.permute.xlu0 %1444
    %v1446 = vsel %vm1380, %v1443, %v1445
    %v1447 = vsel %vm1380, %v1441, %v1443
    %v1448 = vsel %vm1380, %v1439, %v1441
    %v1449 = vsel %vm1380, %v1437, %v1439
    %v1450 = vsel %vm1380, %v1435, %v1437
    %v1451 = vsel %vm1380, %v1433, %v1435
    %v1452 = vsel %vm1380, %v1431, %v1433
    %v1453 = vsel %vm1380, %v1445, %v1431
    %1454 = vrot.lane.b32.xlu0 %v1284, 1
    %v1455 = vpop.permute.xlu0 %1454
    %1456 = vrot.lane.b32.xlu0 %v1293, 1
    %v1457 = vpop.permute.xlu0 %1456
    %1458 = vrot.lane.b32.xlu0 %v1302, 1
    %v1459 = vpop.permute.xlu0 %1458
    %1460 = vrot.lane.b32.xlu0 %v1311, 1
    %v1461 = vpop.permute.xlu0 %1460
    %1462 = vrot.lane.b32.xlu0 %v1320, 1
    %v1463 = vpop.permute.xlu0 %1462
    %1464 = vrot.lane.b32.xlu0 %v1329, 1
    %v1465 = vpop.permute.xlu0 %1464
    %1466 = vrot.lane.b32.xlu0 %v1338, 1
    %v1467 = vpop.permute.xlu0 %1466
    %1468 = vrot.lane.b32.xlu0 %v1347, 1
    %v1469 = vpop.permute.xlu0 %1468
    %v1470 = vsel %vm1405, %v1467, %v1469
    %v1471 = vsel %vm1405, %v1465, %v1467
    %v1472 = vsel %vm1405, %v1463, %v1465
    %v1473 = vsel %vm1405, %v1461, %v1463
    %v1474 = vsel %vm1405, %v1459, %v1461
    %v1475 = vsel %vm1405, %v1457, %v1459
    %v1476 = vsel %vm1405, %v1455, %v1457
    %v1477 = vsel %vm1405, %v1469, %v1455
    %v1478 = vsel %vm1356, %v1452, %v1477
    %v1479 = vsel %vm1357, %v1451, %v1476
    %v1480 = vsel %vm1358, %v1450, %v1475
    %v1481 = vsel %vm1359, %v1449, %v1474
    %v1482 = vsel %vm1360, %v1448, %v1473
    %v1483 = vsel %vm1361, %v1447, %v1472
    %v1484 = vsel %vm1362, %v1446, %v1471
    %v1485 = vsel %vm1363, %v1453, %v1470
    %v1486 = vadd.f32 %v1284, %v1478
    %v1487 = vadd.f32 %v1293, %v1479
    %v1488 = vadd.f32 %v1302, %v1480
    %v1489 = vadd.f32 %v1311, %v1481
    %v1490 = vadd.f32 %v1320, %v1482
    %v1491 = vadd.f32 %v1329, %v1483
    %v1492 = vadd.f32 %v1338, %v1484
    %v1493 = vadd.f32 %v1347, %v1485
    %v1494 = vand.u32 %v684, 2
    %v1495 = vand.u32 %v685, 2
    %v1496 = vand.u32 %v686, 2
    %v1497 = vand.u32 %v687, 2
    %v1498 = vand.u32 %v688, 2
    %v1499 = vand.u32 %v689, 2
    %v1500 = vand.u32 %v690, 2
    %v1501 = vand.u32 %v691, 2
    %vm1502 = vcmp.eq.s32.totalorder %v1494, 0
    %vm1503 = vcmp.eq.s32.totalorder %v1495, 0
    %vm1504 = vcmp.eq.s32.totalorder %v1496, 0
    %vm1505 = vcmp.eq.s32.totalorder %v1497, 0
    %vm1506 = vcmp.eq.s32.totalorder %v1498, 0
    %vm1507 = vcmp.eq.s32.totalorder %v1499, 0
    %vm1508 = vcmp.eq.s32.totalorder %v1500, 0
    %vm1509 = vcmp.eq.s32.totalorder %v1501, 0
    %1510 = vrot.lane.b32.xlu0 %v1422, 126
    %v1511 = vpop.permute.xlu0 %1510
    %1512 = vrot.lane.b32.xlu0 %v1423, 126
    %v1513 = vpop.permute.xlu0 %1512
    %1514 = vrot.lane.b32.xlu0 %v1424, 126
    %v1515 = vpop.permute.xlu0 %1514
    %1516 = vrot.lane.b32.xlu0 %v1425, 126
    %v1517 = vpop.permute.xlu0 %1516
    %1518 = vrot.lane.b32.xlu0 %v1426, 126
    %v1519 = vpop.permute.xlu0 %1518
    %1520 = vrot.lane.b32.xlu0 %v1427, 126
    %v1521 = vpop.permute.xlu0 %1520
    %1522 = vrot.lane.b32.xlu0 %v1428, 126
    %v1523 = vpop.permute.xlu0 %1522
    %1524 = vrot.lane.b32.xlu0 %v1429, 126
    %v1525 = vpop.permute.xlu0 %1524
    %vm1526 = vcmp.lt.s32.totalorder %v684, 126
    %v1527 = vsel %vm1526, %v1523, %v1525
    %v1528 = vsel %vm1526, %v1521, %v1523
    %v1529 = vsel %vm1526, %v1519, %v1521
    %v1530 = vsel %vm1526, %v1517, %v1519
    %v1531 = vsel %vm1526, %v1515, %v1517
    %v1532 = vsel %vm1526, %v1513, %v1515
    %v1533 = vsel %vm1526, %v1511, %v1513
    %v1534 = vsel %vm1526, %v1525, %v1511
    %1535 = vrot.lane.b32.xlu0 %v1422, 2
    %v1536 = vpop.permute.xlu0 %1535
    %1537 = vrot.lane.b32.xlu0 %v1423, 2
    %v1538 = vpop.permute.xlu0 %1537
    %1539 = vrot.lane.b32.xlu0 %v1424, 2
    %v1540 = vpop.permute.xlu0 %1539
    %1541 = vrot.lane.b32.xlu0 %v1425, 2
    %v1542 = vpop.permute.xlu0 %1541
    %1543 = vrot.lane.b32.xlu0 %v1426, 2
    %v1544 = vpop.permute.xlu0 %1543
    %1545 = vrot.lane.b32.xlu0 %v1427, 2
    %v1546 = vpop.permute.xlu0 %1545
    %1547 = vrot.lane.b32.xlu0 %v1428, 2
    %v1548 = vpop.permute.xlu0 %1547
    %1549 = vrot.lane.b32.xlu0 %v1429, 2
    %v1550 = vpop.permute.xlu0 %1549
    %vm1551 = vcmp.lt.s32.totalorder %v684, 2
    %v1552 = vsel %vm1551, %v1548, %v1550
    %v1553 = vsel %vm1551, %v1546, %v1548
    %v1554 = vsel %vm1551, %v1544, %v1546
    %v1555 = vsel %vm1551, %v1542, %v1544
    %v1556 = vsel %vm1551, %v1540, %v1542
    %v1557 = vsel %vm1551, %v1538, %v1540
    %v1558 = vsel %vm1551, %v1536, %v1538
    %v1559 = vsel %vm1551, %v1550, %v1536
    %v1560 = vsel %vm1502, %v1533, %v1559
    %v1561 = vsel %vm1503, %v1532, %v1558
    %v1562 = vsel %vm1504, %v1531, %v1557
    %v1563 = vsel %vm1505, %v1530, %v1556
    %v1564 = vsel %vm1506, %v1529, %v1555
    %v1565 = vsel %vm1507, %v1528, %v1554
    %v1566 = vsel %vm1508, %v1527, %v1553
    %v1567 = vsel %vm1509, %v1534, %v1552
    %v1568 = vadd.f32 %v1422, %v1560
    %v1569 = vadd.f32 %v1423, %v1561
    %v1570 = vadd.f32 %v1424, %v1562
    %v1571 = vadd.f32 %v1425, %v1563
    %v1572 = vadd.f32 %v1426, %v1564
    %v1573 = vadd.f32 %v1427, %v1565
    %v1574 = vadd.f32 %v1428, %v1566
    %v1575 = vadd.f32 %v1429, %v1567
    %1576 = vrot.lane.b32.xlu0 %v1486, 126
    %v1577 = vpop.permute.xlu0 %1576
    %1578 = vrot.lane.b32.xlu0 %v1487, 126
    %v1579 = vpop.permute.xlu0 %1578
    %1580 = vrot.lane.b32.xlu0 %v1488, 126
    %v1581 = vpop.permute.xlu0 %1580
    %1582 = vrot.lane.b32.xlu0 %v1489, 126
    %v1583 = vpop.permute.xlu0 %1582
    %1584 = vrot.lane.b32.xlu0 %v1490, 126
    %v1585 = vpop.permute.xlu0 %1584
    %1586 = vrot.lane.b32.xlu0 %v1491, 126
    %v1587 = vpop.permute.xlu0 %1586
    %1588 = vrot.lane.b32.xlu0 %v1492, 126
    %v1589 = vpop.permute.xlu0 %1588
    %1590 = vrot.lane.b32.xlu0 %v1493, 126
    %v1591 = vpop.permute.xlu0 %1590
    %v1592 = vsel %vm1526, %v1589, %v1591
    %v1593 = vsel %vm1526, %v1587, %v1589
    %v1594 = vsel %vm1526, %v1585, %v1587
    %v1595 = vsel %vm1526, %v1583, %v1585
    %v1596 = vsel %vm1526, %v1581, %v1583
    %v1597 = vsel %vm1526, %v1579, %v1581
    %v1598 = vsel %vm1526, %v1577, %v1579
    %v1599 = vsel %vm1526, %v1591, %v1577
    %1600 = vrot.lane.b32.xlu0 %v1486, 2
    %v1601 = vpop.permute.xlu0 %1600
    %1602 = vrot.lane.b32.xlu0 %v1487, 2
    %v1603 = vpop.permute.xlu0 %1602
    %1604 = vrot.lane.b32.xlu0 %v1488, 2
    %v1605 = vpop.permute.xlu0 %1604
    %1606 = vrot.lane.b32.xlu0 %v1489, 2
    %v1607 = vpop.permute.xlu0 %1606
    %1608 = vrot.lane.b32.xlu0 %v1490, 2
    %v1609 = vpop.permute.xlu0 %1608
    %1610 = vrot.lane.b32.xlu0 %v1491, 2
    %v1611 = vpop.permute.xlu0 %1610
    %1612 = vrot.lane.b32.xlu0 %v1492, 2
    %v1613 = vpop.permute.xlu0 %1612
    %1614 = vrot.lane.b32.xlu0 %v1493, 2
    %v1615 = vpop.permute.xlu0 %1614
    %v1616 = vsel %vm1551, %v1613, %v1615
    %v1617 = vsel %vm1551, %v1611, %v1613
    %v1618 = vsel %vm1551, %v1609, %v1611
    %v1619 = vsel %vm1551, %v1607, %v1609
    %v1620 = vsel %vm1551, %v1605, %v1607
    %v1621 = vsel %vm1551, %v1603, %v1605
    %v1622 = vsel %vm1551, %v1601, %v1603
    %v1623 = vsel %vm1551, %v1615, %v1601
    %v1624 = vsel %vm1502, %v1598, %v1623
    %v1625 = vsel %vm1503, %v1597, %v1622
    %v1626 = vsel %vm1504, %v1596, %v1621
    %v1627 = vsel %vm1505, %v1595, %v1620
    %v1628 = vsel %vm1506, %v1594, %v1619
    %v1629 = vsel %vm1507, %v1593, %v1618
    %v1630 = vsel %vm1508, %v1592, %v1617
    %v1631 = vsel %vm1509, %v1599, %v1616
    %v1632 = vadd.f32 %v1486, %v1624
    %v1633 = vadd.f32 %v1487, %v1625
    %v1634 = vadd.f32 %v1488, %v1626
    %v1635 = vadd.f32 %v1489, %v1627
    %v1636 = vadd.f32 %v1490, %v1628
    %v1637 = vadd.f32 %v1491, %v1629
    %v1638 = vadd.f32 %v1492, %v1630
    %v1639 = vadd.f32 %v1493, %v1631
    %v1640 = vmul.f32 %v1568, 0.0078125
    %v1641 = vmul.f32 %v1569, 0.0078125
    %v1642 = vmul.f32 %v1570, 0.0078125
    %v1643 = vmul.f32 %v1571, 0.0078125
    %v1644 = vmul.f32 %v1572, 0.0078125
    %v1645 = vmul.f32 %v1573, 0.0078125
    %v1646 = vmul.f32 %v1574, 0.0078125
    %v1647 = vmul.f32 %v1575, 0.0078125
    %v1648 = vmul.f32 %v1632, 0.0078125
    %v1649 = vmul.f32 %v1633, 0.0078125
    %v1650 = vmul.f32 %v1634, 0.0078125
    %v1651 = vmul.f32 %v1635, 0.0078125
    %v1652 = vmul.f32 %v1636, 0.0078125
    %v1653 = vmul.f32 %v1637, 0.0078125
    %v1654 = vmul.f32 %v1638, 0.0078125
    %v1655 = vmul.f32 %v1639, 0.0078125
    %v1656 = vmul.f32 %v1640, %v1640
    %v1657 = vmul.f32 %v1641, %v1641
    %v1658 = vmul.f32 %v1642, %v1642
    %v1659 = vmul.f32 %v1643, %v1643
    %v1660 = vmul.f32 %v1644, %v1644
    %v1661 = vmul.f32 %v1645, %v1645
    %v1662 = vmul.f32 %v1646, %v1646
    %v1663 = vmul.f32 %v1647, %v1647
    %v1664 = vsub.f32 %v1648, %v1656
    %v1665 = vsub.f32 %v1649, %v1657
    %v1666 = vsub.f32 %v1650, %v1658
    %v1667 = vsub.f32 %v1651, %v1659
    %v1668 = vsub.f32 %v1652, %v1660
    %v1669 = vsub.f32 %v1653, %v1661
    %v1670 = vsub.f32 %v1654, %v1662
    %v1671 = vsub.f32 %v1655, %v1663
    %v1672 = vmax.f32 %v1664, 0.0
    %v1673 = vmax.f32 %v1665, 0.0
    %v1674 = vmax.f32 %v1666, 0.0
    %v1675 = vmax.f32 %v1667, 0.0
    %v1676 = vmax.f32 %v1668, 0.0
    %v1677 = vmax.f32 %v1669, 0.0
    %v1678 = vmax.f32 %v1670, 0.0
    %v1679 = vmax.f32 %v1671, 0.0
    %v1680 = vadd.f32 %v1672, 1e-05
    %v1681 = vadd.f32 %v1673, 1e-05
    %v1682 = vadd.f32 %v1674, 1e-05
    %v1683 = vadd.f32 %v1675, 1e-05
    %v1684 = vadd.f32 %v1676, 1e-05
    %v1685 = vadd.f32 %v1677, 1e-05
    %v1686 = vadd.f32 %v1678, 1e-05
    %v1687 = vadd.f32 %v1679, 1e-05
    %v1688 = vrsqrt.pop %v1680
    %v1689 = vrsqrt.pop %v1681
    %v1690 = vrsqrt.pop %v1682
    %v1691 = vrsqrt.pop %v1683
    %v1692 = vrsqrt.pop %v1684
    %v1693 = vrsqrt.pop %v1685
    %v1694 = vrsqrt.pop %v1686
    %v1695 = vrsqrt.pop %v1687
    %v1704 = vrot.slane %v1688, 7
    %v1705 = vrot.slane %v1689, 7
    %v1706 = vrot.slane %v1690, 7
    %v1707 = vrot.slane %v1691, 7
    %v1708 = vrot.slane %v1692, 7
    %v1709 = vrot.slane %v1693, 7
    %v1710 = vrot.slane %v1694, 7
    %v1711 = vrot.slane %v1695, 7
    %v1720 = vmul.f32 %v667, %v1704
    %v1721 = vmul.f32 %v668, %v1705
    %v1722 = vmul.f32 %v669, %v1706
    %v1723 = vmul.f32 %v670, %v1707
    %v1724 = vmul.f32 %v671, %v1708
    %v1725 = vmul.f32 %v672, %v1709
    %v1726 = vmul.f32 %v673, %v1710
    %v1727 = vmul.f32 %v674, %v1711
    %v1736 = vrot.slane %v1720, 1
    %v1737 = vrot.slane %v1721, 1
    %v1738 = vrot.slane %v1722, 1
    %v1739 = vrot.slane %v1723, 1
    %v1740 = vrot.slane %v1724, 1
    %v1741 = vrot.slane %v1725, 1
    %v1742 = vrot.slane %v1726, 1
    %v1743 = vrot.slane %v1727, 1
    %v1752 = vmul.f32 %v1640, %v1736
    %v1753 = vmul.f32 %v1641, %v1737
    %v1754 = vmul.f32 %v1642, %v1738
    %v1755 = vmul.f32 %v1643, %v1739
    %v1756 = vmul.f32 %v1644, %v1740
    %v1757 = vmul.f32 %v1645, %v1741
    %v1758 = vmul.f32 %v1646, %v1742
    %v1759 = vmul.f32 %v1647, %v1743
    %v1768 = vrot.slane %v1752, 7
    %v1769 = vrot.slane %v1753, 7
    %v1770 = vrot.slane %v1754, 7
    %v1771 = vrot.slane %v1755, 7
    %v1772 = vrot.slane %v1756, 7
    %v1773 = vrot.slane %v1757, 7
    %v1774 = vrot.slane %v1758, 7
    %v1775 = vrot.slane %v1759, 7
    %v1784 = vsub.f32 %v675, %v1768
    %v1785 = vsub.f32 %v676, %v1769
    %v1786 = vsub.f32 %v677, %v1770
    %v1787 = vsub.f32 %v678, %v1771
    %v1788 = vsub.f32 %v679, %v1772
    %v1789 = vsub.f32 %v680, %v1773
    %v1790 = vsub.f32 %v681, %v1774
    %v1791 = vsub.f32 %v682, %v1775
    %v1792 = vlaneseq
    %v1793 = vshrl.u32 %v1792, 7
    %v1794 = vsub.s32 1, %v1793
    %v1795 = vrot.slane %v1720, %v1794
    %v1796 = vlaneseq
    %v1797 = vshrl.u32 %v1796, 7
    %v1798 = vsub.s32 1, %v1797
    %v1799 = vrot.slane %v1721, %v1798
    %v1800 = vlaneseq
    %v1801 = vshrl.u32 %v1800, 7
    %v1802 = vsub.s32 1, %v1801
    %v1803 = vrot.slane %v1722, %v1802
    %v1804 = vlaneseq
    %v1805 = vshrl.u32 %v1804, 7
    %v1806 = vsub.s32 1, %v1805
    %v1807 = vrot.slane %v1723, %v1806
    %v1808 = vlaneseq
    %v1809 = vshrl.u32 %v1808, 7
    %v1810 = vsub.s32 1, %v1809
    %v1811 = vrot.slane %v1724, %v1810
    %v1812 = vlaneseq
    %v1813 = vshrl.u32 %v1812, 7
    %v1814 = vsub.s32 1, %v1813
    %v1815 = vrot.slane %v1725, %v1814
    %v1816 = vlaneseq
    %v1817 = vshrl.u32 %v1816, 7
    %v1818 = vsub.s32 1, %v1817
    %v1819 = vrot.slane %v1726, %v1818
    %v1820 = vlaneseq
    %v1821 = vshrl.u32 %v1820, 7
    %v1822 = vsub.s32 1, %v1821
    %v1823 = vrot.slane %v1727, %v1822
    %v1824 = vmul.f32 %v1140, %v1795
    %v1825 = vmul.f32 %v1141, %v1799
    %v1826 = vmul.f32 %v1142, %v1803
    %v1827 = vmul.f32 %v1143, %v1807
    %v1828 = vmul.f32 %v1144, %v1811
    %v1829 = vmul.f32 %v1145, %v1815
    %v1830 = vmul.f32 %v1146, %v1819
    %v1831 = vmul.f32 %v1147, %v1823
    %v1832 = vmul.f32 %v1148, %v1795
    %v1833 = vmul.f32 %v1149, %v1799
    %v1834 = vmul.f32 %v1150, %v1803
    %v1835 = vmul.f32 %v1151, %v1807
    %v1836 = vmul.f32 %v1152, %v1811
    %v1837 = vmul.f32 %v1153, %v1815
    %v1838 = vmul.f32 %v1154, %v1819
    %v1839 = vmul.f32 %v1155, %v1823
    %v1840 = vmul.f32 %v1156, %v1795
    %v1841 = vmul.f32 %v1157, %v1799
    %v1842 = vmul.f32 %v1158, %v1803
    %v1843 = vmul.f32 %v1159, %v1807
    %v1844 = vmul.f32 %v1160, %v1811
    %v1845 = vmul.f32 %v1161, %v1815
    %v1846 = vmul.f32 %v1162, %v1819
    %v1847 = vmul.f32 %v1163, %v1823
    %v1848 = vmul.f32 %v1164, %v1795
    %v1849 = vmul.f32 %v1165, %v1799
    %v1850 = vmul.f32 %v1166, %v1803
    %v1851 = vmul.f32 %v1167, %v1807
    %v1852 = vmul.f32 %v1168, %v1811
    %v1853 = vmul.f32 %v1169, %v1815
    %v1854 = vmul.f32 %v1170, %v1819
    %v1855 = vmul.f32 %v1171, %v1823
    %v1856 = vlaneseq
    %v1857 = vshrl.u32 %v1856, 7
    %v1858 = vsub.s32 1, %v1857
    %v1859 = vrot.slane %v1784, %v1858
    %v1860 = vlaneseq
    %v1861 = vshrl.u32 %v1860, 7
    %v1862 = vsub.s32 1, %v1861
    %v1863 = vrot.slane %v1785, %v1862
    %v1864 = vlaneseq
    %v1865 = vshrl.u32 %v1864, 7
    %v1866 = vsub.s32 1, %v1865
    %v1867 = vrot.slane %v1786, %v1866
    %v1868 = vlaneseq
    %v1869 = vshrl.u32 %v1868, 7
    %v1870 = vsub.s32 1, %v1869
    %v1871 = vrot.slane %v1787, %v1870
    %v1872 = vlaneseq
    %v1873 = vshrl.u32 %v1872, 7
    %v1874 = vsub.s32 1, %v1873
    %v1875 = vrot.slane %v1788, %v1874
    %v1876 = vlaneseq
    %v1877 = vshrl.u32 %v1876, 7
    %v1878 = vsub.s32 1, %v1877
    %v1879 = vrot.slane %v1789, %v1878
    %v1880 = vlaneseq
    %v1881 = vshrl.u32 %v1880, 7
    %v1882 = vsub.s32 1, %v1881
    %v1883 = vrot.slane %v1790, %v1882
    %v1884 = vlaneseq
    %v1885 = vshrl.u32 %v1884, 7
    %v1886 = vsub.s32 1, %v1885
    %v1887 = vrot.slane %v1791, %v1886
    %v1888 = vadd.f32 %v1824, %v1859
    %v1889 = vadd.f32 %v1825, %v1863
    %v1890 = vadd.f32 %v1826, %v1867
    %v1891 = vadd.f32 %v1827, %v1871
    %v1892 = vadd.f32 %v1828, %v1875
    %v1893 = vadd.f32 %v1829, %v1879
    %v1894 = vadd.f32 %v1830, %v1883
    %v1895 = vadd.f32 %v1831, %v1887
    %v1896 = vadd.f32 %v1832, %v1859
    %v1897 = vadd.f32 %v1833, %v1863
    %v1898 = vadd.f32 %v1834, %v1867
    %v1899 = vadd.f32 %v1835, %v1871
    %v1900 = vadd.f32 %v1836, %v1875
    %v1901 = vadd.f32 %v1837, %v1879
    %v1902 = vadd.f32 %v1838, %v1883
    %v1903 = vadd.f32 %v1839, %v1887
    %v1904 = vadd.f32 %v1840, %v1859
    %v1905 = vadd.f32 %v1841, %v1863
    %v1906 = vadd.f32 %v1842, %v1867
    %v1907 = vadd.f32 %v1843, %v1871
    %v1908 = vadd.f32 %v1844, %v1875
    %v1909 = vadd.f32 %v1845, %v1879
    %v1910 = vadd.f32 %v1846, %v1883
    %v1911 = vadd.f32 %v1847, %v1887
    %v1912 = vadd.f32 %v1848, %v1859
    %v1913 = vadd.f32 %v1849, %v1863
    %v1914 = vadd.f32 %v1850, %v1867
    %v1915 = vadd.f32 %v1851, %v1871
    %v1916 = vadd.f32 %v1852, %v1875
    %v1917 = vadd.f32 %v1853, %v1879
    %v1918 = vadd.f32 %v1854, %v1883
    %v1919 = vadd.f32 %v1855, %v1887
    %vm1920 = vcmp.ge.f32.partialorder %v1888, 0.0
    %vm1921 = vcmp.ge.f32.partialorder %v1889, 0.0
    %vm1922 = vcmp.ge.f32.partialorder %v1890, 0.0
    %vm1923 = vcmp.ge.f32.partialorder %v1891, 0.0
    %vm1924 = vcmp.ge.f32.partialorder %v1892, 0.0
    %vm1925 = vcmp.ge.f32.partialorder %v1893, 0.0
    %vm1926 = vcmp.ge.f32.partialorder %v1894, 0.0
    %vm1927 = vcmp.ge.f32.partialorder %v1895, 0.0
    %vm1928 = vcmp.ge.f32.partialorder %v1896, 0.0
    %vm1929 = vcmp.ge.f32.partialorder %v1897, 0.0
    %vm1930 = vcmp.ge.f32.partialorder %v1898, 0.0
    %vm1931 = vcmp.ge.f32.partialorder %v1899, 0.0
    %vm1932 = vcmp.ge.f32.partialorder %v1900, 0.0
    %vm1933 = vcmp.ge.f32.partialorder %v1901, 0.0
    %vm1934 = vcmp.ge.f32.partialorder %v1902, 0.0
    %vm1935 = vcmp.ge.f32.partialorder %v1903, 0.0
    %vm1936 = vcmp.ge.f32.partialorder %v1904, 0.0
    %vm1937 = vcmp.ge.f32.partialorder %v1905, 0.0
    %vm1938 = vcmp.ge.f32.partialorder %v1906, 0.0
    %vm1939 = vcmp.ge.f32.partialorder %v1907, 0.0
    %vm1940 = vcmp.ge.f32.partialorder %v1908, 0.0
    %vm1941 = vcmp.ge.f32.partialorder %v1909, 0.0
    %vm1942 = vcmp.ge.f32.partialorder %v1910, 0.0
    %vm1943 = vcmp.ge.f32.partialorder %v1911, 0.0
    %vm1944 = vcmp.ge.f32.partialorder %v1912, 0.0
    %vm1945 = vcmp.ge.f32.partialorder %v1913, 0.0
    %vm1946 = vcmp.ge.f32.partialorder %v1914, 0.0
    %vm1947 = vcmp.ge.f32.partialorder %v1915, 0.0
    %vm1948 = vcmp.ge.f32.partialorder %v1916, 0.0
    %vm1949 = vcmp.ge.f32.partialorder %v1917, 0.0
    %vm1950 = vcmp.ge.f32.partialorder %v1918, 0.0
    %vm1951 = vcmp.ge.f32.partialorder %v1919, 0.0
    %v1952 = vmul.f32 %v1888, 0.01
    %v1953 = vmul.f32 %v1889, 0.01
    %v1954 = vmul.f32 %v1890, 0.01
    %v1955 = vmul.f32 %v1891, 0.01
    %v1956 = vmul.f32 %v1892, 0.01
    %v1957 = vmul.f32 %v1893, 0.01
    %v1958 = vmul.f32 %v1894, 0.01
    %v1959 = vmul.f32 %v1895, 0.01
    %v1960 = vmul.f32 %v1896, 0.01
    %v1961 = vmul.f32 %v1897, 0.01
    %v1962 = vmul.f32 %v1898, 0.01
    %v1963 = vmul.f32 %v1899, 0.01
    %v1964 = vmul.f32 %v1900, 0.01
    %v1965 = vmul.f32 %v1901, 0.01
    %v1966 = vmul.f32 %v1902, 0.01
    %v1967 = vmul.f32 %v1903, 0.01
    %v1968 = vmul.f32 %v1904, 0.01
    %v1969 = vmul.f32 %v1905, 0.01
    %v1970 = vmul.f32 %v1906, 0.01
    %v1971 = vmul.f32 %v1907, 0.01
    %v1972 = vmul.f32 %v1908, 0.01
    %v1973 = vmul.f32 %v1909, 0.01
    %v1974 = vmul.f32 %v1910, 0.01
    %v1975 = vmul.f32 %v1911, 0.01
    %v1976 = vmul.f32 %v1912, 0.01
    %v1977 = vmul.f32 %v1913, 0.01
    %v1978 = vmul.f32 %v1914, 0.01
    %v1979 = vmul.f32 %v1915, 0.01
    %v1980 = vmul.f32 %v1916, 0.01
    %v1981 = vmul.f32 %v1917, 0.01
    %v1982 = vmul.f32 %v1918, 0.01
    %v1983 = vmul.f32 %v1919, 0.01
    %v1984 = vsel %vm1920, %v1888, %v1952
    %v1985 = vsel %vm1921, %v1889, %v1953
    %v1986 = vsel %vm1922, %v1890, %v1954
    %v1987 = vsel %vm1923, %v1891, %v1955
    %v1988 = vsel %vm1924, %v1892, %v1956
    %v1989 = vsel %vm1925, %v1893, %v1957
    %v1990 = vsel %vm1926, %v1894, %v1958
    %v1991 = vsel %vm1927, %v1895, %v1959
    %v1992 = vsel %vm1928, %v1896, %v1960
    %v1993 = vsel %vm1929, %v1897, %v1961
    %v1994 = vsel %vm1930, %v1898, %v1962
    %v1995 = vsel %vm1931, %v1899, %v1963
    %v1996 = vsel %vm1932, %v1900, %v1964
    %v1997 = vsel %vm1933, %v1901, %v1965
    %v1998 = vsel %vm1934, %v1902, %v1966
    %v1999 = vsel %vm1935, %v1903, %v1967
    %v2000 = vsel %vm1936, %v1904, %v1968
    %v2001 = vsel %vm1937, %v1905, %v1969
    %v2002 = vsel %vm1938, %v1906, %v1970
    %v2003 = vsel %vm1939, %v1907, %v1971
    %v2004 = vsel %vm1940, %v1908, %v1972
    %v2005 = vsel %vm1941, %v1909, %v1973
    %v2006 = vsel %vm1942, %v1910, %v1974
    %v2007 = vsel %vm1943, %v1911, %v1975
    %v2008 = vsel %vm1944, %v1912, %v1976
    %v2009 = vsel %vm1945, %v1913, %v1977
    %v2010 = vsel %vm1946, %v1914, %v1978
    %v2011 = vsel %vm1947, %v1915, %v1979
    %v2012 = vsel %vm1948, %v1916, %v1980
    %v2013 = vsel %vm1949, %v1917, %v1981
    %v2014 = vsel %vm1950, %v1918, %v1982
    %v2015 = vsel %vm1951, %v1919, %v1983
    %v2016 = vadd.f32 %v1984, %v1992
    %v2017 = vadd.f32 %v2016, %v2000
    %v2018 = vadd.f32 %v2017, %v2008
    %v2019 = vrot.slane %v2018, 4
    %v2020 = vadd.f32 %v2018, %v2019
    %v2021 = vrot.slane %v2020, 2
    %v2022 = vadd.f32 %v2020, %v2021
    %v2023 = vrot.slane %v2022, 1
    %v2024 = vadd.f32 %v2022, %v2023
    %v2025 = vadd.f32 %v1985, %v1993
    %v2026 = vadd.f32 %v2025, %v2001
    %v2027 = vadd.f32 %v2026, %v2009
    %v2028 = vrot.slane %v2027, 4
    %v2029 = vadd.f32 %v2027, %v2028
    %v2030 = vrot.slane %v2029, 2
    %v2031 = vadd.f32 %v2029, %v2030
    %v2032 = vrot.slane %v2031, 1
    %v2033 = vadd.f32 %v2031, %v2032
    %v2034 = vadd.f32 %v1986, %v1994
    %v2035 = vadd.f32 %v2034, %v2002
    %v2036 = vadd.f32 %v2035, %v2010
    %v2037 = vrot.slane %v2036, 4
    %v2038 = vadd.f32 %v2036, %v2037
    %v2039 = vrot.slane %v2038, 2
    %v2040 = vadd.f32 %v2038, %v2039
    %v2041 = vrot.slane %v2040, 1
    %v2042 = vadd.f32 %v2040, %v2041
    %v2043 = vadd.f32 %v1987, %v1995
    %v2044 = vadd.f32 %v2043, %v2003
    %v2045 = vadd.f32 %v2044, %v2011
    %v2046 = vrot.slane %v2045, 4
    %v2047 = vadd.f32 %v2045, %v2046
    %v2048 = vrot.slane %v2047, 2
    %v2049 = vadd.f32 %v2047, %v2048
    %v2050 = vrot.slane %v2049, 1
    %v2051 = vadd.f32 %v2049, %v2050
    %v2052 = vadd.f32 %v1988, %v1996
    %v2053 = vadd.f32 %v2052, %v2004
    %v2054 = vadd.f32 %v2053, %v2012
    %v2055 = vrot.slane %v2054, 4
    %v2056 = vadd.f32 %v2054, %v2055
    %v2057 = vrot.slane %v2056, 2
    %v2058 = vadd.f32 %v2056, %v2057
    %v2059 = vrot.slane %v2058, 1
    %v2060 = vadd.f32 %v2058, %v2059
    %v2061 = vadd.f32 %v1989, %v1997
    %v2062 = vadd.f32 %v2061, %v2005
    %v2063 = vadd.f32 %v2062, %v2013
    %v2064 = vrot.slane %v2063, 4
    %v2065 = vadd.f32 %v2063, %v2064
    %v2066 = vrot.slane %v2065, 2
    %v2067 = vadd.f32 %v2065, %v2066
    %v2068 = vrot.slane %v2067, 1
    %v2069 = vadd.f32 %v2067, %v2068
    %v2070 = vadd.f32 %v1990, %v1998
    %v2071 = vadd.f32 %v2070, %v2006
    %v2072 = vadd.f32 %v2071, %v2014
    %v2073 = vrot.slane %v2072, 4
    %v2074 = vadd.f32 %v2072, %v2073
    %v2075 = vrot.slane %v2074, 2
    %v2076 = vadd.f32 %v2074, %v2075
    %v2077 = vrot.slane %v2076, 1
    %v2078 = vadd.f32 %v2076, %v2077
    %v2079 = vadd.f32 %v1991, %v1999
    %v2080 = vadd.f32 %v2079, %v2007
    %v2081 = vadd.f32 %v2080, %v2015
    %v2082 = vrot.slane %v2081, 4
    %v2083 = vadd.f32 %v2081, %v2082
    %v2084 = vrot.slane %v2083, 2
    %v2085 = vadd.f32 %v2083, %v2084
    %v2086 = vrot.slane %v2085, 1
    %v2087 = vadd.f32 %v2085, %v2086
    %v2088 = vmul.f32 %v1984, %v1984
    %v2089 = vmul.f32 %v1985, %v1985
    %v2090 = vmul.f32 %v1986, %v1986
    %v2091 = vmul.f32 %v1987, %v1987
    %v2092 = vmul.f32 %v1988, %v1988
    %v2093 = vmul.f32 %v1989, %v1989
    %v2094 = vmul.f32 %v1990, %v1990
    %v2095 = vmul.f32 %v1991, %v1991
    %v2096 = vmul.f32 %v1992, %v1992
    %v2097 = vmul.f32 %v1993, %v1993
    %v2098 = vmul.f32 %v1994, %v1994
    %v2099 = vmul.f32 %v1995, %v1995
    %v2100 = vmul.f32 %v1996, %v1996
    %v2101 = vmul.f32 %v1997, %v1997
    %v2102 = vmul.f32 %v1998, %v1998
    %v2103 = vmul.f32 %v1999, %v1999
    %v2104 = vmul.f32 %v2000, %v2000
    %v2105 = vmul.f32 %v2001, %v2001
    %v2106 = vmul.f32 %v2002, %v2002
    %v2107 = vmul.f32 %v2003, %v2003
    %v2108 = vmul.f32 %v2004, %v2004
    %v2109 = vmul.f32 %v2005, %v2005
    %v2110 = vmul.f32 %v2006, %v2006
    %v2111 = vmul.f32 %v2007, %v2007
    %v2112 = vmul.f32 %v2008, %v2008
    %v2113 = vmul.f32 %v2009, %v2009
    %v2114 = vmul.f32 %v2010, %v2010
    %v2115 = vmul.f32 %v2011, %v2011
    %v2116 = vmul.f32 %v2012, %v2012
    %v2117 = vmul.f32 %v2013, %v2013
    %v2118 = vmul.f32 %v2014, %v2014
    %v2119 = vmul.f32 %v2015, %v2015
    %v2120 = vadd.f32 %v2088, %v2096
    %v2121 = vadd.f32 %v2120, %v2104
    %v2122 = vadd.f32 %v2121, %v2112
    %v2123 = vrot.slane %v2122, 4
    %v2124 = vadd.f32 %v2122, %v2123
    %v2125 = vrot.slane %v2124, 2
    %v2126 = vadd.f32 %v2124, %v2125
    %v2127 = vrot.slane %v2126, 1
    %v2128 = vadd.f32 %v2126, %v2127
    %v2129 = vadd.f32 %v2089, %v2097
    %v2130 = vadd.f32 %v2129, %v2105
    %v2131 = vadd.f32 %v2130, %v2113
    %v2132 = vrot.slane %v2131, 4
    %v2133 = vadd.f32 %v2131, %v2132
    %v2134 = vrot.slane %v2133, 2
    %v2135 = vadd.f32 %v2133, %v2134
    %v2136 = vrot.slane %v2135, 1
    %v2137 = vadd.f32 %v2135, %v2136
    %v2138 = vadd.f32 %v2090, %v2098
    %v2139 = vadd.f32 %v2138, %v2106
    %v2140 = vadd.f32 %v2139, %v2114
    %v2141 = vrot.slane %v2140, 4
    %v2142 = vadd.f32 %v2140, %v2141
    %v2143 = vrot.slane %v2142, 2
    %v2144 = vadd.f32 %v2142, %v2143
    %v2145 = vrot.slane %v2144, 1
    %v2146 = vadd.f32 %v2144, %v2145
    %v2147 = vadd.f32 %v2091, %v2099
    %v2148 = vadd.f32 %v2147, %v2107
    %v2149 = vadd.f32 %v2148, %v2115
    %v2150 = vrot.slane %v2149, 4
    %v2151 = vadd.f32 %v2149, %v2150
    %v2152 = vrot.slane %v2151, 2
    %v2153 = vadd.f32 %v2151, %v2152
    %v2154 = vrot.slane %v2153, 1
    %v2155 = vadd.f32 %v2153, %v2154
    %v2156 = vadd.f32 %v2092, %v2100
    %v2157 = vadd.f32 %v2156, %v2108
    %v2158 = vadd.f32 %v2157, %v2116
    %v2159 = vrot.slane %v2158, 4
    %v2160 = vadd.f32 %v2158, %v2159
    %v2161 = vrot.slane %v2160, 2
    %v2162 = vadd.f32 %v2160, %v2161
    %v2163 = vrot.slane %v2162, 1
    %v2164 = vadd.f32 %v2162, %v2163
    %v2165 = vadd.f32 %v2093, %v2101
    %v2166 = vadd.f32 %v2165, %v2109
    %v2167 = vadd.f32 %v2166, %v2117
    %v2168 = vrot.slane %v2167, 4
    %v2169 = vadd.f32 %v2167, %v2168
    %v2170 = vrot.slane %v2169, 2
    %v2171 = vadd.f32 %v2169, %v2170
    %v2172 = vrot.slane %v2171, 1
    %v2173 = vadd.f32 %v2171, %v2172
    %v2174 = vadd.f32 %v2094, %v2102
    %v2175 = vadd.f32 %v2174, %v2110
    %v2176 = vadd.f32 %v2175, %v2118
    %v2177 = vrot.slane %v2176, 4
    %v2178 = vadd.f32 %v2176, %v2177
    %v2179 = vrot.slane %v2178, 2
    %v2180 = vadd.f32 %v2178, %v2179
    %v2181 = vrot.slane %v2180, 1
    %v2182 = vadd.f32 %v2180, %v2181
    %v2183 = vadd.f32 %v2095, %v2103
    %v2184 = vadd.f32 %v2183, %v2111
    %v2185 = vadd.f32 %v2184, %v2119
    %v2186 = vrot.slane %v2185, 4
    %v2187 = vadd.f32 %v2185, %v2186
    %v2188 = vrot.slane %v2187, 2
    %v2189 = vadd.f32 %v2187, %v2188
    %v2190 = vrot.slane %v2189, 1
    %v2191 = vadd.f32 %v2189, %v2190
    %2192 = vrot.lane.b32.xlu0 %v2024, 127
    %v2193 = vpop.permute.xlu0 %2192
    %2194 = vrot.lane.b32.xlu0 %v2033, 127
    %v2195 = vpop.permute.xlu0 %2194
    %2196 = vrot.lane.b32.xlu0 %v2042, 127
    %v2197 = vpop.permute.xlu0 %2196
    %2198 = vrot.lane.b32.xlu0 %v2051, 127
    %v2199 = vpop.permute.xlu0 %2198
    %2200 = vrot.lane.b32.xlu0 %v2060, 127
    %v2201 = vpop.permute.xlu0 %2200
    %2202 = vrot.lane.b32.xlu0 %v2069, 127
    %v2203 = vpop.permute.xlu0 %2202
    %2204 = vrot.lane.b32.xlu0 %v2078, 127
    %v2205 = vpop.permute.xlu0 %2204
    %2206 = vrot.lane.b32.xlu0 %v2087, 127
    %v2207 = vpop.permute.xlu0 %2206
    %v2208 = vsel %vm1380, %v2205, %v2207
    %v2209 = vsel %vm1380, %v2203, %v2205
    %v2210 = vsel %vm1380, %v2201, %v2203
    %v2211 = vsel %vm1380, %v2199, %v2201
    %v2212 = vsel %vm1380, %v2197, %v2199
    %v2213 = vsel %vm1380, %v2195, %v2197
    %v2214 = vsel %vm1380, %v2193, %v2195
    %v2215 = vsel %vm1380, %v2207, %v2193
    %2216 = vrot.lane.b32.xlu0 %v2024, 1
    %v2217 = vpop.permute.xlu0 %2216
    %2218 = vrot.lane.b32.xlu0 %v2033, 1
    %v2219 = vpop.permute.xlu0 %2218
    %2220 = vrot.lane.b32.xlu0 %v2042, 1
    %v2221 = vpop.permute.xlu0 %2220
    %2222 = vrot.lane.b32.xlu0 %v2051, 1
    %v2223 = vpop.permute.xlu0 %2222
    %2224 = vrot.lane.b32.xlu0 %v2060, 1
    %v2225 = vpop.permute.xlu0 %2224
    %2226 = vrot.lane.b32.xlu0 %v2069, 1
    %v2227 = vpop.permute.xlu0 %2226
    %2228 = vrot.lane.b32.xlu0 %v2078, 1
    %v2229 = vpop.permute.xlu0 %2228
    %2230 = vrot.lane.b32.xlu0 %v2087, 1
    %v2231 = vpop.permute.xlu0 %2230
    %v2232 = vsel %vm1405, %v2229, %v2231
    %v2233 = vsel %vm1405, %v2227, %v2229
    %v2234 = vsel %vm1405, %v2225, %v2227
    %v2235 = vsel %vm1405, %v2223, %v2225
    %v2236 = vsel %vm1405, %v2221, %v2223
    %v2237 = vsel %vm1405, %v2219, %v2221
    %v2238 = vsel %vm1405, %v2217, %v2219
    %v2239 = vsel %vm1405, %v2231, %v2217
    %v2240 = vsel %vm1356, %v2214, %v2239
    %v2241 = vsel %vm1357, %v2213, %v2238
    %v2242 = vsel %vm1358, %v2212, %v2237
    %v2243 = vsel %vm1359, %v2211, %v2236
    %v2244 = vsel %vm1360, %v2210, %v2235
    %v2245 = vsel %vm1361, %v2209, %v2234
    %v2246 = vsel %vm1362, %v2208, %v2233
    %v2247 = vsel %vm1363, %v2215, %v2232
    %v2248 = vadd.f32 %v2024, %v2240
    %v2249 = vadd.f32 %v2033, %v2241
    %v2250 = vadd.f32 %v2042, %v2242
    %v2251 = vadd.f32 %v2051, %v2243
    %v2252 = vadd.f32 %v2060, %v2244
    %v2253 = vadd.f32 %v2069, %v2245
    %v2254 = vadd.f32 %v2078, %v2246
    %v2255 = vadd.f32 %v2087, %v2247
    %2256 = vrot.lane.b32.xlu0 %v2128, 127
    %v2257 = vpop.permute.xlu0 %2256
    %2258 = vrot.lane.b32.xlu0 %v2137, 127
    %v2259 = vpop.permute.xlu0 %2258
    %2260 = vrot.lane.b32.xlu0 %v2146, 127
    %v2261 = vpop.permute.xlu0 %2260
    %2262 = vrot.lane.b32.xlu0 %v2155, 127
    %v2263 = vpop.permute.xlu0 %2262
    %2264 = vrot.lane.b32.xlu0 %v2164, 127
    %v2265 = vpop.permute.xlu0 %2264
    %2266 = vrot.lane.b32.xlu0 %v2173, 127
    %v2267 = vpop.permute.xlu0 %2266
    %2268 = vrot.lane.b32.xlu0 %v2182, 127
    %v2269 = vpop.permute.xlu0 %2268
    %2270 = vrot.lane.b32.xlu0 %v2191, 127
    %v2271 = vpop.permute.xlu0 %2270
    %v2272 = vsel %vm1380, %v2269, %v2271
    %v2273 = vsel %vm1380, %v2267, %v2269
    %v2274 = vsel %vm1380, %v2265, %v2267
    %v2275 = vsel %vm1380, %v2263, %v2265
    %v2276 = vsel %vm1380, %v2261, %v2263
    %v2277 = vsel %vm1380, %v2259, %v2261
    %v2278 = vsel %vm1380, %v2257, %v2259
    %v2279 = vsel %vm1380, %v2271, %v2257
    %2280 = vrot.lane.b32.xlu0 %v2128, 1
    %v2281 = vpop.permute.xlu0 %2280
    %2282 = vrot.lane.b32.xlu0 %v2137, 1
    %v2283 = vpop.permute.xlu0 %2282
    %2284 = vrot.lane.b32.xlu0 %v2146, 1
    %v2285 = vpop.permute.xlu0 %2284
    %2286 = vrot.lane.b32.xlu0 %v2155, 1
    %v2287 = vpop.permute.xlu0 %2286
    %2288 = vrot.lane.b32.xlu0 %v2164, 1
    %v2289 = vpop.permute.xlu0 %2288
    %2290 = vrot.lane.b32.xlu0 %v2173, 1
    %v2291 = vpop.permute.xlu0 %2290
    %2292 = vrot.lane.b32.xlu0 %v2182, 1
    %v2293 = vpop.permute.xlu0 %2292
    %2294 = vrot.lane.b32.xlu0 %v2191, 1
    %v2295 = vpop.permute.xlu0 %2294
    %v2296 = vsel %vm1405, %v2293, %v2295
    %v2297 = vsel %vm1405, %v2291, %v2293
    %v2298 = vsel %vm1405, %v2289, %v2291
    %v2299 = vsel %vm1405, %v2287, %v2289
    %v2300 = vsel %vm1405, %v2285, %v2287
    %v2301 = vsel %vm1405, %v2283, %v2285
    %v2302 = vsel %vm1405, %v2281, %v2283
    %v2303 = vsel %vm1405, %v2295, %v2281
    %v2304 = vsel %vm1356, %v2278, %v2303
    %v2305 = vsel %vm1357, %v2277, %v2302
    %v2306 = vsel %vm1358, %v2276, %v2301
    %v2307 = vsel %vm1359, %v2275, %v2300
    %v2308 = vsel %vm1360, %v2274, %v2299
    %v2309 = vsel %vm1361, %v2273, %v2298
    %v2310 = vsel %vm1362, %v2272, %v2297
    %v2311 = vsel %vm1363, %v2279, %v2296
    %v2312 = vadd.f32 %v2128, %v2304
    %v2313 = vadd.f32 %v2137, %v2305
    %v2314 = vadd.f32 %v2146, %v2306
    %v2315 = vadd.f32 %v2155, %v2307
    %v2316 = vadd.f32 %v2164, %v2308
    %v2317 = vadd.f32 %v2173, %v2309
    %v2318 = vadd.f32 %v2182, %v2310
    %v2319 = vadd.f32 %v2191, %v2311
    %2320 = vrot.lane.b32.xlu0 %v2248, 126
    %v2321 = vpop.permute.xlu0 %2320
    %2322 = vrot.lane.b32.xlu0 %v2249, 126
    %v2323 = vpop.permute.xlu0 %2322
    %2324 = vrot.lane.b32.xlu0 %v2250, 126
    %v2325 = vpop.permute.xlu0 %2324
    %2326 = vrot.lane.b32.xlu0 %v2251, 126
    %v2327 = vpop.permute.xlu0 %2326
    %2328 = vrot.lane.b32.xlu0 %v2252, 126
    %v2329 = vpop.permute.xlu0 %2328
    %2330 = vrot.lane.b32.xlu0 %v2253, 126
    %v2331 = vpop.permute.xlu0 %2330
    %2332 = vrot.lane.b32.xlu0 %v2254, 126
    %v2333 = vpop.permute.xlu0 %2332
    %2334 = vrot.lane.b32.xlu0 %v2255, 126
    %v2335 = vpop.permute.xlu0 %2334
    %v2336 = vsel %vm1526, %v2333, %v2335
    %v2337 = vsel %vm1526, %v2331, %v2333
    %v2338 = vsel %vm1526, %v2329, %v2331
    %v2339 = vsel %vm1526, %v2327, %v2329
    %v2340 = vsel %vm1526, %v2325, %v2327
    %v2341 = vsel %vm1526, %v2323, %v2325
    %v2342 = vsel %vm1526, %v2321, %v2323
    %v2343 = vsel %vm1526, %v2335, %v2321
    %2344 = vrot.lane.b32.xlu0 %v2248, 2
    %v2345 = vpop.permute.xlu0 %2344
    %2346 = vrot.lane.b32.xlu0 %v2249, 2
    %v2347 = vpop.permute.xlu0 %2346
    %2348 = vrot.lane.b32.xlu0 %v2250, 2
    %v2349 = vpop.permute.xlu0 %2348
    %2350 = vrot.lane.b32.xlu0 %v2251, 2
    %v2351 = vpop.permute.xlu0 %2350
    %2352 = vrot.lane.b32.xlu0 %v2252, 2
    %v2353 = vpop.permute.xlu0 %2352
    %2354 = vrot.lane.b32.xlu0 %v2253, 2
    %v2355 = vpop.permute.xlu0 %2354
    %2356 = vrot.lane.b32.xlu0 %v2254, 2
    %v2357 = vpop.permute.xlu0 %2356
    %2358 = vrot.lane.b32.xlu0 %v2255, 2
    %v2359 = vpop.permute.xlu0 %2358
    %v2360 = vsel %vm1551, %v2357, %v2359
    %v2361 = vsel %vm1551, %v2355, %v2357
    %v2362 = vsel %vm1551, %v2353, %v2355
    %v2363 = vsel %vm1551, %v2351, %v2353
    %v2364 = vsel %vm1551, %v2349, %v2351
    %v2365 = vsel %vm1551, %v2347, %v2349
    %v2366 = vsel %vm1551, %v2345, %v2347
    %v2367 = vsel %vm1551, %v2359, %v2345
    %v2368 = vsel %vm1502, %v2342, %v2367
    %v2369 = vsel %vm1503, %v2341, %v2366
    %v2370 = vsel %vm1504, %v2340, %v2365
    %v2371 = vsel %vm1505, %v2339, %v2364
    %v2372 = vsel %vm1506, %v2338, %v2363
    %v2373 = vsel %vm1507, %v2337, %v2362
    %v2374 = vsel %vm1508, %v2336, %v2361
    %v2375 = vsel %vm1509, %v2343, %v2360
    %v2376 = vadd.f32 %v2248, %v2368
    %v2377 = vadd.f32 %v2249, %v2369
    %v2378 = vadd.f32 %v2250, %v2370
    %v2379 = vadd.f32 %v2251, %v2371
    %v2380 = vadd.f32 %v2252, %v2372
    %v2381 = vadd.f32 %v2253, %v2373
    %v2382 = vadd.f32 %v2254, %v2374
    %v2383 = vadd.f32 %v2255, %v2375
    %2384 = vrot.lane.b32.xlu0 %v2312, 126
    %v2385 = vpop.permute.xlu0 %2384
    %2386 = vrot.lane.b32.xlu0 %v2313, 126
    %v2387 = vpop.permute.xlu0 %2386
    %2388 = vrot.lane.b32.xlu0 %v2314, 126
    %v2389 = vpop.permute.xlu0 %2388
    %2390 = vrot.lane.b32.xlu0 %v2315, 126
    %v2391 = vpop.permute.xlu0 %2390
    %2392 = vrot.lane.b32.xlu0 %v2316, 126
    %v2393 = vpop.permute.xlu0 %2392
    %2394 = vrot.lane.b32.xlu0 %v2317, 126
    %v2395 = vpop.permute.xlu0 %2394
    %2396 = vrot.lane.b32.xlu0 %v2318, 126
    %v2397 = vpop.permute.xlu0 %2396
    %2398 = vrot.lane.b32.xlu0 %v2319, 126
    %v2399 = vpop.permute.xlu0 %2398
    %v2400 = vsel %vm1526, %v2397, %v2399
    %v2401 = vsel %vm1526, %v2395, %v2397
    %v2402 = vsel %vm1526, %v2393, %v2395
    %v2403 = vsel %vm1526, %v2391, %v2393
    %v2404 = vsel %vm1526, %v2389, %v2391
    %v2405 = vsel %vm1526, %v2387, %v2389
    %v2406 = vsel %vm1526, %v2385, %v2387
    %v2407 = vsel %vm1526, %v2399, %v2385
    %2408 = vrot.lane.b32.xlu0 %v2312, 2
    %v2409 = vpop.permute.xlu0 %2408
    %2410 = vrot.lane.b32.xlu0 %v2313, 2
    %v2411 = vpop.permute.xlu0 %2410
    %2412 = vrot.lane.b32.xlu0 %v2314, 2
    %v2413 = vpop.permute.xlu0 %2412
    %2414 = vrot.lane.b32.xlu0 %v2315, 2
    %v2415 = vpop.permute.xlu0 %2414
    %2416 = vrot.lane.b32.xlu0 %v2316, 2
    %v2417 = vpop.permute.xlu0 %2416
    %2418 = vrot.lane.b32.xlu0 %v2317, 2
    %v2419 = vpop.permute.xlu0 %2418
    %2420 = vrot.lane.b32.xlu0 %v2318, 2
    %v2421 = vpop.permute.xlu0 %2420
    %2422 = vrot.lane.b32.xlu0 %v2319, 2
    %v2423 = vpop.permute.xlu0 %2422
    %v2424 = vsel %vm1551, %v2421, %v2423
    %v2425 = vsel %vm1551, %v2419, %v2421
    %v2426 = vsel %vm1551, %v2417, %v2419
    %v2427 = vsel %vm1551, %v2415, %v2417
    %v2428 = vsel %vm1551, %v2413, %v2415
    %v2429 = vsel %vm1551, %v2411, %v2413
    %v2430 = vsel %vm1551, %v2409, %v2411
    %v2431 = vsel %vm1551, %v2423, %v2409
    %v2432 = vsel %vm1502, %v2406, %v2431
    %v2433 = vsel %vm1503, %v2405, %v2430
    %v2434 = vsel %vm1504, %v2404, %v2429
    %v2435 = vsel %vm1505, %v2403, %v2428
    %v2436 = vsel %vm1506, %v2402, %v2427
    %v2437 = vsel %vm1507, %v2401, %v2426
    %v2438 = vsel %vm1508, %v2400, %v2425
    %v2439 = vsel %vm1509, %v2407, %v2424
    %v2440 = vadd.f32 %v2312, %v2432
    %v2441 = vadd.f32 %v2313, %v2433
    %v2442 = vadd.f32 %v2314, %v2434
    %v2443 = vadd.f32 %v2315, %v2435
    %v2444 = vadd.f32 %v2316, %v2436
    %v2445 = vadd.f32 %v2317, %v2437
    %v2446 = vadd.f32 %v2318, %v2438
    %v2447 = vadd.f32 %v2319, %v2439
    %v2448 = vand.u32 %v684, 4
    %v2449 = vand.u32 %v685, 4
    %v2450 = vand.u32 %v686, 4
    %v2451 = vand.u32 %v687, 4
    %v2452 = vand.u32 %v688, 4
    %v2453 = vand.u32 %v689, 4
    %v2454 = vand.u32 %v690, 4
    %v2455 = vand.u32 %v691, 4
    %vm2456 = vcmp.eq.s32.totalorder %v2448, 0
    %vm2457 = vcmp.eq.s32.totalorder %v2449, 0
    %vm2458 = vcmp.eq.s32.totalorder %v2450, 0
    %vm2459 = vcmp.eq.s32.totalorder %v2451, 0
    %vm2460 = vcmp.eq.s32.totalorder %v2452, 0
    %vm2461 = vcmp.eq.s32.totalorder %v2453, 0
    %vm2462 = vcmp.eq.s32.totalorder %v2454, 0
    %vm2463 = vcmp.eq.s32.totalorder %v2455, 0
    %2464 = vrot.lane.b32.xlu0 %v2376, 124
    %v2465 = vpop.permute.xlu0 %2464
    %2466 = vrot.lane.b32.xlu0 %v2377, 124
    %v2467 = vpop.permute.xlu0 %2466
    %2468 = vrot.lane.b32.xlu0 %v2378, 124
    %v2469 = vpop.permute.xlu0 %2468
    %2470 = vrot.lane.b32.xlu0 %v2379, 124
    %v2471 = vpop.permute.xlu0 %2470
    %2472 = vrot.lane.b32.xlu0 %v2380, 124
    %v2473 = vpop.permute.xlu0 %2472
    %2474 = vrot.lane.b32.xlu0 %v2381, 124
    %v2475 = vpop.permute.xlu0 %2474
    %2476 = vrot.lane.b32.xlu0 %v2382, 124
    %v2477 = vpop.permute.xlu0 %2476
    %2478 = vrot.lane.b32.xlu0 %v2383, 124
    %v2479 = vpop.permute.xlu0 %2478
    %vm2480 = vcmp.lt.s32.totalorder %v684, 124
    %v2481 = vsel %vm2480, %v2477, %v2479
    %v2482 = vsel %vm2480, %v2475, %v2477
    %v2483 = vsel %vm2480, %v2473, %v2475
    %v2484 = vsel %vm2480, %v2471, %v2473
    %v2485 = vsel %vm2480, %v2469, %v2471
    %v2486 = vsel %vm2480, %v2467, %v2469
    %v2487 = vsel %vm2480, %v2465, %v2467
    %v2488 = vsel %vm2480, %v2479, %v2465
    %2489 = vrot.lane.b32.xlu0 %v2376, 4
    %v2490 = vpop.permute.xlu0 %2489
    %2491 = vrot.lane.b32.xlu0 %v2377, 4
    %v2492 = vpop.permute.xlu0 %2491
    %2493 = vrot.lane.b32.xlu0 %v2378, 4
    %v2494 = vpop.permute.xlu0 %2493
    %2495 = vrot.lane.b32.xlu0 %v2379, 4
    %v2496 = vpop.permute.xlu0 %2495
    %2497 = vrot.lane.b32.xlu0 %v2380, 4
    %v2498 = vpop.permute.xlu0 %2497
    %2499 = vrot.lane.b32.xlu0 %v2381, 4
    %v2500 = vpop.permute.xlu0 %2499
    %2501 = vrot.lane.b32.xlu0 %v2382, 4
    %v2502 = vpop.permute.xlu0 %2501
    %2503 = vrot.lane.b32.xlu0 %v2383, 4
    %v2504 = vpop.permute.xlu0 %2503
    %vm2505 = vcmp.lt.s32.totalorder %v684, 4
    %v2506 = vsel %vm2505, %v2502, %v2504
    %v2507 = vsel %vm2505, %v2500, %v2502
    %v2508 = vsel %vm2505, %v2498, %v2500
    %v2509 = vsel %vm2505, %v2496, %v2498
    %v2510 = vsel %vm2505, %v2494, %v2496
    %v2511 = vsel %vm2505, %v2492, %v2494
    %v2512 = vsel %vm2505, %v2490, %v2492
    %v2513 = vsel %vm2505, %v2504, %v2490
    %v2514 = vsel %vm2456, %v2487, %v2513
    %v2515 = vsel %vm2457, %v2486, %v2512
    %v2516 = vsel %vm2458, %v2485, %v2511
    %v2517 = vsel %vm2459, %v2484, %v2510
    %v2518 = vsel %vm2460, %v2483, %v2509
    %v2519 = vsel %vm2461, %v2482, %v2508
    %v2520 = vsel %vm2462, %v2481, %v2507
    %v2521 = vsel %vm2463, %v2488, %v2506
    %v2522 = vadd.f32 %v2376, %v2514
    %v2523 = vadd.f32 %v2377, %v2515
    %v2524 = vadd.f32 %v2378, %v2516
    %v2525 = vadd.f32 %v2379, %v2517
    %v2526 = vadd.f32 %v2380, %v2518
    %v2527 = vadd.f32 %v2381, %v2519
    %v2528 = vadd.f32 %v2382, %v2520
    %v2529 = vadd.f32 %v2383, %v2521
    %2530 = vrot.lane.b32.xlu0 %v2440, 124
    %v2531 = vpop.permute.xlu0 %2530
    %2532 = vrot.lane.b32.xlu0 %v2441, 124
    %v2533 = vpop.permute.xlu0 %2532
    %2534 = vrot.lane.b32.xlu0 %v2442, 124
    %v2535 = vpop.permute.xlu0 %2534
    %2536 = vrot.lane.b32.xlu0 %v2443, 124
    %v2537 = vpop.permute.xlu0 %2536
    %2538 = vrot.lane.b32.xlu0 %v2444, 124
    %v2539 = vpop.permute.xlu0 %2538
    %2540 = vrot.lane.b32.xlu0 %v2445, 124
    %v2541 = vpop.permute.xlu0 %2540
    %2542 = vrot.lane.b32.xlu0 %v2446, 124
    %v2543 = vpop.permute.xlu0 %2542
    %2544 = vrot.lane.b32.xlu0 %v2447, 124
    %v2545 = vpop.permute.xlu0 %2544
    %v2546 = vsel %vm2480, %v2543, %v2545
    %v2547 = vsel %vm2480, %v2541, %v2543
    %v2548 = vsel %vm2480, %v2539, %v2541
    %v2549 = vsel %vm2480, %v2537, %v2539
    %v2550 = vsel %vm2480, %v2535, %v2537
    %v2551 = vsel %vm2480, %v2533, %v2535
    %v2552 = vsel %vm2480, %v2531, %v2533
    %v2553 = vsel %vm2480, %v2545, %v2531
    %2554 = vrot.lane.b32.xlu0 %v2440, 4
    %v2555 = vpop.permute.xlu0 %2554
    %2556 = vrot.lane.b32.xlu0 %v2441, 4
    %v2557 = vpop.permute.xlu0 %2556
    %2558 = vrot.lane.b32.xlu0 %v2442, 4
    %v2559 = vpop.permute.xlu0 %2558
    %2560 = vrot.lane.b32.xlu0 %v2443, 4
    %v2561 = vpop.permute.xlu0 %2560
    %2562 = vrot.lane.b32.xlu0 %v2444, 4
    %v2563 = vpop.permute.xlu0 %2562
    %2564 = vrot.lane.b32.xlu0 %v2445, 4
    %v2565 = vpop.permute.xlu0 %2564
    %2566 = vrot.lane.b32.xlu0 %v2446, 4
    %v2567 = vpop.permute.xlu0 %2566
    %2568 = vrot.lane.b32.xlu0 %v2447, 4
    %v2569 = vpop.permute.xlu0 %2568
    %v2570 = vsel %vm2505, %v2567, %v2569
    %v2571 = vsel %vm2505, %v2565, %v2567
    %v2572 = vsel %vm2505, %v2563, %v2565
    %v2573 = vsel %vm2505, %v2561, %v2563
    %v2574 = vsel %vm2505, %v2559, %v2561
    %v2575 = vsel %vm2505, %v2557, %v2559
    %v2576 = vsel %vm2505, %v2555, %v2557
    %v2577 = vsel %vm2505, %v2569, %v2555
    %v2578 = vsel %vm2456, %v2552, %v2577
    %v2579 = vsel %vm2457, %v2551, %v2576
    %v2580 = vsel %vm2458, %v2550, %v2575
    %v2581 = vsel %vm2459, %v2549, %v2574
    %v2582 = vsel %vm2460, %v2548, %v2573
    %v2583 = vsel %vm2461, %v2547, %v2572
    %v2584 = vsel %vm2462, %v2546, %v2571
    %v2585 = vsel %vm2463, %v2553, %v2570
    %v2586 = vadd.f32 %v2440, %v2578
    %v2587 = vadd.f32 %v2441, %v2579
    %v2588 = vadd.f32 %v2442, %v2580
    %v2589 = vadd.f32 %v2443, %v2581
    %v2590 = vadd.f32 %v2444, %v2582
    %v2591 = vadd.f32 %v2445, %v2583
    %v2592 = vadd.f32 %v2446, %v2584
    %v2593 = vadd.f32 %v2447, %v2585
    %v2594 = vand.u32 %v684, 8
    %v2595 = vand.u32 %v685, 8
    %v2596 = vand.u32 %v686, 8
    %v2597 = vand.u32 %v687, 8
    %v2598 = vand.u32 %v688, 8
    %v2599 = vand.u32 %v689, 8
    %v2600 = vand.u32 %v690, 8
    %v2601 = vand.u32 %v691, 8
    %vm2602 = vcmp.eq.s32.totalorder %v2594, 0
    %vm2603 = vcmp.eq.s32.totalorder %v2595, 0
    %vm2604 = vcmp.eq.s32.totalorder %v2596, 0
    %vm2605 = vcmp.eq.s32.totalorder %v2597, 0
    %vm2606 = vcmp.eq.s32.totalorder %v2598, 0
    %vm2607 = vcmp.eq.s32.totalorder %v2599, 0
    %vm2608 = vcmp.eq.s32.totalorder %v2600, 0
    %vm2609 = vcmp.eq.s32.totalorder %v2601, 0
    %2610 = vrot.lane.b32.xlu0 %v2522, 120
    %v2611 = vpop.permute.xlu0 %2610
    %2612 = vrot.lane.b32.xlu0 %v2523, 120
    %v2613 = vpop.permute.xlu0 %2612
    %2614 = vrot.lane.b32.xlu0 %v2524, 120
    %v2615 = vpop.permute.xlu0 %2614
    %2616 = vrot.lane.b32.xlu0 %v2525, 120
    %v2617 = vpop.permute.xlu0 %2616
    %2618 = vrot.lane.b32.xlu0 %v2526, 120
    %v2619 = vpop.permute.xlu0 %2618
    %2620 = vrot.lane.b32.xlu0 %v2527, 120
    %v2621 = vpop.permute.xlu0 %2620
    %2622 = vrot.lane.b32.xlu0 %v2528, 120
    %v2623 = vpop.permute.xlu0 %2622
    %2624 = vrot.lane.b32.xlu0 %v2529, 120
    %v2625 = vpop.permute.xlu0 %2624
    %vm2626 = vcmp.lt.s32.totalorder %v684, 120
    %v2627 = vsel %vm2626, %v2623, %v2625
    %v2628 = vsel %vm2626, %v2621, %v2623
    %v2629 = vsel %vm2626, %v2619, %v2621
    %v2630 = vsel %vm2626, %v2617, %v2619
    %v2631 = vsel %vm2626, %v2615, %v2617
    %v2632 = vsel %vm2626, %v2613, %v2615
    %v2633 = vsel %vm2626, %v2611, %v2613
    %v2634 = vsel %vm2626, %v2625, %v2611
    %2635 = vrot.lane.b32.xlu0 %v2522, 8
    %v2636 = vpop.permute.xlu0 %2635
    %2637 = vrot.lane.b32.xlu0 %v2523, 8
    %v2638 = vpop.permute.xlu0 %2637
    %2639 = vrot.lane.b32.xlu0 %v2524, 8
    %v2640 = vpop.permute.xlu0 %2639
    %2641 = vrot.lane.b32.xlu0 %v2525, 8
    %v2642 = vpop.permute.xlu0 %2641
    %2643 = vrot.lane.b32.xlu0 %v2526, 8
    %v2644 = vpop.permute.xlu0 %2643
    %2645 = vrot.lane.b32.xlu0 %v2527, 8
    %v2646 = vpop.permute.xlu0 %2645
    %2647 = vrot.lane.b32.xlu0 %v2528, 8
    %v2648 = vpop.permute.xlu0 %2647
    %2649 = vrot.lane.b32.xlu0 %v2529, 8
    %v2650 = vpop.permute.xlu0 %2649
    %vm2651 = vcmp.lt.s32.totalorder %v684, 8
    %v2652 = vsel %vm2651, %v2648, %v2650
    %v2653 = vsel %vm2651, %v2646, %v2648
    %v2654 = vsel %vm2651, %v2644, %v2646
    %v2655 = vsel %vm2651, %v2642, %v2644
    %v2656 = vsel %vm2651, %v2640, %v2642
    %v2657 = vsel %vm2651, %v2638, %v2640
    %v2658 = vsel %vm2651, %v2636, %v2638
    %v2659 = vsel %vm2651, %v2650, %v2636
    %v2660 = vsel %vm2602, %v2633, %v2659
    %v2661 = vsel %vm2603, %v2632, %v2658
    %v2662 = vsel %vm2604, %v2631, %v2657
    %v2663 = vsel %vm2605, %v2630, %v2656
    %v2664 = vsel %vm2606, %v2629, %v2655
    %v2665 = vsel %vm2607, %v2628, %v2654
    %v2666 = vsel %vm2608, %v2627, %v2653
    %v2667 = vsel %vm2609, %v2634, %v2652
    %v2668 = vadd.f32 %v2522, %v2660
    %v2669 = vadd.f32 %v2523, %v2661
    %v2670 = vadd.f32 %v2524, %v2662
    %v2671 = vadd.f32 %v2525, %v2663
    %v2672 = vadd.f32 %v2526, %v2664
    %v2673 = vadd.f32 %v2527, %v2665
    %v2674 = vadd.f32 %v2528, %v2666
    %v2675 = vadd.f32 %v2529, %v2667
    %2676 = vrot.lane.b32.xlu0 %v2586, 120
    %v2677 = vpop.permute.xlu0 %2676
    %2678 = vrot.lane.b32.xlu0 %v2587, 120
    %v2679 = vpop.permute.xlu0 %2678
    %2680 = vrot.lane.b32.xlu0 %v2588, 120
    %v2681 = vpop.permute.xlu0 %2680
    %2682 = vrot.lane.b32.xlu0 %v2589, 120
    %v2683 = vpop.permute.xlu0 %2682
    %2684 = vrot.lane.b32.xlu0 %v2590, 120
    %v2685 = vpop.permute.xlu0 %2684
    %2686 = vrot.lane.b32.xlu0 %v2591, 120
    %v2687 = vpop.permute.xlu0 %2686
    %2688 = vrot.lane.b32.xlu0 %v2592, 120
    %v2689 = vpop.permute.xlu0 %2688
    %2690 = vrot.lane.b32.xlu0 %v2593, 120
    %v2691 = vpop.permute.xlu0 %2690
    %v2692 = vsel %vm2626, %v2689, %v2691
    %v2693 = vsel %vm2626, %v2687, %v2689
    %v2694 = vsel %vm2626, %v2685, %v2687
    %v2695 = vsel %vm2626, %v2683, %v2685
    %v2696 = vsel %vm2626, %v2681, %v2683
    %v2697 = vsel %vm2626, %v2679, %v2681
    %v2698 = vsel %vm2626, %v2677, %v2679
    %v2699 = vsel %vm2626, %v2691, %v2677
    %2700 = vrot.lane.b32.xlu0 %v2586, 8
    %v2701 = vpop.permute.xlu0 %2700
    %2702 = vrot.lane.b32.xlu0 %v2587, 8
    %v2703 = vpop.permute.xlu0 %2702
    %2704 = vrot.lane.b32.xlu0 %v2588, 8
    %v2705 = vpop.permute.xlu0 %2704
    %2706 = vrot.lane.b32.xlu0 %v2589, 8
    %v2707 = vpop.permute.xlu0 %2706
    %2708 = vrot.lane.b32.xlu0 %v2590, 8
    %v2709 = vpop.permute.xlu0 %2708
    %2710 = vrot.lane.b32.xlu0 %v2591, 8
    %v2711 = vpop.permute.xlu0 %2710
    %2712 = vrot.lane.b32.xlu0 %v2592, 8
    %v2713 = vpop.permute.xlu0 %2712
    %2714 = vrot.lane.b32.xlu0 %v2593, 8
    %v2715 = vpop.permute.xlu0 %2714
    %v2716 = vsel %vm2651, %v2713, %v2715
    %v2717 = vsel %vm2651, %v2711, %v2713
    %v2718 = vsel %vm2651, %v2709, %v2711
    %v2719 = vsel %vm2651, %v2707, %v2709
    %v2720 = vsel %vm2651, %v2705, %v2707
    %v2721 = vsel %vm2651, %v2703, %v2705
    %v2722 = vsel %vm2651, %v2701, %v2703
    %v2723 = vsel %vm2651, %v2715, %v2701
    %v2724 = vsel %vm2602, %v2698, %v2723
    %v2725 = vsel %vm2603, %v2697, %v2722
    %v2726 = vsel %vm2604, %v2696, %v2721
    %v2727 = vsel %vm2605, %v2695, %v2720
    %v2728 = vsel %vm2606, %v2694, %v2719
    %v2729 = vsel %vm2607, %v2693, %v2718
    %v2730 = vsel %vm2608, %v2692, %v2717
    %v2731 = vsel %vm2609, %v2699, %v2716
    %v2732 = vadd.f32 %v2586, %v2724
    %v2733 = vadd.f32 %v2587, %v2725
    %v2734 = vadd.f32 %v2588, %v2726
    %v2735 = vadd.f32 %v2589, %v2727
    %v2736 = vadd.f32 %v2590, %v2728
    %v2737 = vadd.f32 %v2591, %v2729
    %v2738 = vadd.f32 %v2592, %v2730
    %v2739 = vadd.f32 %v2593, %v2731
    %v2740 = vmul.f32 %v2668, 0.001953125
    %v2741 = vmul.f32 %v2669, 0.001953125
    %v2742 = vmul.f32 %v2670, 0.001953125
    %v2743 = vmul.f32 %v2671, 0.001953125
    %v2744 = vmul.f32 %v2672, 0.001953125
    %v2745 = vmul.f32 %v2673, 0.001953125
    %v2746 = vmul.f32 %v2674, 0.001953125
    %v2747 = vmul.f32 %v2675, 0.001953125
    %v2748 = vmul.f32 %v2732, 0.001953125
    %v2749 = vmul.f32 %v2733, 0.001953125
    %v2750 = vmul.f32 %v2734, 0.001953125
    %v2751 = vmul.f32 %v2735, 0.001953125
    %v2752 = vmul.f32 %v2736, 0.001953125
    %v2753 = vmul.f32 %v2737, 0.001953125
    %v2754 = vmul.f32 %v2738, 0.001953125
    %v2755 = vmul.f32 %v2739, 0.001953125
    %v2756 = vmul.f32 %v2740, %v2740
    %v2757 = vmul.f32 %v2741, %v2741
    %v2758 = vmul.f32 %v2742, %v2742
    %v2759 = vmul.f32 %v2743, %v2743
    %v2760 = vmul.f32 %v2744, %v2744
    %v2761 = vmul.f32 %v2745, %v2745
    %v2762 = vmul.f32 %v2746, %v2746
    %v2763 = vmul.f32 %v2747, %v2747
    %v2764 = vsub.f32 %v2748, %v2756
    %v2765 = vsub.f32 %v2749, %v2757
    %v2766 = vsub.f32 %v2750, %v2758
    %v2767 = vsub.f32 %v2751, %v2759
    %v2768 = vsub.f32 %v2752, %v2760
    %v2769 = vsub.f32 %v2753, %v2761
    %v2770 = vsub.f32 %v2754, %v2762
    %v2771 = vsub.f32 %v2755, %v2763
    %v2772 = vmax.f32 %v2764, 0.0
    %v2773 = vmax.f32 %v2765, 0.0
    %v2774 = vmax.f32 %v2766, 0.0
    %v2775 = vmax.f32 %v2767, 0.0
    %v2776 = vmax.f32 %v2768, 0.0
    %v2777 = vmax.f32 %v2769, 0.0
    %v2778 = vmax.f32 %v2770, 0.0
    %v2779 = vmax.f32 %v2771, 0.0
    %v2780 = vadd.f32 %v2772, 1e-05
    %v2781 = vadd.f32 %v2773, 1e-05
    %v2782 = vadd.f32 %v2774, 1e-05
    %v2783 = vadd.f32 %v2775, 1e-05
    %v2784 = vadd.f32 %v2776, 1e-05
    %v2785 = vadd.f32 %v2777, 1e-05
    %v2786 = vadd.f32 %v2778, 1e-05
    %v2787 = vadd.f32 %v2779, 1e-05
    %v2788 = vrsqrt.pop %v2780
    %v2789 = vrsqrt.pop %v2781
    %v2790 = vrsqrt.pop %v2782
    %v2791 = vrsqrt.pop %v2783
    %v2792 = vrsqrt.pop %v2784
    %v2793 = vrsqrt.pop %v2785
    %v2794 = vrsqrt.pop %v2786
    %v2795 = vrsqrt.pop %v2787
    %v2804 = vrot.slane %v2788, 6
    %v2805 = vrot.slane %v2789, 6
    %v2806 = vrot.slane %v2790, 6
    %v2807 = vrot.slane %v2791, 6
    %v2808 = vrot.slane %v2792, 6
    %v2809 = vrot.slane %v2793, 6
    %v2810 = vrot.slane %v2794, 6
    %v2811 = vrot.slane %v2795, 6
    %v2820 = vmul.f32 %v667, %v2804
    %v2821 = vmul.f32 %v668, %v2805
    %v2822 = vmul.f32 %v669, %v2806
    %v2823 = vmul.f32 %v670, %v2807
    %v2824 = vmul.f32 %v671, %v2808
    %v2825 = vmul.f32 %v672, %v2809
    %v2826 = vmul.f32 %v673, %v2810
    %v2827 = vmul.f32 %v674, %v2811
    %v2836 = vrot.slane %v2820, 2
    %v2837 = vrot.slane %v2821, 2
    %v2838 = vrot.slane %v2822, 2
    %v2839 = vrot.slane %v2823, 2
    %v2840 = vrot.slane %v2824, 2
    %v2841 = vrot.slane %v2825, 2
    %v2842 = vrot.slane %v2826, 2
    %v2843 = vrot.slane %v2827, 2
    %v2852 = vmul.f32 %v2740, %v2836
    %v2853 = vmul.f32 %v2741, %v2837
    %v2854 = vmul.f32 %v2742, %v2838
    %v2855 = vmul.f32 %v2743, %v2839
    %v2856 = vmul.f32 %v2744, %v2840
    %v2857 = vmul.f32 %v2745, %v2841
    %v2858 = vmul.f32 %v2746, %v2842
    %v2859 = vmul.f32 %v2747, %v2843
    %v2868 = vrot.slane %v2852, 6
    %v2869 = vrot.slane %v2853, 6
    %v2870 = vrot.slane %v2854, 6
    %v2871 = vrot.slane %v2855, 6
    %v2872 = vrot.slane %v2856, 6
    %v2873 = vrot.slane %v2857, 6
    %v2874 = vrot.slane %v2858, 6
    %v2875 = vrot.slane %v2859, 6
    %v2884 = vsub.f32 %v675, %v2868
    %v2885 = vsub.f32 %v676, %v2869
    %v2886 = vsub.f32 %v677, %v2870
    %v2887 = vsub.f32 %v678, %v2871
    %v2888 = vsub.f32 %v679, %v2872
    %v2889 = vsub.f32 %v680, %v2873
    %v2890 = vsub.f32 %v681, %v2874
    %v2891 = vsub.f32 %v682, %v2875
    %v2892 = vlaneseq
    %v2893 = vshrl.u32 %v2892, 7
    %v2894 = vsub.s32 2, %v2893
    %v2895 = vrot.slane %v2820, %v2894
    %v2896 = vlaneseq
    %v2897 = vshrl.u32 %v2896, 7
    %v2898 = vsub.s32 2, %v2897
    %v2899 = vrot.slane %v2821, %v2898
    %v2900 = vlaneseq
    %v2901 = vshrl.u32 %v2900, 7
    %v2902 = vsub.s32 2, %v2901
    %v2903 = vrot.slane %v2822, %v2902
    %v2904 = vlaneseq
    %v2905 = vshrl.u32 %v2904, 7
    %v2906 = vsub.s32 2, %v2905
    %v2907 = vrot.slane %v2823, %v2906
    %v2908 = vlaneseq
    %v2909 = vshrl.u32 %v2908, 7
    %v2910 = vsub.s32 2, %v2909
    %v2911 = vrot.slane %v2824, %v2910
    %v2912 = vlaneseq
    %v2913 = vshrl.u32 %v2912, 7
    %v2914 = vsub.s32 2, %v2913
    %v2915 = vrot.slane %v2825, %v2914
    %v2916 = vlaneseq
    %v2917 = vshrl.u32 %v2916, 7
    %v2918 = vsub.s32 2, %v2917
    %v2919 = vrot.slane %v2826, %v2918
    %v2920 = vlaneseq
    %v2921 = vshrl.u32 %v2920, 7
    %v2922 = vsub.s32 2, %v2921
    %v2923 = vrot.slane %v2827, %v2922
    %v2924 = vmul.f32 %v1984, %v2895
    %v2925 = vmul.f32 %v1985, %v2899
    %v2926 = vmul.f32 %v1986, %v2903
    %v2927 = vmul.f32 %v1987, %v2907
    %v2928 = vmul.f32 %v1988, %v2911
    %v2929 = vmul.f32 %v1989, %v2915
    %v2930 = vmul.f32 %v1990, %v2919
    %v2931 = vmul.f32 %v1991, %v2923
    %v2932 = vmul.f32 %v1992, %v2895
    %v2933 = vmul.f32 %v1993, %v2899
    %v2934 = vmul.f32 %v1994, %v2903
    %v2935 = vmul.f32 %v1995, %v2907
    %v2936 = vmul.f32 %v1996, %v2911
    %v2937 = vmul.f32 %v1997, %v2915
    %v2938 = vmul.f32 %v1998, %v2919
    %v2939 = vmul.f32 %v1999, %v2923
    %v2940 = vmul.f32 %v2000, %v2895
    %v2941 = vmul.f32 %v2001, %v2899
    %v2942 = vmul.f32 %v2002, %v2903
    %v2943 = vmul.f32 %v2003, %v2907
    %v2944 = vmul.f32 %v2004, %v2911
    %v2945 = vmul.f32 %v2005, %v2915
    %v2946 = vmul.f32 %v2006, %v2919
    %v2947 = vmul.f32 %v2007, %v2923
    %v2948 = vmul.f32 %v2008, %v2895
    %v2949 = vmul.f32 %v2009, %v2899
    %v2950 = vmul.f32 %v2010, %v2903
    %v2951 = vmul.f32 %v2011, %v2907
    %v2952 = vmul.f32 %v2012, %v2911
    %v2953 = vmul.f32 %v2013, %v2915
    %v2954 = vmul.f32 %v2014, %v2919
    %v2955 = vmul.f32 %v2015, %v2923
    %v2956 = vlaneseq
    %v2957 = vshrl.u32 %v2956, 7
    %v2958 = vsub.s32 2, %v2957
    %v2959 = vrot.slane %v2884, %v2958
    %v2960 = vlaneseq
    %v2961 = vshrl.u32 %v2960, 7
    %v2962 = vsub.s32 2, %v2961
    %v2963 = vrot.slane %v2885, %v2962
    %v2964 = vlaneseq
    %v2965 = vshrl.u32 %v2964, 7
    %v2966 = vsub.s32 2, %v2965
    %v2967 = vrot.slane %v2886, %v2966
    %v2968 = vlaneseq
    %v2969 = vshrl.u32 %v2968, 7
    %v2970 = vsub.s32 2, %v2969
    %v2971 = vrot.slane %v2887, %v2970
    %v2972 = vlaneseq
    %v2973 = vshrl.u32 %v2972, 7
    %v2974 = vsub.s32 2, %v2973
    %v2975 = vrot.slane %v2888, %v2974
    %v2976 = vlaneseq
    %v2977 = vshrl.u32 %v2976, 7
    %v2978 = vsub.s32 2, %v2977
    %v2979 = vrot.slane %v2889, %v2978
    %v2980 = vlaneseq
    %v2981 = vshrl.u32 %v2980, 7
    %v2982 = vsub.s32 2, %v2981
    %v2983 = vrot.slane %v2890, %v2982
    %v2984 = vlaneseq
    %v2985 = vshrl.u32 %v2984, 7
    %v2986 = vsub.s32 2, %v2985
    %v2987 = vrot.slane %v2891, %v2986
    %v2988 = vadd.f32 %v2924, %v2959
    %v2989 = vadd.f32 %v2925, %v2963
    %v2990 = vadd.f32 %v2926, %v2967
    %v2991 = vadd.f32 %v2927, %v2971
    %v2992 = vadd.f32 %v2928, %v2975
    %v2993 = vadd.f32 %v2929, %v2979
    %v2994 = vadd.f32 %v2930, %v2983
    %v2995 = vadd.f32 %v2931, %v2987
    %v2996 = vadd.f32 %v2932, %v2959
    %v2997 = vadd.f32 %v2933, %v2963
    %v2998 = vadd.f32 %v2934, %v2967
    %v2999 = vadd.f32 %v2935, %v2971
    %v3000 = vadd.f32 %v2936, %v2975
    %v3001 = vadd.f32 %v2937, %v2979
    %v3002 = vadd.f32 %v2938, %v2983
    %v3003 = vadd.f32 %v2939, %v2987
    %v3004 = vadd.f32 %v2940, %v2959
    %v3005 = vadd.f32 %v2941, %v2963
    %v3006 = vadd.f32 %v2942, %v2967
    %v3007 = vadd.f32 %v2943, %v2971
    %v3008 = vadd.f32 %v2944, %v2975
    %v3009 = vadd.f32 %v2945, %v2979
    %v3010 = vadd.f32 %v2946, %v2983
    %v3011 = vadd.f32 %v2947, %v2987
    %v3012 = vadd.f32 %v2948, %v2959
    %v3013 = vadd.f32 %v2949, %v2963
    %v3014 = vadd.f32 %v2950, %v2967
    %v3015 = vadd.f32 %v2951, %v2971
    %v3016 = vadd.f32 %v2952, %v2975
    %v3017 = vadd.f32 %v2953, %v2979
    %v3018 = vadd.f32 %v2954, %v2983
    %v3019 = vadd.f32 %v2955, %v2987
    %vm3020 = vcmp.ge.f32.partialorder %v2988, 0.0
    %vm3021 = vcmp.ge.f32.partialorder %v2989, 0.0
    %vm3022 = vcmp.ge.f32.partialorder %v2990, 0.0
    %vm3023 = vcmp.ge.f32.partialorder %v2991, 0.0
    %vm3024 = vcmp.ge.f32.partialorder %v2992, 0.0
    %vm3025 = vcmp.ge.f32.partialorder %v2993, 0.0
    %vm3026 = vcmp.ge.f32.partialorder %v2994, 0.0
    %vm3027 = vcmp.ge.f32.partialorder %v2995, 0.0
    %vm3028 = vcmp.ge.f32.partialorder %v2996, 0.0
    %vm3029 = vcmp.ge.f32.partialorder %v2997, 0.0
    %vm3030 = vcmp.ge.f32.partialorder %v2998, 0.0
    %vm3031 = vcmp.ge.f32.partialorder %v2999, 0.0
    %vm3032 = vcmp.ge.f32.partialorder %v3000, 0.0
    %vm3033 = vcmp.ge.f32.partialorder %v3001, 0.0
    %vm3034 = vcmp.ge.f32.partialorder %v3002, 0.0
    %vm3035 = vcmp.ge.f32.partialorder %v3003, 0.0
    %vm3036 = vcmp.ge.f32.partialorder %v3004, 0.0
    %vm3037 = vcmp.ge.f32.partialorder %v3005, 0.0
    %vm3038 = vcmp.ge.f32.partialorder %v3006, 0.0
    %vm3039 = vcmp.ge.f32.partialorder %v3007, 0.0
    %vm3040 = vcmp.ge.f32.partialorder %v3008, 0.0
    %vm3041 = vcmp.ge.f32.partialorder %v3009, 0.0
    %vm3042 = vcmp.ge.f32.partialorder %v3010, 0.0
    %vm3043 = vcmp.ge.f32.partialorder %v3011, 0.0
    %vm3044 = vcmp.ge.f32.partialorder %v3012, 0.0
    %vm3045 = vcmp.ge.f32.partialorder %v3013, 0.0
    %vm3046 = vcmp.ge.f32.partialorder %v3014, 0.0
    %vm3047 = vcmp.ge.f32.partialorder %v3015, 0.0
    %vm3048 = vcmp.ge.f32.partialorder %v3016, 0.0
    %vm3049 = vcmp.ge.f32.partialorder %v3017, 0.0
    %vm3050 = vcmp.ge.f32.partialorder %v3018, 0.0
    %vm3051 = vcmp.ge.f32.partialorder %v3019, 0.0
    %v3052 = vmul.f32 %v2988, 0.01
    %v3053 = vmul.f32 %v2989, 0.01
    %v3054 = vmul.f32 %v2990, 0.01
    %v3055 = vmul.f32 %v2991, 0.01
    %v3056 = vmul.f32 %v2992, 0.01
    %v3057 = vmul.f32 %v2993, 0.01
    %v3058 = vmul.f32 %v2994, 0.01
    %v3059 = vmul.f32 %v2995, 0.01
    %v3060 = vmul.f32 %v2996, 0.01
    %v3061 = vmul.f32 %v2997, 0.01
    %v3062 = vmul.f32 %v2998, 0.01
    %v3063 = vmul.f32 %v2999, 0.01
    %v3064 = vmul.f32 %v3000, 0.01
    %v3065 = vmul.f32 %v3001, 0.01
    %v3066 = vmul.f32 %v3002, 0.01
    %v3067 = vmul.f32 %v3003, 0.01
    %v3068 = vmul.f32 %v3004, 0.01
    %v3069 = vmul.f32 %v3005, 0.01
    %v3070 = vmul.f32 %v3006, 0.01
    %v3071 = vmul.f32 %v3007, 0.01
    %v3072 = vmul.f32 %v3008, 0.01
    %v3073 = vmul.f32 %v3009, 0.01
    %v3074 = vmul.f32 %v3010, 0.01
    %v3075 = vmul.f32 %v3011, 0.01
    %v3076 = vmul.f32 %v3012, 0.01
    %v3077 = vmul.f32 %v3013, 0.01
    %v3078 = vmul.f32 %v3014, 0.01
    %v3079 = vmul.f32 %v3015, 0.01
    %v3080 = vmul.f32 %v3016, 0.01
    %v3081 = vmul.f32 %v3017, 0.01
    %v3082 = vmul.f32 %v3018, 0.01
    %v3083 = vmul.f32 %v3019, 0.01
    %v3084 = vsel %vm3020, %v2988, %v3052
    %v3085 = vsel %vm3021, %v2989, %v3053
    %v3086 = vsel %vm3022, %v2990, %v3054
    %v3087 = vsel %vm3023, %v2991, %v3055
    %v3088 = vsel %vm3024, %v2992, %v3056
    %v3089 = vsel %vm3025, %v2993, %v3057
    %v3090 = vsel %vm3026, %v2994, %v3058
    %v3091 = vsel %vm3027, %v2995, %v3059
    %v3092 = vsel %vm3028, %v2996, %v3060
    %v3093 = vsel %vm3029, %v2997, %v3061
    %v3094 = vsel %vm3030, %v2998, %v3062
    %v3095 = vsel %vm3031, %v2999, %v3063
    %v3096 = vsel %vm3032, %v3000, %v3064
    %v3097 = vsel %vm3033, %v3001, %v3065
    %v3098 = vsel %vm3034, %v3002, %v3066
    %v3099 = vsel %vm3035, %v3003, %v3067
    %v3100 = vsel %vm3036, %v3004, %v3068
    %v3101 = vsel %vm3037, %v3005, %v3069
    %v3102 = vsel %vm3038, %v3006, %v3070
    %v3103 = vsel %vm3039, %v3007, %v3071
    %v3104 = vsel %vm3040, %v3008, %v3072
    %v3105 = vsel %vm3041, %v3009, %v3073
    %v3106 = vsel %vm3042, %v3010, %v3074
    %v3107 = vsel %vm3043, %v3011, %v3075
    %v3108 = vsel %vm3044, %v3012, %v3076
    %v3109 = vsel %vm3045, %v3013, %v3077
    %v3110 = vsel %vm3046, %v3014, %v3078
    %v3111 = vsel %vm3047, %v3015, %v3079
    %v3112 = vsel %vm3048, %v3016, %v3080
    %v3113 = vsel %vm3049, %v3017, %v3081
    %v3114 = vsel %vm3050, %v3018, %v3082
    %v3115 = vsel %vm3051, %v3019, %v3083
    %v3116 = vadd.f32 %v3084, %v3092
    %v3117 = vadd.f32 %v3116, %v3100
    %v3118 = vadd.f32 %v3117, %v3108
    %v3119 = vrot.slane %v3118, 4
    %v3120 = vadd.f32 %v3118, %v3119
    %v3121 = vrot.slane %v3120, 2
    %v3122 = vadd.f32 %v3120, %v3121
    %v3123 = vrot.slane %v3122, 1
    %v3124 = vadd.f32 %v3122, %v3123
    %v3125 = vadd.f32 %v3085, %v3093
    %v3126 = vadd.f32 %v3125, %v3101
    %v3127 = vadd.f32 %v3126, %v3109
    %v3128 = vrot.slane %v3127, 4
    %v3129 = vadd.f32 %v3127, %v3128
    %v3130 = vrot.slane %v3129, 2
    %v3131 = vadd.f32 %v3129, %v3130
    %v3132 = vrot.slane %v3131, 1
    %v3133 = vadd.f32 %v3131, %v3132
    %v3134 = vadd.f32 %v3086, %v3094
    %v3135 = vadd.f32 %v3134, %v3102
    %v3136 = vadd.f32 %v3135, %v3110
    %v3137 = vrot.slane %v3136, 4
    %v3138 = vadd.f32 %v3136, %v3137
    %v3139 = vrot.slane %v3138, 2
    %v3140 = vadd.f32 %v3138, %v3139
    %v3141 = vrot.slane %v3140, 1
    %v3142 = vadd.f32 %v3140, %v3141
    %v3143 = vadd.f32 %v3087, %v3095
    %v3144 = vadd.f32 %v3143, %v3103
    %v3145 = vadd.f32 %v3144, %v3111
    %v3146 = vrot.slane %v3145, 4
    %v3147 = vadd.f32 %v3145, %v3146
    %v3148 = vrot.slane %v3147, 2
    %v3149 = vadd.f32 %v3147, %v3148
    %v3150 = vrot.slane %v3149, 1
    %v3151 = vadd.f32 %v3149, %v3150
    %v3152 = vadd.f32 %v3088, %v3096
    %v3153 = vadd.f32 %v3152, %v3104
    %v3154 = vadd.f32 %v3153, %v3112
    %v3155 = vrot.slane %v3154, 4
    %v3156 = vadd.f32 %v3154, %v3155
    %v3157 = vrot.slane %v3156, 2
    %v3158 = vadd.f32 %v3156, %v3157
    %v3159 = vrot.slane %v3158, 1
    %v3160 = vadd.f32 %v3158, %v3159
    %v3161 = vadd.f32 %v3089, %v3097
    %v3162 = vadd.f32 %v3161, %v3105
    %v3163 = vadd.f32 %v3162, %v3113
    %v3164 = vrot.slane %v3163, 4
    %v3165 = vadd.f32 %v3163, %v3164
    %v3166 = vrot.slane %v3165, 2
    %v3167 = vadd.f32 %v3165, %v3166
    %v3168 = vrot.slane %v3167, 1
    %v3169 = vadd.f32 %v3167, %v3168
    %v3170 = vadd.f32 %v3090, %v3098
    %v3171 = vadd.f32 %v3170, %v3106
    %v3172 = vadd.f32 %v3171, %v3114
    %v3173 = vrot.slane %v3172, 4
    %v3174 = vadd.f32 %v3172, %v3173
    %v3175 = vrot.slane %v3174, 2
    %v3176 = vadd.f32 %v3174, %v3175
    %v3177 = vrot.slane %v3176, 1
    %v3178 = vadd.f32 %v3176, %v3177
    %v3179 = vadd.f32 %v3091, %v3099
    %v3180 = vadd.f32 %v3179, %v3107
    %v3181 = vadd.f32 %v3180, %v3115
    %v3182 = vrot.slane %v3181, 4
    %v3183 = vadd.f32 %v3181, %v3182
    %v3184 = vrot.slane %v3183, 2
    %v3185 = vadd.f32 %v3183, %v3184
    %v3186 = vrot.slane %v3185, 1
    %v3187 = vadd.f32 %v3185, %v3186
    %v3188 = vmul.f32 %v3084, %v3084
    %v3189 = vmul.f32 %v3085, %v3085
    %v3190 = vmul.f32 %v3086, %v3086
    %v3191 = vmul.f32 %v3087, %v3087
    %v3192 = vmul.f32 %v3088, %v3088
    %v3193 = vmul.f32 %v3089, %v3089
    %v3194 = vmul.f32 %v3090, %v3090
    %v3195 = vmul.f32 %v3091, %v3091
    %v3196 = vmul.f32 %v3092, %v3092
    %v3197 = vmul.f32 %v3093, %v3093
    %v3198 = vmul.f32 %v3094, %v3094
    %v3199 = vmul.f32 %v3095, %v3095
    %v3200 = vmul.f32 %v3096, %v3096
    %v3201 = vmul.f32 %v3097, %v3097
    %v3202 = vmul.f32 %v3098, %v3098
    %v3203 = vmul.f32 %v3099, %v3099
    %v3204 = vmul.f32 %v3100, %v3100
    %v3205 = vmul.f32 %v3101, %v3101
    %v3206 = vmul.f32 %v3102, %v3102
    %v3207 = vmul.f32 %v3103, %v3103
    %v3208 = vmul.f32 %v3104, %v3104
    %v3209 = vmul.f32 %v3105, %v3105
    %v3210 = vmul.f32 %v3106, %v3106
    %v3211 = vmul.f32 %v3107, %v3107
    %v3212 = vmul.f32 %v3108, %v3108
    %v3213 = vmul.f32 %v3109, %v3109
    %v3214 = vmul.f32 %v3110, %v3110
    %v3215 = vmul.f32 %v3111, %v3111
    %v3216 = vmul.f32 %v3112, %v3112
    %v3217 = vmul.f32 %v3113, %v3113
    %v3218 = vmul.f32 %v3114, %v3114
    %v3219 = vmul.f32 %v3115, %v3115
    %v3220 = vadd.f32 %v3188, %v3196
    %v3221 = vadd.f32 %v3220, %v3204
    %v3222 = vadd.f32 %v3221, %v3212
    %v3223 = vrot.slane %v3222, 4
    %v3224 = vadd.f32 %v3222, %v3223
    %v3225 = vrot.slane %v3224, 2
    %v3226 = vadd.f32 %v3224, %v3225
    %v3227 = vrot.slane %v3226, 1
    %v3228 = vadd.f32 %v3226, %v3227
    %v3229 = vadd.f32 %v3189, %v3197
    %v3230 = vadd.f32 %v3229, %v3205
    %v3231 = vadd.f32 %v3230, %v3213
    %v3232 = vrot.slane %v3231, 4
    %v3233 = vadd.f32 %v3231, %v3232
    %v3234 = vrot.slane %v3233, 2
    %v3235 = vadd.f32 %v3233, %v3234
    %v3236 = vrot.slane %v3235, 1
    %v3237 = vadd.f32 %v3235, %v3236
    %v3238 = vadd.f32 %v3190, %v3198
    %v3239 = vadd.f32 %v3238, %v3206
    %v3240 = vadd.f32 %v3239, %v3214
    %v3241 = vrot.slane %v3240, 4
    %v3242 = vadd.f32 %v3240, %v3241
    %v3243 = vrot.slane %v3242, 2
    %v3244 = vadd.f32 %v3242, %v3243
    %v3245 = vrot.slane %v3244, 1
    %v3246 = vadd.f32 %v3244, %v3245
    %v3247 = vadd.f32 %v3191, %v3199
    %v3248 = vadd.f32 %v3247, %v3207
    %v3249 = vadd.f32 %v3248, %v3215
    %v3250 = vrot.slane %v3249, 4
    %v3251 = vadd.f32 %v3249, %v3250
    %v3252 = vrot.slane %v3251, 2
    %v3253 = vadd.f32 %v3251, %v3252
    %v3254 = vrot.slane %v3253, 1
    %v3255 = vadd.f32 %v3253, %v3254
    %v3256 = vadd.f32 %v3192, %v3200
    %v3257 = vadd.f32 %v3256, %v3208
    %v3258 = vadd.f32 %v3257, %v3216
    %v3259 = vrot.slane %v3258, 4
    %v3260 = vadd.f32 %v3258, %v3259
    %v3261 = vrot.slane %v3260, 2
    %v3262 = vadd.f32 %v3260, %v3261
    %v3263 = vrot.slane %v3262, 1
    %v3264 = vadd.f32 %v3262, %v3263
    %v3265 = vadd.f32 %v3193, %v3201
    %v3266 = vadd.f32 %v3265, %v3209
    %v3267 = vadd.f32 %v3266, %v3217
    %v3268 = vrot.slane %v3267, 4
    %v3269 = vadd.f32 %v3267, %v3268
    %v3270 = vrot.slane %v3269, 2
    %v3271 = vadd.f32 %v3269, %v3270
    %v3272 = vrot.slane %v3271, 1
    %v3273 = vadd.f32 %v3271, %v3272
    %v3274 = vadd.f32 %v3194, %v3202
    %v3275 = vadd.f32 %v3274, %v3210
    %v3276 = vadd.f32 %v3275, %v3218
    %v3277 = vrot.slane %v3276, 4
    %v3278 = vadd.f32 %v3276, %v3277
    %v3279 = vrot.slane %v3278, 2
    %v3280 = vadd.f32 %v3278, %v3279
    %v3281 = vrot.slane %v3280, 1
    %v3282 = vadd.f32 %v3280, %v3281
    %v3283 = vadd.f32 %v3195, %v3203
    %v3284 = vadd.f32 %v3283, %v3211
    %v3285 = vadd.f32 %v3284, %v3219
    %v3286 = vrot.slane %v3285, 4
    %v3287 = vadd.f32 %v3285, %v3286
    %v3288 = vrot.slane %v3287, 2
    %v3289 = vadd.f32 %v3287, %v3288
    %v3290 = vrot.slane %v3289, 1
    %v3291 = vadd.f32 %v3289, %v3290
    %3292 = vrot.lane.b32.xlu0 %v3124, 127
    %v3293 = vpop.permute.xlu0 %3292
    %3294 = vrot.lane.b32.xlu0 %v3133, 127
    %v3295 = vpop.permute.xlu0 %3294
    %3296 = vrot.lane.b32.xlu0 %v3142, 127
    %v3297 = vpop.permute.xlu0 %3296
    %3298 = vrot.lane.b32.xlu0 %v3151, 127
    %v3299 = vpop.permute.xlu0 %3298
    %3300 = vrot.lane.b32.xlu0 %v3160, 127
    %v3301 = vpop.permute.xlu0 %3300
    %3302 = vrot.lane.b32.xlu0 %v3169, 127
    %v3303 = vpop.permute.xlu0 %3302
    %3304 = vrot.lane.b32.xlu0 %v3178, 127
    %v3305 = vpop.permute.xlu0 %3304
    %3306 = vrot.lane.b32.xlu0 %v3187, 127
    %v3307 = vpop.permute.xlu0 %3306
    %v3308 = vsel %vm1380, %v3305, %v3307
    %v3309 = vsel %vm1380, %v3303, %v3305
    %v3310 = vsel %vm1380, %v3301, %v3303
    %v3311 = vsel %vm1380, %v3299, %v3301
    %v3312 = vsel %vm1380, %v3297, %v3299
    %v3313 = vsel %vm1380, %v3295, %v3297
    %v3314 = vsel %vm1380, %v3293, %v3295
    %v3315 = vsel %vm1380, %v3307, %v3293
    %3316 = vrot.lane.b32.xlu0 %v3124, 1
    %v3317 = vpop.permute.xlu0 %3316
    %3318 = vrot.lane.b32.xlu0 %v3133, 1
    %v3319 = vpop.permute.xlu0 %3318
    %3320 = vrot.lane.b32.xlu0 %v3142, 1
    %v3321 = vpop.permute.xlu0 %3320
    %3322 = vrot.lane.b32.xlu0 %v3151, 1
    %v3323 = vpop.permute.xlu0 %3322
    %3324 = vrot.lane.b32.xlu0 %v3160, 1
    %v3325 = vpop.permute.xlu0 %3324
    %3326 = vrot.lane.b32.xlu0 %v3169, 1
    %v3327 = vpop.permute.xlu0 %3326
    %3328 = vrot.lane.b32.xlu0 %v3178, 1
    %v3329 = vpop.permute.xlu0 %3328
    %3330 = vrot.lane.b32.xlu0 %v3187, 1
    %v3331 = vpop.permute.xlu0 %3330
    %v3332 = vsel %vm1405, %v3329, %v3331
    %v3333 = vsel %vm1405, %v3327, %v3329
    %v3334 = vsel %vm1405, %v3325, %v3327
    %v3335 = vsel %vm1405, %v3323, %v3325
    %v3336 = vsel %vm1405, %v3321, %v3323
    %v3337 = vsel %vm1405, %v3319, %v3321
    %v3338 = vsel %vm1405, %v3317, %v3319
    %v3339 = vsel %vm1405, %v3331, %v3317
    %v3340 = vsel %vm1356, %v3314, %v3339
    %v3341 = vsel %vm1357, %v3313, %v3338
    %v3342 = vsel %vm1358, %v3312, %v3337
    %v3343 = vsel %vm1359, %v3311, %v3336
    %v3344 = vsel %vm1360, %v3310, %v3335
    %v3345 = vsel %vm1361, %v3309, %v3334
    %v3346 = vsel %vm1362, %v3308, %v3333
    %v3347 = vsel %vm1363, %v3315, %v3332
    %v3348 = vadd.f32 %v3124, %v3340
    %v3349 = vadd.f32 %v3133, %v3341
    %v3350 = vadd.f32 %v3142, %v3342
    %v3351 = vadd.f32 %v3151, %v3343
    %v3352 = vadd.f32 %v3160, %v3344
    %v3353 = vadd.f32 %v3169, %v3345
    %v3354 = vadd.f32 %v3178, %v3346
    %v3355 = vadd.f32 %v3187, %v3347
    %3356 = vrot.lane.b32.xlu0 %v3228, 127
    %v3357 = vpop.permute.xlu0 %3356
    %3358 = vrot.lane.b32.xlu0 %v3237, 127
    %v3359 = vpop.permute.xlu0 %3358
    %3360 = vrot.lane.b32.xlu0 %v3246, 127
    %v3361 = vpop.permute.xlu0 %3360
    %3362 = vrot.lane.b32.xlu0 %v3255, 127
    %v3363 = vpop.permute.xlu0 %3362
    %3364 = vrot.lane.b32.xlu0 %v3264, 127
    %v3365 = vpop.permute.xlu0 %3364
    %3366 = vrot.lane.b32.xlu0 %v3273, 127
    %v3367 = vpop.permute.xlu0 %3366
    %3368 = vrot.lane.b32.xlu0 %v3282, 127
    %v3369 = vpop.permute.xlu0 %3368
    %3370 = vrot.lane.b32.xlu0 %v3291, 127
    %v3371 = vpop.permute.xlu0 %3370
    %v3372 = vsel %vm1380, %v3369, %v3371
    %v3373 = vsel %vm1380, %v3367, %v3369
    %v3374 = vsel %vm1380, %v3365, %v3367
    %v3375 = vsel %vm1380, %v3363, %v3365
    %v3376 = vsel %vm1380, %v3361, %v3363
    %v3377 = vsel %vm1380, %v3359, %v3361
    %v3378 = vsel %vm1380, %v3357, %v3359
    %v3379 = vsel %vm1380, %v3371, %v3357
    %3380 = vrot.lane.b32.xlu0 %v3228, 1
    %v3381 = vpop.permute.xlu0 %3380
    %3382 = vrot.lane.b32.xlu0 %v3237, 1
    %v3383 = vpop.permute.xlu0 %3382
    %3384 = vrot.lane.b32.xlu0 %v3246, 1
    %v3385 = vpop.permute.xlu0 %3384
    %3386 = vrot.lane.b32.xlu0 %v3255, 1
    %v3387 = vpop.permute.xlu0 %3386
    %3388 = vrot.lane.b32.xlu0 %v3264, 1
    %v3389 = vpop.permute.xlu0 %3388
    %3390 = vrot.lane.b32.xlu0 %v3273, 1
    %v3391 = vpop.permute.xlu0 %3390
    %3392 = vrot.lane.b32.xlu0 %v3282, 1
    %v3393 = vpop.permute.xlu0 %3392
    %3394 = vrot.lane.b32.xlu0 %v3291, 1
    %v3395 = vpop.permute.xlu0 %3394
    %v3396 = vsel %vm1405, %v3393, %v3395
    %v3397 = vsel %vm1405, %v3391, %v3393
    %v3398 = vsel %vm1405, %v3389, %v3391
    %v3399 = vsel %vm1405, %v3387, %v3389
    %v3400 = vsel %vm1405, %v3385, %v3387
    %v3401 = vsel %vm1405, %v3383, %v3385
    %v3402 = vsel %vm1405, %v3381, %v3383
    %v3403 = vsel %vm1405, %v3395, %v3381
    %v3404 = vsel %vm1356, %v3378, %v3403
    %v3405 = vsel %vm1357, %v3377, %v3402
    %v3406 = vsel %vm1358, %v3376, %v3401
    %v3407 = vsel %vm1359, %v3375, %v3400
    %v3408 = vsel %vm1360, %v3374, %v3399
    %v3409 = vsel %vm1361, %v3373, %v3398
    %v3410 = vsel %vm1362, %v3372, %v3397
    %v3411 = vsel %vm1363, %v3379, %v3396
    %v3412 = vadd.f32 %v3228, %v3404
    %v3413 = vadd.f32 %v3237, %v3405
    %v3414 = vadd.f32 %v3246, %v3406
    %v3415 = vadd.f32 %v3255, %v3407
    %v3416 = vadd.f32 %v3264, %v3408
    %v3417 = vadd.f32 %v3273, %v3409
    %v3418 = vadd.f32 %v3282, %v3410
    %v3419 = vadd.f32 %v3291, %v3411
    %3420 = vrot.lane.b32.xlu0 %v3348, 126
    %v3421 = vpop.permute.xlu0 %3420
    %3422 = vrot.lane.b32.xlu0 %v3349, 126
    %v3423 = vpop.permute.xlu0 %3422
    %3424 = vrot.lane.b32.xlu0 %v3350, 126
    %v3425 = vpop.permute.xlu0 %3424
    %3426 = vrot.lane.b32.xlu0 %v3351, 126
    %v3427 = vpop.permute.xlu0 %3426
    %3428 = vrot.lane.b32.xlu0 %v3352, 126
    %v3429 = vpop.permute.xlu0 %3428
    %3430 = vrot.lane.b32.xlu0 %v3353, 126
    %v3431 = vpop.permute.xlu0 %3430
    %3432 = vrot.lane.b32.xlu0 %v3354, 126
    %v3433 = vpop.permute.xlu0 %3432
    %3434 = vrot.lane.b32.xlu0 %v3355, 126
    %v3435 = vpop.permute.xlu0 %3434
    %v3436 = vsel %vm1526, %v3433, %v3435
    %v3437 = vsel %vm1526, %v3431, %v3433
    %v3438 = vsel %vm1526, %v3429, %v3431
    %v3439 = vsel %vm1526, %v3427, %v3429
    %v3440 = vsel %vm1526, %v3425, %v3427
    %v3441 = vsel %vm1526, %v3423, %v3425
    %v3442 = vsel %vm1526, %v3421, %v3423
    %v3443 = vsel %vm1526, %v3435, %v3421
    %3444 = vrot.lane.b32.xlu0 %v3348, 2
    %v3445 = vpop.permute.xlu0 %3444
    %3446 = vrot.lane.b32.xlu0 %v3349, 2
    %v3447 = vpop.permute.xlu0 %3446
    %3448 = vrot.lane.b32.xlu0 %v3350, 2
    %v3449 = vpop.permute.xlu0 %3448
    %3450 = vrot.lane.b32.xlu0 %v3351, 2
    %v3451 = vpop.permute.xlu0 %3450
    %3452 = vrot.lane.b32.xlu0 %v3352, 2
    %v3453 = vpop.permute.xlu0 %3452
    %3454 = vrot.lane.b32.xlu0 %v3353, 2
    %v3455 = vpop.permute.xlu0 %3454
    %3456 = vrot.lane.b32.xlu0 %v3354, 2
    %v3457 = vpop.permute.xlu0 %3456
    %3458 = vrot.lane.b32.xlu0 %v3355, 2
    %v3459 = vpop.permute.xlu0 %3458
    %v3460 = vsel %vm1551, %v3457, %v3459
    %v3461 = vsel %vm1551, %v3455, %v3457
    %v3462 = vsel %vm1551, %v3453, %v3455
    %v3463 = vsel %vm1551, %v3451, %v3453
    %v3464 = vsel %vm1551, %v3449, %v3451
    %v3465 = vsel %vm1551, %v3447, %v3449
    %v3466 = vsel %vm1551, %v3445, %v3447
    %v3467 = vsel %vm1551, %v3459, %v3445
    %v3468 = vsel %vm1502, %v3442, %v3467
    %v3469 = vsel %vm1503, %v3441, %v3466
    %v3470 = vsel %vm1504, %v3440, %v3465
    %v3471 = vsel %vm1505, %v3439, %v3464
    %v3472 = vsel %vm1506, %v3438, %v3463
    %v3473 = vsel %vm1507, %v3437, %v3462
    %v3474 = vsel %vm1508, %v3436, %v3461
    %v3475 = vsel %vm1509, %v3443, %v3460
    %v3476 = vadd.f32 %v3348, %v3468
    %v3477 = vadd.f32 %v3349, %v3469
    %v3478 = vadd.f32 %v3350, %v3470
    %v3479 = vadd.f32 %v3351, %v3471
    %v3480 = vadd.f32 %v3352, %v3472
    %v3481 = vadd.f32 %v3353, %v3473
    %v3482 = vadd.f32 %v3354, %v3474
    %v3483 = vadd.f32 %v3355, %v3475
    %3484 = vrot.lane.b32.xlu0 %v3412, 126
    %v3485 = vpop.permute.xlu0 %3484
    %3486 = vrot.lane.b32.xlu0 %v3413, 126
    %v3487 = vpop.permute.xlu0 %3486
    %3488 = vrot.lane.b32.xlu0 %v3414, 126
    %v3489 = vpop.permute.xlu0 %3488
    %3490 = vrot.lane.b32.xlu0 %v3415, 126
    %v3491 = vpop.permute.xlu0 %3490
    %3492 = vrot.lane.b32.xlu0 %v3416, 126
    %v3493 = vpop.permute.xlu0 %3492
    %3494 = vrot.lane.b32.xlu0 %v3417, 126
    %v3495 = vpop.permute.xlu0 %3494
    %3496 = vrot.lane.b32.xlu0 %v3418, 126
    %v3497 = vpop.permute.xlu0 %3496
    %3498 = vrot.lane.b32.xlu0 %v3419, 126
    %v3499 = vpop.permute.xlu0 %3498
    %v3500 = vsel %vm1526, %v3497, %v3499
    %v3501 = vsel %vm1526, %v3495, %v3497
    %v3502 = vsel %vm1526, %v3493, %v3495
    %v3503 = vsel %vm1526, %v3491, %v3493
    %v3504 = vsel %vm1526, %v3489, %v3491
    %v3505 = vsel %vm1526, %v3487, %v3489
    %v3506 = vsel %vm1526, %v3485, %v3487
    %v3507 = vsel %vm1526, %v3499, %v3485
    %3508 = vrot.lane.b32.xlu0 %v3412, 2
    %v3509 = vpop.permute.xlu0 %3508
    %3510 = vrot.lane.b32.xlu0 %v3413, 2
    %v3511 = vpop.permute.xlu0 %3510
    %3512 = vrot.lane.b32.xlu0 %v3414, 2
    %v3513 = vpop.permute.xlu0 %3512
    %3514 = vrot.lane.b32.xlu0 %v3415, 2
    %v3515 = vpop.permute.xlu0 %3514
    %3516 = vrot.lane.b32.xlu0 %v3416, 2
    %v3517 = vpop.permute.xlu0 %3516
    %3518 = vrot.lane.b32.xlu0 %v3417, 2
    %v3519 = vpop.permute.xlu0 %3518
    %3520 = vrot.lane.b32.xlu0 %v3418, 2
    %v3521 = vpop.permute.xlu0 %3520
    %3522 = vrot.lane.b32.xlu0 %v3419, 2
    %v3523 = vpop.permute.xlu0 %3522
    %v3524 = vsel %vm1551, %v3521, %v3523
    %v3525 = vsel %vm1551, %v3519, %v3521
    %v3526 = vsel %vm1551, %v3517, %v3519
    %v3527 = vsel %vm1551, %v3515, %v3517
    %v3528 = vsel %vm1551, %v3513, %v3515
    %v3529 = vsel %vm1551, %v3511, %v3513
    %v3530 = vsel %vm1551, %v3509, %v3511
    %v3531 = vsel %vm1551, %v3523, %v3509
    %v3532 = vsel %vm1502, %v3506, %v3531
    %v3533 = vsel %vm1503, %v3505, %v3530
    %v3534 = vsel %vm1504, %v3504, %v3529
    %v3535 = vsel %vm1505, %v3503, %v3528
    %v3536 = vsel %vm1506, %v3502, %v3527
    %v3537 = vsel %vm1507, %v3501, %v3526
    %v3538 = vsel %vm1508, %v3500, %v3525
    %v3539 = vsel %vm1509, %v3507, %v3524
    %v3540 = vadd.f32 %v3412, %v3532
    %v3541 = vadd.f32 %v3413, %v3533
    %v3542 = vadd.f32 %v3414, %v3534
    %v3543 = vadd.f32 %v3415, %v3535
    %v3544 = vadd.f32 %v3416, %v3536
    %v3545 = vadd.f32 %v3417, %v3537
    %v3546 = vadd.f32 %v3418, %v3538
    %v3547 = vadd.f32 %v3419, %v3539
    %3548 = vrot.lane.b32.xlu0 %v3476, 124
    %v3549 = vpop.permute.xlu0 %3548
    %3550 = vrot.lane.b32.xlu0 %v3477, 124
    %v3551 = vpop.permute.xlu0 %3550
    %3552 = vrot.lane.b32.xlu0 %v3478, 124
    %v3553 = vpop.permute.xlu0 %3552
    %3554 = vrot.lane.b32.xlu0 %v3479, 124
    %v3555 = vpop.permute.xlu0 %3554
    %3556 = vrot.lane.b32.xlu0 %v3480, 124
    %v3557 = vpop.permute.xlu0 %3556
    %3558 = vrot.lane.b32.xlu0 %v3481, 124
    %v3559 = vpop.permute.xlu0 %3558
    %3560 = vrot.lane.b32.xlu0 %v3482, 124
    %v3561 = vpop.permute.xlu0 %3560
    %3562 = vrot.lane.b32.xlu0 %v3483, 124
    %v3563 = vpop.permute.xlu0 %3562
    %v3564 = vsel %vm2480, %v3561, %v3563
    %v3565 = vsel %vm2480, %v3559, %v3561
    %v3566 = vsel %vm2480, %v3557, %v3559
    %v3567 = vsel %vm2480, %v3555, %v3557
    %v3568 = vsel %vm2480, %v3553, %v3555
    %v3569 = vsel %vm2480, %v3551, %v3553
    %v3570 = vsel %vm2480, %v3549, %v3551
    %v3571 = vsel %vm2480, %v3563, %v3549
    %3572 = vrot.lane.b32.xlu0 %v3476, 4
    %v3573 = vpop.permute.xlu0 %3572
    %3574 = vrot.lane.b32.xlu0 %v3477, 4
    %v3575 = vpop.permute.xlu0 %3574
    %3576 = vrot.lane.b32.xlu0 %v3478, 4
    %v3577 = vpop.permute.xlu0 %3576
    %3578 = vrot.lane.b32.xlu0 %v3479, 4
    %v3579 = vpop.permute.xlu0 %3578
    %3580 = vrot.lane.b32.xlu0 %v3480, 4
    %v3581 = vpop.permute.xlu0 %3580
    %3582 = vrot.lane.b32.xlu0 %v3481, 4
    %v3583 = vpop.permute.xlu0 %3582
    %3584 = vrot.lane.b32.xlu0 %v3482, 4
    %v3585 = vpop.permute.xlu0 %3584
    %3586 = vrot.lane.b32.xlu0 %v3483, 4
    %v3587 = vpop.permute.xlu0 %3586
    %v3588 = vsel %vm2505, %v3585, %v3587
    %v3589 = vsel %vm2505, %v3583, %v3585
    %v3590 = vsel %vm2505, %v3581, %v3583
    %v3591 = vsel %vm2505, %v3579, %v3581
    %v3592 = vsel %vm2505, %v3577, %v3579
    %v3593 = vsel %vm2505, %v3575, %v3577
    %v3594 = vsel %vm2505, %v3573, %v3575
    %v3595 = vsel %vm2505, %v3587, %v3573
    %v3596 = vsel %vm2456, %v3570, %v3595
    %v3597 = vsel %vm2457, %v3569, %v3594
    %v3598 = vsel %vm2458, %v3568, %v3593
    %v3599 = vsel %vm2459, %v3567, %v3592
    %v3600 = vsel %vm2460, %v3566, %v3591
    %v3601 = vsel %vm2461, %v3565, %v3590
    %v3602 = vsel %vm2462, %v3564, %v3589
    %v3603 = vsel %vm2463, %v3571, %v3588
    %v3604 = vadd.f32 %v3476, %v3596
    %v3605 = vadd.f32 %v3477, %v3597
    %v3606 = vadd.f32 %v3478, %v3598
    %v3607 = vadd.f32 %v3479, %v3599
    %v3608 = vadd.f32 %v3480, %v3600
    %v3609 = vadd.f32 %v3481, %v3601
    %v3610 = vadd.f32 %v3482, %v3602
    %v3611 = vadd.f32 %v3483, %v3603
    %3612 = vrot.lane.b32.xlu0 %v3540, 124
    %v3613 = vpop.permute.xlu0 %3612
    %3614 = vrot.lane.b32.xlu0 %v3541, 124
    %v3615 = vpop.permute.xlu0 %3614
    %3616 = vrot.lane.b32.xlu0 %v3542, 124
    %v3617 = vpop.permute.xlu0 %3616
    %3618 = vrot.lane.b32.xlu0 %v3543, 124
    %v3619 = vpop.permute.xlu0 %3618
    %3620 = vrot.lane.b32.xlu0 %v3544, 124
    %v3621 = vpop.permute.xlu0 %3620
    %3622 = vrot.lane.b32.xlu0 %v3545, 124
    %v3623 = vpop.permute.xlu0 %3622
    %3624 = vrot.lane.b32.xlu0 %v3546, 124
    %v3625 = vpop.permute.xlu0 %3624
    %3626 = vrot.lane.b32.xlu0 %v3547, 124
    %v3627 = vpop.permute.xlu0 %3626
    %v3628 = vsel %vm2480, %v3625, %v3627
    %v3629 = vsel %vm2480, %v3623, %v3625
    %v3630 = vsel %vm2480, %v3621, %v3623
    %v3631 = vsel %vm2480, %v3619, %v3621
    %v3632 = vsel %vm2480, %v3617, %v3619
    %v3633 = vsel %vm2480, %v3615, %v3617
    %v3634 = vsel %vm2480, %v3613, %v3615
    %v3635 = vsel %vm2480, %v3627, %v3613
    %3636 = vrot.lane.b32.xlu0 %v3540, 4
    %v3637 = vpop.permute.xlu0 %3636
    %3638 = vrot.lane.b32.xlu0 %v3541, 4
    %v3639 = vpop.permute.xlu0 %3638
    %3640 = vrot.lane.b32.xlu0 %v3542, 4
    %v3641 = vpop.permute.xlu0 %3640
    %3642 = vrot.lane.b32.xlu0 %v3543, 4
    %v3643 = vpop.permute.xlu0 %3642
    %3644 = vrot.lane.b32.xlu0 %v3544, 4
    %v3645 = vpop.permute.xlu0 %3644
    %3646 = vrot.lane.b32.xlu0 %v3545, 4
    %v3647 = vpop.permute.xlu0 %3646
    %3648 = vrot.lane.b32.xlu0 %v3546, 4
    %v3649 = vpop.permute.xlu0 %3648
    %3650 = vrot.lane.b32.xlu0 %v3547, 4
    %v3651 = vpop.permute.xlu0 %3650
    %v3652 = vsel %vm2505, %v3649, %v3651
    %v3653 = vsel %vm2505, %v3647, %v3649
    %v3654 = vsel %vm2505, %v3645, %v3647
    %v3655 = vsel %vm2505, %v3643, %v3645
    %v3656 = vsel %vm2505, %v3641, %v3643
    %v3657 = vsel %vm2505, %v3639, %v3641
    %v3658 = vsel %vm2505, %v3637, %v3639
    %v3659 = vsel %vm2505, %v3651, %v3637
    %v3660 = vsel %vm2456, %v3634, %v3659
    %v3661 = vsel %vm2457, %v3633, %v3658
    %v3662 = vsel %vm2458, %v3632, %v3657
    %v3663 = vsel %vm2459, %v3631, %v3656
    %v3664 = vsel %vm2460, %v3630, %v3655
    %v3665 = vsel %vm2461, %v3629, %v3654
    %v3666 = vsel %vm2462, %v3628, %v3653
    %v3667 = vsel %vm2463, %v3635, %v3652
    %v3668 = vadd.f32 %v3540, %v3660
    %v3669 = vadd.f32 %v3541, %v3661
    %v3670 = vadd.f32 %v3542, %v3662
    %v3671 = vadd.f32 %v3543, %v3663
    %v3672 = vadd.f32 %v3544, %v3664
    %v3673 = vadd.f32 %v3545, %v3665
    %v3674 = vadd.f32 %v3546, %v3666
    %v3675 = vadd.f32 %v3547, %v3667
    %3676 = vrot.lane.b32.xlu0 %v3604, 120
    %v3677 = vpop.permute.xlu0 %3676
    %3678 = vrot.lane.b32.xlu0 %v3605, 120
    %v3679 = vpop.permute.xlu0 %3678
    %3680 = vrot.lane.b32.xlu0 %v3606, 120
    %v3681 = vpop.permute.xlu0 %3680
    %3682 = vrot.lane.b32.xlu0 %v3607, 120
    %v3683 = vpop.permute.xlu0 %3682
    %3684 = vrot.lane.b32.xlu0 %v3608, 120
    %v3685 = vpop.permute.xlu0 %3684
    %3686 = vrot.lane.b32.xlu0 %v3609, 120
    %v3687 = vpop.permute.xlu0 %3686
    %3688 = vrot.lane.b32.xlu0 %v3610, 120
    %v3689 = vpop.permute.xlu0 %3688
    %3690 = vrot.lane.b32.xlu0 %v3611, 120
    %v3691 = vpop.permute.xlu0 %3690
    %v3692 = vsel %vm2626, %v3689, %v3691
    %v3693 = vsel %vm2626, %v3687, %v3689
    %v3694 = vsel %vm2626, %v3685, %v3687
    %v3695 = vsel %vm2626, %v3683, %v3685
    %v3696 = vsel %vm2626, %v3681, %v3683
    %v3697 = vsel %vm2626, %v3679, %v3681
    %v3698 = vsel %vm2626, %v3677, %v3679
    %v3699 = vsel %vm2626, %v3691, %v3677
    %3700 = vrot.lane.b32.xlu0 %v3604, 8
    %v3701 = vpop.permute.xlu0 %3700
    %3702 = vrot.lane.b32.xlu0 %v3605, 8
    %v3703 = vpop.permute.xlu0 %3702
    %3704 = vrot.lane.b32.xlu0 %v3606, 8
    %v3705 = vpop.permute.xlu0 %3704
    %3706 = vrot.lane.b32.xlu0 %v3607, 8
    %v3707 = vpop.permute.xlu0 %3706
    %3708 = vrot.lane.b32.xlu0 %v3608, 8
    %v3709 = vpop.permute.xlu0 %3708
    %3710 = vrot.lane.b32.xlu0 %v3609, 8
    %v3711 = vpop.permute.xlu0 %3710
    %3712 = vrot.lane.b32.xlu0 %v3610, 8
    %v3713 = vpop.permute.xlu0 %3712
    %3714 = vrot.lane.b32.xlu0 %v3611, 8
    %v3715 = vpop.permute.xlu0 %3714
    %v3716 = vsel %vm2651, %v3713, %v3715
    %v3717 = vsel %vm2651, %v3711, %v3713
    %v3718 = vsel %vm2651, %v3709, %v3711
    %v3719 = vsel %vm2651, %v3707, %v3709
    %v3720 = vsel %vm2651, %v3705, %v3707
    %v3721 = vsel %vm2651, %v3703, %v3705
    %v3722 = vsel %vm2651, %v3701, %v3703
    %v3723 = vsel %vm2651, %v3715, %v3701
    %v3724 = vsel %vm2602, %v3698, %v3723
    %v3725 = vsel %vm2603, %v3697, %v3722
    %v3726 = vsel %vm2604, %v3696, %v3721
    %v3727 = vsel %vm2605, %v3695, %v3720
    %v3728 = vsel %vm2606, %v3694, %v3719
    %v3729 = vsel %vm2607, %v3693, %v3718
    %v3730 = vsel %vm2608, %v3692, %v3717
    %v3731 = vsel %vm2609, %v3699, %v3716
    %v3732 = vadd.f32 %v3604, %v3724
    %v3733 = vadd.f32 %v3605, %v3725
    %v3734 = vadd.f32 %v3606, %v3726
    %v3735 = vadd.f32 %v3607, %v3727
    %v3736 = vadd.f32 %v3608, %v3728
    %v3737 = vadd.f32 %v3609, %v3729
    %v3738 = vadd.f32 %v3610, %v3730
    %v3739 = vadd.f32 %v3611, %v3731
    %3740 = vrot.lane.b32.xlu0 %v3668, 120
    %v3741 = vpop.permute.xlu0 %3740
    %3742 = vrot.lane.b32.xlu0 %v3669, 120
    %v3743 = vpop.permute.xlu0 %3742
    %3744 = vrot.lane.b32.xlu0 %v3670, 120
    %v3745 = vpop.permute.xlu0 %3744
    %3746 = vrot.lane.b32.xlu0 %v3671, 120
    %v3747 = vpop.permute.xlu0 %3746
    %3748 = vrot.lane.b32.xlu0 %v3672, 120
    %v3749 = vpop.permute.xlu0 %3748
    %3750 = vrot.lane.b32.xlu0 %v3673, 120
    %v3751 = vpop.permute.xlu0 %3750
    %3752 = vrot.lane.b32.xlu0 %v3674, 120
    %v3753 = vpop.permute.xlu0 %3752
    %3754 = vrot.lane.b32.xlu0 %v3675, 120
    %v3755 = vpop.permute.xlu0 %3754
    %v3756 = vsel %vm2626, %v3753, %v3755
    %v3757 = vsel %vm2626, %v3751, %v3753
    %v3758 = vsel %vm2626, %v3749, %v3751
    %v3759 = vsel %vm2626, %v3747, %v3749
    %v3760 = vsel %vm2626, %v3745, %v3747
    %v3761 = vsel %vm2626, %v3743, %v3745
    %v3762 = vsel %vm2626, %v3741, %v3743
    %v3763 = vsel %vm2626, %v3755, %v3741
    %3764 = vrot.lane.b32.xlu0 %v3668, 8
    %v3765 = vpop.permute.xlu0 %3764
    %3766 = vrot.lane.b32.xlu0 %v3669, 8
    %v3767 = vpop.permute.xlu0 %3766
    %3768 = vrot.lane.b32.xlu0 %v3670, 8
    %v3769 = vpop.permute.xlu0 %3768
    %3770 = vrot.lane.b32.xlu0 %v3671, 8
    %v3771 = vpop.permute.xlu0 %3770
    %3772 = vrot.lane.b32.xlu0 %v3672, 8
    %v3773 = vpop.permute.xlu0 %3772
    %3774 = vrot.lane.b32.xlu0 %v3673, 8
    %v3775 = vpop.permute.xlu0 %3774
    %3776 = vrot.lane.b32.xlu0 %v3674, 8
    %v3777 = vpop.permute.xlu0 %3776
    %3778 = vrot.lane.b32.xlu0 %v3675, 8
    %v3779 = vpop.permute.xlu0 %3778
    %v3780 = vsel %vm2651, %v3777, %v3779
    %v3781 = vsel %vm2651, %v3775, %v3777
    %v3782 = vsel %vm2651, %v3773, %v3775
    %v3783 = vsel %vm2651, %v3771, %v3773
    %v3784 = vsel %vm2651, %v3769, %v3771
    %v3785 = vsel %vm2651, %v3767, %v3769
    %v3786 = vsel %vm2651, %v3765, %v3767
    %v3787 = vsel %vm2651, %v3779, %v3765
    %v3788 = vsel %vm2602, %v3762, %v3787
    %v3789 = vsel %vm2603, %v3761, %v3786
    %v3790 = vsel %vm2604, %v3760, %v3785
    %v3791 = vsel %vm2605, %v3759, %v3784
    %v3792 = vsel %vm2606, %v3758, %v3783
    %v3793 = vsel %vm2607, %v3757, %v3782
    %v3794 = vsel %vm2608, %v3756, %v3781
    %v3795 = vsel %vm2609, %v3763, %v3780
    %v3796 = vadd.f32 %v3668, %v3788
    %v3797 = vadd.f32 %v3669, %v3789
    %v3798 = vadd.f32 %v3670, %v3790
    %v3799 = vadd.f32 %v3671, %v3791
    %v3800 = vadd.f32 %v3672, %v3792
    %v3801 = vadd.f32 %v3673, %v3793
    %v3802 = vadd.f32 %v3674, %v3794
    %v3803 = vadd.f32 %v3675, %v3795
    %v3804 = vand.u32 %v684, 16
    %v3805 = vand.u32 %v685, 16
    %v3806 = vand.u32 %v686, 16
    %v3807 = vand.u32 %v687, 16
    %v3808 = vand.u32 %v688, 16
    %v3809 = vand.u32 %v689, 16
    %v3810 = vand.u32 %v690, 16
    %v3811 = vand.u32 %v691, 16
    %vm3812 = vcmp.eq.s32.totalorder %v3804, 0
    %vm3813 = vcmp.eq.s32.totalorder %v3805, 0
    %vm3814 = vcmp.eq.s32.totalorder %v3806, 0
    %vm3815 = vcmp.eq.s32.totalorder %v3807, 0
    %vm3816 = vcmp.eq.s32.totalorder %v3808, 0
    %vm3817 = vcmp.eq.s32.totalorder %v3809, 0
    %vm3818 = vcmp.eq.s32.totalorder %v3810, 0
    %vm3819 = vcmp.eq.s32.totalorder %v3811, 0
    %3820 = vrot.lane.b32.xlu0 %v3732, 112
    %v3821 = vpop.permute.xlu0 %3820
    %3822 = vrot.lane.b32.xlu0 %v3733, 112
    %v3823 = vpop.permute.xlu0 %3822
    %3824 = vrot.lane.b32.xlu0 %v3734, 112
    %v3825 = vpop.permute.xlu0 %3824
    %3826 = vrot.lane.b32.xlu0 %v3735, 112
    %v3827 = vpop.permute.xlu0 %3826
    %3828 = vrot.lane.b32.xlu0 %v3736, 112
    %v3829 = vpop.permute.xlu0 %3828
    %3830 = vrot.lane.b32.xlu0 %v3737, 112
    %v3831 = vpop.permute.xlu0 %3830
    %3832 = vrot.lane.b32.xlu0 %v3738, 112
    %v3833 = vpop.permute.xlu0 %3832
    %3834 = vrot.lane.b32.xlu0 %v3739, 112
    %v3835 = vpop.permute.xlu0 %3834
    %vm3836 = vcmp.lt.s32.totalorder %v684, 112
    %v3837 = vsel %vm3836, %v3833, %v3835
    %v3838 = vsel %vm3836, %v3831, %v3833
    %v3839 = vsel %vm3836, %v3829, %v3831
    %v3840 = vsel %vm3836, %v3827, %v3829
    %v3841 = vsel %vm3836, %v3825, %v3827
    %v3842 = vsel %vm3836, %v3823, %v3825
    %v3843 = vsel %vm3836, %v3821, %v3823
    %v3844 = vsel %vm3836, %v3835, %v3821
    %3845 = vrot.lane.b32.xlu0 %v3732, 16
    %v3846 = vpop.permute.xlu0 %3845
    %3847 = vrot.lane.b32.xlu0 %v3733, 16
    %v3848 = vpop.permute.xlu0 %3847
    %3849 = vrot.lane.b32.xlu0 %v3734, 16
    %v3850 = vpop.permute.xlu0 %3849
    %3851 = vrot.lane.b32.xlu0 %v3735, 16
    %v3852 = vpop.permute.xlu0 %3851
    %3853 = vrot.lane.b32.xlu0 %v3736, 16
    %v3854 = vpop.permute.xlu0 %3853
    %3855 = vrot.lane.b32.xlu0 %v3737, 16
    %v3856 = vpop.permute.xlu0 %3855
    %3857 = vrot.lane.b32.xlu0 %v3738, 16
    %v3858 = vpop.permute.xlu0 %3857
    %3859 = vrot.lane.b32.xlu0 %v3739, 16
    %v3860 = vpop.permute.xlu0 %3859
    %vm3861 = vcmp.lt.s32.totalorder %v684, 16
    %v3862 = vsel %vm3861, %v3858, %v3860
    %v3863 = vsel %vm3861, %v3856, %v3858
    %v3864 = vsel %vm3861, %v3854, %v3856
    %v3865 = vsel %vm3861, %v3852, %v3854
    %v3866 = vsel %vm3861, %v3850, %v3852
    %v3867 = vsel %vm3861, %v3848, %v3850
    %v3868 = vsel %vm3861, %v3846, %v3848
    %v3869 = vsel %vm3861, %v3860, %v3846
    %v3870 = vsel %vm3812, %v3843, %v3869
    %v3871 = vsel %vm3813, %v3842, %v3868
    %v3872 = vsel %vm3814, %v3841, %v3867
    %v3873 = vsel %vm3815, %v3840, %v3866
    %v3874 = vsel %vm3816, %v3839, %v3865
    %v3875 = vsel %vm3817, %v3838, %v3864
    %v3876 = vsel %vm3818, %v3837, %v3863
    %v3877 = vsel %vm3819, %v3844, %v3862
    %v3878 = vadd.f32 %v3732, %v3870
    %v3879 = vadd.f32 %v3733, %v3871
    %v3880 = vadd.f32 %v3734, %v3872
    %v3881 = vadd.f32 %v3735, %v3873
    %v3882 = vadd.f32 %v3736, %v3874
    %v3883 = vadd.f32 %v3737, %v3875
    %v3884 = vadd.f32 %v3738, %v3876
    %v3885 = vadd.f32 %v3739, %v3877
    %3886 = vrot.lane.b32.xlu0 %v3796, 112
    %v3887 = vpop.permute.xlu0 %3886
    %3888 = vrot.lane.b32.xlu0 %v3797, 112
    %v3889 = vpop.permute.xlu0 %3888
    %3890 = vrot.lane.b32.xlu0 %v3798, 112
    %v3891 = vpop.permute.xlu0 %3890
    %3892 = vrot.lane.b32.xlu0 %v3799, 112
    %v3893 = vpop.permute.xlu0 %3892
    %3894 = vrot.lane.b32.xlu0 %v3800, 112
    %v3895 = vpop.permute.xlu0 %3894
    %3896 = vrot.lane.b32.xlu0 %v3801, 112
    %v3897 = vpop.permute.xlu0 %3896
    %3898 = vrot.lane.b32.xlu0 %v3802, 112
    %v3899 = vpop.permute.xlu0 %3898
    %3900 = vrot.lane.b32.xlu0 %v3803, 112
    %v3901 = vpop.permute.xlu0 %3900
    %v3902 = vsel %vm3836, %v3899, %v3901
    %v3903 = vsel %vm3836, %v3897, %v3899
    %v3904 = vsel %vm3836, %v3895, %v3897
    %v3905 = vsel %vm3836, %v3893, %v3895
    %v3906 = vsel %vm3836, %v3891, %v3893
    %v3907 = vsel %vm3836, %v3889, %v3891
    %v3908 = vsel %vm3836, %v3887, %v3889
    %v3909 = vsel %vm3836, %v3901, %v3887
    %3910 = vrot.lane.b32.xlu0 %v3796, 16
    %v3911 = vpop.permute.xlu0 %3910
    %3912 = vrot.lane.b32.xlu0 %v3797, 16
    %v3913 = vpop.permute.xlu0 %3912
    %3914 = vrot.lane.b32.xlu0 %v3798, 16
    %v3915 = vpop.permute.xlu0 %3914
    %3916 = vrot.lane.b32.xlu0 %v3799, 16
    %v3917 = vpop.permute.xlu0 %3916
    %3918 = vrot.lane.b32.xlu0 %v3800, 16
    %v3919 = vpop.permute.xlu0 %3918
    %3920 = vrot.lane.b32.xlu0 %v3801, 16
    %v3921 = vpop.permute.xlu0 %3920
    %3922 = vrot.lane.b32.xlu0 %v3802, 16
    %v3923 = vpop.permute.xlu0 %3922
    %3924 = vrot.lane.b32.xlu0 %v3803, 16
    %v3925 = vpop.permute.xlu0 %3924
    %v3926 = vsel %vm3861, %v3923, %v3925
    %v3927 = vsel %vm3861, %v3921, %v3923
    %v3928 = vsel %vm3861, %v3919, %v3921
    %v3929 = vsel %vm3861, %v3917, %v3919
    %v3930 = vsel %vm3861, %v3915, %v3917
    %v3931 = vsel %vm3861, %v3913, %v3915
    %v3932 = vsel %vm3861, %v3911, %v3913
    %v3933 = vsel %vm3861, %v3925, %v3911
    %v3934 = vsel %vm3812, %v3908, %v3933
    %v3935 = vsel %vm3813, %v3907, %v3932
    %v3936 = vsel %vm3814, %v3906, %v3931
    %v3937 = vsel %vm3815, %v3905, %v3930
    %v3938 = vsel %vm3816, %v3904, %v3929
    %v3939 = vsel %vm3817, %v3903, %v3928
    %v3940 = vsel %vm3818, %v3902, %v3927
    %v3941 = vsel %vm3819, %v3909, %v3926
    %v3942 = vadd.f32 %v3796, %v3934
    %v3943 = vadd.f32 %v3797, %v3935
    %v3944 = vadd.f32 %v3798, %v3936
    %v3945 = vadd.f32 %v3799, %v3937
    %v3946 = vadd.f32 %v3800, %v3938
    %v3947 = vadd.f32 %v3801, %v3939
    %v3948 = vadd.f32 %v3802, %v3940
    %v3949 = vadd.f32 %v3803, %v3941
    %v3950 = vand.u32 %v684, 32
    %v3951 = vand.u32 %v685, 32
    %v3952 = vand.u32 %v686, 32
    %v3953 = vand.u32 %v687, 32
    %v3954 = vand.u32 %v688, 32
    %v3955 = vand.u32 %v689, 32
    %v3956 = vand.u32 %v690, 32
    %v3957 = vand.u32 %v691, 32
    %vm3958 = vcmp.eq.s32.totalorder %v3950, 0
    %vm3959 = vcmp.eq.s32.totalorder %v3951, 0
    %vm3960 = vcmp.eq.s32.totalorder %v3952, 0
    %vm3961 = vcmp.eq.s32.totalorder %v3953, 0
    %vm3962 = vcmp.eq.s32.totalorder %v3954, 0
    %vm3963 = vcmp.eq.s32.totalorder %v3955, 0
    %vm3964 = vcmp.eq.s32.totalorder %v3956, 0
    %vm3965 = vcmp.eq.s32.totalorder %v3957, 0
    %3966 = vrot.lane.b32.xlu0 %v3878, 96
    %v3967 = vpop.permute.xlu0 %3966
    %3968 = vrot.lane.b32.xlu0 %v3879, 96
    %v3969 = vpop.permute.xlu0 %3968
    %3970 = vrot.lane.b32.xlu0 %v3880, 96
    %v3971 = vpop.permute.xlu0 %3970
    %3972 = vrot.lane.b32.xlu0 %v3881, 96
    %v3973 = vpop.permute.xlu0 %3972
    %3974 = vrot.lane.b32.xlu0 %v3882, 96
    %v3975 = vpop.permute.xlu0 %3974
    %3976 = vrot.lane.b32.xlu0 %v3883, 96
    %v3977 = vpop.permute.xlu0 %3976
    %3978 = vrot.lane.b32.xlu0 %v3884, 96
    %v3979 = vpop.permute.xlu0 %3978
    %3980 = vrot.lane.b32.xlu0 %v3885, 96
    %v3981 = vpop.permute.xlu0 %3980
    %vm3982 = vcmp.lt.s32.totalorder %v684, 96
    %v3983 = vsel %vm3982, %v3979, %v3981
    %v3984 = vsel %vm3982, %v3977, %v3979
    %v3985 = vsel %vm3982, %v3975, %v3977
    %v3986 = vsel %vm3982, %v3973, %v3975
    %v3987 = vsel %vm3982, %v3971, %v3973
    %v3988 = vsel %vm3982, %v3969, %v3971
    %v3989 = vsel %vm3982, %v3967, %v3969
    %v3990 = vsel %vm3982, %v3981, %v3967
    %3991 = vrot.lane.b32.xlu0 %v3878, 32
    %v3992 = vpop.permute.xlu0 %3991
    %3993 = vrot.lane.b32.xlu0 %v3879, 32
    %v3994 = vpop.permute.xlu0 %3993
    %3995 = vrot.lane.b32.xlu0 %v3880, 32
    %v3996 = vpop.permute.xlu0 %3995
    %3997 = vrot.lane.b32.xlu0 %v3881, 32
    %v3998 = vpop.permute.xlu0 %3997
    %3999 = vrot.lane.b32.xlu0 %v3882, 32
    %v4000 = vpop.permute.xlu0 %3999
    %4001 = vrot.lane.b32.xlu0 %v3883, 32
    %v4002 = vpop.permute.xlu0 %4001
    %4003 = vrot.lane.b32.xlu0 %v3884, 32
    %v4004 = vpop.permute.xlu0 %4003
    %4005 = vrot.lane.b32.xlu0 %v3885, 32
    %v4006 = vpop.permute.xlu0 %4005
    %vm4007 = vcmp.lt.s32.totalorder %v684, 32
    %v4008 = vsel %vm4007, %v4004, %v4006
    %v4009 = vsel %vm4007, %v4002, %v4004
    %v4010 = vsel %vm4007, %v4000, %v4002
    %v4011 = vsel %vm4007, %v3998, %v4000
    %v4012 = vsel %vm4007, %v3996, %v3998
    %v4013 = vsel %vm4007, %v3994, %v3996
    %v4014 = vsel %vm4007, %v3992, %v3994
    %v4015 = vsel %vm4007, %v4006, %v3992
    %v4016 = vsel %vm3958, %v3989, %v4015
    %v4017 = vsel %vm3959, %v3988, %v4014
    %v4018 = vsel %vm3960, %v3987, %v4013
    %v4019 = vsel %vm3961, %v3986, %v4012
    %v4020 = vsel %vm3962, %v3985, %v4011
    %v4021 = vsel %vm3963, %v3984, %v4010
    %v4022 = vsel %vm3964, %v3983, %v4009
    %v4023 = vsel %vm3965, %v3990, %v4008
    %v4024 = vadd.f32 %v3878, %v4016
    %v4025 = vadd.f32 %v3879, %v4017
    %v4026 = vadd.f32 %v3880, %v4018
    %v4027 = vadd.f32 %v3881, %v4019
    %v4028 = vadd.f32 %v3882, %v4020
    %v4029 = vadd.f32 %v3883, %v4021
    %v4030 = vadd.f32 %v3884, %v4022
    %v4031 = vadd.f32 %v3885, %v4023
    %4032 = vrot.lane.b32.xlu0 %v3942, 96
    %v4033 = vpop.permute.xlu0 %4032
    %4034 = vrot.lane.b32.xlu0 %v3943, 96
    %v4035 = vpop.permute.xlu0 %4034
    %4036 = vrot.lane.b32.xlu0 %v3944, 96
    %v4037 = vpop.permute.xlu0 %4036
    %4038 = vrot.lane.b32.xlu0 %v3945, 96
    %v4039 = vpop.permute.xlu0 %4038
    %4040 = vrot.lane.b32.xlu0 %v3946, 96
    %v4041 = vpop.permute.xlu0 %4040
    %4042 = vrot.lane.b32.xlu0 %v3947, 96
    %v4043 = vpop.permute.xlu0 %4042
    %4044 = vrot.lane.b32.xlu0 %v3948, 96
    %v4045 = vpop.permute.xlu0 %4044
    %4046 = vrot.lane.b32.xlu0 %v3949, 96
    %v4047 = vpop.permute.xlu0 %4046
    %v4048 = vsel %vm3982, %v4045, %v4047
    %v4049 = vsel %vm3982, %v4043, %v4045
    %v4050 = vsel %vm3982, %v4041, %v4043
    %v4051 = vsel %vm3982, %v4039, %v4041
    %v4052 = vsel %vm3982, %v4037, %v4039
    %v4053 = vsel %vm3982, %v4035, %v4037
    %v4054 = vsel %vm3982, %v4033, %v4035
    %v4055 = vsel %vm3982, %v4047, %v4033
    %4056 = vrot.lane.b32.xlu0 %v3942, 32
    %v4057 = vpop.permute.xlu0 %4056
    %4058 = vrot.lane.b32.xlu0 %v3943, 32
    %v4059 = vpop.permute.xlu0 %4058
    %4060 = vrot.lane.b32.xlu0 %v3944, 32
    %v4061 = vpop.permute.xlu0 %4060
    %4062 = vrot.lane.b32.xlu0 %v3945, 32
    %v4063 = vpop.permute.xlu0 %4062
    %4064 = vrot.lane.b32.xlu0 %v3946, 32
    %v4065 = vpop.permute.xlu0 %4064
    %4066 = vrot.lane.b32.xlu0 %v3947, 32
    %v4067 = vpop.permute.xlu0 %4066
    %4068 = vrot.lane.b32.xlu0 %v3948, 32
    %v4069 = vpop.permute.xlu0 %4068
    %4070 = vrot.lane.b32.xlu0 %v3949, 32
    %v4071 = vpop.permute.xlu0 %4070
    %v4072 = vsel %vm4007, %v4069, %v4071
    %v4073 = vsel %vm4007, %v4067, %v4069
    %v4074 = vsel %vm4007, %v4065, %v4067
    %v4075 = vsel %vm4007, %v4063, %v4065
    %v4076 = vsel %vm4007, %v4061, %v4063
    %v4077 = vsel %vm4007, %v4059, %v4061
    %v4078 = vsel %vm4007, %v4057, %v4059
    %v4079 = vsel %vm4007, %v4071, %v4057
    %v4080 = vsel %vm3958, %v4054, %v4079
    %v4081 = vsel %vm3959, %v4053, %v4078
    %v4082 = vsel %vm3960, %v4052, %v4077
    %v4083 = vsel %vm3961, %v4051, %v4076
    %v4084 = vsel %vm3962, %v4050, %v4075
    %v4085 = vsel %vm3963, %v4049, %v4074
    %v4086 = vsel %vm3964, %v4048, %v4073
    %v4087 = vsel %vm3965, %v4055, %v4072
    %v4088 = vadd.f32 %v3942, %v4080
    %v4089 = vadd.f32 %v3943, %v4081
    %v4090 = vadd.f32 %v3944, %v4082
    %v4091 = vadd.f32 %v3945, %v4083
    %v4092 = vadd.f32 %v3946, %v4084
    %v4093 = vadd.f32 %v3947, %v4085
    %v4094 = vadd.f32 %v3948, %v4086
    %v4095 = vadd.f32 %v3949, %v4087
    %v4096 = vmul.f32 %v4024, 0.00048828125
    %v4097 = vmul.f32 %v4025, 0.00048828125
    %v4098 = vmul.f32 %v4026, 0.00048828125
    %v4099 = vmul.f32 %v4027, 0.00048828125
    %v4100 = vmul.f32 %v4028, 0.00048828125
    %v4101 = vmul.f32 %v4029, 0.00048828125
    %v4102 = vmul.f32 %v4030, 0.00048828125
    %v4103 = vmul.f32 %v4031, 0.00048828125
    %v4104 = vmul.f32 %v4088, 0.00048828125
    %v4105 = vmul.f32 %v4089, 0.00048828125
    %v4106 = vmul.f32 %v4090, 0.00048828125
    %v4107 = vmul.f32 %v4091, 0.00048828125
    %v4108 = vmul.f32 %v4092, 0.00048828125
    %v4109 = vmul.f32 %v4093, 0.00048828125
    %v4110 = vmul.f32 %v4094, 0.00048828125
    %v4111 = vmul.f32 %v4095, 0.00048828125
    %v4112 = vmul.f32 %v4096, %v4096
    %v4113 = vmul.f32 %v4097, %v4097
    %v4114 = vmul.f32 %v4098, %v4098
    %v4115 = vmul.f32 %v4099, %v4099
    %v4116 = vmul.f32 %v4100, %v4100
    %v4117 = vmul.f32 %v4101, %v4101
    %v4118 = vmul.f32 %v4102, %v4102
    %v4119 = vmul.f32 %v4103, %v4103
    %v4120 = vsub.f32 %v4104, %v4112
    %v4121 = vsub.f32 %v4105, %v4113
    %v4122 = vsub.f32 %v4106, %v4114
    %v4123 = vsub.f32 %v4107, %v4115
    %v4124 = vsub.f32 %v4108, %v4116
    %v4125 = vsub.f32 %v4109, %v4117
    %v4126 = vsub.f32 %v4110, %v4118
    %v4127 = vsub.f32 %v4111, %v4119
    %v4128 = vmax.f32 %v4120, 0.0
    %v4129 = vmax.f32 %v4121, 0.0
    %v4130 = vmax.f32 %v4122, 0.0
    %v4131 = vmax.f32 %v4123, 0.0
    %v4132 = vmax.f32 %v4124, 0.0
    %v4133 = vmax.f32 %v4125, 0.0
    %v4134 = vmax.f32 %v4126, 0.0
    %v4135 = vmax.f32 %v4127, 0.0
    %v4136 = vadd.f32 %v4128, 1e-05
    %v4137 = vadd.f32 %v4129, 1e-05
    %v4138 = vadd.f32 %v4130, 1e-05
    %v4139 = vadd.f32 %v4131, 1e-05
    %v4140 = vadd.f32 %v4132, 1e-05
    %v4141 = vadd.f32 %v4133, 1e-05
    %v4142 = vadd.f32 %v4134, 1e-05
    %v4143 = vadd.f32 %v4135, 1e-05
    %v4144 = vrsqrt.pop %v4136
    %v4145 = vrsqrt.pop %v4137
    %v4146 = vrsqrt.pop %v4138
    %v4147 = vrsqrt.pop %v4139
    %v4148 = vrsqrt.pop %v4140
    %v4149 = vrsqrt.pop %v4141
    %v4150 = vrsqrt.pop %v4142
    %v4151 = vrsqrt.pop %v4143
    %v4160 = vrot.slane %v4144, 5
    %v4161 = vrot.slane %v4145, 5
    %v4162 = vrot.slane %v4146, 5
    %v4163 = vrot.slane %v4147, 5
    %v4164 = vrot.slane %v4148, 5
    %v4165 = vrot.slane %v4149, 5
    %v4166 = vrot.slane %v4150, 5
    %v4167 = vrot.slane %v4151, 5
    %v4176 = vmul.f32 %v667, %v4160
    %v4177 = vmul.f32 %v668, %v4161
    %v4178 = vmul.f32 %v669, %v4162
    %v4179 = vmul.f32 %v670, %v4163
    %v4180 = vmul.f32 %v671, %v4164
    %v4181 = vmul.f32 %v672, %v4165
    %v4182 = vmul.f32 %v673, %v4166
    %v4183 = vmul.f32 %v674, %v4167
    %v4192 = vrot.slane %v4176, 3
    %v4193 = vrot.slane %v4177, 3
    %v4194 = vrot.slane %v4178, 3
    %v4195 = vrot.slane %v4179, 3
    %v4196 = vrot.slane %v4180, 3
    %v4197 = vrot.slane %v4181, 3
    %v4198 = vrot.slane %v4182, 3
    %v4199 = vrot.slane %v4183, 3
    %v4208 = vmul.f32 %v4096, %v4192
    %v4209 = vmul.f32 %v4097, %v4193
    %v4210 = vmul.f32 %v4098, %v4194
    %v4211 = vmul.f32 %v4099, %v4195
    %v4212 = vmul.f32 %v4100, %v4196
    %v4213 = vmul.f32 %v4101, %v4197
    %v4214 = vmul.f32 %v4102, %v4198
    %v4215 = vmul.f32 %v4103, %v4199
    %v4224 = vrot.slane %v4208, 5
    %v4225 = vrot.slane %v4209, 5
    %v4226 = vrot.slane %v4210, 5
    %v4227 = vrot.slane %v4211, 5
    %v4228 = vrot.slane %v4212, 5
    %v4229 = vrot.slane %v4213, 5
    %v4230 = vrot.slane %v4214, 5
    %v4231 = vrot.slane %v4215, 5
    %v4240 = vsub.f32 %v675, %v4224
    %v4241 = vsub.f32 %v676, %v4225
    %v4242 = vsub.f32 %v677, %v4226
    %v4243 = vsub.f32 %v678, %v4227
    %v4244 = vsub.f32 %v679, %v4228
    %v4245 = vsub.f32 %v680, %v4229
    %v4246 = vsub.f32 %v681, %v4230
    %v4247 = vsub.f32 %v682, %v4231
    %v4248 = vlaneseq
    %v4249 = vshrl.u32 %v4248, 7
    %v4250 = vsub.s32 3, %v4249
    %v4251 = vrot.slane %v4176, %v4250
    %v4252 = vlaneseq
    %v4253 = vshrl.u32 %v4252, 7
    %v4254 = vsub.s32 3, %v4253
    %v4255 = vrot.slane %v4177, %v4254
    %v4256 = vlaneseq
    %v4257 = vshrl.u32 %v4256, 7
    %v4258 = vsub.s32 3, %v4257
    %v4259 = vrot.slane %v4178, %v4258
    %v4260 = vlaneseq
    %v4261 = vshrl.u32 %v4260, 7
    %v4262 = vsub.s32 3, %v4261
    %v4263 = vrot.slane %v4179, %v4262
    %v4264 = vlaneseq
    %v4265 = vshrl.u32 %v4264, 7
    %v4266 = vsub.s32 3, %v4265
    %v4267 = vrot.slane %v4180, %v4266
    %v4268 = vlaneseq
    %v4269 = vshrl.u32 %v4268, 7
    %v4270 = vsub.s32 3, %v4269
    %v4271 = vrot.slane %v4181, %v4270
    %v4272 = vlaneseq
    %v4273 = vshrl.u32 %v4272, 7
    %v4274 = vsub.s32 3, %v4273
    %v4275 = vrot.slane %v4182, %v4274
    %v4276 = vlaneseq
    %v4277 = vshrl.u32 %v4276, 7
    %v4278 = vsub.s32 3, %v4277
    %v4279 = vrot.slane %v4183, %v4278
    %v4280 = vmul.f32 %v3084, %v4251
    %v4281 = vmul.f32 %v3085, %v4255
    %v4282 = vmul.f32 %v3086, %v4259
    %v4283 = vmul.f32 %v3087, %v4263
    %v4284 = vmul.f32 %v3088, %v4267
    %v4285 = vmul.f32 %v3089, %v4271
    %v4286 = vmul.f32 %v3090, %v4275
    %v4287 = vmul.f32 %v3091, %v4279
    %v4288 = vmul.f32 %v3092, %v4251
    %v4289 = vmul.f32 %v3093, %v4255
    %v4290 = vmul.f32 %v3094, %v4259
    %v4291 = vmul.f32 %v3095, %v4263
    %v4292 = vmul.f32 %v3096, %v4267
    %v4293 = vmul.f32 %v3097, %v4271
    %v4294 = vmul.f32 %v3098, %v4275
    %v4295 = vmul.f32 %v3099, %v4279
    %v4296 = vmul.f32 %v3100, %v4251
    %v4297 = vmul.f32 %v3101, %v4255
    %v4298 = vmul.f32 %v3102, %v4259
    %v4299 = vmul.f32 %v3103, %v4263
    %v4300 = vmul.f32 %v3104, %v4267
    %v4301 = vmul.f32 %v3105, %v4271
    %v4302 = vmul.f32 %v3106, %v4275
    %v4303 = vmul.f32 %v3107, %v4279
    %v4304 = vmul.f32 %v3108, %v4251
    %v4305 = vmul.f32 %v3109, %v4255
    %v4306 = vmul.f32 %v3110, %v4259
    %v4307 = vmul.f32 %v3111, %v4263
    %v4308 = vmul.f32 %v3112, %v4267
    %v4309 = vmul.f32 %v3113, %v4271
    %v4310 = vmul.f32 %v3114, %v4275
    %v4311 = vmul.f32 %v3115, %v4279
    %v4312 = vlaneseq
    %v4313 = vshrl.u32 %v4312, 7
    %v4314 = vsub.s32 3, %v4313
    %v4315 = vrot.slane %v4240, %v4314
    %v4316 = vlaneseq
    %v4317 = vshrl.u32 %v4316, 7
    %v4318 = vsub.s32 3, %v4317
    %v4319 = vrot.slane %v4241, %v4318
    %v4320 = vlaneseq
    %v4321 = vshrl.u32 %v4320, 7
    %v4322 = vsub.s32 3, %v4321
    %v4323 = vrot.slane %v4242, %v4322
    %v4324 = vlaneseq
    %v4325 = vshrl.u32 %v4324, 7
    %v4326 = vsub.s32 3, %v4325
    %v4327 = vrot.slane %v4243, %v4326
    %v4328 = vlaneseq
    %v4329 = vshrl.u32 %v4328, 7
    %v4330 = vsub.s32 3, %v4329
    %v4331 = vrot.slane %v4244, %v4330
    %v4332 = vlaneseq
    %v4333 = vshrl.u32 %v4332, 7
    %v4334 = vsub.s32 3, %v4333
    %v4335 = vrot.slane %v4245, %v4334
    %v4336 = vlaneseq
    %v4337 = vshrl.u32 %v4336, 7
    %v4338 = vsub.s32 3, %v4337
    %v4339 = vrot.slane %v4246, %v4338
    %v4340 = vlaneseq
    %v4341 = vshrl.u32 %v4340, 7
    %v4342 = vsub.s32 3, %v4341
    %v4343 = vrot.slane %v4247, %v4342
    %v4344 = vadd.f32 %v4280, %v4315
    %v4345 = vadd.f32 %v4281, %v4319
    %v4346 = vadd.f32 %v4282, %v4323
    %v4347 = vadd.f32 %v4283, %v4327
    %v4348 = vadd.f32 %v4284, %v4331
    %v4349 = vadd.f32 %v4285, %v4335
    %v4350 = vadd.f32 %v4286, %v4339
    %v4351 = vadd.f32 %v4287, %v4343
    %v4352 = vadd.f32 %v4288, %v4315
    %v4353 = vadd.f32 %v4289, %v4319
    %v4354 = vadd.f32 %v4290, %v4323
    %v4355 = vadd.f32 %v4291, %v4327
    %v4356 = vadd.f32 %v4292, %v4331
    %v4357 = vadd.f32 %v4293, %v4335
    %v4358 = vadd.f32 %v4294, %v4339
    %v4359 = vadd.f32 %v4295, %v4343
    %v4360 = vadd.f32 %v4296, %v4315
    %v4361 = vadd.f32 %v4297, %v4319
    %v4362 = vadd.f32 %v4298, %v4323
    %v4363 = vadd.f32 %v4299, %v4327
    %v4364 = vadd.f32 %v4300, %v4331
    %v4365 = vadd.f32 %v4301, %v4335
    %v4366 = vadd.f32 %v4302, %v4339
    %v4367 = vadd.f32 %v4303, %v4343
    %v4368 = vadd.f32 %v4304, %v4315
    %v4369 = vadd.f32 %v4305, %v4319
    %v4370 = vadd.f32 %v4306, %v4323
    %v4371 = vadd.f32 %v4307, %v4327
    %v4372 = vadd.f32 %v4308, %v4331
    %v4373 = vadd.f32 %v4309, %v4335
    %v4374 = vadd.f32 %v4310, %v4339
    %v4375 = vadd.f32 %v4311, %v4343
    %vm4376 = vcmp.ge.f32.partialorder %v4344, 0.0
    %vm4377 = vcmp.ge.f32.partialorder %v4345, 0.0
    %vm4378 = vcmp.ge.f32.partialorder %v4346, 0.0
    %vm4379 = vcmp.ge.f32.partialorder %v4347, 0.0
    %vm4380 = vcmp.ge.f32.partialorder %v4348, 0.0
    %vm4381 = vcmp.ge.f32.partialorder %v4349, 0.0
    %vm4382 = vcmp.ge.f32.partialorder %v4350, 0.0
    %vm4383 = vcmp.ge.f32.partialorder %v4351, 0.0
    %vm4384 = vcmp.ge.f32.partialorder %v4352, 0.0
    %vm4385 = vcmp.ge.f32.partialorder %v4353, 0.0
    %vm4386 = vcmp.ge.f32.partialorder %v4354, 0.0
    %vm4387 = vcmp.ge.f32.partialorder %v4355, 0.0
    %vm4388 = vcmp.ge.f32.partialorder %v4356, 0.0
    %vm4389 = vcmp.ge.f32.partialorder %v4357, 0.0
    %vm4390 = vcmp.ge.f32.partialorder %v4358, 0.0
    %vm4391 = vcmp.ge.f32.partialorder %v4359, 0.0
    %vm4392 = vcmp.ge.f32.partialorder %v4360, 0.0
    %vm4393 = vcmp.ge.f32.partialorder %v4361, 0.0
    %vm4394 = vcmp.ge.f32.partialorder %v4362, 0.0
    %vm4395 = vcmp.ge.f32.partialorder %v4363, 0.0
    %vm4396 = vcmp.ge.f32.partialorder %v4364, 0.0
    %vm4397 = vcmp.ge.f32.partialorder %v4365, 0.0
    %vm4398 = vcmp.ge.f32.partialorder %v4366, 0.0
    %vm4399 = vcmp.ge.f32.partialorder %v4367, 0.0
    %vm4400 = vcmp.ge.f32.partialorder %v4368, 0.0
    %vm4401 = vcmp.ge.f32.partialorder %v4369, 0.0
    %vm4402 = vcmp.ge.f32.partialorder %v4370, 0.0
    %vm4403 = vcmp.ge.f32.partialorder %v4371, 0.0
    %vm4404 = vcmp.ge.f32.partialorder %v4372, 0.0
    %vm4405 = vcmp.ge.f32.partialorder %v4373, 0.0
    %vm4406 = vcmp.ge.f32.partialorder %v4374, 0.0
    %vm4407 = vcmp.ge.f32.partialorder %v4375, 0.0
    %v4408 = vmul.f32 %v4344, 0.01
    %v4409 = vmul.f32 %v4345, 0.01
    %v4410 = vmul.f32 %v4346, 0.01
    %v4411 = vmul.f32 %v4347, 0.01
    %v4412 = vmul.f32 %v4348, 0.01
    %v4413 = vmul.f32 %v4349, 0.01
    %v4414 = vmul.f32 %v4350, 0.01
    %v4415 = vmul.f32 %v4351, 0.01
    %v4416 = vmul.f32 %v4352, 0.01
    %v4417 = vmul.f32 %v4353, 0.01
    %v4418 = vmul.f32 %v4354, 0.01
    %v4419 = vmul.f32 %v4355, 0.01
    %v4420 = vmul.f32 %v4356, 0.01
    %v4421 = vmul.f32 %v4357, 0.01
    %v4422 = vmul.f32 %v4358, 0.01
    %v4423 = vmul.f32 %v4359, 0.01
    %v4424 = vmul.f32 %v4360, 0.01
    %v4425 = vmul.f32 %v4361, 0.01
    %v4426 = vmul.f32 %v4362, 0.01
    %v4427 = vmul.f32 %v4363, 0.01
    %v4428 = vmul.f32 %v4364, 0.01
    %v4429 = vmul.f32 %v4365, 0.01
    %v4430 = vmul.f32 %v4366, 0.01
    %v4431 = vmul.f32 %v4367, 0.01
    %v4432 = vmul.f32 %v4368, 0.01
    %v4433 = vmul.f32 %v4369, 0.01
    %v4434 = vmul.f32 %v4370, 0.01
    %v4435 = vmul.f32 %v4371, 0.01
    %v4436 = vmul.f32 %v4372, 0.01
    %v4437 = vmul.f32 %v4373, 0.01
    %v4438 = vmul.f32 %v4374, 0.01
    %v4439 = vmul.f32 %v4375, 0.01
    %v4440 = vsel %vm4376, %v4344, %v4408
    %v4441 = vsel %vm4377, %v4345, %v4409
    %v4442 = vsel %vm4378, %v4346, %v4410
    %v4443 = vsel %vm4379, %v4347, %v4411
    %v4444 = vsel %vm4380, %v4348, %v4412
    %v4445 = vsel %vm4381, %v4349, %v4413
    %v4446 = vsel %vm4382, %v4350, %v4414
    %v4447 = vsel %vm4383, %v4351, %v4415
    %v4448 = vsel %vm4384, %v4352, %v4416
    %v4449 = vsel %vm4385, %v4353, %v4417
    %v4450 = vsel %vm4386, %v4354, %v4418
    %v4451 = vsel %vm4387, %v4355, %v4419
    %v4452 = vsel %vm4388, %v4356, %v4420
    %v4453 = vsel %vm4389, %v4357, %v4421
    %v4454 = vsel %vm4390, %v4358, %v4422
    %v4455 = vsel %vm4391, %v4359, %v4423
    %v4456 = vsel %vm4392, %v4360, %v4424
    %v4457 = vsel %vm4393, %v4361, %v4425
    %v4458 = vsel %vm4394, %v4362, %v4426
    %v4459 = vsel %vm4395, %v4363, %v4427
    %v4460 = vsel %vm4396, %v4364, %v4428
    %v4461 = vsel %vm4397, %v4365, %v4429
    %v4462 = vsel %vm4398, %v4366, %v4430
    %v4463 = vsel %vm4399, %v4367, %v4431
    %v4464 = vsel %vm4400, %v4368, %v4432
    %v4465 = vsel %vm4401, %v4369, %v4433
    %v4466 = vsel %vm4402, %v4370, %v4434
    %v4467 = vsel %vm4403, %v4371, %v4435
    %v4468 = vsel %vm4404, %v4372, %v4436
    %v4469 = vsel %vm4405, %v4373, %v4437
    %v4470 = vsel %vm4406, %v4374, %v4438
    %v4471 = vsel %vm4407, %v4375, %v4439
    %v4472 = vadd.f32 %v4440, %v4448
    %v4473 = vadd.f32 %v4472, %v4456
    %v4474 = vadd.f32 %v4473, %v4464
    %v4475 = vrot.slane %v4474, 4
    %v4476 = vadd.f32 %v4474, %v4475
    %v4477 = vrot.slane %v4476, 2
    %v4478 = vadd.f32 %v4476, %v4477
    %v4479 = vrot.slane %v4478, 1
    %v4480 = vadd.f32 %v4478, %v4479
    %v4481 = vadd.f32 %v4441, %v4449
    %v4482 = vadd.f32 %v4481, %v4457
    %v4483 = vadd.f32 %v4482, %v4465
    %v4484 = vrot.slane %v4483, 4
    %v4485 = vadd.f32 %v4483, %v4484
    %v4486 = vrot.slane %v4485, 2
    %v4487 = vadd.f32 %v4485, %v4486
    %v4488 = vrot.slane %v4487, 1
    %v4489 = vadd.f32 %v4487, %v4488
    %v4490 = vadd.f32 %v4442, %v4450
    %v4491 = vadd.f32 %v4490, %v4458
    %v4492 = vadd.f32 %v4491, %v4466
    %v4493 = vrot.slane %v4492, 4
    %v4494 = vadd.f32 %v4492, %v4493
    %v4495 = vrot.slane %v4494, 2
    %v4496 = vadd.f32 %v4494, %v4495
    %v4497 = vrot.slane %v4496, 1
    %v4498 = vadd.f32 %v4496, %v4497
    %v4499 = vadd.f32 %v4443, %v4451
    %v4500 = vadd.f32 %v4499, %v4459
    %v4501 = vadd.f32 %v4500, %v4467
    %v4502 = vrot.slane %v4501, 4
    %v4503 = vadd.f32 %v4501, %v4502
    %v4504 = vrot.slane %v4503, 2
    %v4505 = vadd.f32 %v4503, %v4504
    %v4506 = vrot.slane %v4505, 1
    %v4507 = vadd.f32 %v4505, %v4506
    %v4508 = vadd.f32 %v4444, %v4452
    %v4509 = vadd.f32 %v4508, %v4460
    %v4510 = vadd.f32 %v4509, %v4468
    %v4511 = vrot.slane %v4510, 4
    %v4512 = vadd.f32 %v4510, %v4511
    %v4513 = vrot.slane %v4512, 2
    %v4514 = vadd.f32 %v4512, %v4513
    %v4515 = vrot.slane %v4514, 1
    %v4516 = vadd.f32 %v4514, %v4515
    %v4517 = vadd.f32 %v4445, %v4453
    %v4518 = vadd.f32 %v4517, %v4461
    %v4519 = vadd.f32 %v4518, %v4469
    %v4520 = vrot.slane %v4519, 4
    %v4521 = vadd.f32 %v4519, %v4520
    %v4522 = vrot.slane %v4521, 2
    %v4523 = vadd.f32 %v4521, %v4522
    %v4524 = vrot.slane %v4523, 1
    %v4525 = vadd.f32 %v4523, %v4524
    %v4526 = vadd.f32 %v4446, %v4454
    %v4527 = vadd.f32 %v4526, %v4462
    %v4528 = vadd.f32 %v4527, %v4470
    %v4529 = vrot.slane %v4528, 4
    %v4530 = vadd.f32 %v4528, %v4529
    %v4531 = vrot.slane %v4530, 2
    %v4532 = vadd.f32 %v4530, %v4531
    %v4533 = vrot.slane %v4532, 1
    %v4534 = vadd.f32 %v4532, %v4533
    %v4535 = vadd.f32 %v4447, %v4455
    %v4536 = vadd.f32 %v4535, %v4463
    %v4537 = vadd.f32 %v4536, %v4471
    %v4538 = vrot.slane %v4537, 4
    %v4539 = vadd.f32 %v4537, %v4538
    %v4540 = vrot.slane %v4539, 2
    %v4541 = vadd.f32 %v4539, %v4540
    %v4542 = vrot.slane %v4541, 1
    %v4543 = vadd.f32 %v4541, %v4542
    %v4544 = vmul.f32 %v4440, %v4440
    %v4545 = vmul.f32 %v4441, %v4441
    %v4546 = vmul.f32 %v4442, %v4442
    %v4547 = vmul.f32 %v4443, %v4443
    %v4548 = vmul.f32 %v4444, %v4444
    %v4549 = vmul.f32 %v4445, %v4445
    %v4550 = vmul.f32 %v4446, %v4446
    %v4551 = vmul.f32 %v4447, %v4447
    %v4552 = vmul.f32 %v4448, %v4448
    %v4553 = vmul.f32 %v4449, %v4449
    %v4554 = vmul.f32 %v4450, %v4450
    %v4555 = vmul.f32 %v4451, %v4451
    %v4556 = vmul.f32 %v4452, %v4452
    %v4557 = vmul.f32 %v4453, %v4453
    %v4558 = vmul.f32 %v4454, %v4454
    %v4559 = vmul.f32 %v4455, %v4455
    %v4560 = vmul.f32 %v4456, %v4456
    %v4561 = vmul.f32 %v4457, %v4457
    %v4562 = vmul.f32 %v4458, %v4458
    %v4563 = vmul.f32 %v4459, %v4459
    %v4564 = vmul.f32 %v4460, %v4460
    %v4565 = vmul.f32 %v4461, %v4461
    %v4566 = vmul.f32 %v4462, %v4462
    %v4567 = vmul.f32 %v4463, %v4463
    %v4568 = vmul.f32 %v4464, %v4464
    %v4569 = vmul.f32 %v4465, %v4465
    %v4570 = vmul.f32 %v4466, %v4466
    %v4571 = vmul.f32 %v4467, %v4467
    %v4572 = vmul.f32 %v4468, %v4468
    %v4573 = vmul.f32 %v4469, %v4469
    %v4574 = vmul.f32 %v4470, %v4470
    %v4575 = vmul.f32 %v4471, %v4471
    %v4576 = vadd.f32 %v4544, %v4552
    %v4577 = vadd.f32 %v4576, %v4560
    %v4578 = vadd.f32 %v4577, %v4568
    %v4579 = vrot.slane %v4578, 4
    %v4580 = vadd.f32 %v4578, %v4579
    %v4581 = vrot.slane %v4580, 2
    %v4582 = vadd.f32 %v4580, %v4581
    %v4583 = vrot.slane %v4582, 1
    %v4584 = vadd.f32 %v4582, %v4583
    %v4585 = vadd.f32 %v4545, %v4553
    %v4586 = vadd.f32 %v4585, %v4561
    %v4587 = vadd.f32 %v4586, %v4569
    %v4588 = vrot.slane %v4587, 4
    %v4589 = vadd.f32 %v4587, %v4588
    %v4590 = vrot.slane %v4589, 2
    %v4591 = vadd.f32 %v4589, %v4590
    %v4592 = vrot.slane %v4591, 1
    %v4593 = vadd.f32 %v4591, %v4592
    %v4594 = vadd.f32 %v4546, %v4554
    %v4595 = vadd.f32 %v4594, %v4562
    %v4596 = vadd.f32 %v4595, %v4570
    %v4597 = vrot.slane %v4596, 4
    %v4598 = vadd.f32 %v4596, %v4597
    %v4599 = vrot.slane %v4598, 2
    %v4600 = vadd.f32 %v4598, %v4599
    %v4601 = vrot.slane %v4600, 1
    %v4602 = vadd.f32 %v4600, %v4601
    %v4603 = vadd.f32 %v4547, %v4555
    %v4604 = vadd.f32 %v4603, %v4563
    %v4605 = vadd.f32 %v4604, %v4571
    %v4606 = vrot.slane %v4605, 4
    %v4607 = vadd.f32 %v4605, %v4606
    %v4608 = vrot.slane %v4607, 2
    %v4609 = vadd.f32 %v4607, %v4608
    %v4610 = vrot.slane %v4609, 1
    %v4611 = vadd.f32 %v4609, %v4610
    %v4612 = vadd.f32 %v4548, %v4556
    %v4613 = vadd.f32 %v4612, %v4564
    %v4614 = vadd.f32 %v4613, %v4572
    %v4615 = vrot.slane %v4614, 4
    %v4616 = vadd.f32 %v4614, %v4615
    %v4617 = vrot.slane %v4616, 2
    %v4618 = vadd.f32 %v4616, %v4617
    %v4619 = vrot.slane %v4618, 1
    %v4620 = vadd.f32 %v4618, %v4619
    %v4621 = vadd.f32 %v4549, %v4557
    %v4622 = vadd.f32 %v4621, %v4565
    %v4623 = vadd.f32 %v4622, %v4573
    %v4624 = vrot.slane %v4623, 4
    %v4625 = vadd.f32 %v4623, %v4624
    %v4626 = vrot.slane %v4625, 2
    %v4627 = vadd.f32 %v4625, %v4626
    %v4628 = vrot.slane %v4627, 1
    %v4629 = vadd.f32 %v4627, %v4628
    %v4630 = vadd.f32 %v4550, %v4558
    %v4631 = vadd.f32 %v4630, %v4566
    %v4632 = vadd.f32 %v4631, %v4574
    %v4633 = vrot.slane %v4632, 4
    %v4634 = vadd.f32 %v4632, %v4633
    %v4635 = vrot.slane %v4634, 2
    %v4636 = vadd.f32 %v4634, %v4635
    %v4637 = vrot.slane %v4636, 1
    %v4638 = vadd.f32 %v4636, %v4637
    %v4639 = vadd.f32 %v4551, %v4559
    %v4640 = vadd.f32 %v4639, %v4567
    %v4641 = vadd.f32 %v4640, %v4575
    %v4642 = vrot.slane %v4641, 4
    %v4643 = vadd.f32 %v4641, %v4642
    %v4644 = vrot.slane %v4643, 2
    %v4645 = vadd.f32 %v4643, %v4644
    %v4646 = vrot.slane %v4645, 1
    %v4647 = vadd.f32 %v4645, %v4646
    %4648 = vrot.lane.b32.xlu0 %v4480, 127
    %v4649 = vpop.permute.xlu0 %4648
    %4650 = vrot.lane.b32.xlu0 %v4489, 127
    %v4651 = vpop.permute.xlu0 %4650
    %4652 = vrot.lane.b32.xlu0 %v4498, 127
    %v4653 = vpop.permute.xlu0 %4652
    %4654 = vrot.lane.b32.xlu0 %v4507, 127
    %v4655 = vpop.permute.xlu0 %4654
    %4656 = vrot.lane.b32.xlu0 %v4516, 127
    %v4657 = vpop.permute.xlu0 %4656
    %4658 = vrot.lane.b32.xlu0 %v4525, 127
    %v4659 = vpop.permute.xlu0 %4658
    %4660 = vrot.lane.b32.xlu0 %v4534, 127
    %v4661 = vpop.permute.xlu0 %4660
    %4662 = vrot.lane.b32.xlu0 %v4543, 127
    %v4663 = vpop.permute.xlu0 %4662
    %v4664 = vsel %vm1380, %v4661, %v4663
    %v4665 = vsel %vm1380, %v4659, %v4661
    %v4666 = vsel %vm1380, %v4657, %v4659
    %v4667 = vsel %vm1380, %v4655, %v4657
    %v4668 = vsel %vm1380, %v4653, %v4655
    %v4669 = vsel %vm1380, %v4651, %v4653
    %v4670 = vsel %vm1380, %v4649, %v4651
    %v4671 = vsel %vm1380, %v4663, %v4649
    %4672 = vrot.lane.b32.xlu0 %v4480, 1
    %v4673 = vpop.permute.xlu0 %4672
    %4674 = vrot.lane.b32.xlu0 %v4489, 1
    %v4675 = vpop.permute.xlu0 %4674
    %4676 = vrot.lane.b32.xlu0 %v4498, 1
    %v4677 = vpop.permute.xlu0 %4676
    %4678 = vrot.lane.b32.xlu0 %v4507, 1
    %v4679 = vpop.permute.xlu0 %4678
    %4680 = vrot.lane.b32.xlu0 %v4516, 1
    %v4681 = vpop.permute.xlu0 %4680
    %4682 = vrot.lane.b32.xlu0 %v4525, 1
    %v4683 = vpop.permute.xlu0 %4682
    %4684 = vrot.lane.b32.xlu0 %v4534, 1
    %v4685 = vpop.permute.xlu0 %4684
    %4686 = vrot.lane.b32.xlu0 %v4543, 1
    %v4687 = vpop.permute.xlu0 %4686
    %v4688 = vsel %vm1405, %v4685, %v4687
    %v4689 = vsel %vm1405, %v4683, %v4685
    %v4690 = vsel %vm1405, %v4681, %v4683
    %v4691 = vsel %vm1405, %v4679, %v4681
    %v4692 = vsel %vm1405, %v4677, %v4679
    %v4693 = vsel %vm1405, %v4675, %v4677
    %v4694 = vsel %vm1405, %v4673, %v4675
    %v4695 = vsel %vm1405, %v4687, %v4673
    %v4696 = vsel %vm1356, %v4670, %v4695
    %v4697 = vsel %vm1357, %v4669, %v4694
    %v4698 = vsel %vm1358, %v4668, %v4693
    %v4699 = vsel %vm1359, %v4667, %v4692
    %v4700 = vsel %vm1360, %v4666, %v4691
    %v4701 = vsel %vm1361, %v4665, %v4690
    %v4702 = vsel %vm1362, %v4664, %v4689
    %v4703 = vsel %vm1363, %v4671, %v4688
    %v4704 = vadd.f32 %v4480, %v4696
    %v4705 = vadd.f32 %v4489, %v4697
    %v4706 = vadd.f32 %v4498, %v4698
    %v4707 = vadd.f32 %v4507, %v4699
    %v4708 = vadd.f32 %v4516, %v4700
    %v4709 = vadd.f32 %v4525, %v4701
    %v4710 = vadd.f32 %v4534, %v4702
    %v4711 = vadd.f32 %v4543, %v4703
    %4712 = vrot.lane.b32.xlu0 %v4584, 127
    %v4713 = vpop.permute.xlu0 %4712
    %4714 = vrot.lane.b32.xlu0 %v4593, 127
    %v4715 = vpop.permute.xlu0 %4714
    %4716 = vrot.lane.b32.xlu0 %v4602, 127
    %v4717 = vpop.permute.xlu0 %4716
    %4718 = vrot.lane.b32.xlu0 %v4611, 127
    %v4719 = vpop.permute.xlu0 %4718
    %4720 = vrot.lane.b32.xlu0 %v4620, 127
    %v4721 = vpop.permute.xlu0 %4720
    %4722 = vrot.lane.b32.xlu0 %v4629, 127
    %v4723 = vpop.permute.xlu0 %4722
    %4724 = vrot.lane.b32.xlu0 %v4638, 127
    %v4725 = vpop.permute.xlu0 %4724
    %4726 = vrot.lane.b32.xlu0 %v4647, 127
    %v4727 = vpop.permute.xlu0 %4726
    %v4728 = vsel %vm1380, %v4725, %v4727
    %v4729 = vsel %vm1380, %v4723, %v4725
    %v4730 = vsel %vm1380, %v4721, %v4723
    %v4731 = vsel %vm1380, %v4719, %v4721
    %v4732 = vsel %vm1380, %v4717, %v4719
    %v4733 = vsel %vm1380, %v4715, %v4717
    %v4734 = vsel %vm1380, %v4713, %v4715
    %v4735 = vsel %vm1380, %v4727, %v4713
    %4736 = vrot.lane.b32.xlu0 %v4584, 1
    %v4737 = vpop.permute.xlu0 %4736
    %4738 = vrot.lane.b32.xlu0 %v4593, 1
    %v4739 = vpop.permute.xlu0 %4738
    %4740 = vrot.lane.b32.xlu0 %v4602, 1
    %v4741 = vpop.permute.xlu0 %4740
    %4742 = vrot.lane.b32.xlu0 %v4611, 1
    %v4743 = vpop.permute.xlu0 %4742
    %4744 = vrot.lane.b32.xlu0 %v4620, 1
    %v4745 = vpop.permute.xlu0 %4744
    %4746 = vrot.lane.b32.xlu0 %v4629, 1
    %v4747 = vpop.permute.xlu0 %4746
    %4748 = vrot.lane.b32.xlu0 %v4638, 1
    %v4749 = vpop.permute.xlu0 %4748
    %4750 = vrot.lane.b32.xlu0 %v4647, 1
    %v4751 = vpop.permute.xlu0 %4750
    %v4752 = vsel %vm1405, %v4749, %v4751
    %v4753 = vsel %vm1405, %v4747, %v4749
    %v4754 = vsel %vm1405, %v4745, %v4747
    %v4755 = vsel %vm1405, %v4743, %v4745
    %v4756 = vsel %vm1405, %v4741, %v4743
    %v4757 = vsel %vm1405, %v4739, %v4741
    %v4758 = vsel %vm1405, %v4737, %v4739
    %v4759 = vsel %vm1405, %v4751, %v4737
    %v4760 = vsel %vm1356, %v4734, %v4759
    %v4761 = vsel %vm1357, %v4733, %v4758
    %v4762 = vsel %vm1358, %v4732, %v4757
    %v4763 = vsel %vm1359, %v4731, %v4756
    %v4764 = vsel %vm1360, %v4730, %v4755
    %v4765 = vsel %vm1361, %v4729, %v4754
    %v4766 = vsel %vm1362, %v4728, %v4753
    %v4767 = vsel %vm1363, %v4735, %v4752
    %v4768 = vadd.f32 %v4584, %v4760
    %v4769 = vadd.f32 %v4593, %v4761
    %v4770 = vadd.f32 %v4602, %v4762
    %v4771 = vadd.f32 %v4611, %v4763
    %v4772 = vadd.f32 %v4620, %v4764
    %v4773 = vadd.f32 %v4629, %v4765
    %v4774 = vadd.f32 %v4638, %v4766
    %v4775 = vadd.f32 %v4647, %v4767
    %4776 = vrot.lane.b32.xlu0 %v4704, 126
    %v4777 = vpop.permute.xlu0 %4776
    %4778 = vrot.lane.b32.xlu0 %v4705, 126
    %v4779 = vpop.permute.xlu0 %4778
    %4780 = vrot.lane.b32.xlu0 %v4706, 126
    %v4781 = vpop.permute.xlu0 %4780
    %4782 = vrot.lane.b32.xlu0 %v4707, 126
    %v4783 = vpop.permute.xlu0 %4782
    %4784 = vrot.lane.b32.xlu0 %v4708, 126
    %v4785 = vpop.permute.xlu0 %4784
    %4786 = vrot.lane.b32.xlu0 %v4709, 126
    %v4787 = vpop.permute.xlu0 %4786
    %4788 = vrot.lane.b32.xlu0 %v4710, 126
    %v4789 = vpop.permute.xlu0 %4788
    %4790 = vrot.lane.b32.xlu0 %v4711, 126
    %v4791 = vpop.permute.xlu0 %4790
    %v4792 = vsel %vm1526, %v4789, %v4791
    %v4793 = vsel %vm1526, %v4787, %v4789
    %v4794 = vsel %vm1526, %v4785, %v4787
    %v4795 = vsel %vm1526, %v4783, %v4785
    %v4796 = vsel %vm1526, %v4781, %v4783
    %v4797 = vsel %vm1526, %v4779, %v4781
    %v4798 = vsel %vm1526, %v4777, %v4779
    %v4799 = vsel %vm1526, %v4791, %v4777
    %4800 = vrot.lane.b32.xlu0 %v4704, 2
    %v4801 = vpop.permute.xlu0 %4800
    %4802 = vrot.lane.b32.xlu0 %v4705, 2
    %v4803 = vpop.permute.xlu0 %4802
    %4804 = vrot.lane.b32.xlu0 %v4706, 2
    %v4805 = vpop.permute.xlu0 %4804
    %4806 = vrot.lane.b32.xlu0 %v4707, 2
    %v4807 = vpop.permute.xlu0 %4806
    %4808 = vrot.lane.b32.xlu0 %v4708, 2
    %v4809 = vpop.permute.xlu0 %4808
    %4810 = vrot.lane.b32.xlu0 %v4709, 2
    %v4811 = vpop.permute.xlu0 %4810
    %4812 = vrot.lane.b32.xlu0 %v4710, 2
    %v4813 = vpop.permute.xlu0 %4812
    %4814 = vrot.lane.b32.xlu0 %v4711, 2
    %v4815 = vpop.permute.xlu0 %4814
    %v4816 = vsel %vm1551, %v4813, %v4815
    %v4817 = vsel %vm1551, %v4811, %v4813
    %v4818 = vsel %vm1551, %v4809, %v4811
    %v4819 = vsel %vm1551, %v4807, %v4809
    %v4820 = vsel %vm1551, %v4805, %v4807
    %v4821 = vsel %vm1551, %v4803, %v4805
    %v4822 = vsel %vm1551, %v4801, %v4803
    %v4823 = vsel %vm1551, %v4815, %v4801
    %v4824 = vsel %vm1502, %v4798, %v4823
    %v4825 = vsel %vm1503, %v4797, %v4822
    %v4826 = vsel %vm1504, %v4796, %v4821
    %v4827 = vsel %vm1505, %v4795, %v4820
    %v4828 = vsel %vm1506, %v4794, %v4819
    %v4829 = vsel %vm1507, %v4793, %v4818
    %v4830 = vsel %vm1508, %v4792, %v4817
    %v4831 = vsel %vm1509, %v4799, %v4816
    %v4832 = vadd.f32 %v4704, %v4824
    %v4833 = vadd.f32 %v4705, %v4825
    %v4834 = vadd.f32 %v4706, %v4826
    %v4835 = vadd.f32 %v4707, %v4827
    %v4836 = vadd.f32 %v4708, %v4828
    %v4837 = vadd.f32 %v4709, %v4829
    %v4838 = vadd.f32 %v4710, %v4830
    %v4839 = vadd.f32 %v4711, %v4831
    %4840 = vrot.lane.b32.xlu0 %v4768, 126
    %v4841 = vpop.permute.xlu0 %4840
    %4842 = vrot.lane.b32.xlu0 %v4769, 126
    %v4843 = vpop.permute.xlu0 %4842
    %4844 = vrot.lane.b32.xlu0 %v4770, 126
    %v4845 = vpop.permute.xlu0 %4844
    %4846 = vrot.lane.b32.xlu0 %v4771, 126
    %v4847 = vpop.permute.xlu0 %4846
    %4848 = vrot.lane.b32.xlu0 %v4772, 126
    %v4849 = vpop.permute.xlu0 %4848
    %4850 = vrot.lane.b32.xlu0 %v4773, 126
    %v4851 = vpop.permute.xlu0 %4850
    %4852 = vrot.lane.b32.xlu0 %v4774, 126
    %v4853 = vpop.permute.xlu0 %4852
    %4854 = vrot.lane.b32.xlu0 %v4775, 126
    %v4855 = vpop.permute.xlu0 %4854
    %v4856 = vsel %vm1526, %v4853, %v4855
    %v4857 = vsel %vm1526, %v4851, %v4853
    %v4858 = vsel %vm1526, %v4849, %v4851
    %v4859 = vsel %vm1526, %v4847, %v4849
    %v4860 = vsel %vm1526, %v4845, %v4847
    %v4861 = vsel %vm1526, %v4843, %v4845
    %v4862 = vsel %vm1526, %v4841, %v4843
    %v4863 = vsel %vm1526, %v4855, %v4841
    %4864 = vrot.lane.b32.xlu0 %v4768, 2
    %v4865 = vpop.permute.xlu0 %4864
    %4866 = vrot.lane.b32.xlu0 %v4769, 2
    %v4867 = vpop.permute.xlu0 %4866
    %4868 = vrot.lane.b32.xlu0 %v4770, 2
    %v4869 = vpop.permute.xlu0 %4868
    %4870 = vrot.lane.b32.xlu0 %v4771, 2
    %v4871 = vpop.permute.xlu0 %4870
    %4872 = vrot.lane.b32.xlu0 %v4772, 2
    %v4873 = vpop.permute.xlu0 %4872
    %4874 = vrot.lane.b32.xlu0 %v4773, 2
    %v4875 = vpop.permute.xlu0 %4874
    %4876 = vrot.lane.b32.xlu0 %v4774, 2
    %v4877 = vpop.permute.xlu0 %4876
    %4878 = vrot.lane.b32.xlu0 %v4775, 2
    %v4879 = vpop.permute.xlu0 %4878
    %v4880 = vsel %vm1551, %v4877, %v4879
    %v4881 = vsel %vm1551, %v4875, %v4877
    %v4882 = vsel %vm1551, %v4873, %v4875
    %v4883 = vsel %vm1551, %v4871, %v4873
    %v4884 = vsel %vm1551, %v4869, %v4871
    %v4885 = vsel %vm1551, %v4867, %v4869
    %v4886 = vsel %vm1551, %v4865, %v4867
    %v4887 = vsel %vm1551, %v4879, %v4865
    %v4888 = vsel %vm1502, %v4862, %v4887
    %v4889 = vsel %vm1503, %v4861, %v4886
    %v4890 = vsel %vm1504, %v4860, %v4885
    %v4891 = vsel %vm1505, %v4859, %v4884
    %v4892 = vsel %vm1506, %v4858, %v4883
    %v4893 = vsel %vm1507, %v4857, %v4882
    %v4894 = vsel %vm1508, %v4856, %v4881
    %v4895 = vsel %vm1509, %v4863, %v4880
    %v4896 = vadd.f32 %v4768, %v4888
    %v4897 = vadd.f32 %v4769, %v4889
    %v4898 = vadd.f32 %v4770, %v4890
    %v4899 = vadd.f32 %v4771, %v4891
    %v4900 = vadd.f32 %v4772, %v4892
    %v4901 = vadd.f32 %v4773, %v4893
    %v4902 = vadd.f32 %v4774, %v4894
    %v4903 = vadd.f32 %v4775, %v4895
    %4904 = vrot.lane.b32.xlu0 %v4832, 124
    %v4905 = vpop.permute.xlu0 %4904
    %4906 = vrot.lane.b32.xlu0 %v4833, 124
    %v4907 = vpop.permute.xlu0 %4906
    %4908 = vrot.lane.b32.xlu0 %v4834, 124
    %v4909 = vpop.permute.xlu0 %4908
    %4910 = vrot.lane.b32.xlu0 %v4835, 124
    %v4911 = vpop.permute.xlu0 %4910
    %4912 = vrot.lane.b32.xlu0 %v4836, 124
    %v4913 = vpop.permute.xlu0 %4912
    %4914 = vrot.lane.b32.xlu0 %v4837, 124
    %v4915 = vpop.permute.xlu0 %4914
    %4916 = vrot.lane.b32.xlu0 %v4838, 124
    %v4917 = vpop.permute.xlu0 %4916
    %4918 = vrot.lane.b32.xlu0 %v4839, 124
    %v4919 = vpop.permute.xlu0 %4918
    %v4920 = vsel %vm2480, %v4917, %v4919
    %v4921 = vsel %vm2480, %v4915, %v4917
    %v4922 = vsel %vm2480, %v4913, %v4915
    %v4923 = vsel %vm2480, %v4911, %v4913
    %v4924 = vsel %vm2480, %v4909, %v4911
    %v4925 = vsel %vm2480, %v4907, %v4909
    %v4926 = vsel %vm2480, %v4905, %v4907
    %v4927 = vsel %vm2480, %v4919, %v4905
    %4928 = vrot.lane.b32.xlu0 %v4832, 4
    %v4929 = vpop.permute.xlu0 %4928
    %4930 = vrot.lane.b32.xlu0 %v4833, 4
    %v4931 = vpop.permute.xlu0 %4930
    %4932 = vrot.lane.b32.xlu0 %v4834, 4
    %v4933 = vpop.permute.xlu0 %4932
    %4934 = vrot.lane.b32.xlu0 %v4835, 4
    %v4935 = vpop.permute.xlu0 %4934
    %4936 = vrot.lane.b32.xlu0 %v4836, 4
    %v4937 = vpop.permute.xlu0 %4936
    %4938 = vrot.lane.b32.xlu0 %v4837, 4
    %v4939 = vpop.permute.xlu0 %4938
    %4940 = vrot.lane.b32.xlu0 %v4838, 4
    %v4941 = vpop.permute.xlu0 %4940
    %4942 = vrot.lane.b32.xlu0 %v4839, 4
    %v4943 = vpop.permute.xlu0 %4942
    %v4944 = vsel %vm2505, %v4941, %v4943
    %v4945 = vsel %vm2505, %v4939, %v4941
    %v4946 = vsel %vm2505, %v4937, %v4939
    %v4947 = vsel %vm2505, %v4935, %v4937
    %v4948 = vsel %vm2505, %v4933, %v4935
    %v4949 = vsel %vm2505, %v4931, %v4933
    %v4950 = vsel %vm2505, %v4929, %v4931
    %v4951 = vsel %vm2505, %v4943, %v4929
    %v4952 = vsel %vm2456, %v4926, %v4951
    %v4953 = vsel %vm2457, %v4925, %v4950
    %v4954 = vsel %vm2458, %v4924, %v4949
    %v4955 = vsel %vm2459, %v4923, %v4948
    %v4956 = vsel %vm2460, %v4922, %v4947
    %v4957 = vsel %vm2461, %v4921, %v4946
    %v4958 = vsel %vm2462, %v4920, %v4945
    %v4959 = vsel %vm2463, %v4927, %v4944
    %v4960 = vadd.f32 %v4832, %v4952
    %v4961 = vadd.f32 %v4833, %v4953
    %v4962 = vadd.f32 %v4834, %v4954
    %v4963 = vadd.f32 %v4835, %v4955
    %v4964 = vadd.f32 %v4836, %v4956
    %v4965 = vadd.f32 %v4837, %v4957
    %v4966 = vadd.f32 %v4838, %v4958
    %v4967 = vadd.f32 %v4839, %v4959
    %4968 = vrot.lane.b32.xlu0 %v4896, 124
    %v4969 = vpop.permute.xlu0 %4968
    %4970 = vrot.lane.b32.xlu0 %v4897, 124
    %v4971 = vpop.permute.xlu0 %4970
    %4972 = vrot.lane.b32.xlu0 %v4898, 124
    %v4973 = vpop.permute.xlu0 %4972
    %4974 = vrot.lane.b32.xlu0 %v4899, 124
    %v4975 = vpop.permute.xlu0 %4974
    %4976 = vrot.lane.b32.xlu0 %v4900, 124
    %v4977 = vpop.permute.xlu0 %4976
    %4978 = vrot.lane.b32.xlu0 %v4901, 124
    %v4979 = vpop.permute.xlu0 %4978
    %4980 = vrot.lane.b32.xlu0 %v4902, 124
    %v4981 = vpop.permute.xlu0 %4980
    %4982 = vrot.lane.b32.xlu0 %v4903, 124
    %v4983 = vpop.permute.xlu0 %4982
    %v4984 = vsel %vm2480, %v4981, %v4983
    %v4985 = vsel %vm2480, %v4979, %v4981
    %v4986 = vsel %vm2480, %v4977, %v4979
    %v4987 = vsel %vm2480, %v4975, %v4977
    %v4988 = vsel %vm2480, %v4973, %v4975
    %v4989 = vsel %vm2480, %v4971, %v4973
    %v4990 = vsel %vm2480, %v4969, %v4971
    %v4991 = vsel %vm2480, %v4983, %v4969
    %4992 = vrot.lane.b32.xlu0 %v4896, 4
    %v4993 = vpop.permute.xlu0 %4992
    %4994 = vrot.lane.b32.xlu0 %v4897, 4
    %v4995 = vpop.permute.xlu0 %4994
    %4996 = vrot.lane.b32.xlu0 %v4898, 4
    %v4997 = vpop.permute.xlu0 %4996
    %4998 = vrot.lane.b32.xlu0 %v4899, 4
    %v4999 = vpop.permute.xlu0 %4998
    %5000 = vrot.lane.b32.xlu0 %v4900, 4
    %v5001 = vpop.permute.xlu0 %5000
    %5002 = vrot.lane.b32.xlu0 %v4901, 4
    %v5003 = vpop.permute.xlu0 %5002
    %5004 = vrot.lane.b32.xlu0 %v4902, 4
    %v5005 = vpop.permute.xlu0 %5004
    %5006 = vrot.lane.b32.xlu0 %v4903, 4
    %v5007 = vpop.permute.xlu0 %5006
    %v5008 = vsel %vm2505, %v5005, %v5007
    %v5009 = vsel %vm2505, %v5003, %v5005
    %v5010 = vsel %vm2505, %v5001, %v5003
    %v5011 = vsel %vm2505, %v4999, %v5001
    %v5012 = vsel %vm2505, %v4997, %v4999
    %v5013 = vsel %vm2505, %v4995, %v4997
    %v5014 = vsel %vm2505, %v4993, %v4995
    %v5015 = vsel %vm2505, %v5007, %v4993
    %v5016 = vsel %vm2456, %v4990, %v5015
    %v5017 = vsel %vm2457, %v4989, %v5014
    %v5018 = vsel %vm2458, %v4988, %v5013
    %v5019 = vsel %vm2459, %v4987, %v5012
    %v5020 = vsel %vm2460, %v4986, %v5011
    %v5021 = vsel %vm2461, %v4985, %v5010
    %v5022 = vsel %vm2462, %v4984, %v5009
    %v5023 = vsel %vm2463, %v4991, %v5008
    %v5024 = vadd.f32 %v4896, %v5016
    %v5025 = vadd.f32 %v4897, %v5017
    %v5026 = vadd.f32 %v4898, %v5018
    %v5027 = vadd.f32 %v4899, %v5019
    %v5028 = vadd.f32 %v4900, %v5020
    %v5029 = vadd.f32 %v4901, %v5021
    %v5030 = vadd.f32 %v4902, %v5022
    %v5031 = vadd.f32 %v4903, %v5023
    %5032 = vrot.lane.b32.xlu0 %v4960, 120
    %v5033 = vpop.permute.xlu0 %5032
    %5034 = vrot.lane.b32.xlu0 %v4961, 120
    %v5035 = vpop.permute.xlu0 %5034
    %5036 = vrot.lane.b32.xlu0 %v4962, 120
    %v5037 = vpop.permute.xlu0 %5036
    %5038 = vrot.lane.b32.xlu0 %v4963, 120
    %v5039 = vpop.permute.xlu0 %5038
    %5040 = vrot.lane.b32.xlu0 %v4964, 120
    %v5041 = vpop.permute.xlu0 %5040
    %5042 = vrot.lane.b32.xlu0 %v4965, 120
    %v5043 = vpop.permute.xlu0 %5042
    %5044 = vrot.lane.b32.xlu0 %v4966, 120
    %v5045 = vpop.permute.xlu0 %5044
    %5046 = vrot.lane.b32.xlu0 %v4967, 120
    %v5047 = vpop.permute.xlu0 %5046
    %v5048 = vsel %vm2626, %v5045, %v5047
    %v5049 = vsel %vm2626, %v5043, %v5045
    %v5050 = vsel %vm2626, %v5041, %v5043
    %v5051 = vsel %vm2626, %v5039, %v5041
    %v5052 = vsel %vm2626, %v5037, %v5039
    %v5053 = vsel %vm2626, %v5035, %v5037
    %v5054 = vsel %vm2626, %v5033, %v5035
    %v5055 = vsel %vm2626, %v5047, %v5033
    %5056 = vrot.lane.b32.xlu0 %v4960, 8
    %v5057 = vpop.permute.xlu0 %5056
    %5058 = vrot.lane.b32.xlu0 %v4961, 8
    %v5059 = vpop.permute.xlu0 %5058
    %5060 = vrot.lane.b32.xlu0 %v4962, 8
    %v5061 = vpop.permute.xlu0 %5060
    %5062 = vrot.lane.b32.xlu0 %v4963, 8
    %v5063 = vpop.permute.xlu0 %5062
    %5064 = vrot.lane.b32.xlu0 %v4964, 8
    %v5065 = vpop.permute.xlu0 %5064
    %5066 = vrot.lane.b32.xlu0 %v4965, 8
    %v5067 = vpop.permute.xlu0 %5066
    %5068 = vrot.lane.b32.xlu0 %v4966, 8
    %v5069 = vpop.permute.xlu0 %5068
    %5070 = vrot.lane.b32.xlu0 %v4967, 8
    %v5071 = vpop.permute.xlu0 %5070
    %v5072 = vsel %vm2651, %v5069, %v5071
    %v5073 = vsel %vm2651, %v5067, %v5069
    %v5074 = vsel %vm2651, %v5065, %v5067
    %v5075 = vsel %vm2651, %v5063, %v5065
    %v5076 = vsel %vm2651, %v5061, %v5063
    %v5077 = vsel %vm2651, %v5059, %v5061
    %v5078 = vsel %vm2651, %v5057, %v5059
    %v5079 = vsel %vm2651, %v5071, %v5057
    %v5080 = vsel %vm2602, %v5054, %v5079
    %v5081 = vsel %vm2603, %v5053, %v5078
    %v5082 = vsel %vm2604, %v5052, %v5077
    %v5083 = vsel %vm2605, %v5051, %v5076
    %v5084 = vsel %vm2606, %v5050, %v5075
    %v5085 = vsel %vm2607, %v5049, %v5074
    %v5086 = vsel %vm2608, %v5048, %v5073
    %v5087 = vsel %vm2609, %v5055, %v5072
    %v5088 = vadd.f32 %v4960, %v5080
    %v5089 = vadd.f32 %v4961, %v5081
    %v5090 = vadd.f32 %v4962, %v5082
    %v5091 = vadd.f32 %v4963, %v5083
    %v5092 = vadd.f32 %v4964, %v5084
    %v5093 = vadd.f32 %v4965, %v5085
    %v5094 = vadd.f32 %v4966, %v5086
    %v5095 = vadd.f32 %v4967, %v5087
    %5096 = vrot.lane.b32.xlu0 %v5024, 120
    %v5097 = vpop.permute.xlu0 %5096
    %5098 = vrot.lane.b32.xlu0 %v5025, 120
    %v5099 = vpop.permute.xlu0 %5098
    %5100 = vrot.lane.b32.xlu0 %v5026, 120
    %v5101 = vpop.permute.xlu0 %5100
    %5102 = vrot.lane.b32.xlu0 %v5027, 120
    %v5103 = vpop.permute.xlu0 %5102
    %5104 = vrot.lane.b32.xlu0 %v5028, 120
    %v5105 = vpop.permute.xlu0 %5104
    %5106 = vrot.lane.b32.xlu0 %v5029, 120
    %v5107 = vpop.permute.xlu0 %5106
    %5108 = vrot.lane.b32.xlu0 %v5030, 120
    %v5109 = vpop.permute.xlu0 %5108
    %5110 = vrot.lane.b32.xlu0 %v5031, 120
    %v5111 = vpop.permute.xlu0 %5110
    %v5112 = vsel %vm2626, %v5109, %v5111
    %v5113 = vsel %vm2626, %v5107, %v5109
    %v5114 = vsel %vm2626, %v5105, %v5107
    %v5115 = vsel %vm2626, %v5103, %v5105
    %v5116 = vsel %vm2626, %v5101, %v5103
    %v5117 = vsel %vm2626, %v5099, %v5101
    %v5118 = vsel %vm2626, %v5097, %v5099
    %v5119 = vsel %vm2626, %v5111, %v5097
    %5120 = vrot.lane.b32.xlu0 %v5024, 8
    %v5121 = vpop.permute.xlu0 %5120
    %5122 = vrot.lane.b32.xlu0 %v5025, 8
    %v5123 = vpop.permute.xlu0 %5122
    %5124 = vrot.lane.b32.xlu0 %v5026, 8
    %v5125 = vpop.permute.xlu0 %5124
    %5126 = vrot.lane.b32.xlu0 %v5027, 8
    %v5127 = vpop.permute.xlu0 %5126
    %5128 = vrot.lane.b32.xlu0 %v5028, 8
    %v5129 = vpop.permute.xlu0 %5128
    %5130 = vrot.lane.b32.xlu0 %v5029, 8
    %v5131 = vpop.permute.xlu0 %5130
    %5132 = vrot.lane.b32.xlu0 %v5030, 8
    %v5133 = vpop.permute.xlu0 %5132
    %5134 = vrot.lane.b32.xlu0 %v5031, 8
    %v5135 = vpop.permute.xlu0 %5134
    %v5136 = vsel %vm2651, %v5133, %v5135
    %v5137 = vsel %vm2651, %v5131, %v5133
    %v5138 = vsel %vm2651, %v5129, %v5131
    %v5139 = vsel %vm2651, %v5127, %v5129
    %v5140 = vsel %vm2651, %v5125, %v5127
    %v5141 = vsel %vm2651, %v5123, %v5125
    %v5142 = vsel %vm2651, %v5121, %v5123
    %v5143 = vsel %vm2651, %v5135, %v5121
    %v5144 = vsel %vm2602, %v5118, %v5143
    %v5145 = vsel %vm2603, %v5117, %v5142
    %v5146 = vsel %vm2604, %v5116, %v5141
    %v5147 = vsel %vm2605, %v5115, %v5140
    %v5148 = vsel %vm2606, %v5114, %v5139
    %v5149 = vsel %vm2607, %v5113, %v5138
    %v5150 = vsel %vm2608, %v5112, %v5137
    %v5151 = vsel %vm2609, %v5119, %v5136
    %v5152 = vadd.f32 %v5024, %v5144
    %v5153 = vadd.f32 %v5025, %v5145
    %v5154 = vadd.f32 %v5026, %v5146
    %v5155 = vadd.f32 %v5027, %v5147
    %v5156 = vadd.f32 %v5028, %v5148
    %v5157 = vadd.f32 %v5029, %v5149
    %v5158 = vadd.f32 %v5030, %v5150
    %v5159 = vadd.f32 %v5031, %v5151
    %5160 = vrot.lane.b32.xlu0 %v5088, 112
    %v5161 = vpop.permute.xlu0 %5160
    %5162 = vrot.lane.b32.xlu0 %v5089, 112
    %v5163 = vpop.permute.xlu0 %5162
    %5164 = vrot.lane.b32.xlu0 %v5090, 112
    %v5165 = vpop.permute.xlu0 %5164
    %5166 = vrot.lane.b32.xlu0 %v5091, 112
    %v5167 = vpop.permute.xlu0 %5166
    %5168 = vrot.lane.b32.xlu0 %v5092, 112
    %v5169 = vpop.permute.xlu0 %5168
    %5170 = vrot.lane.b32.xlu0 %v5093, 112
    %v5171 = vpop.permute.xlu0 %5170
    %5172 = vrot.lane.b32.xlu0 %v5094, 112
    %v5173 = vpop.permute.xlu0 %5172
    %5174 = vrot.lane.b32.xlu0 %v5095, 112
    %v5175 = vpop.permute.xlu0 %5174
    %v5176 = vsel %vm3836, %v5173, %v5175
    %v5177 = vsel %vm3836, %v5171, %v5173
    %v5178 = vsel %vm3836, %v5169, %v5171
    %v5179 = vsel %vm3836, %v5167, %v5169
    %v5180 = vsel %vm3836, %v5165, %v5167
    %v5181 = vsel %vm3836, %v5163, %v5165
    %v5182 = vsel %vm3836, %v5161, %v5163
    %v5183 = vsel %vm3836, %v5175, %v5161
    %5184 = vrot.lane.b32.xlu0 %v5088, 16
    %v5185 = vpop.permute.xlu0 %5184
    %5186 = vrot.lane.b32.xlu0 %v5089, 16
    %v5187 = vpop.permute.xlu0 %5186
    %5188 = vrot.lane.b32.xlu0 %v5090, 16
    %v5189 = vpop.permute.xlu0 %5188
    %5190 = vrot.lane.b32.xlu0 %v5091, 16
    %v5191 = vpop.permute.xlu0 %5190
    %5192 = vrot.lane.b32.xlu0 %v5092, 16
    %v5193 = vpop.permute.xlu0 %5192
    %5194 = vrot.lane.b32.xlu0 %v5093, 16
    %v5195 = vpop.permute.xlu0 %5194
    %5196 = vrot.lane.b32.xlu0 %v5094, 16
    %v5197 = vpop.permute.xlu0 %5196
    %5198 = vrot.lane.b32.xlu0 %v5095, 16
    %v5199 = vpop.permute.xlu0 %5198
    %v5200 = vsel %vm3861, %v5197, %v5199
    %v5201 = vsel %vm3861, %v5195, %v5197
    %v5202 = vsel %vm3861, %v5193, %v5195
    %v5203 = vsel %vm3861, %v5191, %v5193
    %v5204 = vsel %vm3861, %v5189, %v5191
    %v5205 = vsel %vm3861, %v5187, %v5189
    %v5206 = vsel %vm3861, %v5185, %v5187
    %v5207 = vsel %vm3861, %v5199, %v5185
    %v5208 = vsel %vm3812, %v5182, %v5207
    %v5209 = vsel %vm3813, %v5181, %v5206
    %v5210 = vsel %vm3814, %v5180, %v5205
    %v5211 = vsel %vm3815, %v5179, %v5204
    %v5212 = vsel %vm3816, %v5178, %v5203
    %v5213 = vsel %vm3817, %v5177, %v5202
    %v5214 = vsel %vm3818, %v5176, %v5201
    %v5215 = vsel %vm3819, %v5183, %v5200
    %v5216 = vadd.f32 %v5088, %v5208
    %v5217 = vadd.f32 %v5089, %v5209
    %v5218 = vadd.f32 %v5090, %v5210
    %v5219 = vadd.f32 %v5091, %v5211
    %v5220 = vadd.f32 %v5092, %v5212
    %v5221 = vadd.f32 %v5093, %v5213
    %v5222 = vadd.f32 %v5094, %v5214
    %v5223 = vadd.f32 %v5095, %v5215
    %5224 = vrot.lane.b32.xlu0 %v5152, 112
    %v5225 = vpop.permute.xlu0 %5224
    %5226 = vrot.lane.b32.xlu0 %v5153, 112
    %v5227 = vpop.permute.xlu0 %5226
    %5228 = vrot.lane.b32.xlu0 %v5154, 112
    %v5229 = vpop.permute.xlu0 %5228
    %5230 = vrot.lane.b32.xlu0 %v5155, 112
    %v5231 = vpop.permute.xlu0 %5230
    %5232 = vrot.lane.b32.xlu0 %v5156, 112
    %v5233 = vpop.permute.xlu0 %5232
    %5234 = vrot.lane.b32.xlu0 %v5157, 112
    %v5235 = vpop.permute.xlu0 %5234
    %5236 = vrot.lane.b32.xlu0 %v5158, 112
    %v5237 = vpop.permute.xlu0 %5236
    %5238 = vrot.lane.b32.xlu0 %v5159, 112
    %v5239 = vpop.permute.xlu0 %5238
    %v5240 = vsel %vm3836, %v5237, %v5239
    %v5241 = vsel %vm3836, %v5235, %v5237
    %v5242 = vsel %vm3836, %v5233, %v5235
    %v5243 = vsel %vm3836, %v5231, %v5233
    %v5244 = vsel %vm3836, %v5229, %v5231
    %v5245 = vsel %vm3836, %v5227, %v5229
    %v5246 = vsel %vm3836, %v5225, %v5227
    %v5247 = vsel %vm3836, %v5239, %v5225
    %5248 = vrot.lane.b32.xlu0 %v5152, 16
    %v5249 = vpop.permute.xlu0 %5248
    %5250 = vrot.lane.b32.xlu0 %v5153, 16
    %v5251 = vpop.permute.xlu0 %5250
    %5252 = vrot.lane.b32.xlu0 %v5154, 16
    %v5253 = vpop.permute.xlu0 %5252
    %5254 = vrot.lane.b32.xlu0 %v5155, 16
    %v5255 = vpop.permute.xlu0 %5254
    %5256 = vrot.lane.b32.xlu0 %v5156, 16
    %v5257 = vpop.permute.xlu0 %5256
    %5258 = vrot.lane.b32.xlu0 %v5157, 16
    %v5259 = vpop.permute.xlu0 %5258
    %5260 = vrot.lane.b32.xlu0 %v5158, 16
    %v5261 = vpop.permute.xlu0 %5260
    %5262 = vrot.lane.b32.xlu0 %v5159, 16
    %v5263 = vpop.permute.xlu0 %5262
    %v5264 = vsel %vm3861, %v5261, %v5263
    %v5265 = vsel %vm3861, %v5259, %v5261
    %v5266 = vsel %vm3861, %v5257, %v5259
    %v5267 = vsel %vm3861, %v5255, %v5257
    %v5268 = vsel %vm3861, %v5253, %v5255
    %v5269 = vsel %vm3861, %v5251, %v5253
    %v5270 = vsel %vm3861, %v5249, %v5251
    %v5271 = vsel %vm3861, %v5263, %v5249
    %v5272 = vsel %vm3812, %v5246, %v5271
    %v5273 = vsel %vm3813, %v5245, %v5270
    %v5274 = vsel %vm3814, %v5244, %v5269
    %v5275 = vsel %vm3815, %v5243, %v5268
    %v5276 = vsel %vm3816, %v5242, %v5267
    %v5277 = vsel %vm3817, %v5241, %v5266
    %v5278 = vsel %vm3818, %v5240, %v5265
    %v5279 = vsel %vm3819, %v5247, %v5264
    %v5280 = vadd.f32 %v5152, %v5272
    %v5281 = vadd.f32 %v5153, %v5273
    %v5282 = vadd.f32 %v5154, %v5274
    %v5283 = vadd.f32 %v5155, %v5275
    %v5284 = vadd.f32 %v5156, %v5276
    %v5285 = vadd.f32 %v5157, %v5277
    %v5286 = vadd.f32 %v5158, %v5278
    %v5287 = vadd.f32 %v5159, %v5279
    %5288 = vrot.lane.b32.xlu0 %v5216, 96
    %v5289 = vpop.permute.xlu0 %5288
    %5290 = vrot.lane.b32.xlu0 %v5217, 96
    %v5291 = vpop.permute.xlu0 %5290
    %5292 = vrot.lane.b32.xlu0 %v5218, 96
    %v5293 = vpop.permute.xlu0 %5292
    %5294 = vrot.lane.b32.xlu0 %v5219, 96
    %v5295 = vpop.permute.xlu0 %5294
    %5296 = vrot.lane.b32.xlu0 %v5220, 96
    %v5297 = vpop.permute.xlu0 %5296
    %5298 = vrot.lane.b32.xlu0 %v5221, 96
    %v5299 = vpop.permute.xlu0 %5298
    %5300 = vrot.lane.b32.xlu0 %v5222, 96
    %v5301 = vpop.permute.xlu0 %5300
    %5302 = vrot.lane.b32.xlu0 %v5223, 96
    %v5303 = vpop.permute.xlu0 %5302
    %v5304 = vsel %vm3982, %v5301, %v5303
    %v5305 = vsel %vm3982, %v5299, %v5301
    %v5306 = vsel %vm3982, %v5297, %v5299
    %v5307 = vsel %vm3982, %v5295, %v5297
    %v5308 = vsel %vm3982, %v5293, %v5295
    %v5309 = vsel %vm3982, %v5291, %v5293
    %v5310 = vsel %vm3982, %v5289, %v5291
    %v5311 = vsel %vm3982, %v5303, %v5289
    %5312 = vrot.lane.b32.xlu0 %v5216, 32
    %v5313 = vpop.permute.xlu0 %5312
    %5314 = vrot.lane.b32.xlu0 %v5217, 32
    %v5315 = vpop.permute.xlu0 %5314
    %5316 = vrot.lane.b32.xlu0 %v5218, 32
    %v5317 = vpop.permute.xlu0 %5316
    %5318 = vrot.lane.b32.xlu0 %v5219, 32
    %v5319 = vpop.permute.xlu0 %5318
    %5320 = vrot.lane.b32.xlu0 %v5220, 32
    %v5321 = vpop.permute.xlu0 %5320
    %5322 = vrot.lane.b32.xlu0 %v5221, 32
    %v5323 = vpop.permute.xlu0 %5322
    %5324 = vrot.lane.b32.xlu0 %v5222, 32
    %v5325 = vpop.permute.xlu0 %5324
    %5326 = vrot.lane.b32.xlu0 %v5223, 32
    %v5327 = vpop.permute.xlu0 %5326
    %v5328 = vsel %vm4007, %v5325, %v5327
    %v5329 = vsel %vm4007, %v5323, %v5325
    %v5330 = vsel %vm4007, %v5321, %v5323
    %v5331 = vsel %vm4007, %v5319, %v5321
    %v5332 = vsel %vm4007, %v5317, %v5319
    %v5333 = vsel %vm4007, %v5315, %v5317
    %v5334 = vsel %vm4007, %v5313, %v5315
    %v5335 = vsel %vm4007, %v5327, %v5313
    %v5336 = vsel %vm3958, %v5310, %v5335
    %v5337 = vsel %vm3959, %v5309, %v5334
    %v5338 = vsel %vm3960, %v5308, %v5333
    %v5339 = vsel %vm3961, %v5307, %v5332
    %v5340 = vsel %vm3962, %v5306, %v5331
    %v5341 = vsel %vm3963, %v5305, %v5330
    %v5342 = vsel %vm3964, %v5304, %v5329
    %v5343 = vsel %vm3965, %v5311, %v5328
    %v5344 = vadd.f32 %v5216, %v5336
    %v5345 = vadd.f32 %v5217, %v5337
    %v5346 = vadd.f32 %v5218, %v5338
    %v5347 = vadd.f32 %v5219, %v5339
    %v5348 = vadd.f32 %v5220, %v5340
    %v5349 = vadd.f32 %v5221, %v5341
    %v5350 = vadd.f32 %v5222, %v5342
    %v5351 = vadd.f32 %v5223, %v5343
    %5352 = vrot.lane.b32.xlu0 %v5280, 96
    %v5353 = vpop.permute.xlu0 %5352
    %5354 = vrot.lane.b32.xlu0 %v5281, 96
    %v5355 = vpop.permute.xlu0 %5354
    %5356 = vrot.lane.b32.xlu0 %v5282, 96
    %v5357 = vpop.permute.xlu0 %5356
    %5358 = vrot.lane.b32.xlu0 %v5283, 96
    %v5359 = vpop.permute.xlu0 %5358
    %5360 = vrot.lane.b32.xlu0 %v5284, 96
    %v5361 = vpop.permute.xlu0 %5360
    %5362 = vrot.lane.b32.xlu0 %v5285, 96
    %v5363 = vpop.permute.xlu0 %5362
    %5364 = vrot.lane.b32.xlu0 %v5286, 96
    %v5365 = vpop.permute.xlu0 %5364
    %5366 = vrot.lane.b32.xlu0 %v5287, 96
    %v5367 = vpop.permute.xlu0 %5366
    %v5368 = vsel %vm3982, %v5365, %v5367
    %v5369 = vsel %vm3982, %v5363, %v5365
    %v5370 = vsel %vm3982, %v5361, %v5363
    %v5371 = vsel %vm3982, %v5359, %v5361
    %v5372 = vsel %vm3982, %v5357, %v5359
    %v5373 = vsel %vm3982, %v5355, %v5357
    %v5374 = vsel %vm3982, %v5353, %v5355
    %v5375 = vsel %vm3982, %v5367, %v5353
    %5376 = vrot.lane.b32.xlu0 %v5280, 32
    %v5377 = vpop.permute.xlu0 %5376
    %5378 = vrot.lane.b32.xlu0 %v5281, 32
    %v5379 = vpop.permute.xlu0 %5378
    %5380 = vrot.lane.b32.xlu0 %v5282, 32
    %v5381 = vpop.permute.xlu0 %5380
    %5382 = vrot.lane.b32.xlu0 %v5283, 32
    %v5383 = vpop.permute.xlu0 %5382
    %5384 = vrot.lane.b32.xlu0 %v5284, 32
    %v5385 = vpop.permute.xlu0 %5384
    %5386 = vrot.lane.b32.xlu0 %v5285, 32
    %v5387 = vpop.permute.xlu0 %5386
    %5388 = vrot.lane.b32.xlu0 %v5286, 32
    %v5389 = vpop.permute.xlu0 %5388
    %5390 = vrot.lane.b32.xlu0 %v5287, 32
    %v5391 = vpop.permute.xlu0 %5390
    %v5392 = vsel %vm4007, %v5389, %v5391
    %v5393 = vsel %vm4007, %v5387, %v5389
    %v5394 = vsel %vm4007, %v5385, %v5387
    %v5395 = vsel %vm4007, %v5383, %v5385
    %v5396 = vsel %vm4007, %v5381, %v5383
    %v5397 = vsel %vm4007, %v5379, %v5381
    %v5398 = vsel %vm4007, %v5377, %v5379
    %v5399 = vsel %vm4007, %v5391, %v5377
    %v5400 = vsel %vm3958, %v5374, %v5399
    %v5401 = vsel %vm3959, %v5373, %v5398
    %v5402 = vsel %vm3960, %v5372, %v5397
    %v5403 = vsel %vm3961, %v5371, %v5396
    %v5404 = vsel %vm3962, %v5370, %v5395
    %v5405 = vsel %vm3963, %v5369, %v5394
    %v5406 = vsel %vm3964, %v5368, %v5393
    %v5407 = vsel %vm3965, %v5375, %v5392
    %v5408 = vadd.f32 %v5280, %v5400
    %v5409 = vadd.f32 %v5281, %v5401
    %v5410 = vadd.f32 %v5282, %v5402
    %v5411 = vadd.f32 %v5283, %v5403
    %v5412 = vadd.f32 %v5284, %v5404
    %v5413 = vadd.f32 %v5285, %v5405
    %v5414 = vadd.f32 %v5286, %v5406
    %v5415 = vadd.f32 %v5287, %v5407
    %v5416 = vand.u32 %v684, 64
    %v5417 = vand.u32 %v685, 64
    %v5418 = vand.u32 %v686, 64
    %v5419 = vand.u32 %v687, 64
    %v5420 = vand.u32 %v688, 64
    %v5421 = vand.u32 %v689, 64
    %v5422 = vand.u32 %v690, 64
    %v5423 = vand.u32 %v691, 64
    %vm5424 = vcmp.eq.s32.totalorder %v5416, 0
    %vm5425 = vcmp.eq.s32.totalorder %v5417, 0
    %vm5426 = vcmp.eq.s32.totalorder %v5418, 0
    %vm5427 = vcmp.eq.s32.totalorder %v5419, 0
    %vm5428 = vcmp.eq.s32.totalorder %v5420, 0
    %vm5429 = vcmp.eq.s32.totalorder %v5421, 0
    %vm5430 = vcmp.eq.s32.totalorder %v5422, 0
    %vm5431 = vcmp.eq.s32.totalorder %v5423, 0
    %5432 = vrot.lane.b32.xlu0 %v5344, 64
    %v5433 = vpop.permute.xlu0 %5432
    %5434 = vrot.lane.b32.xlu0 %v5345, 64
    %v5435 = vpop.permute.xlu0 %5434
    %5436 = vrot.lane.b32.xlu0 %v5346, 64
    %v5437 = vpop.permute.xlu0 %5436
    %5438 = vrot.lane.b32.xlu0 %v5347, 64
    %v5439 = vpop.permute.xlu0 %5438
    %5440 = vrot.lane.b32.xlu0 %v5348, 64
    %v5441 = vpop.permute.xlu0 %5440
    %5442 = vrot.lane.b32.xlu0 %v5349, 64
    %v5443 = vpop.permute.xlu0 %5442
    %5444 = vrot.lane.b32.xlu0 %v5350, 64
    %v5445 = vpop.permute.xlu0 %5444
    %5446 = vrot.lane.b32.xlu0 %v5351, 64
    %v5447 = vpop.permute.xlu0 %5446
    %vm5448 = vcmp.lt.s32.totalorder %v684, 64
    %v5449 = vsel %vm5448, %v5445, %v5447
    %v5450 = vsel %vm5448, %v5443, %v5445
    %v5451 = vsel %vm5448, %v5441, %v5443
    %v5452 = vsel %vm5448, %v5439, %v5441
    %v5453 = vsel %vm5448, %v5437, %v5439
    %v5454 = vsel %vm5448, %v5435, %v5437
    %v5455 = vsel %vm5448, %v5433, %v5435
    %v5456 = vsel %vm5448, %v5447, %v5433
    %v5457 = vsel %vm5424, %v5455, %v5456
    %v5458 = vsel %vm5425, %v5454, %v5455
    %v5459 = vsel %vm5426, %v5453, %v5454
    %v5460 = vsel %vm5427, %v5452, %v5453
    %v5461 = vsel %vm5428, %v5451, %v5452
    %v5462 = vsel %vm5429, %v5450, %v5451
    %v5463 = vsel %vm5430, %v5449, %v5450
    %v5464 = vsel %vm5431, %v5456, %v5449
    %v5465 = vadd.f32 %v5344, %v5457
    %v5466 = vadd.f32 %v5345, %v5458
    %v5467 = vadd.f32 %v5346, %v5459
    %v5468 = vadd.f32 %v5347, %v5460
    %v5469 = vadd.f32 %v5348, %v5461
    %v5470 = vadd.f32 %v5349, %v5462
    %v5471 = vadd.f32 %v5350, %v5463
    %v5472 = vadd.f32 %v5351, %v5464
    %5473 = vrot.lane.b32.xlu0 %v5408, 64
    %v5474 = vpop.permute.xlu0 %5473
    %5475 = vrot.lane.b32.xlu0 %v5409, 64
    %v5476 = vpop.permute.xlu0 %5475
    %5477 = vrot.lane.b32.xlu0 %v5410, 64
    %v5478 = vpop.permute.xlu0 %5477
    %5479 = vrot.lane.b32.xlu0 %v5411, 64
    %v5480 = vpop.permute.xlu0 %5479
    %5481 = vrot.lane.b32.xlu0 %v5412, 64
    %v5482 = vpop.permute.xlu0 %5481
    %5483 = vrot.lane.b32.xlu0 %v5413, 64
    %v5484 = vpop.permute.xlu0 %5483
    %5485 = vrot.lane.b32.xlu0 %v5414, 64
    %v5486 = vpop.permute.xlu0 %5485
    %5487 = vrot.lane.b32.xlu0 %v5415, 64
    %v5488 = vpop.permute.xlu0 %5487
    %v5489 = vsel %vm5448, %v5486, %v5488
    %v5490 = vsel %vm5448, %v5484, %v5486
    %v5491 = vsel %vm5448, %v5482, %v5484
    %v5492 = vsel %vm5448, %v5480, %v5482
    %v5493 = vsel %vm5448, %v5478, %v5480
    %v5494 = vsel %vm5448, %v5476, %v5478
    %v5495 = vsel %vm5448, %v5474, %v5476
    %v5496 = vsel %vm5448, %v5488, %v5474
    %v5497 = vsel %vm5424, %v5495, %v5496
    %v5498 = vsel %vm5425, %v5494, %v5495
    %v5499 = vsel %vm5426, %v5493, %v5494
    %v5500 = vsel %vm5427, %v5492, %v5493
    %v5501 = vsel %vm5428, %v5491, %v5492
    %v5502 = vsel %vm5429, %v5490, %v5491
    %v5503 = vsel %vm5430, %v5489, %v5490
    %v5504 = vsel %vm5431, %v5496, %v5489
    %v5505 = vadd.f32 %v5408, %v5497
    %v5506 = vadd.f32 %v5409, %v5498
    %v5507 = vadd.f32 %v5410, %v5499
    %v5508 = vadd.f32 %v5411, %v5500
    %v5509 = vadd.f32 %v5412, %v5501
    %v5510 = vadd.f32 %v5413, %v5502
    %v5511 = vadd.f32 %v5414, %v5503
    %v5512 = vadd.f32 %v5415, %v5504
    %v5513 = vand.u32 %v684, 128
    %v5514 = vand.u32 %v685, 128
    %v5515 = vand.u32 %v686, 128
    %v5516 = vand.u32 %v687, 128
    %v5517 = vand.u32 %v688, 128
    %v5518 = vand.u32 %v689, 128
    %v5519 = vand.u32 %v690, 128
    %v5520 = vand.u32 %v691, 128
    %vm5521 = vcmp.eq.s32.totalorder %v5513, 0
    %vm5522 = vcmp.eq.s32.totalorder %v5514, 0
    %vm5523 = vcmp.eq.s32.totalorder %v5515, 0
    %vm5524 = vcmp.eq.s32.totalorder %v5516, 0
    %vm5525 = vcmp.eq.s32.totalorder %v5517, 0
    %vm5526 = vcmp.eq.s32.totalorder %v5518, 0
    %vm5527 = vcmp.eq.s32.totalorder %v5519, 0
    %vm5528 = vcmp.eq.s32.totalorder %v5520, 0
    %v5529 = vsel %vm5521, %v5466, %v5472
    %v5530 = vsel %vm5522, %v5467, %v5465
    %v5531 = vsel %vm5523, %v5468, %v5466
    %v5532 = vsel %vm5524, %v5469, %v5467
    %v5533 = vsel %vm5525, %v5470, %v5468
    %v5534 = vsel %vm5526, %v5471, %v5469
    %v5535 = vsel %vm5527, %v5472, %v5470
    %v5536 = vsel %vm5528, %v5465, %v5471
    %v5537 = vadd.f32 %v5465, %v5529
    %v5538 = vadd.f32 %v5466, %v5530
    %v5539 = vadd.f32 %v5467, %v5531
    %v5540 = vadd.f32 %v5468, %v5532
    %v5541 = vadd.f32 %v5469, %v5533
    %v5542 = vadd.f32 %v5470, %v5534
    %v5543 = vadd.f32 %v5471, %v5535
    %v5544 = vadd.f32 %v5472, %v5536
    %v5545 = vsel %vm5521, %v5506, %v5512
    %v5546 = vsel %vm5522, %v5507, %v5505
    %v5547 = vsel %vm5523, %v5508, %v5506
    %v5548 = vsel %vm5524, %v5509, %v5507
    %v5549 = vsel %vm5525, %v5510, %v5508
    %v5550 = vsel %vm5526, %v5511, %v5509
    %v5551 = vsel %vm5527, %v5512, %v5510
    %v5552 = vsel %vm5528, %v5505, %v5511
    %v5553 = vadd.f32 %v5505, %v5545
    %v5554 = vadd.f32 %v5506, %v5546
    %v5555 = vadd.f32 %v5507, %v5547
    %v5556 = vadd.f32 %v5508, %v5548
    %v5557 = vadd.f32 %v5509, %v5549
    %v5558 = vadd.f32 %v5510, %v5550
    %v5559 = vadd.f32 %v5511, %v5551
    %v5560 = vadd.f32 %v5512, %v5552
    %v5561 = vmul.f32 %v5537, 0.00012207031
    %v5562 = vmul.f32 %v5538, 0.00012207031
    %v5563 = vmul.f32 %v5539, 0.00012207031
    %v5564 = vmul.f32 %v5540, 0.00012207031
    %v5565 = vmul.f32 %v5541, 0.00012207031
    %v5566 = vmul.f32 %v5542, 0.00012207031
    %v5567 = vmul.f32 %v5543, 0.00012207031
    %v5568 = vmul.f32 %v5544, 0.00012207031
    %v5569 = vmul.f32 %v5553, 0.00012207031
    %v5570 = vmul.f32 %v5554, 0.00012207031
    %v5571 = vmul.f32 %v5555, 0.00012207031
    %v5572 = vmul.f32 %v5556, 0.00012207031
    %v5573 = vmul.f32 %v5557, 0.00012207031
    %v5574 = vmul.f32 %v5558, 0.00012207031
    %v5575 = vmul.f32 %v5559, 0.00012207031
    %v5576 = vmul.f32 %v5560, 0.00012207031
    %v5577 = vmul.f32 %v5561, %v5561
    %v5578 = vmul.f32 %v5562, %v5562
    %v5579 = vmul.f32 %v5563, %v5563
    %v5580 = vmul.f32 %v5564, %v5564
    %v5581 = vmul.f32 %v5565, %v5565
    %v5582 = vmul.f32 %v5566, %v5566
    %v5583 = vmul.f32 %v5567, %v5567
    %v5584 = vmul.f32 %v5568, %v5568
    %v5585 = vsub.f32 %v5569, %v5577
    %v5586 = vsub.f32 %v5570, %v5578
    %v5587 = vsub.f32 %v5571, %v5579
    %v5588 = vsub.f32 %v5572, %v5580
    %v5589 = vsub.f32 %v5573, %v5581
    %v5590 = vsub.f32 %v5574, %v5582
    %v5591 = vsub.f32 %v5575, %v5583
    %v5592 = vsub.f32 %v5576, %v5584
    %v5593 = vmax.f32 %v5585, 0.0
    %v5594 = vmax.f32 %v5586, 0.0
    %v5595 = vmax.f32 %v5587, 0.0
    %v5596 = vmax.f32 %v5588, 0.0
    %v5597 = vmax.f32 %v5589, 0.0
    %v5598 = vmax.f32 %v5590, 0.0
    %v5599 = vmax.f32 %v5591, 0.0
    %v5600 = vmax.f32 %v5592, 0.0
    %v5601 = vadd.f32 %v5593, 1e-05
    %v5602 = vadd.f32 %v5594, 1e-05
    %v5603 = vadd.f32 %v5595, 1e-05
    %v5604 = vadd.f32 %v5596, 1e-05
    %v5605 = vadd.f32 %v5597, 1e-05
    %v5606 = vadd.f32 %v5598, 1e-05
    %v5607 = vadd.f32 %v5599, 1e-05
    %v5608 = vadd.f32 %v5600, 1e-05
    %v5609 = vrsqrt.pop %v5601
    %v5610 = vrsqrt.pop %v5602
    %v5611 = vrsqrt.pop %v5603
    %v5612 = vrsqrt.pop %v5604
    %v5613 = vrsqrt.pop %v5605
    %v5614 = vrsqrt.pop %v5606
    %v5615 = vrsqrt.pop %v5607
    %v5616 = vrsqrt.pop %v5608
    %v5625 = vrot.slane %v5609, 4
    %v5626 = vrot.slane %v5610, 4
    %v5627 = vrot.slane %v5611, 4
    %v5628 = vrot.slane %v5612, 4
    %v5629 = vrot.slane %v5613, 4
    %v5630 = vrot.slane %v5614, 4
    %v5631 = vrot.slane %v5615, 4
    %v5632 = vrot.slane %v5616, 4
    %v5641 = vmul.f32 %v667, %v5625
    %v5642 = vmul.f32 %v668, %v5626
    %v5643 = vmul.f32 %v669, %v5627
    %v5644 = vmul.f32 %v670, %v5628
    %v5645 = vmul.f32 %v671, %v5629
    %v5646 = vmul.f32 %v672, %v5630
    %v5647 = vmul.f32 %v673, %v5631
    %v5648 = vmul.f32 %v674, %v5632
    %v5657 = vrot.slane %v5641, 4
    %v5658 = vrot.slane %v5642, 4
    %v5659 = vrot.slane %v5643, 4
    %v5660 = vrot.slane %v5644, 4
    %v5661 = vrot.slane %v5645, 4
    %v5662 = vrot.slane %v5646, 4
    %v5663 = vrot.slane %v5647, 4
    %v5664 = vrot.slane %v5648, 4
    %v5673 = vmul.f32 %v5561, %v5657
    %v5674 = vmul.f32 %v5562, %v5658
    %v5675 = vmul.f32 %v5563, %v5659
    %v5676 = vmul.f32 %v5564, %v5660
    %v5677 = vmul.f32 %v5565, %v5661
    %v5678 = vmul.f32 %v5566, %v5662
    %v5679 = vmul.f32 %v5567, %v5663
    %v5680 = vmul.f32 %v5568, %v5664
    %v5689 = vrot.slane %v5673, 4
    %v5690 = vrot.slane %v5674, 4
    %v5691 = vrot.slane %v5675, 4
    %v5692 = vrot.slane %v5676, 4
    %v5693 = vrot.slane %v5677, 4
    %v5694 = vrot.slane %v5678, 4
    %v5695 = vrot.slane %v5679, 4
    %v5696 = vrot.slane %v5680, 4
    %v5705 = vsub.f32 %v675, %v5689
    %v5706 = vsub.f32 %v676, %v5690
    %v5707 = vsub.f32 %v677, %v5691
    %v5708 = vsub.f32 %v678, %v5692
    %v5709 = vsub.f32 %v679, %v5693
    %v5710 = vsub.f32 %v680, %v5694
    %v5711 = vsub.f32 %v681, %v5695
    %v5712 = vsub.f32 %v682, %v5696
    %v5713 = vlaneseq
    %v5714 = vshrl.u32 %v5713, 7
    %v5715 = vsub.s32 4, %v5714
    %v5716 = vrot.slane %v5641, %v5715
    %v5717 = vlaneseq
    %v5718 = vshrl.u32 %v5717, 7
    %v5719 = vsub.s32 4, %v5718
    %v5720 = vrot.slane %v5642, %v5719
    %v5721 = vlaneseq
    %v5722 = vshrl.u32 %v5721, 7
    %v5723 = vsub.s32 4, %v5722
    %v5724 = vrot.slane %v5643, %v5723
    %v5725 = vlaneseq
    %v5726 = vshrl.u32 %v5725, 7
    %v5727 = vsub.s32 4, %v5726
    %v5728 = vrot.slane %v5644, %v5727
    %v5729 = vlaneseq
    %v5730 = vshrl.u32 %v5729, 7
    %v5731 = vsub.s32 4, %v5730
    %v5732 = vrot.slane %v5645, %v5731
    %v5733 = vlaneseq
    %v5734 = vshrl.u32 %v5733, 7
    %v5735 = vsub.s32 4, %v5734
    %v5736 = vrot.slane %v5646, %v5735
    %v5737 = vlaneseq
    %v5738 = vshrl.u32 %v5737, 7
    %v5739 = vsub.s32 4, %v5738
    %v5740 = vrot.slane %v5647, %v5739
    %v5741 = vlaneseq
    %v5742 = vshrl.u32 %v5741, 7
    %v5743 = vsub.s32 4, %v5742
    %v5744 = vrot.slane %v5648, %v5743
    %v5745 = vmul.f32 %v4440, %v5716
    %v5746 = vmul.f32 %v4441, %v5720
    %v5747 = vmul.f32 %v4442, %v5724
    %v5748 = vmul.f32 %v4443, %v5728
    %v5749 = vmul.f32 %v4444, %v5732
    %v5750 = vmul.f32 %v4445, %v5736
    %v5751 = vmul.f32 %v4446, %v5740
    %v5752 = vmul.f32 %v4447, %v5744
    %v5753 = vmul.f32 %v4448, %v5716
    %v5754 = vmul.f32 %v4449, %v5720
    %v5755 = vmul.f32 %v4450, %v5724
    %v5756 = vmul.f32 %v4451, %v5728
    %v5757 = vmul.f32 %v4452, %v5732
    %v5758 = vmul.f32 %v4453, %v5736
    %v5759 = vmul.f32 %v4454, %v5740
    %v5760 = vmul.f32 %v4455, %v5744
    %v5761 = vmul.f32 %v4456, %v5716
    %v5762 = vmul.f32 %v4457, %v5720
    %v5763 = vmul.f32 %v4458, %v5724
    %v5764 = vmul.f32 %v4459, %v5728
    %v5765 = vmul.f32 %v4460, %v5732
    %v5766 = vmul.f32 %v4461, %v5736
    %v5767 = vmul.f32 %v4462, %v5740
    %v5768 = vmul.f32 %v4463, %v5744
    %v5769 = vmul.f32 %v4464, %v5716
    %v5770 = vmul.f32 %v4465, %v5720
    %v5771 = vmul.f32 %v4466, %v5724
    %v5772 = vmul.f32 %v4467, %v5728
    %v5773 = vmul.f32 %v4468, %v5732
    %v5774 = vmul.f32 %v4469, %v5736
    %v5775 = vmul.f32 %v4470, %v5740
    %v5776 = vmul.f32 %v4471, %v5744
    %v5777 = vlaneseq
    %v5778 = vshrl.u32 %v5777, 7
    %v5779 = vsub.s32 4, %v5778
    %v5780 = vrot.slane %v5705, %v5779
    %v5781 = vlaneseq
    %v5782 = vshrl.u32 %v5781, 7
    %v5783 = vsub.s32 4, %v5782
    %v5784 = vrot.slane %v5706, %v5783
    %v5785 = vlaneseq
    %v5786 = vshrl.u32 %v5785, 7
    %v5787 = vsub.s32 4, %v5786
    %v5788 = vrot.slane %v5707, %v5787
    %v5789 = vlaneseq
    %v5790 = vshrl.u32 %v5789, 7
    %v5791 = vsub.s32 4, %v5790
    %v5792 = vrot.slane %v5708, %v5791
    %v5793 = vlaneseq
    %v5794 = vshrl.u32 %v5793, 7
    %v5795 = vsub.s32 4, %v5794
    %v5796 = vrot.slane %v5709, %v5795
    %v5797 = vlaneseq
    %v5798 = vshrl.u32 %v5797, 7
    %v5799 = vsub.s32 4, %v5798
    %v5800 = vrot.slane %v5710, %v5799
    %v5801 = vlaneseq
    %v5802 = vshrl.u32 %v5801, 7
    %v5803 = vsub.s32 4, %v5802
    %v5804 = vrot.slane %v5711, %v5803
    %v5805 = vlaneseq
    %v5806 = vshrl.u32 %v5805, 7
    %v5807 = vsub.s32 4, %v5806
    %v5808 = vrot.slane %v5712, %v5807
    %v5809 = vadd.f32 %v5745, %v5780
    %v5810 = vadd.f32 %v5746, %v5784
    %v5811 = vadd.f32 %v5747, %v5788
    %v5812 = vadd.f32 %v5748, %v5792
    %v5813 = vadd.f32 %v5749, %v5796
    %v5814 = vadd.f32 %v5750, %v5800
    %v5815 = vadd.f32 %v5751, %v5804
    %v5816 = vadd.f32 %v5752, %v5808
    %v5817 = vadd.f32 %v5753, %v5780
    %v5818 = vadd.f32 %v5754, %v5784
    %v5819 = vadd.f32 %v5755, %v5788
    %v5820 = vadd.f32 %v5756, %v5792
    %v5821 = vadd.f32 %v5757, %v5796
    %v5822 = vadd.f32 %v5758, %v5800
    %v5823 = vadd.f32 %v5759, %v5804
    %v5824 = vadd.f32 %v5760, %v5808
    %v5825 = vadd.f32 %v5761, %v5780
    %v5826 = vadd.f32 %v5762, %v5784
    %v5827 = vadd.f32 %v5763, %v5788
    %v5828 = vadd.f32 %v5764, %v5792
    %v5829 = vadd.f32 %v5765, %v5796
    %v5830 = vadd.f32 %v5766, %v5800
    %v5831 = vadd.f32 %v5767, %v5804
    %v5832 = vadd.f32 %v5768, %v5808
    %v5833 = vadd.f32 %v5769, %v5780
    %v5834 = vadd.f32 %v5770, %v5784
    %v5835 = vadd.f32 %v5771, %v5788
    %v5836 = vadd.f32 %v5772, %v5792
    %v5837 = vadd.f32 %v5773, %v5796
    %v5838 = vadd.f32 %v5774, %v5800
    %v5839 = vadd.f32 %v5775, %v5804
    %v5840 = vadd.f32 %v5776, %v5808
    %vm5841 = vcmp.ge.f32.partialorder %v5809, 0.0
    %vm5842 = vcmp.ge.f32.partialorder %v5810, 0.0
    %vm5843 = vcmp.ge.f32.partialorder %v5811, 0.0
    %vm5844 = vcmp.ge.f32.partialorder %v5812, 0.0
    %vm5845 = vcmp.ge.f32.partialorder %v5813, 0.0
    %vm5846 = vcmp.ge.f32.partialorder %v5814, 0.0
    %vm5847 = vcmp.ge.f32.partialorder %v5815, 0.0
    %vm5848 = vcmp.ge.f32.partialorder %v5816, 0.0
    %vm5849 = vcmp.ge.f32.partialorder %v5817, 0.0
    %vm5850 = vcmp.ge.f32.partialorder %v5818, 0.0
    %vm5851 = vcmp.ge.f32.partialorder %v5819, 0.0
    %vm5852 = vcmp.ge.f32.partialorder %v5820, 0.0
    %vm5853 = vcmp.ge.f32.partialorder %v5821, 0.0
    %vm5854 = vcmp.ge.f32.partialorder %v5822, 0.0
    %vm5855 = vcmp.ge.f32.partialorder %v5823, 0.0
    %vm5856 = vcmp.ge.f32.partialorder %v5824, 0.0
    %vm5857 = vcmp.ge.f32.partialorder %v5825, 0.0
    %vm5858 = vcmp.ge.f32.partialorder %v5826, 0.0
    %vm5859 = vcmp.ge.f32.partialorder %v5827, 0.0
    %vm5860 = vcmp.ge.f32.partialorder %v5828, 0.0
    %vm5861 = vcmp.ge.f32.partialorder %v5829, 0.0
    %vm5862 = vcmp.ge.f32.partialorder %v5830, 0.0
    %vm5863 = vcmp.ge.f32.partialorder %v5831, 0.0
    %vm5864 = vcmp.ge.f32.partialorder %v5832, 0.0
    %vm5865 = vcmp.ge.f32.partialorder %v5833, 0.0
    %vm5866 = vcmp.ge.f32.partialorder %v5834, 0.0
    %vm5867 = vcmp.ge.f32.partialorder %v5835, 0.0
    %vm5868 = vcmp.ge.f32.partialorder %v5836, 0.0
    %vm5869 = vcmp.ge.f32.partialorder %v5837, 0.0
    %vm5870 = vcmp.ge.f32.partialorder %v5838, 0.0
    %vm5871 = vcmp.ge.f32.partialorder %v5839, 0.0
    %vm5872 = vcmp.ge.f32.partialorder %v5840, 0.0
    %v5873 = vmul.f32 %v5809, 0.01
    %v5874 = vmul.f32 %v5810, 0.01
    %v5875 = vmul.f32 %v5811, 0.01
    %v5876 = vmul.f32 %v5812, 0.01
    %v5877 = vmul.f32 %v5813, 0.01
    %v5878 = vmul.f32 %v5814, 0.01
    %v5879 = vmul.f32 %v5815, 0.01
    %v5880 = vmul.f32 %v5816, 0.01
    %v5881 = vmul.f32 %v5817, 0.01
    %v5882 = vmul.f32 %v5818, 0.01
    %v5883 = vmul.f32 %v5819, 0.01
    %v5884 = vmul.f32 %v5820, 0.01
    %v5885 = vmul.f32 %v5821, 0.01
    %v5886 = vmul.f32 %v5822, 0.01
    %v5887 = vmul.f32 %v5823, 0.01
    %v5888 = vmul.f32 %v5824, 0.01
    %v5889 = vmul.f32 %v5825, 0.01
    %v5890 = vmul.f32 %v5826, 0.01
    %v5891 = vmul.f32 %v5827, 0.01
    %v5892 = vmul.f32 %v5828, 0.01
    %v5893 = vmul.f32 %v5829, 0.01
    %v5894 = vmul.f32 %v5830, 0.01
    %v5895 = vmul.f32 %v5831, 0.01
    %v5896 = vmul.f32 %v5832, 0.01
    %v5897 = vmul.f32 %v5833, 0.01
    %v5898 = vmul.f32 %v5834, 0.01
    %v5899 = vmul.f32 %v5835, 0.01
    %v5900 = vmul.f32 %v5836, 0.01
    %v5901 = vmul.f32 %v5837, 0.01
    %v5902 = vmul.f32 %v5838, 0.01
    %v5903 = vmul.f32 %v5839, 0.01
    %v5904 = vmul.f32 %v5840, 0.01
    %v5905 = vsel %vm5841, %v5809, %v5873
    %v5906 = vsel %vm5842, %v5810, %v5874
    %v5907 = vsel %vm5843, %v5811, %v5875
    %v5908 = vsel %vm5844, %v5812, %v5876
    %v5909 = vsel %vm5845, %v5813, %v5877
    %v5910 = vsel %vm5846, %v5814, %v5878
    %v5911 = vsel %vm5847, %v5815, %v5879
    %v5912 = vsel %vm5848, %v5816, %v5880
    %v5913 = vsel %vm5849, %v5817, %v5881
    %v5914 = vsel %vm5850, %v5818, %v5882
    %v5915 = vsel %vm5851, %v5819, %v5883
    %v5916 = vsel %vm5852, %v5820, %v5884
    %v5917 = vsel %vm5853, %v5821, %v5885
    %v5918 = vsel %vm5854, %v5822, %v5886
    %v5919 = vsel %vm5855, %v5823, %v5887
    %v5920 = vsel %vm5856, %v5824, %v5888
    %v5921 = vsel %vm5857, %v5825, %v5889
    %v5922 = vsel %vm5858, %v5826, %v5890
    %v5923 = vsel %vm5859, %v5827, %v5891
    %v5924 = vsel %vm5860, %v5828, %v5892
    %v5925 = vsel %vm5861, %v5829, %v5893
    %v5926 = vsel %vm5862, %v5830, %v5894
    %v5927 = vsel %vm5863, %v5831, %v5895
    %v5928 = vsel %vm5864, %v5832, %v5896
    %v5929 = vsel %vm5865, %v5833, %v5897
    %v5930 = vsel %vm5866, %v5834, %v5898
    %v5931 = vsel %vm5867, %v5835, %v5899
    %v5932 = vsel %vm5868, %v5836, %v5900
    %v5933 = vsel %vm5869, %v5837, %v5901
    %v5934 = vsel %vm5870, %v5838, %v5902
    %v5935 = vsel %vm5871, %v5839, %v5903
    %v5936 = vsel %vm5872, %v5840, %v5904
    %v5937 = vtanh.pop %v5905
    %v5938 = vtanh.pop %v5906
    %v5939 = vtanh.pop %v5907
    %v5940 = vtanh.pop %v5908
    %v5941 = vtanh.pop %v5909
    %v5942 = vtanh.pop %v5910
    %v5943 = vtanh.pop %v5911
    %v5944 = vtanh.pop %v5912
    %v5945 = vtanh.pop %v5913
    %v5946 = vtanh.pop %v5914
    %v5947 = vtanh.pop %v5915
    %v5948 = vtanh.pop %v5916
    %v5949 = vtanh.pop %v5917
    %v5950 = vtanh.pop %v5918
    %v5951 = vtanh.pop %v5919
    %v5952 = vtanh.pop %v5920
    %v5953 = vtanh.pop %v5921
    %v5954 = vtanh.pop %v5922
    %v5955 = vtanh.pop %v5923
    %v5956 = vtanh.pop %v5924
    %v5957 = vtanh.pop %v5925
    %v5958 = vtanh.pop %v5926
    %v5959 = vtanh.pop %v5927
    %v5960 = vtanh.pop %v5928
    %v5961 = vtanh.pop %v5929
    %v5962 = vtanh.pop %v5930
    %v5963 = vtanh.pop %v5931
    %v5964 = vtanh.pop %v5932
    %v5965 = vtanh.pop %v5933
    %v5966 = vtanh.pop %v5934
    %v5967 = vtanh.pop %v5935
    %v5968 = vtanh.pop %v5936
    %v5969 = vpack.c.bf16 %v5945, %v5937
    %v5970 = vpack.c.bf16 %v5946, %v5938
    %v5971 = vpack.c.bf16 %v5947, %v5939
    %v5972 = vpack.c.bf16 %v5948, %v5940
    %v5973 = vpack.c.bf16 %v5949, %v5941
    %v5974 = vpack.c.bf16 %v5950, %v5942
    %v5975 = vpack.c.bf16 %v5951, %v5943
    %v5976 = vpack.c.bf16 %v5952, %v5944
    %v5977 = vpack.c.bf16 %v5961, %v5953
    %v5978 = vpack.c.bf16 %v5962, %v5954
    %v5979 = vpack.c.bf16 %v5963, %v5955
    %v5980 = vpack.c.bf16 %v5964, %v5956
    %v5981 = vpack.c.bf16 %v5965, %v5957
    %v5982 = vpack.c.bf16 %v5966, %v5958
    %v5983 = vpack.c.bf16 %v5967, %v5959
    %v5984 = vpack.c.bf16 %v5968, %v5960
    %v6001 = vunpack.c.l.b16 %v5969
    %v6002 = vunpack.c.l.b16 %v5970
    %v6003 = vunpack.c.l.b16 %v5971
    %v6004 = vunpack.c.l.b16 %v5972
    %v6005 = vunpack.c.l.b16 %v5973
    %v6006 = vunpack.c.l.b16 %v5974
    %v6007 = vunpack.c.l.b16 %v5975
    %v6008 = vunpack.c.l.b16 %v5976
    %v6009 = vunpack.c.h.b16 %v5969
    %v6010 = vunpack.c.h.b16 %v5970
    %v6011 = vunpack.c.h.b16 %v5971
    %v6012 = vunpack.c.h.b16 %v5972
    %v6013 = vunpack.c.h.b16 %v5973
    %v6014 = vunpack.c.h.b16 %v5974
    %v6015 = vunpack.c.h.b16 %v5975
    %v6016 = vunpack.c.h.b16 %v5976
    %v6017 = vunpack.c.l.b16 %v5977
    %v6018 = vunpack.c.l.b16 %v5978
    %v6019 = vunpack.c.l.b16 %v5979
    %v6020 = vunpack.c.l.b16 %v5980
    %v6021 = vunpack.c.l.b16 %v5981
    %v6022 = vunpack.c.l.b16 %v5982
    %v6023 = vunpack.c.l.b16 %v5983
    %v6024 = vunpack.c.l.b16 %v5984
    %v6025 = vunpack.c.h.b16 %v5977
    %v6026 = vunpack.c.h.b16 %v5978
    %v6027 = vunpack.c.h.b16 %v5979
    %v6028 = vunpack.c.h.b16 %v5980
    %v6029 = vunpack.c.h.b16 %v5981
    %v6030 = vunpack.c.h.b16 %v5982
    %v6031 = vunpack.c.h.b16 %v5983
    %v6032 = vunpack.c.h.b16 %v5984
    %v6033 = vpack.c.b16 %v6002, %v6001
    %v6034 = vpack.c.b16 %v6004, %v6003
    %v6035 = vpack.c.b16 %v6006, %v6005
    %v6036 = vpack.c.b16 %v6008, %v6007
    %v6037 = vpack.c.b16 %v6010, %v6009
    %v6038 = vpack.c.b16 %v6012, %v6011
    %v6039 = vpack.c.b16 %v6014, %v6013
    %v6040 = vpack.c.b16 %v6016, %v6015
    %v6041 = vpack.c.b16 %v6018, %v6017
    %v6042 = vpack.c.b16 %v6020, %v6019
    %v6043 = vpack.c.b16 %v6022, %v6021
    %v6044 = vpack.c.b16 %v6024, %v6023
    %v6045 = vpack.c.b16 %v6026, %v6025
    %v6046 = vpack.c.b16 %v6028, %v6027
    %v6047 = vpack.c.b16 %v6030, %v6029
    %v6048 = vpack.c.b16 %v6032, %v6031
    %6065 = vst [vmem:[%s4] sm:$0xff] %v6033
    %6066 = vst [vmem:[%s4 + $0x8] sm:$0xff] %v6034
    %6067 = vst [vmem:[%s4 + $0x10] sm:$0xff] %v6035
    %6068 = vst [vmem:[%s4 + $0x18] sm:$0xff] %v6036
    %6069 = vst [vmem:[%s4 + $0x20] sm:$0xff] %v6037
    %6070 = vst [vmem:[%s4 + $0x28] sm:$0xff] %v6038
    %6071 = vst [vmem:[%s4 + $0x30] sm:$0xff] %v6039
    %6072 = vst [vmem:[%s4 + $0x38] sm:$0xff] %v6040
    %6073 = vst [vmem:[%s4 + $0x40] sm:$0xff] %v6041
    %6074 = vst [vmem:[%s4 + $0x48] sm:$0xff] %v6042
    %6075 = vst [vmem:[%s4 + $0x50] sm:$0xff] %v6043
    %6076 = vst [vmem:[%s4 + $0x58] sm:$0xff] %v6044
    %6077 = vst [vmem:[%s4 + $0x60] sm:$0xff] %v6045
    %6078 = vst [vmem:[%s4 + $0x68] sm:$0xff] %v6046
    %6079 = vst [vmem:[%s4 + $0x70] sm:$0xff] %v6047
    %6080 = vst [vmem:[%s4 + $0x78] sm:$0xff] %v6048
    // Predicated region
    $region30: #{psgenerator_forward.1} parent=1 // pred_check
      _
    $region31: #{psgenerator_forward.1} parent=1 // pred_check_branch
      %6082 = sbr.rel (0) target = $region33
    $region32: #{psgenerator_forward.1} parent=1 // pred_region
      _
    $region33: #{psgenerator_forward.1} parent=1 // pred_fallthru
      _
    // Predicated region
    $region34: #{psgenerator_forward.1} parent=1 // pred_check
      _
    $region35: #{psgenerator_forward.1} parent=1 // pred_check_branch
      %6084 = sbr.rel (0) target = $region37
    $region36: #{psgenerator_forward.1} parent=1 // pred_region
      _
    $region37: #{psgenerator_forward.1} parent=1 // pred_fallthru
      _
    %6085 = vsyncpa [#allocation3], 1
    %6086 = vsyncpa [#allocation5], 1

</llo_original>
